<compile_context>
chip_gen: v7x
topology: tpu7x:2x2x1
jax: 0.10.0
libtpu: 0.0.40
codegen_flags: <defaults>
</compile_context>

<pallas_src>
import functools

import jax
import jax.numpy as jnp
from jax.experimental import pallas as pl
from jax.experimental.pallas import tpu as pltpu

F32 = jnp.float32
BF16 = jnp.bfloat16


# --------------------------------------------------------------------------
# Pallas kernels
# --------------------------------------------------------------------------
def _mm_bias_kernel(a_ref, w_ref, b_ref, o_ref):
    acc = jnp.dot(a_ref[...], w_ref[...], preferred_element_type=jnp.float32)
    o_ref[...] = acc + b_ref[...]


def matmul_bias(a_bf16, w_bf16, bias_f32, tm=256):
    """(M,K) @ (K,N) + bias on the MXU; rows (M) tiled on a parallel grid axis."""
    M, K = a_bf16.shape
    N = w_bf16.shape[1]
    if M > tm:
        Mp = ((M + tm - 1) // tm) * tm
        tme = tm
    else:
        Mp = ((M + 15) // 16) * 16
        tme = Mp
    if Mp != M:
        a_bf16 = jnp.pad(a_bf16, ((0, Mp - M), (0, 0)))
    bias2d = bias_f32.reshape(1, N).astype(F32)
    out = pl.pallas_call(
        _mm_bias_kernel,
        grid=(Mp // tme,),
        out_shape=jax.ShapeDtypeStruct((Mp, N), F32),
        in_specs=[pl.BlockSpec((tme, K), lambda i: (i, 0)),
                  pl.BlockSpec((K, N), lambda i: (0, 0)),
                  pl.BlockSpec((1, N), lambda i: (0, 0))],
        out_specs=pl.BlockSpec((tme, N), lambda i: (i, 0)),
        compiler_params=pltpu.CompilerParams(
            dimension_semantics=("parallel",)),
    )(a_bf16, w_bf16, bias2d)
    return out[:M] if Mp != M else out


def _ln_lrelu_kernel(x_ref, o_ref, *, eps, slope):
    x = x_ref[...]
    mean = jnp.mean(x)
    c = x - mean
    var = jnp.mean(c * c)
    y = c * jax.lax.rsqrt(var + eps)
    o_ref[...] = jnp.where(y >= 0, y, slope * y)


def layernorm_lrelu(x_nhwc, eps=1e-5, slope=0.2):
    """nn.LayerNorm(x.shape[1:], elementwise_affine=False) + LeakyReLU(0.2)."""
    B, H, W, C = x_nhwc.shape
    n = H * W * C
    if n % 128 == 0:
        flat = x_nhwc.reshape(B, n // 128, 128)   # lane-dense layout
    else:
        flat = x_nhwc.reshape(B, H * W, C)
    blk = (1,) + flat.shape[1:]
    out = pl.pallas_call(
        functools.partial(_ln_lrelu_kernel, eps=eps, slope=slope),
        grid=(B,),
        out_shape=jax.ShapeDtypeStruct(flat.shape, F32),
        in_specs=[pl.BlockSpec(blk, lambda b: (b, 0, 0))],
        out_specs=pl.BlockSpec(blk, lambda b: (b, 0, 0)),
        compiler_params=pltpu.CompilerParams(
            dimension_semantics=("parallel",)),
    )(flat.astype(F32))
    return out.reshape(B, H, W, C)


# --------------------------------------------------------------------------
# Conv / deconv wrappers (NHWC, im2col is a channel-axis concat)
# --------------------------------------------------------------------------
def conv3x3(x_nhwc, w_mat, bias):
    """3x3 / pad=1 / stride=1 conv: NHWC im2col + fused matmul+bias kernel."""
    B, H, W, Cin = x_nhwc.shape
    Cout = w_mat.shape[1]
    # TODO(synk): patch gather (im2col) is XLA glue; a shifted-accumulate
    # Pallas kernel could avoid materializing 9x the activation bytes.
    xp = jnp.pad(x_nhwc.astype(BF16), ((0, 0), (1, 1), (1, 1), (0, 0)))
    cols = [xp[:, di:di + H, dj:dj + W, :] for di in range(3) for dj in range(3)]
    patches = jnp.concatenate(cols, axis=-1).reshape(B * H * W, 9 * Cin)
    y = matmul_bias(patches, w_mat, bias)
    return y.reshape(B, H, W, Cout)


def deconv2x2(x_nhwc, w_mat, bias4):
    """ConvTranspose2d(k=2, s=2): per-pixel matmul, lane-dense 4*Cout output."""
    B, H, W, Cin = x_nhwc.shape
    Cout = w_mat.shape[1] // 4
    y = matmul_bias(x_nhwc.astype(BF16).reshape(B * H * W, Cin), w_mat, bias4)
    y = y.reshape(B, H, W, 2, 2, Cout)
    y = jnp.transpose(y, (0, 1, 3, 2, 4, 5)).reshape(B, 2 * H, 2 * W, Cout)
    return y


# --------------------------------------------------------------------------
# Parameters (deterministic synthetic init, PyTorch layouts)
# --------------------------------------------------------------------------
def _conv_p(key, cout, cin, k=3):
    k1, k2 = jax.random.split(key)
    s = 1.0 / float(cin * k * k) ** 0.5
    return {'w': jax.random.normal(k1, (cout, cin, k, k), F32) * s,
            'b': jax.random.normal(k2, (cout,), F32) * s}


def _deconv_p(key, cin, cout):
    k1, k2 = jax.random.split(key)
    s = 1.0 / float(cin * 4) ** 0.5
    return {'w': jax.random.normal(k1, (cin, cout, 2, 2), F32) * s,
            'b': jax.random.normal(k2, (cout,), F32) * s}


def init_params(seed=0, base_dim=32):
    keys = iter(jax.random.split(jax.random.PRNGKey(seed), 16))
    nk = lambda: next(keys)
    bd = base_dim
    return {
        'deconv_6': _deconv_p(nk(), 4 * bd, 2 * bd),   # ConvTranspose2d(128, 64, 2, 2)
        'conv_6_1': _conv_p(nk(), 2 * bd, 4 * bd),     # Conv2d(128, 64, 3, pad=1)
        'conv_6_2': _conv_p(nk(), 2 * bd, 2 * bd),     # Conv2d(64, 64, 3, pad=1)
        'deconv_7': _deconv_p(nk(), 2 * bd, bd),       # ConvTranspose2d(64, 32, 2, 2)
        'conv_7_1': _conv_p(nk(), bd, 2 * bd),         # Conv2d(64, 32, 3, pad=1)
        'conv_7_2': _conv_p(nk(), bd, bd),             # Conv2d(32, 32, 3, pad=1)
        'conv_8': _conv_p(nk(), 3, bd),                # Conv2d(32, 3, 3, pad=1)
    }


def prepare_params(p):
    """Fold weights into matmul-ready bf16 layouts once (not per forward step)."""
    def conv_w(w):    # (Cout, Cin, 3, 3) -> (9*Cin, Cout), rows ordered (kh, kw, ci)
        cout, cin = w.shape[0], w.shape[1]
        return jnp.transpose(w, (2, 3, 1, 0)).reshape(9 * cin, cout).astype(BF16)

    def deconv_w(w):  # (Cin, Cout, 2, 2) -> (Cin, 4*Cout), cols ordered (di, dj, co)
        cin, cout = w.shape[0], w.shape[1]
        return jnp.transpose(w, (0, 2, 3, 1)).reshape(cin, 4 * cout).astype(BF16)

    out = {}
    for name in ('conv_6_1', 'conv_6_2', 'conv_7_1', 'conv_7_2', 'conv_8'):
        out[name] = {'w': conv_w(p[name]['w']), 'b': p[name]['b'].astype(F32)}
    for name in ('deconv_6', 'deconv_7'):
        out[name] = {'w': deconv_w(p[name]['w']),
                     'b': jnp.tile(p[name]['b'].astype(F32), 4)}
    return out


# --------------------------------------------------------------------------
# Decoder_2D forward (NCHW in / NCHW out; NHWC internally)
# --------------------------------------------------------------------------
def decoder_forward(P, input_tensor, conv_3_feature, conv_1_feature):
    x = jnp.transpose(input_tensor.astype(F32), (0, 2, 3, 1))
    skip3 = jnp.transpose(conv_3_feature[:, 64:128].astype(F32), (0, 2, 3, 1))
    skip1 = jnp.transpose(conv_1_feature[:, 64:96].astype(F32), (0, 2, 3, 1))

    up6 = deconv2x2(x, P['deconv_6']['w'], P['deconv_6']['b'])
    c6 = jnp.concatenate([up6, skip3], axis=-1)                       # 128 ch
    c6 = conv3x3(c6, P['conv_6_1']['w'], P['conv_6_1']['b'])          # -> 64
    c6 = layernorm_lrelu(c6)
    c6 = conv3x3(c6, P['conv_6_2']['w'], P['conv_6_2']['b'])          # -> 64
    c6 = layernorm_lrelu(c6)

    up7 = deconv2x2(c6, P['deconv_7']['w'], P['deconv_7']['b'])
    c7 = jnp.concatenate([up7, skip1], axis=-1)                       # 64 ch
    c7 = conv3x3(c7, P['conv_7_1']['w'], P['conv_7_1']['b'])          # -> 32
    c7 = layernorm_lrelu(c7)
    c7 = conv3x3(c7, P['conv_7_2']['w'], P['conv_7_2']['b'])          # -> 32
    c7 = layernorm_lrelu(c7)

    out = conv3x3(c7, P['conv_8']['w'], P['conv_8']['b'])             # -> 3
    return jnp.transpose(out, (0, 3, 1, 2))                           # back to NCHW


# --------------------------------------------------------------------------
if __name__ == "__main__":
    B, H, W = 2, 8, 8   # input_tensor (B,128,H,W) -> output (B,3,4H,4W)
    key = jax.random.PRNGKey(0)
    k1, k2, k3 = jax.random.split(key, 3)
    input_tensor = jax.random.normal(k1, (B, 128, H, W), F32)
    conv_3_feature = jax.random.normal(k2, (B, 128, 2 * H, 2 * W), F32)
    conv_1_feature = jax.random.normal(k3, (B, 96, 4 * H, 4 * W), F32)

    params = prepare_params(init_params(seed=0, base_dim=32))

    fwd = jax.jit(decoder_forward)
    out = fwd(params, input_tensor, conv_3_feature, conv_1_feature)
    jax.block_until_ready(out)

    assert out.shape == (B, 3, 4 * H, 4 * W)
    assert bool(jnp.all(jnp.isfinite(out)))
    print("KERNEL_OK")
</pallas_src>

<mosaic_0001>
module attributes {stable_mosaic.version = 11 : i64} {
  func.func @_mm_bias_kernel(%arg0: i32, %arg1: memref<128x128xbf16, #tpu.memory_space<vmem>>, %arg2: memref<128x256xbf16, #tpu.memory_space<vmem>>, %arg3: memref<1x256xf32, #tpu.memory_space<vmem>>, %arg4: memref<128x256xf32, #tpu.memory_space<vmem>>) attributes {dimension_semantics = [#tpu.dimension_semantics<parallel>], iteration_bounds = array<i64: 1>, scalar_prefetch = 0 : i64, scratch_operands = 0 : i64, tpu.core_type = #tpu.core_type<tc>, window_params = [{transform_indices = @transform_0, window_bounds = array<i64: 128, 128>}, {pipeline_mode = #tpu.pipeline_mode<synchronous>, transform_indices = @transform_1, window_bounds = array<i64: 128, 256>}, {pipeline_mode = #tpu.pipeline_mode<synchronous>, transform_indices = @transform_2, window_bounds = array<i64: 1, 256>}, {transform_indices = @transform_3, window_bounds = array<i64: 128, 256>}]} {
    %c0 = arith.constant 0 : index
    %c0_0 = arith.constant 0 : index
    %0 = vector.load %arg1[%c0, %c0_0] : memref<128x128xbf16, #tpu.memory_space<vmem>>, vector<128x128xbf16>
    %c0_1 = arith.constant 0 : index
    %c0_2 = arith.constant 0 : index
    %1 = vector.load %arg2[%c0_1, %c0_2] : memref<128x256xbf16, #tpu.memory_space<vmem>>, vector<128x256xbf16>
    %cst = arith.constant dense<0.000000e+00> : vector<128x256xf32>
    %2 = tpu.matmul %0, %1, %cst {dimension_numbers = #tpu.dot_dimension_numbers<[1], [0], [0], [1], [0, 0, 1, 1], [], []>} : vector<128x128xbf16>, vector<128x256xbf16>, vector<128x256xf32> -> vector<128x256xf32>
    %c0_3 = arith.constant 0 : index
    %c0_4 = arith.constant 0 : index
    %3 = vector.load %arg3[%c0_3, %c0_4] : memref<1x256xf32, #tpu.memory_space<vmem>>, vector<1x256xf32>
    %4 = vector.broadcast %3 : vector<1x256xf32> to vector<128x256xf32>
    %5 = arith.addf %2, %4 : vector<128x256xf32>
    %c0_5 = arith.constant 0 : index
    %c0_6 = arith.constant 0 : index
    %6 = vector.load %arg4[%c0_5, %c0_6] : memref<128x256xf32, #tpu.memory_space<vmem>>, vector<128x256xf32>
    tpu.vector_store %arg4[%c0_5, %c0_6], %5 {strides = array<i32>} : memref<128x256xf32, #tpu.memory_space<vmem>>, vector<128x256xf32>,
    return
  }
  func.func @transform_0(%arg0: i32) -> (i32, i32) {
    %c0_i32 = arith.constant 0 : i32
    %c0_i32_0 = arith.constant 0 : i32
    return %arg0, %c0_i32 : i32, i32
  }
  func.func @transform_1(%arg0: i32) -> (i32, i32) {
    %c0_i32 = arith.constant 0 : i32
    %c0_i32_0 = arith.constant 0 : i32
    %c0_i32_1 = arith.constant 0 : i32
    return %c0_i32, %c0_i32_0 : i32, i32
  }
  func.func @transform_2(%arg0: i32) -> (i32, i32) {
    %c0_i32 = arith.constant 0 : i32
    %c0_i32_0 = arith.constant 0 : i32
    %c0_i32_1 = arith.constant 0 : i32
    return %c0_i32, %c0_i32_0 : i32, i32
  }
  func.func @transform_3(%arg0: i32) -> (i32, i32) {
    %c0_i32 = arith.constant 0 : i32
    %c0_i32_0 = arith.constant 0 : i32
    return %arg0, %c0_i32 : i32, i32
  }
}

module attributes {stable_mosaic.version = 11 : i64} {
  func.func @_mm_bias_kernel(%arg0: i32, %arg1: memref<256x1152xbf16, #tpu.memory_space<vmem>>, %arg2: memref<1152x64xbf16, #tpu.memory_space<vmem>>, %arg3: memref<1x64xf32, #tpu.memory_space<vmem>>, %arg4: memref<256x64xf32, #tpu.memory_space<vmem>>) attributes {dimension_semantics = [#tpu.dimension_semantics<parallel>], iteration_bounds = array<i64: 2>, scalar_prefetch = 0 : i64, scratch_operands = 0 : i64, tpu.core_type = #tpu.core_type<tc>, window_params = [{transform_indices = @transform_0, window_bounds = array<i64: 256, 1152>}, {pipeline_mode = #tpu.pipeline_mode<synchronous>, transform_indices = @transform_1, window_bounds = array<i64: 1152, 64>}, {pipeline_mode = #tpu.pipeline_mode<synchronous>, transform_indices = @transform_2, window_bounds = array<i64: 1, 64>}, {transform_indices = @transform_3, window_bounds = array<i64: 256, 64>}]} {
    %c0 = arith.constant 0 : index
    %c0_0 = arith.constant 0 : index
    %0 = vector.load %arg1[%c0, %c0_0] : memref<256x1152xbf16, #tpu.memory_space<vmem>>, vector<256x1152xbf16>
    %c0_1 = arith.constant 0 : index
    %c0_2 = arith.constant 0 : index
    %1 = vector.load %arg2[%c0_1, %c0_2] : memref<1152x64xbf16, #tpu.memory_space<vmem>>, vector<1152x64xbf16>
    %cst = arith.constant dense<0.000000e+00> : vector<256x64xf32>
    %2 = tpu.matmul %0, %1, %cst {dimension_numbers = #tpu.dot_dimension_numbers<[1], [0], [0], [1], [0, 0, 1, 1], [], []>} : vector<256x1152xbf16>, vector<1152x64xbf16>, vector<256x64xf32> -> vector<256x64xf32>
    %c0_3 = arith.constant 0 : index
    %c0_4 = arith.constant 0 : index
    %3 = vector.load %arg3[%c0_3, %c0_4] : memref<1x64xf32, #tpu.memory_space<vmem>>, vector<1x64xf32>
    %4 = vector.broadcast %3 : vector<1x64xf32> to vector<256x64xf32>
    %5 = arith.addf %2, %4 : vector<256x64xf32>
    %c0_5 = arith.constant 0 : index
    %c0_6 = arith.constant 0 : index
    %6 = vector.load %arg4[%c0_5, %c0_6] : memref<256x64xf32, #tpu.memory_space<vmem>>, vector<256x64xf32>
    tpu.vector_store %arg4[%c0_5, %c0_6], %5 {strides = array<i32>} : memref<256x64xf32, #tpu.memory_space<vmem>>, vector<256x64xf32>,
    return
  }
  func.func @transform_0(%arg0: i32) -> (i32, i32) {
    %c0_i32 = arith.constant 0 : i32
    %c0_i32_0 = arith.constant 0 : i32
    return %arg0, %c0_i32 : i32, i32
  }
  func.func @transform_1(%arg0: i32) -> (i32, i32) {
    %c0_i32 = arith.constant 0 : i32
    %c0_i32_0 = arith.constant 0 : i32
    %c0_i32_1 = arith.constant 0 : i32
    return %c0_i32, %c0_i32_0 : i32, i32
  }
  func.func @transform_2(%arg0: i32) -> (i32, i32) {
    %c0_i32 = arith.constant 0 : i32
    %c0_i32_0 = arith.constant 0 : i32
    %c0_i32_1 = arith.constant 0 : i32
    return %c0_i32, %c0_i32_0 : i32, i32
  }
  func.func @transform_3(%arg0: i32) -> (i32, i32) {
    %c0_i32 = arith.constant 0 : i32
    %c0_i32_0 = arith.constant 0 : i32
    return %arg0, %c0_i32 : i32, i32
  }
}

module attributes {stable_mosaic.version = 11 : i64} {
  func.func @_ln_lrelu_kernel(%arg0: i32, %arg1: memref<1x128x128xf32, #tpu.memory_space<vmem>>, %arg2: memref<1x128x128xf32, #tpu.memory_space<vmem>>) attributes {dimension_semantics = [#tpu.dimension_semantics<parallel>], iteration_bounds = array<i64: 2>, scalar_prefetch = 0 : i64, scratch_operands = 0 : i64, tpu.core_type = #tpu.core_type<tc>, window_params = [{transform_indices = @transform_0, window_bounds = array<i64: 1, 128, 128>}, {transform_indices = @transform_1, window_bounds = array<i64: 1, 128, 128>}]} {
    %c0 = arith.constant 0 : index
    %c0_0 = arith.constant 0 : index
    %c0_1 = arith.constant 0 : index
    %0 = vector.load %arg1[%c0, %c0_0, %c0_1] : memref<1x128x128xf32, #tpu.memory_space<vmem>>, vector<1x128x128xf32>
    %1 = vector.shape_cast %0 : vector<1x128x128xf32> to vector<1x1x128x128xf32>
    %cst = arith.constant dense<0.000000e+00> : vector<1xf32>
    %2 = vector.multi_reduction <add>, %1, %cst [1, 2, 3] : vector<1x1x128x128xf32> to vector<1xf32>
    %3 = vector.shape_cast %2 : vector<1xf32> to vector<1x1x1x1xf32>
    %4 = vector.extract %3[0, 0, 0, 0] : f32 from vector<1x1x1x1xf32>
    %cst_2 = arith.constant 1.638400e+04 : f32
    %5 = arith.divf %4, %cst_2 : f32
    %6 = vector.broadcast %5 : f32 to vector<1x128x128xf32>
    %7 = arith.subf %0, %6 : vector<1x128x128xf32>
    %8 = arith.mulf %7, %7 : vector<1x128x128xf32>
    %9 = vector.shape_cast %8 : vector<1x128x128xf32> to vector<1x1x128x128xf32>
    %cst_3 = arith.constant dense<0.000000e+00> : vector<1xf32>
    %10 = vector.multi_reduction <add>, %9, %cst_3 [1, 2, 3] : vector<1x1x128x128xf32> to vector<1xf32>
    %11 = vector.shape_cast %10 : vector<1xf32> to vector<1x1x1x1xf32>
    %12 = vector.extract %11[0, 0, 0, 0] : f32 from vector<1x1x1x1xf32>
    %cst_4 = arith.constant 1.638400e+04 : f32
    %13 = arith.divf %12, %cst_4 : f32
    %cst_5 = arith.constant 9.99999974E-6 : f32
    %14 = arith.addf %13, %cst_5 : f32
    %15 = math.rsqrt %14 : f32
    %16 = vector.broadcast %15 : f32 to vector<1x128x128xf32>
    %17 = arith.mulf %7, %16 : vector<1x128x128xf32>
    %cst_6 = arith.constant 0.000000e+00 : f32
    %18 = vector.broadcast %cst_6 : f32 to vector<1x128x128xf32>
    %19 = arith.cmpf oge, %17, %18 : vector<1x128x128xf32>
    %cst_7 = arith.constant 2.000000e-01 : f32
    %20 = vector.broadcast %cst_7 : f32 to vector<1x128x128xf32>
    %21 = arith.mulf %20, %17 : vector<1x128x128xf32>
    %22 = arith.select %19, %17, %21 : vector<1x128x128xi1>, vector<1x128x128xf32>
    %c0_8 = arith.constant 0 : index
    %c0_9 = arith.constant 0 : index
    %c0_10 = arith.constant 0 : index
    %23 = vector.load %arg2[%c0_8, %c0_9, %c0_10] : memref<1x128x128xf32, #tpu.memory_space<vmem>>, vector<1x128x128xf32>
    tpu.vector_store %arg2[%c0_8, %c0_9, %c0_10], %22 {strides = array<i32>} : memref<1x128x128xf32, #tpu.memory_space<vmem>>, vector<1x128x128xf32>,
    return
  }
  func.func @transform_0(%arg0: i32) -> (i32, i32, i32) {
    %c0_i32 = arith.constant 0 : i32
    %c0_i32_0 = arith.constant 0 : i32
    %c0_i32_1 = arith.constant 0 : i32
    return %arg0, %c0_i32, %c0_i32_0 : i32, i32, i32
  }
  func.func @transform_1(%arg0: i32) -> (i32, i32, i32) {
    %c0_i32 = arith.constant 0 : i32
    %c0_i32_0 = arith.constant 0 : i32
    %c0_i32_1 = arith.constant 0 : i32
    return %arg0, %c0_i32, %c0_i32_0 : i32, i32, i32
  }
}

module attributes {stable_mosaic.version = 11 : i64} {
  func.func @_mm_bias_kernel(%arg0: i32, %arg1: memref<256x576xbf16, #tpu.memory_space<vmem>>, %arg2: memref<576x64xbf16, #tpu.memory_space<vmem>>, %arg3: memref<1x64xf32, #tpu.memory_space<vmem>>, %arg4: memref<256x64xf32, #tpu.memory_space<vmem>>) attributes {dimension_semantics = [#tpu.dimension_semantics<parallel>], iteration_bounds = array<i64: 2>, scalar_prefetch = 0 : i64, scratch_operands = 0 : i64, tpu.core_type = #tpu.core_type<tc>, window_params = [{transform_indices = @transform_0, window_bounds = array<i64: 256, 576>}, {pipeline_mode = #tpu.pipeline_mode<synchronous>, transform_indices = @transform_1, window_bounds = array<i64: 576, 64>}, {pipeline_mode = #tpu.pipeline_mode<synchronous>, transform_indices = @transform_2, window_bounds = array<i64: 1, 64>}, {transform_indices = @transform_3, window_bounds = array<i64: 256, 64>}]} {
    %c0 = arith.constant 0 : index
    %c0_0 = arith.constant 0 : index
    %0 = vector.load %arg1[%c0, %c0_0] : memref<256x576xbf16, #tpu.memory_space<vmem>>, vector<256x576xbf16>
    %c0_1 = arith.constant 0 : index
    %c0_2 = arith.constant 0 : index
    %1 = vector.load %arg2[%c0_1, %c0_2] : memref<576x64xbf16, #tpu.memory_space<vmem>>, vector<576x64xbf16>
    %cst = arith.constant dense<0.000000e+00> : vector<256x64xf32>
    %2 = tpu.matmul %0, %1, %cst {dimension_numbers = #tpu.dot_dimension_numbers<[1], [0], [0], [1], [0, 0, 1, 1], [], []>} : vector<256x576xbf16>, vector<576x64xbf16>, vector<256x64xf32> -> vector<256x64xf32>
    %c0_3 = arith.constant 0 : index
    %c0_4 = arith.constant 0 : index
    %3 = vector.load %arg3[%c0_3, %c0_4] : memref<1x64xf32, #tpu.memory_space<vmem>>, vector<1x64xf32>
    %4 = vector.broadcast %3 : vector<1x64xf32> to vector<256x64xf32>
    %5 = arith.addf %2, %4 : vector<256x64xf32>
    %c0_5 = arith.constant 0 : index
    %c0_6 = arith.constant 0 : index
    %6 = vector.load %arg4[%c0_5, %c0_6] : memref<256x64xf32, #tpu.memory_space<vmem>>, vector<256x64xf32>
    tpu.vector_store %arg4[%c0_5, %c0_6], %5 {strides = array<i32>} : memref<256x64xf32, #tpu.memory_space<vmem>>, vector<256x64xf32>,
    return
  }
  func.func @transform_0(%arg0: i32) -> (i32, i32) {
    %c0_i32 = arith.constant 0 : i32
    %c0_i32_0 = arith.constant 0 : i32
    return %arg0, %c0_i32 : i32, i32
  }
  func.func @transform_1(%arg0: i32) -> (i32, i32) {
    %c0_i32 = arith.constant 0 : i32
    %c0_i32_0 = arith.constant 0 : i32
    %c0_i32_1 = arith.constant 0 : i32
    return %c0_i32, %c0_i32_0 : i32, i32
  }
  func.func @transform_2(%arg0: i32) -> (i32, i32) {
    %c0_i32 = arith.constant 0 : i32
    %c0_i32_0 = arith.constant 0 : i32
    %c0_i32_1 = arith.constant 0 : i32
    return %c0_i32, %c0_i32_0 : i32, i32
  }
  func.func @transform_3(%arg0: i32) -> (i32, i32) {
    %c0_i32 = arith.constant 0 : i32
    %c0_i32_0 = arith.constant 0 : i32
    return %arg0, %c0_i32 : i32, i32
  }
}

module attributes {stable_mosaic.version = 11 : i64} {
  func.func @_mm_bias_kernel(%arg0: i32, %arg1: memref<256x64xbf16, #tpu.memory_space<vmem>>, %arg2: memref<64x128xbf16, #tpu.memory_space<vmem>>, %arg3: memref<1x128xf32, #tpu.memory_space<vmem>>, %arg4: memref<256x128xf32, #tpu.memory_space<vmem>>) attributes {dimension_semantics = [#tpu.dimension_semantics<parallel>], iteration_bounds = array<i64: 2>, scalar_prefetch = 0 : i64, scratch_operands = 0 : i64, tpu.core_type = #tpu.core_type<tc>, window_params = [{transform_indices = @transform_0, window_bounds = array<i64: 256, 64>}, {pipeline_mode = #tpu.pipeline_mode<synchronous>, transform_indices = @transform_1, window_bounds = array<i64: 64, 128>}, {pipeline_mode = #tpu.pipeline_mode<synchronous>, transform_indices = @transform_2, window_bounds = array<i64: 1, 128>}, {transform_indices = @transform_3, window_bounds = array<i64: 256, 128>}]} {
    %c0 = arith.constant 0 : index
    %c0_0 = arith.constant 0 : index
    %0 = vector.load %arg1[%c0, %c0_0] : memref<256x64xbf16, #tpu.memory_space<vmem>>, vector<256x64xbf16>
    %c0_1 = arith.constant 0 : index
    %c0_2 = arith.constant 0 : index
    %1 = vector.load %arg2[%c0_1, %c0_2] : memref<64x128xbf16, #tpu.memory_space<vmem>>, vector<64x128xbf16>
    %cst = arith.constant dense<0.000000e+00> : vector<256x128xf32>
    %2 = tpu.matmul %0, %1, %cst {dimension_numbers = #tpu.dot_dimension_numbers<[1], [0], [0], [1], [0, 0, 1, 1], [], []>} : vector<256x64xbf16>, vector<64x128xbf16>, vector<256x128xf32> -> vector<256x128xf32>
    %c0_3 = arith.constant 0 : index
    %c0_4 = arith.constant 0 : index
    %3 = vector.load %arg3[%c0_3, %c0_4] : memref<1x128xf32, #tpu.memory_space<vmem>>, vector<1x128xf32>
    %4 = vector.broadcast %3 : vector<1x128xf32> to vector<256x128xf32>
    %5 = arith.addf %2, %4 : vector<256x128xf32>
    %c0_5 = arith.constant 0 : index
    %c0_6 = arith.constant 0 : index
    %6 = vector.load %arg4[%c0_5, %c0_6] : memref<256x128xf32, #tpu.memory_space<vmem>>, vector<256x128xf32>
    tpu.vector_store %arg4[%c0_5, %c0_6], %5 {strides = array<i32>} : memref<256x128xf32, #tpu.memory_space<vmem>>, vector<256x128xf32>,
    return
  }
  func.func @transform_0(%arg0: i32) -> (i32, i32) {
    %c0_i32 = arith.constant 0 : i32
    %c0_i32_0 = arith.constant 0 : i32
    return %arg0, %c0_i32 : i32, i32
  }
  func.func @transform_1(%arg0: i32) -> (i32, i32) {
    %c0_i32 = arith.constant 0 : i32
    %c0_i32_0 = arith.constant 0 : i32
    %c0_i32_1 = arith.constant 0 : i32
    return %c0_i32, %c0_i32_0 : i32, i32
  }
  func.func @transform_2(%arg0: i32) -> (i32, i32) {
    %c0_i32 = arith.constant 0 : i32
    %c0_i32_0 = arith.constant 0 : i32
    %c0_i32_1 = arith.constant 0 : i32
    return %c0_i32, %c0_i32_0 : i32, i32
  }
  func.func @transform_3(%arg0: i32) -> (i32, i32) {
    %c0_i32 = arith.constant 0 : i32
    %c0_i32_0 = arith.constant 0 : i32
    return %arg0, %c0_i32 : i32, i32
  }
}

module attributes {stable_mosaic.version = 11 : i64} {
  func.func @_mm_bias_kernel(%arg0: i32, %arg1: memref<256x576xbf16, #tpu.memory_space<vmem>>, %arg2: memref<576x32xbf16, #tpu.memory_space<vmem>>, %arg3: memref<1x32xf32, #tpu.memory_space<vmem>>, %arg4: memref<256x32xf32, #tpu.memory_space<vmem>>) attributes {dimension_semantics = [#tpu.dimension_semantics<parallel>], iteration_bounds = array<i64: 8>, scalar_prefetch = 0 : i64, scratch_operands = 0 : i64, tpu.core_type = #tpu.core_type<tc>, window_params = [{transform_indices = @transform_0, window_bounds = array<i64: 256, 576>}, {pipeline_mode = #tpu.pipeline_mode<synchronous>, transform_indices = @transform_1, window_bounds = array<i64: 576, 32>}, {pipeline_mode = #tpu.pipeline_mode<synchronous>, transform_indices = @transform_2, window_bounds = array<i64: 1, 32>}, {transform_indices = @transform_3, window_bounds = array<i64: 256, 32>}]} {
    %c0 = arith.constant 0 : index
    %c0_0 = arith.constant 0 : index
    %0 = vector.load %arg1[%c0, %c0_0] : memref<256x576xbf16, #tpu.memory_space<vmem>>, vector<256x576xbf16>
    %c0_1 = arith.constant 0 : index
    %c0_2 = arith.constant 0 : index
    %1 = vector.load %arg2[%c0_1, %c0_2] : memref<576x32xbf16, #tpu.memory_space<vmem>>, vector<576x32xbf16>
    %cst = arith.constant dense<0.000000e+00> : vector<256x32xf32>
    %2 = tpu.matmul %0, %1, %cst {dimension_numbers = #tpu.dot_dimension_numbers<[1], [0], [0], [1], [0, 0, 1, 1], [], []>} : vector<256x576xbf16>, vector<576x32xbf16>, vector<256x32xf32> -> vector<256x32xf32>
    %c0_3 = arith.constant 0 : index
    %c0_4 = arith.constant 0 : index
    %3 = vector.load %arg3[%c0_3, %c0_4] : memref<1x32xf32, #tpu.memory_space<vmem>>, vector<1x32xf32>
    %4 = vector.broadcast %3 : vector<1x32xf32> to vector<256x32xf32>
    %5 = arith.addf %2, %4 : vector<256x32xf32>
    %c0_5 = arith.constant 0 : index
    %c0_6 = arith.constant 0 : index
    %6 = vector.load %arg4[%c0_5, %c0_6] : memref<256x32xf32, #tpu.memory_space<vmem>>, vector<256x32xf32>
    tpu.vector_store %arg4[%c0_5, %c0_6], %5 {strides = array<i32>} : memref<256x32xf32, #tpu.memory_space<vmem>>, vector<256x32xf32>,
    return
  }
  func.func @transform_0(%arg0: i32) -> (i32, i32) {
    %c0_i32 = arith.constant 0 : i32
    %c0_i32_0 = arith.constant 0 : i32
    return %arg0, %c0_i32 : i32, i32
  }
  func.func @transform_1(%arg0: i32) -> (i32, i32) {
    %c0_i32 = arith.constant 0 : i32
    %c0_i32_0 = arith.constant 0 : i32
    %c0_i32_1 = arith.constant 0 : i32
    return %c0_i32, %c0_i32_0 : i32, i32
  }
  func.func @transform_2(%arg0: i32) -> (i32, i32) {
    %c0_i32 = arith.constant 0 : i32
    %c0_i32_0 = arith.constant 0 : i32
    %c0_i32_1 = arith.constant 0 : i32
    return %c0_i32, %c0_i32_0 : i32, i32
  }
  func.func @transform_3(%arg0: i32) -> (i32, i32) {
    %c0_i32 = arith.constant 0 : i32
    %c0_i32_0 = arith.constant 0 : i32
    return %arg0, %c0_i32 : i32, i32
  }
}

module attributes {stable_mosaic.version = 11 : i64} {
  func.func @_ln_lrelu_kernel(%arg0: i32, %arg1: memref<1x256x128xf32, #tpu.memory_space<vmem>>, %arg2: memref<1x256x128xf32, #tpu.memory_space<vmem>>) attributes {dimension_semantics = [#tpu.dimension_semantics<parallel>], iteration_bounds = array<i64: 2>, scalar_prefetch = 0 : i64, scratch_operands = 0 : i64, tpu.core_type = #tpu.core_type<tc>, window_params = [{transform_indices = @transform_0, window_bounds = array<i64: 1, 256, 128>}, {transform_indices = @transform_1, window_bounds = array<i64: 1, 256, 128>}]} {
    %c0 = arith.constant 0 : index
    %c0_0 = arith.constant 0 : index
    %c0_1 = arith.constant 0 : index
    %0 = vector.load %arg1[%c0, %c0_0, %c0_1] : memref<1x256x128xf32, #tpu.memory_space<vmem>>, vector<1x256x128xf32>
    %1 = vector.shape_cast %0 : vector<1x256x128xf32> to vector<1x1x256x128xf32>
    %cst = arith.constant dense<0.000000e+00> : vector<1xf32>
    %2 = vector.multi_reduction <add>, %1, %cst [1, 2, 3] : vector<1x1x256x128xf32> to vector<1xf32>
    %3 = vector.shape_cast %2 : vector<1xf32> to vector<1x1x1x1xf32>
    %4 = vector.extract %3[0, 0, 0, 0] : f32 from vector<1x1x1x1xf32>
    %cst_2 = arith.constant 3.276800e+04 : f32
    %5 = arith.divf %4, %cst_2 : f32
    %6 = vector.broadcast %5 : f32 to vector<1x256x128xf32>
    %7 = arith.subf %0, %6 : vector<1x256x128xf32>
    %8 = arith.mulf %7, %7 : vector<1x256x128xf32>
    %9 = vector.shape_cast %8 : vector<1x256x128xf32> to vector<1x1x256x128xf32>
    %cst_3 = arith.constant dense<0.000000e+00> : vector<1xf32>
    %10 = vector.multi_reduction <add>, %9, %cst_3 [1, 2, 3] : vector<1x1x256x128xf32> to vector<1xf32>
    %11 = vector.shape_cast %10 : vector<1xf32> to vector<1x1x1x1xf32>
    %12 = vector.extract %11[0, 0, 0, 0] : f32 from vector<1x1x1x1xf32>
    %cst_4 = arith.constant 3.276800e+04 : f32
    %13 = arith.divf %12, %cst_4 : f32
    %cst_5 = arith.constant 9.99999974E-6 : f32
    %14 = arith.addf %13, %cst_5 : f32
    %15 = math.rsqrt %14 : f32
    %16 = vector.broadcast %15 : f32 to vector<1x256x128xf32>
    %17 = arith.mulf %7, %16 : vector<1x256x128xf32>
    %cst_6 = arith.constant 0.000000e+00 : f32
    %18 = vector.broadcast %cst_6 : f32 to vector<1x256x128xf32>
    %19 = arith.cmpf oge, %17, %18 : vector<1x256x128xf32>
    %cst_7 = arith.constant 2.000000e-01 : f32
    %20 = vector.broadcast %cst_7 : f32 to vector<1x256x128xf32>
    %21 = arith.mulf %20, %17 : vector<1x256x128xf32>
    %22 = arith.select %19, %17, %21 : vector<1x256x128xi1>, vector<1x256x128xf32>
    %c0_8 = arith.constant 0 : index
    %c0_9 = arith.constant 0 : index
    %c0_10 = arith.constant 0 : index
    %23 = vector.load %arg2[%c0_8, %c0_9, %c0_10] : memref<1x256x128xf32, #tpu.memory_space<vmem>>, vector<1x256x128xf32>
    tpu.vector_store %arg2[%c0_8, %c0_9, %c0_10], %22 {strides = array<i32>} : memref<1x256x128xf32, #tpu.memory_space<vmem>>, vector<1x256x128xf32>,
    return
  }
  func.func @transform_0(%arg0: i32) -> (i32, i32, i32) {
    %c0_i32 = arith.constant 0 : i32
    %c0_i32_0 = arith.constant 0 : i32
    %c0_i32_1 = arith.constant 0 : i32
    return %arg0, %c0_i32, %c0_i32_0 : i32, i32, i32
  }
  func.func @transform_1(%arg0: i32) -> (i32, i32, i32) {
    %c0_i32 = arith.constant 0 : i32
    %c0_i32_0 = arith.constant 0 : i32
    %c0_i32_1 = arith.constant 0 : i32
    return %arg0, %c0_i32, %c0_i32_0 : i32, i32, i32
  }
}

module attributes {stable_mosaic.version = 11 : i64} {
  func.func @_mm_bias_kernel(%arg0: i32, %arg1: memref<256x288xbf16, #tpu.memory_space<vmem>>, %arg2: memref<288x32xbf16, #tpu.memory_space<vmem>>, %arg3: memref<1x32xf32, #tpu.memory_space<vmem>>, %arg4: memref<256x32xf32, #tpu.memory_space<vmem>>) attributes {dimension_semantics = [#tpu.dimension_semantics<parallel>], iteration_bounds = array<i64: 8>, scalar_prefetch = 0 : i64, scratch_operands = 0 : i64, tpu.core_type = #tpu.core_type<tc>, window_params = [{transform_indices = @transform_0, window_bounds = array<i64: 256, 288>}, {pipeline_mode = #tpu.pipeline_mode<synchronous>, transform_indices = @transform_1, window_bounds = array<i64: 288, 32>}, {pipeline_mode = #tpu.pipeline_mode<synchronous>, transform_indices = @transform_2, window_bounds = array<i64: 1, 32>}, {transform_indices = @transform_3, window_bounds = array<i64: 256, 32>}]} {
    %c0 = arith.constant 0 : index
    %c0_0 = arith.constant 0 : index
    %0 = vector.load %arg1[%c0, %c0_0] : memref<256x288xbf16, #tpu.memory_space<vmem>>, vector<256x288xbf16>
    %c0_1 = arith.constant 0 : index
    %c0_2 = arith.constant 0 : index
    %1 = vector.load %arg2[%c0_1, %c0_2] : memref<288x32xbf16, #tpu.memory_space<vmem>>, vector<288x32xbf16>
    %cst = arith.constant dense<0.000000e+00> : vector<256x32xf32>
    %2 = tpu.matmul %0, %1, %cst {dimension_numbers = #tpu.dot_dimension_numbers<[1], [0], [0], [1], [0, 0, 1, 1], [], []>} : vector<256x288xbf16>, vector<288x32xbf16>, vector<256x32xf32> -> vector<256x32xf32>
    %c0_3 = arith.constant 0 : index
    %c0_4 = arith.constant 0 : index
    %3 = vector.load %arg3[%c0_3, %c0_4] : memref<1x32xf32, #tpu.memory_space<vmem>>, vector<1x32xf32>
    %4 = vector.broadcast %3 : vector<1x32xf32> to vector<256x32xf32>
    %5 = arith.addf %2, %4 : vector<256x32xf32>
    %c0_5 = arith.constant 0 : index
    %c0_6 = arith.constant 0 : index
    %6 = vector.load %arg4[%c0_5, %c0_6] : memref<256x32xf32, #tpu.memory_space<vmem>>, vector<256x32xf32>
    tpu.vector_store %arg4[%c0_5, %c0_6], %5 {strides = array<i32>} : memref<256x32xf32, #tpu.memory_space<vmem>>, vector<256x32xf32>,
    return
  }
  func.func @transform_0(%arg0: i32) -> (i32, i32) {
    %c0_i32 = arith.constant 0 : i32
    %c0_i32_0 = arith.constant 0 : i32
    return %arg0, %c0_i32 : i32, i32
  }
  func.func @transform_1(%arg0: i32) -> (i32, i32) {
    %c0_i32 = arith.constant 0 : i32
    %c0_i32_0 = arith.constant 0 : i32
    %c0_i32_1 = arith.constant 0 : i32
    return %c0_i32, %c0_i32_0 : i32, i32
  }
  func.func @transform_2(%arg0: i32) -> (i32, i32) {
    %c0_i32 = arith.constant 0 : i32
    %c0_i32_0 = arith.constant 0 : i32
    %c0_i32_1 = arith.constant 0 : i32
    return %c0_i32, %c0_i32_0 : i32, i32
  }
  func.func @transform_3(%arg0: i32) -> (i32, i32) {
    %c0_i32 = arith.constant 0 : i32
    %c0_i32_0 = arith.constant 0 : i32
    return %arg0, %c0_i32 : i32, i32
  }
}

module attributes {stable_mosaic.version = 11 : i64} {
  func.func @_mm_bias_kernel(%arg0: i32, %arg1: memref<256x288xbf16, #tpu.memory_space<vmem>>, %arg2: memref<288x3xbf16, #tpu.memory_space<vmem>>, %arg3: memref<1x3xf32, #tpu.memory_space<vmem>>, %arg4: memref<256x3xf32, #tpu.memory_space<vmem>>) attributes {dimension_semantics = [#tpu.dimension_semantics<parallel>], iteration_bounds = array<i64: 8>, scalar_prefetch = 0 : i64, scratch_operands = 0 : i64, tpu.core_type = #tpu.core_type<tc>, window_params = [{transform_indices = @transform_0, window_bounds = array<i64: 256, 288>}, {pipeline_mode = #tpu.pipeline_mode<synchronous>, transform_indices = @transform_1, window_bounds = array<i64: 288, 3>}, {pipeline_mode = #tpu.pipeline_mode<synchronous>, transform_indices = @transform_2, window_bounds = array<i64: 1, 3>}, {transform_indices = @transform_3, window_bounds = array<i64: 256, 3>}]} {
    %c0 = arith.constant 0 : index
    %c0_0 = arith.constant 0 : index
    %0 = vector.load %arg1[%c0, %c0_0] : memref<256x288xbf16, #tpu.memory_space<vmem>>, vector<256x288xbf16>
    %c0_1 = arith.constant 0 : index
    %c0_2 = arith.constant 0 : index
    %1 = vector.load %arg2[%c0_1, %c0_2] : memref<288x3xbf16, #tpu.memory_space<vmem>>, vector<288x3xbf16>
    %cst = arith.constant dense<0.000000e+00> : vector<256x3xf32>
    %2 = tpu.matmul %0, %1, %cst {dimension_numbers = #tpu.dot_dimension_numbers<[1], [0], [0], [1], [0, 0, 1, 1], [], []>} : vector<256x288xbf16>, vector<288x3xbf16>, vector<256x3xf32> -> vector<256x3xf32>
    %c0_3 = arith.constant 0 : index
    %c0_4 = arith.constant 0 : index
    %3 = vector.load %arg3[%c0_3, %c0_4] : memref<1x3xf32, #tpu.memory_space<vmem>>, vector<1x3xf32>
    %4 = vector.broadcast %3 : vector<1x3xf32> to vector<256x3xf32>
    %5 = arith.addf %2, %4 : vector<256x3xf32>
    %c0_5 = arith.constant 0 : index
    %c0_6 = arith.constant 0 : index
    %6 = vector.load %arg4[%c0_5, %c0_6] : memref<256x3xf32, #tpu.memory_space<vmem>>, vector<256x3xf32>
    tpu.vector_store %arg4[%c0_5, %c0_6], %5 {strides = array<i32>} : memref<256x3xf32, #tpu.memory_space<vmem>>, vector<256x3xf32>,
    return
  }
  func.func @transform_0(%arg0: i32) -> (i32, i32) {
    %c0_i32 = arith.constant 0 : i32
    %c0_i32_0 = arith.constant 0 : i32
    return %arg0, %c0_i32 : i32, i32
  }
  func.func @transform_1(%arg0: i32) -> (i32, i32) {
    %c0_i32 = arith.constant 0 : i32
    %c0_i32_0 = arith.constant 0 : i32
    %c0_i32_1 = arith.constant 0 : i32
    return %c0_i32, %c0_i32_0 : i32, i32
  }
  func.func @transform_2(%arg0: i32) -> (i32, i32) {
    %c0_i32 = arith.constant 0 : i32
    %c0_i32_0 = arith.constant 0 : i32
    %c0_i32_1 = arith.constant 0 : i32
    return %c0_i32, %c0_i32_0 : i32, i32
  }
  func.func @transform_3(%arg0: i32) -> (i32, i32) {
    %c0_i32 = arith.constant 0 : i32
    %c0_i32_0 = arith.constant 0 : i32
    return %arg0, %c0_i32 : i32, i32
  }
}

</mosaic_0001>

<llo_original>
// kernel: decoder_forward.11
$region0: #{decoder_forward.11}
  #allocation0 [shape = 'u32[]', space=smem, size = 0x4, offset = 0x4, fixed_abs, tag = 'smem constant byte address 0x4 - core index']
  #allocation1 [shape = 'u32[144,128]{1,0:T(1,128)}', space=vmem, size = 0x12000, scoped, tag = 'internal scratch']
  %s0 = inlined_call_operand.vmem [shape: bf16[128,128], index: 0, kind: input, shape index: {}]
  %s1 = inlined_call_operand.hbm [shape: bf16[128,256], index: 1, kind: input, shape index: {}]
  %s2 = inlined_call_operand.hbm [shape: f32[1,256], index: 2, kind: input, shape index: {}]
  %s3 = inlined_call_operand.vmem [shape: f32[128,256], index: 3, kind: output, shape index: {}]
  %s4 = sld [smem:[#allocation0]]
  $region30: #{decoder_forward.11} parent=0
    _
  %s6 = ssub.s32 1, %s4
  %s7 = scalar_select 0, %s6, %s4
  $region1: #{decoder_forward.11} parent=0
    #allocation2 [shape = 'u8[65536]{0}', space=vmem, size = 0x10000, scoped, tag = 'input window, operand 1, single buffered']
    #allocation3 [shape = 's32[1]{0}', space=sflag, size = 0x4, scoped, tag = 'scoped memory for decoder_forward.11']
    #allocation4 [shape = 'u8[1024]{0}', space=vmem, size = 0x400, scoped, tag = 'input window, operand 2, single buffered']
    #allocation5 [shape = 's32[1]{0}', space=sflag, size = 0x4, scoped, tag = 'scoped memory for decoder_forward.11']
    %8 = vsyncpa [#allocation3], 0
    %9 = vsyncpa [#allocation5], 0
    // Predicated region
    $region2: #{decoder_forward.11} parent=1 // pred_check
      _
    $region3: #{decoder_forward.11} parent=1 // pred_check_branch
      %11 = sbr.rel (0) target = $region5
    $region4: #{decoder_forward.11} parent=1 // pred_region
      _
    $region5: #{decoder_forward.11} parent=1 // pred_fallthru
      _
    // Predicated region
    $region6: #{decoder_forward.11} parent=1 // pred_check
      _
    $region7: #{decoder_forward.11} parent=1 // pred_check_branch
      %13 = sbr.rel (0) target = $region9
    $region8: #{decoder_forward.11} parent=1 // pred_region
      %s15 = ssub.s32 2048, 2048
      %16 = vsyncadd [#allocation3], %s15
      %s17 = sshll.u32 [#allocation2], 4
      %s18 = int_to_ptr.vmem [resolvable:$true] %s17
      %23 = dma.hbm_to_vmem [thread:$0]  %s1, 2048, %s18, [#allocation3], 128, 128, 8
    $region9: #{decoder_forward.11} parent=1 // pred_fallthru
      _
    // Predicated region
    $region10: #{decoder_forward.11} parent=1 // pred_check
      _
    $region11: #{decoder_forward.11} parent=1 // pred_check_branch
      %25 = sbr.rel (0) target = $region13
    $region12: #{decoder_forward.11} parent=1 // pred_region
      %s27 = ssub.s32 32, 32
      %28 = vsyncadd [#allocation5], %s27
      %s30 = sshll.u32 [#allocation4], 4
      %s31 = int_to_ptr.vmem [resolvable:$true] %s30
      %33 = dma.hbm_to_vmem [thread:$0]  %s2, 32, %s31, [#allocation5]
    $region13: #{decoder_forward.11} parent=1 // pred_fallthru
      _
    // Predicated region
    $region14: #{decoder_forward.11} parent=1 // pred_check
      _
    $region15: #{decoder_forward.11} parent=1 // pred_check_branch
      %35 = sbr.rel (0) target = $region17
    $region16: #{decoder_forward.11} parent=1 // pred_region
      %36 = dma.done [#allocation3], 2048
    $region17: #{decoder_forward.11} parent=1 // pred_fallthru
      _
    // Predicated region
    $region18: #{decoder_forward.11} parent=1 // pred_check
      _
    $region19: #{decoder_forward.11} parent=1 // pred_check_branch
      %38 = sbr.rel (0) target = $region21
    $region20: #{decoder_forward.11} parent=1 // pred_region
      %39 = dma.done [#allocation5], 32
    $region21: #{decoder_forward.11} parent=1 // pred_fallthru
      _
    %v41 = vld [vmem:[%s0] sm:$0xf]
    %v42 = vld [vmem:[%s0 + $0x4] sm:$0xf]
    %v43 = vld [vmem:[%s0 + $0x8] sm:$0xf]
    %v44 = vld [vmem:[%s0 + $0xc] sm:$0xf]
    %v45 = vld [vmem:[%s0 + $0x10] sm:$0xf]
    %v46 = vld [vmem:[%s0 + $0x14] sm:$0xf]
    %v47 = vld [vmem:[%s0 + $0x18] sm:$0xf]
    %v48 = vld [vmem:[%s0 + $0x1c] sm:$0xf]
    %v49 = vld [vmem:[%s0 + $0x20] sm:$0xf]
    %v50 = vld [vmem:[%s0 + $0x24] sm:$0xf]
    %v51 = vld [vmem:[%s0 + $0x28] sm:$0xf]
    %v52 = vld [vmem:[%s0 + $0x2c] sm:$0xf]
    %v53 = vld [vmem:[%s0 + $0x30] sm:$0xf]
    %v54 = vld [vmem:[%s0 + $0x34] sm:$0xf]
    %v55 = vld [vmem:[%s0 + $0x38] sm:$0xf]
    %v56 = vld [vmem:[%s0 + $0x3c] sm:$0xf]
    %v57 = vld [vmem:[#allocation2] sm:$0xff]
    %v58 = vld [vmem:[#allocation2 + $0x8] sm:$0xff]
    %v59 = vld [vmem:[#allocation2 + $0x10] sm:$0xff]
    %v60 = vld [vmem:[#allocation2 + $0x18] sm:$0xff]
    %v61 = vld [vmem:[#allocation2 + $0x20] sm:$0xff]
    %v62 = vld [vmem:[#allocation2 + $0x28] sm:$0xff]
    %v63 = vld [vmem:[#allocation2 + $0x30] sm:$0xff]
    %v64 = vld [vmem:[#allocation2 + $0x38] sm:$0xff]
    %v65 = vld [vmem:[#allocation2 + $0x40] sm:$0xff]
    %v66 = vld [vmem:[#allocation2 + $0x48] sm:$0xff]
    %v67 = vld [vmem:[#allocation2 + $0x50] sm:$0xff]
    %v68 = vld [vmem:[#allocation2 + $0x58] sm:$0xff]
    %v69 = vld [vmem:[#allocation2 + $0x60] sm:$0xff]
    %v70 = vld [vmem:[#allocation2 + $0x68] sm:$0xff]
    %v71 = vld [vmem:[#allocation2 + $0x70] sm:$0xff]
    %v72 = vld [vmem:[#allocation2 + $0x78] sm:$0xff]
    %v73 = vld [vmem:[#allocation4] sm:$0x3]
    %v75 = vlaneseq
    %v76 = vshrl.u32 %v75, 7
    %v77 = vsub.s32 0, %v76
    %v78 = vrot.slane %v73, %v77
    %v79 = vlaneseq
    %v80 = vshrl.u32 %v79, 7
    %v81 = vsub.s32 1, %v80
    %v82 = vrot.slane %v73, %v81
    %v101 = vunpack.c.l.b16 %v41
    %v102 = vunpack.c.l.b16 %v42
    %v103 = vunpack.c.l.b16 %v43
    %v104 = vunpack.c.l.b16 %v44
    %v105 = vunpack.c.l.b16 %v45
    %v106 = vunpack.c.l.b16 %v46
    %v107 = vunpack.c.l.b16 %v47
    %v108 = vunpack.c.l.b16 %v48
    %v109 = vunpack.c.l.b16 %v49
    %v110 = vunpack.c.l.b16 %v50
    %v111 = vunpack.c.l.b16 %v51
    %v112 = vunpack.c.l.b16 %v52
    %v113 = vunpack.c.l.b16 %v53
    %v114 = vunpack.c.l.b16 %v54
    %v115 = vunpack.c.l.b16 %v55
    %v116 = vunpack.c.l.b16 %v56
    %v117 = vpack.c.b16 %v102, %v101
    %v118 = vpack.c.b16 %v104, %v103
    %v119 = vpack.c.b16 %v106, %v105
    %v120 = vpack.c.b16 %v108, %v107
    %v121 = vpack.c.b16 %v110, %v109
    %v122 = vpack.c.b16 %v112, %v111
    %v123 = vpack.c.b16 %v114, %v113
    %v124 = vpack.c.b16 %v116, %v115
    %v149 = vunpack.c.l.b16 %v57
    %v150 = vunpack.c.h.b16 %v57
    %v151 = vunpack.c.l.b16 %v58
    %v152 = vunpack.c.h.b16 %v58
    %v153 = vunpack.c.l.b16 %v59
    %v154 = vunpack.c.h.b16 %v59
    %v155 = vunpack.c.l.b16 %v60
    %v156 = vunpack.c.h.b16 %v60
    %v157 = vunpack.c.l.b16 %v61
    %v158 = vunpack.c.h.b16 %v61
    %v159 = vunpack.c.l.b16 %v62
    %v160 = vunpack.c.h.b16 %v62
    %v161 = vunpack.c.l.b16 %v63
    %v162 = vunpack.c.h.b16 %v63
    %v163 = vunpack.c.l.b16 %v64
    %v164 = vunpack.c.h.b16 %v64
    %v165 = vunpack.c.l.b16 %v65
    %v166 = vunpack.c.h.b16 %v65
    %v167 = vunpack.c.l.b16 %v66
    %v168 = vunpack.c.h.b16 %v66
    %v169 = vunpack.c.l.b16 %v67
    %v170 = vunpack.c.h.b16 %v67
    %v171 = vunpack.c.l.b16 %v68
    %v172 = vunpack.c.h.b16 %v68
    %v173 = vunpack.c.l.b16 %v69
    %v174 = vunpack.c.h.b16 %v69
    %v175 = vunpack.c.l.b16 %v70
    %v176 = vunpack.c.h.b16 %v70
    %v177 = vunpack.c.l.b16 %v71
    %v178 = vunpack.c.h.b16 %v71
    %v179 = vunpack.c.l.b16 %v72
    %v180 = vunpack.c.h.b16 %v72
    %v181 = vpack.c.b16 %v151, %v149
    %v182 = vpack.c.b16 %v152, %v150
    %v183 = vpack.c.b16 %v155, %v153
    %v184 = vpack.c.b16 %v156, %v154
    %v185 = vpack.c.b16 %v159, %v157
    %v186 = vpack.c.b16 %v160, %v158
    %v187 = vpack.c.b16 %v163, %v161
    %v188 = vpack.c.b16 %v164, %v162
    %v189 = vpack.c.b16 %v167, %v165
    %v190 = vpack.c.b16 %v168, %v166
    %v191 = vpack.c.b16 %v171, %v169
    %v192 = vpack.c.b16 %v172, %v170
    %v193 = vpack.c.b16 %v175, %v173
    %v194 = vpack.c.b16 %v176, %v174
    %v195 = vpack.c.b16 %v179, %v177
    %v196 = vpack.c.b16 %v180, %v178
    %213 = vmatprep.subr.bf16.mxu0 %v182
    %214 = vmatpush1.bf16.msra.mxu0 %v181
    %215 = vmatprep.subr.bf16.mxu0 %v184
    %216 = vmatpush1.bf16.msra.mxu0 %v183
    %217 = vmatprep.subr.bf16.mxu0 %v186
    %218 = vmatpush1.bf16.msra.mxu0 %v185
    %219 = vmatprep.subr.bf16.mxu0 %v188
    %220 = vmatpush1.bf16.msra.mxu0 %v187
    %221 = vmatprep.subr.bf16.mxu0 %v190
    %222 = vmatpush1.bf16.msra.mxu0 %v189
    %223 = vmatprep.subr.bf16.mxu0 %v192
    %224 = vmatpush1.bf16.msra.mxu0 %v191
    %225 = vmatprep.subr.bf16.mxu0 %v194
    %226 = vmatpush1.bf16.msra.mxu0 %v193
    %227 = vmatprep.subr.bf16.mxu0 %v196
    %228 = vmatpush1.bf16.msra.mxu0 %v195
    %229 = vmatprep.subr.bf16.mxu0 0
    %230 = vmatpush1.bf16.msra.mxu0 0
    %231 = vmatprep.subr.bf16.mxu0 0
    %232 = vmatpush1.bf16.msra.mxu0 0
    %233 = vmatprep.subr.bf16.mxu0 0
    %234 = vmatpush1.bf16.msra.mxu0 0
    %235 = vmatprep.subr.bf16.mxu0 0
    %236 = vmatpush1.bf16.msra.mxu0 0
    %237 = vmatprep.subr.bf16.mxu0 0
    %238 = vmatpush1.bf16.msra.mxu0 0
    %239 = vmatprep.subr.bf16.mxu0 0
    %240 = vmatpush1.bf16.msra.mxu0 0
    %241 = vmatprep.subr.bf16.mxu0 0
    %242 = vmatpush1.bf16.msra.mxu0 0
    %243 = vmatprep.subr.bf16.mxu0 0
    %244 = vmatpush1.bf16.msra.mxu0 0
    %245 = vmatprep.mubr.bf16.mxu0 0
    %246 = vmatmul.mubr.bf16.gmra.mrb[0].mxu0 %v117
    %v247 = vpop.f32.mrb[0].mxu0
    %v248 = vadd.f32 %v78, %v247
    %v249 = vpop.f32.mrb[0].mxu0
    %v250 = vadd.f32 %v82, %v249
    %v251 = vpop.f32.mrb[0].mxu0
    %v252 = vadd.f32 %v78, %v251
    %v253 = vpop.f32.mrb[0].mxu0
    %v254 = vadd.f32 %v82, %v253
    %255 = vmatprep.mubr.bf16.mxu0 0
    %256 = vmatmul.mubr.bf16.gmra.mrb[0].mxu0 %v118
    %v257 = vpop.f32.mrb[0].mxu0
    %v258 = vadd.f32 %v78, %v257
    %v259 = vpop.f32.mrb[0].mxu0
    %v260 = vadd.f32 %v82, %v259
    %v261 = vpop.f32.mrb[0].mxu0
    %v262 = vadd.f32 %v78, %v261
    %v263 = vpop.f32.mrb[0].mxu0
    %v264 = vadd.f32 %v82, %v263
    %265 = vmatprep.mubr.bf16.mxu0 0
    %266 = vmatmul.mubr.bf16.gmra.mrb[0].mxu0 %v119
    %v267 = vpop.f32.mrb[0].mxu0
    %v268 = vadd.f32 %v78, %v267
    %v269 = vpop.f32.mrb[0].mxu0
    %v270 = vadd.f32 %v82, %v269
    %v271 = vpop.f32.mrb[0].mxu0
    %v272 = vadd.f32 %v78, %v271
    %v273 = vpop.f32.mrb[0].mxu0
    %v274 = vadd.f32 %v82, %v273
    %275 = vmatprep.mubr.bf16.mxu0 0
    %276 = vmatmul.mubr.bf16.gmra.mrb[0].mxu0 %v120
    %v277 = vpop.f32.mrb[0].mxu0
    %v278 = vadd.f32 %v78, %v277
    %v279 = vpop.f32.mrb[0].mxu0
    %v280 = vadd.f32 %v82, %v279
    %v281 = vpop.f32.mrb[0].mxu0
    %v282 = vadd.f32 %v78, %v281
    %v283 = vpop.f32.mrb[0].mxu0
    %v284 = vadd.f32 %v82, %v283
    %285 = vmatprep.mubr.bf16.mxu0 0
    %286 = vmatmul.mubr.bf16.gmra.mrb[0].mxu0 %v121
    %v287 = vpop.f32.mrb[0].mxu0
    %v288 = vadd.f32 %v78, %v287
    %v289 = vpop.f32.mrb[0].mxu0
    %v290 = vadd.f32 %v82, %v289
    %v291 = vpop.f32.mrb[0].mxu0
    %v292 = vadd.f32 %v78, %v291
    %v293 = vpop.f32.mrb[0].mxu0
    %v294 = vadd.f32 %v82, %v293
    %295 = vmatprep.mubr.bf16.mxu0 0
    %296 = vmatmul.mubr.bf16.gmra.mrb[0].mxu0 %v122
    %v297 = vpop.f32.mrb[0].mxu0
    %v298 = vadd.f32 %v78, %v297
    %v299 = vpop.f32.mrb[0].mxu0
    %v300 = vadd.f32 %v82, %v299
    %v301 = vpop.f32.mrb[0].mxu0
    %v302 = vadd.f32 %v78, %v301
    %v303 = vpop.f32.mrb[0].mxu0
    %v304 = vadd.f32 %v82, %v303
    %305 = vmatprep.mubr.bf16.mxu0 0
    %306 = vmatmul.mubr.bf16.gmra.mrb[0].mxu0 %v123
    %v307 = vpop.f32.mrb[0].mxu0
    %v308 = vadd.f32 %v78, %v307
    %v309 = vpop.f32.mrb[0].mxu0
    %v310 = vadd.f32 %v82, %v309
    %v311 = vpop.f32.mrb[0].mxu0
    %v312 = vadd.f32 %v78, %v311
    %v313 = vpop.f32.mrb[0].mxu0
    %v314 = vadd.f32 %v82, %v313
    %315 = vmatprep.mubr.bf16.mxu0 0
    %316 = vmatmul.mubr.bf16.gmra.mrb[0].mxu0 %v124
    %v317 = vpop.f32.mrb[0].mxu0
    %v318 = vadd.f32 %v78, %v317
    %v319 = vpop.f32.mrb[0].mxu0
    %v320 = vadd.f32 %v82, %v319
    %v321 = vpop.f32.mrb[0].mxu0
    %v322 = vadd.f32 %v78, %v321
    %v323 = vpop.f32.mrb[0].mxu0
    %v324 = vadd.f32 %v82, %v323
    %325 = vdwg.mxu0
    %326 = vst [vmem:[%s3] sm:$0xff] %v248
    %327 = vst [vmem:[%s3 + $0x8] sm:$0xff] %v250
    %328 = vst [vmem:[%s3 + $0x10] sm:$0xff] %v252
    %329 = vst [vmem:[%s3 + $0x18] sm:$0xff] %v254
    %330 = vst [vmem:[%s3 + $0x20] sm:$0xff] %v258
    %331 = vst [vmem:[%s3 + $0x28] sm:$0xff] %v260
    %332 = vst [vmem:[%s3 + $0x30] sm:$0xff] %v262
    %333 = vst [vmem:[%s3 + $0x38] sm:$0xff] %v264
    %334 = vst [vmem:[%s3 + $0x40] sm:$0xff] %v268
    %335 = vst [vmem:[%s3 + $0x48] sm:$0xff] %v270
    %336 = vst [vmem:[%s3 + $0x50] sm:$0xff] %v272
    %337 = vst [vmem:[%s3 + $0x58] sm:$0xff] %v274
    %338 = vst [vmem:[%s3 + $0x60] sm:$0xff] %v278
    %339 = vst [vmem:[%s3 + $0x68] sm:$0xff] %v280
    %340 = vst [vmem:[%s3 + $0x70] sm:$0xff] %v282
    %341 = vst [vmem:[%s3 + $0x78] sm:$0xff] %v284
    %342 = vst [vmem:[%s3 + $0x80] sm:$0xff] %v288
    %343 = vst [vmem:[%s3 + $0x88] sm:$0xff] %v290
    %344 = vst [vmem:[%s3 + $0x90] sm:$0xff] %v292
    %345 = vst [vmem:[%s3 + $0x98] sm:$0xff] %v294
    %346 = vst [vmem:[%s3 + $0xa0] sm:$0xff] %v298
    %347 = vst [vmem:[%s3 + $0xa8] sm:$0xff] %v300
    %348 = vst [vmem:[%s3 + $0xb0] sm:$0xff] %v302
    %349 = vst [vmem:[%s3 + $0xb8] sm:$0xff] %v304
    %350 = vst [vmem:[%s3 + $0xc0] sm:$0xff] %v308
    %351 = vst [vmem:[%s3 + $0xc8] sm:$0xff] %v310
    %352 = vst [vmem:[%s3 + $0xd0] sm:$0xff] %v312
    %353 = vst [vmem:[%s3 + $0xd8] sm:$0xff] %v314
    %354 = vst [vmem:[%s3 + $0xe0] sm:$0xff] %v318
    %355 = vst [vmem:[%s3 + $0xe8] sm:$0xff] %v320
    %356 = vst [vmem:[%s3 + $0xf0] sm:$0xff] %v322
    %357 = vst [vmem:[%s3 + $0xf8] sm:$0xff] %v324
    // Predicated region
    $region22: #{decoder_forward.11} parent=1 // pred_check
      _
    $region23: #{decoder_forward.11} parent=1 // pred_check_branch
      %359 = sbr.rel (0) target = $region25
    $region24: #{decoder_forward.11} parent=1 // pred_region
      _
    $region25: #{decoder_forward.11} parent=1 // pred_fallthru
      _
    // Predicated region
    $region26: #{decoder_forward.11} parent=1 // pred_check
      _
    $region27: #{decoder_forward.11} parent=1 // pred_check_branch
      %361 = sbr.rel (0) target = $region29
    $region28: #{decoder_forward.11} parent=1 // pred_region
      _
    $region29: #{decoder_forward.11} parent=1 // pred_fallthru
      _
    %362 = vsyncpa [#allocation3], 1
    %363 = vsyncpa [#allocation5], 1

// kernel: decoder_forward.13
$region0: #{decoder_forward.13}
  #allocation0 [shape = 'u32[]', space=smem, size = 0x4, offset = 0x4, fixed_abs, tag = 'smem constant byte address 0x4 - core index']
  #allocation1 [shape = 'u32[144,128]{1,0:T(1,128)}', space=vmem, size = 0x12000, scoped, tag = 'internal scratch']
  %s0 = inlined_call_operand.vmem [shape: f32[2,128,128], index: 0, kind: input, shape index: {}]
  %s1 = inlined_call_operand.vmem [shape: f32[2,128,128], index: 1, kind: output, shape index: {}]
  %s2 = sld [smem:[#allocation0]]
  $region37: #{decoder_forward.13} parent=0
    _
  %s4 = ssub.s32 1, %s2
  %s5 = scalar_select 0, %s4, %s2
  loop: start=0, step=1, limit=4
  $region2: #{decoder_forward.13} parent=0 // loop_pre_header
    _
  $region3: #{decoder_forward.13} parent=0 // loop_header
    %s7 = sphi 0, %s11
    %p8 = scmp.ge.s32.totalorder %s7, 4
    %s17 = sphi 0, %s19
    %s20 = sphi 0, %s17
    %s21 = sphi 0, %s20
    %s37 = sphi 0, %s21
    %s43 = sphi 0, %s45
    %s46 = sphi 0, %s43
    %s47 = sphi 0, %s46
    %s63 = sphi 0, %s47
  $region4: #{decoder_forward.13} parent=0 // loop_header_branch
    %10 = sbr.rel (%p8) target = $region8
  $region5: #{decoder_forward.13} parent=0 // loop_body
    %s12 = ssub.s32 %s7, 1
    %s13 = ssub.s32 %s7, 2
    %s14 = sadd.s32 %s7, 1
    %s15 = ssub.s32 %s7, %s14
    %p16 = scmp.eq.s32.totalorder %s15, 0
    %s18 = sadd.s32 %s17, 1
    %s19 = scalar_select %p16, %s17, %s18
    %p22 = pneg %p16
    %p23 = scmp.eq.s32.totalorder %s7, 1
    %p24 = por %p22, %p23
    %p25 = scmp.ne.s32.totalorder %s17, %s20
    %p26 = scmp.eq.s32.totalorder %s7, 0
    %p27 = por %p25, %p26
    %p28 = scmp.ne.s32.totalorder %s17, %s20
    %p29 = scmp.eq.s32.totalorder %s12, 1
    %p30 = por %p28, %p29
    %p31 = scmp.ne.s32.totalorder %s20, %s21
    %p32 = scmp.eq.s32.totalorder %s12, 0
    %p33 = por %p31, %p32
    %p34 = scmp.ne.s32.totalorder %s20, %s21
    %p35 = scmp.eq.s32.totalorder %s13, 1
    %p36 = por %p34, %p35
    %p38 = scmp.ne.s32.totalorder %s21, %s37
    %p39 = scmp.eq.s32.totalorder %s13, 0
    %p40 = por %p38, %p39
    %s41 = ssub.s32 %s7, %s14
    %p42 = scmp.eq.s32.totalorder %s41, 0
    %s44 = sadd.s32 %s43, 1
    %s45 = scalar_select %p42, %s43, %s44
    %p48 = pneg %p42
    %p49 = scmp.eq.s32.totalorder %s7, 1
    %p50 = por %p48, %p49
    %p51 = scmp.ne.s32.totalorder %s43, %s46
    %p52 = scmp.eq.s32.totalorder %s7, 0
    %p53 = por %p51, %p52
    %p54 = scmp.ne.s32.totalorder %s43, %s46
    %p55 = scmp.eq.s32.totalorder %s12, 1
    %p56 = por %p54, %p55
    %p57 = scmp.ne.s32.totalorder %s46, %s47
    %p58 = scmp.eq.s32.totalorder %s12, 0
    %p59 = por %p57, %p58
    %p60 = scmp.ne.s32.totalorder %s46, %s47
    %p61 = scmp.eq.s32.totalorder %s13, 1
    %p62 = por %p60, %p61
    %p64 = scmp.ne.s32.totalorder %s47, %s63
    %p65 = scmp.eq.s32.totalorder %s13, 0
    %p66 = por %p64, %p65
    %p67 = scmp.le.s32.totalorder 1, %s7
    %p68 = scmp.lt.s32.totalorder %s7, 3
    %p69 = pnand %p67, %p68
    %p70 = pneg %p69
    // Predicated region
    $region9: #{decoder_forward.13} parent=5 // pred_check
      _
    $region10: #{decoder_forward.13} parent=5 // pred_check_branch
      %72 = sbr.rel (%p69) target = $region12
    $region11: #{decoder_forward.13} parent=5 // pred_region
      %s73 = ssub.s32 %s7, 1
    $region12: #{decoder_forward.13} parent=5 // pred_fallthru
      _
    %p74 = scmp.lt.s32.totalorder %s7, 2
    // Predicated region
    $region13: #{decoder_forward.13} parent=5 // pred_check
      %p75 = pneg %p74
    $region14: #{decoder_forward.13} parent=5 // pred_check_branch
      %77 = sbr.rel (%p75) target = $region16
    $region15: #{decoder_forward.13} parent=5 // pred_region
      // Predicated region
      $region17: #{decoder_forward.13} parent=15 // pred_check
        %p78 = pneg %p27
      $region18: #{decoder_forward.13} parent=15 // pred_check_branch
        %80 = sbr.rel (%p78) target = $region20
      $region19: #{decoder_forward.13} parent=15 // pred_region
        %p81 = scmp.lt.s32.totalorder %s7, 1
        %s82 = scalar_select %p81, %s7, 1
        %s83 = smul.addr %s82, 16
        %s84 = smul.addr %s83, 8
        %s85 = scalar_lea.vmem %s0, %s84
      $region20: #{decoder_forward.13} parent=15 // pred_fallthru
        _
    $region16: #{decoder_forward.13} parent=5 // pred_fallthru
      _
    %p86 = scmp.le.s32.totalorder 1, %s7
    %p87 = scmp.lt.s32.totalorder %s7, 3
    %p88 = pnand %p86, %p87
    %p89 = pneg %p88
    // Predicated region
    $region21: #{decoder_forward.13} parent=5 // pred_check
      _
    $region22: #{decoder_forward.13} parent=5 // pred_check_branch
      %91 = sbr.rel (%p88) target = $region24
    $region23: #{decoder_forward.13} parent=5 // pred_region
      %s92 = ssub.s32 %s7, 1
      %p93 = scmp.lt.s32.totalorder %s12, 1
      %s94 = scalar_select %p93, %s12, 1
      %s95 = smul.addr %s94, 16
      %s96 = smul.addr %s95, 8
      %s97 = scalar_lea.vmem %s0, %s96
      %p98 = pneg %p33
      %p99 = pneg %p30
      %p100 = pneg %p59
      %p101 = pneg %p56
      %p102 = scmp.lt.s32.totalorder %s12, 1
      %s103 = scalar_select %p102, %s12, 1
      %s104 = smul.addr %s103, 16
      %s105 = smul.addr %s104, 8
      %s106 = scalar_lea.vmem %s1, %s105
      %p107 = scmp.lt.s32.totalorder %s12, 1
      %s108 = scalar_select %p107, %s12, 1
      %s109 = smul.addr %s108, 16
      %s110 = smul.addr %s109, 8
      %s111 = scalar_lea.vmem %s0, %s110
      %p112 = scmp.lt.s32.totalorder %s12, 1
      %s113 = scalar_select %p112, %s12, 1
      %s114 = smul.addr %s113, 16
      %s115 = smul.addr %s114, 8
      %s116 = scalar_lea.vmem %s1, %s115
      %v117 = vld [vmem:[%s111] sm:$0xff]
      %v118 = vld [vmem:[%s111 + $0x8] sm:$0xff]
      %v119 = vld [vmem:[%s111 + $0x10] sm:$0xff]
      %v120 = vld [vmem:[%s111 + $0x18] sm:$0xff]
      %v121 = vld [vmem:[%s111 + $0x20] sm:$0xff]
      %v122 = vld [vmem:[%s111 + $0x28] sm:$0xff]
      %v123 = vld [vmem:[%s111 + $0x30] sm:$0xff]
      %v124 = vld [vmem:[%s111 + $0x38] sm:$0xff]
      %v125 = vld [vmem:[%s111 + $0x40] sm:$0xff]
      %v126 = vld [vmem:[%s111 + $0x48] sm:$0xff]
      %v127 = vld [vmem:[%s111 + $0x50] sm:$0xff]
      %v128 = vld [vmem:[%s111 + $0x58] sm:$0xff]
      %v129 = vld [vmem:[%s111 + $0x60] sm:$0xff]
      %v130 = vld [vmem:[%s111 + $0x68] sm:$0xff]
      %v131 = vld [vmem:[%s111 + $0x70] sm:$0xff]
      %v132 = vld [vmem:[%s111 + $0x78] sm:$0xff]
      %v133 = vadd.f32 %v117, %v118
      %v134 = vadd.f32 %v133, %v119
      %v135 = vadd.f32 %v134, %v120
      %v136 = vadd.f32 %v135, %v121
      %v137 = vadd.f32 %v136, %v122
      %v138 = vadd.f32 %v137, %v123
      %v139 = vadd.f32 %v138, %v124
      %v140 = vadd.f32 %v139, %v125
      %v141 = vadd.f32 %v140, %v126
      %v142 = vadd.f32 %v141, %v127
      %v143 = vadd.f32 %v142, %v128
      %v144 = vadd.f32 %v143, %v129
      %v145 = vadd.f32 %v144, %v130
      %v146 = vadd.f32 %v145, %v131
      %v147 = vadd.f32 %v146, %v132
      %148 = vadd.xlane.f32.xlu0 %v147
      %v149 = vpop.xlane.xlu0 %148
      %v150 = vrot.slane %v149, 4
      %v151 = vadd.f32 %v149, %v150
      %v152 = vrot.slane %v151, 2
      %v153 = vadd.f32 %v151, %v152
      %v154 = vrot.slane %v153, 1
      %v155 = vadd.f32 %v153, %v154
      %s156 = vtos %v155
      %v157 = vrcp.pop 16384.0
      %s158 = vtos %v157
      %s159 = smul.f32 %s156, %s158
      %v160 = vstv %s159
      %v161 = vsub.f32 %v117, %v160
      %v162 = vsub.f32 %v118, %v160
      %v163 = vsub.f32 %v119, %v160
      %v164 = vsub.f32 %v120, %v160
      %v165 = vsub.f32 %v121, %v160
      %v166 = vsub.f32 %v122, %v160
      %v167 = vsub.f32 %v123, %v160
      %v168 = vsub.f32 %v124, %v160
      %v169 = vsub.f32 %v125, %v160
      %v170 = vsub.f32 %v126, %v160
      %v171 = vsub.f32 %v127, %v160
      %v172 = vsub.f32 %v128, %v160
      %v173 = vsub.f32 %v129, %v160
      %v174 = vsub.f32 %v130, %v160
      %v175 = vsub.f32 %v131, %v160
      %v176 = vsub.f32 %v132, %v160
      %v177 = vmul.f32 %v161, %v161
      %v178 = vmul.f32 %v162, %v162
      %v179 = vmul.f32 %v163, %v163
      %v180 = vmul.f32 %v164, %v164
      %v181 = vmul.f32 %v165, %v165
      %v182 = vmul.f32 %v166, %v166
      %v183 = vmul.f32 %v167, %v167
      %v184 = vmul.f32 %v168, %v168
      %v185 = vmul.f32 %v169, %v169
      %v186 = vmul.f32 %v170, %v170
      %v187 = vmul.f32 %v171, %v171
      %v188 = vmul.f32 %v172, %v172
      %v189 = vmul.f32 %v173, %v173
      %v190 = vmul.f32 %v174, %v174
      %v191 = vmul.f32 %v175, %v175
      %v192 = vmul.f32 %v176, %v176
      %v193 = vadd.f32 %v177, %v178
      %v194 = vadd.f32 %v193, %v179
      %v195 = vadd.f32 %v194, %v180
      %v196 = vadd.f32 %v195, %v181
      %v197 = vadd.f32 %v196, %v182
      %v198 = vadd.f32 %v197, %v183
      %v199 = vadd.f32 %v198, %v184
      %v200 = vadd.f32 %v199, %v185
      %v201 = vadd.f32 %v200, %v186
      %v202 = vadd.f32 %v201, %v187
      %v203 = vadd.f32 %v202, %v188
      %v204 = vadd.f32 %v203, %v189
      %v205 = vadd.f32 %v204, %v190
      %v206 = vadd.f32 %v205, %v191
      %v207 = vadd.f32 %v206, %v192
      %208 = vadd.xlane.f32.xlu0 %v207
      %v209 = vpop.xlane.xlu0 %208
      %v210 = vrot.slane %v209, 4
      %v211 = vadd.f32 %v209, %v210
      %v212 = vrot.slane %v211, 2
      %v213 = vadd.f32 %v211, %v212
      %v214 = vrot.slane %v213, 1
      %v215 = vadd.f32 %v213, %v214
      %s216 = vtos %v215
      %v217 = vrcp.pop 16384.0
      %s218 = vtos %v217
      %s219 = smul.f32 %s216, %s218
      %s220 = sadd.f32 %s219, 1e-05
      %v221 = vstv %s220
      %v222 = vrsqrt.pop %v221
      %s223 = vtos %v222
      %v224 = vstv %s223
      %v225 = vmul.f32 %v161, %v224
      %v226 = vmul.f32 %v162, %v224
      %v227 = vmul.f32 %v163, %v224
      %v228 = vmul.f32 %v164, %v224
      %v229 = vmul.f32 %v165, %v224
      %v230 = vmul.f32 %v166, %v224
      %v231 = vmul.f32 %v167, %v224
      %v232 = vmul.f32 %v168, %v224
      %v233 = vmul.f32 %v169, %v224
      %v234 = vmul.f32 %v170, %v224
      %v235 = vmul.f32 %v171, %v224
      %v236 = vmul.f32 %v172, %v224
      %v237 = vmul.f32 %v173, %v224
      %v238 = vmul.f32 %v174, %v224
      %v239 = vmul.f32 %v175, %v224
      %v240 = vmul.f32 %v176, %v224
      %vm241 = vcmp.ge.f32.partialorder %v225, 0.0
      %vm242 = vcmp.ge.f32.partialorder %v226, 0.0
      %vm243 = vcmp.ge.f32.partialorder %v227, 0.0
      %vm244 = vcmp.ge.f32.partialorder %v228, 0.0
      %vm245 = vcmp.ge.f32.partialorder %v229, 0.0
      %vm246 = vcmp.ge.f32.partialorder %v230, 0.0
      %vm247 = vcmp.ge.f32.partialorder %v231, 0.0
      %vm248 = vcmp.ge.f32.partialorder %v232, 0.0
      %vm249 = vcmp.ge.f32.partialorder %v233, 0.0
      %vm250 = vcmp.ge.f32.partialorder %v234, 0.0
      %vm251 = vcmp.ge.f32.partialorder %v235, 0.0
      %vm252 = vcmp.ge.f32.partialorder %v236, 0.0
      %vm253 = vcmp.ge.f32.partialorder %v237, 0.0
      %vm254 = vcmp.ge.f32.partialorder %v238, 0.0
      %vm255 = vcmp.ge.f32.partialorder %v239, 0.0
      %vm256 = vcmp.ge.f32.partialorder %v240, 0.0
      %v257 = vmul.f32 %v225, 0.2
      %v258 = vmul.f32 %v226, 0.2
      %v259 = vmul.f32 %v227, 0.2
      %v260 = vmul.f32 %v228, 0.2
      %v261 = vmul.f32 %v229, 0.2
      %v262 = vmul.f32 %v230, 0.2
      %v263 = vmul.f32 %v231, 0.2
      %v264 = vmul.f32 %v232, 0.2
      %v265 = vmul.f32 %v233, 0.2
      %v266 = vmul.f32 %v234, 0.2
      %v267 = vmul.f32 %v235, 0.2
      %v268 = vmul.f32 %v236, 0.2
      %v269 = vmul.f32 %v237, 0.2
      %v270 = vmul.f32 %v238, 0.2
      %v271 = vmul.f32 %v239, 0.2
      %v272 = vmul.f32 %v240, 0.2
      %v273 = vsel %vm241, %v225, %v257
      %v274 = vsel %vm242, %v226, %v258
      %v275 = vsel %vm243, %v227, %v259
      %v276 = vsel %vm244, %v228, %v260
      %v277 = vsel %vm245, %v229, %v261
      %v278 = vsel %vm246, %v230, %v262
      %v279 = vsel %vm247, %v231, %v263
      %v280 = vsel %vm248, %v232, %v264
      %v281 = vsel %vm249, %v233, %v265
      %v282 = vsel %vm250, %v234, %v266
      %v283 = vsel %vm251, %v235, %v267
      %v284 = vsel %vm252, %v236, %v268
      %v285 = vsel %vm253, %v237, %v269
      %v286 = vsel %vm254, %v238, %v270
      %v287 = vsel %vm255, %v239, %v271
      %v288 = vsel %vm256, %v240, %v272
      %289 = vst [vmem:[%s116] sm:$0xff] %v273
      %290 = vst [vmem:[%s116 + $0x8] sm:$0xff] %v274
      %291 = vst [vmem:[%s116 + $0x10] sm:$0xff] %v275
      %292 = vst [vmem:[%s116 + $0x18] sm:$0xff] %v276
      %293 = vst [vmem:[%s116 + $0x20] sm:$0xff] %v277
      %294 = vst [vmem:[%s116 + $0x28] sm:$0xff] %v278
      %295 = vst [vmem:[%s116 + $0x30] sm:$0xff] %v279
      %296 = vst [vmem:[%s116 + $0x38] sm:$0xff] %v280
      %297 = vst [vmem:[%s116 + $0x40] sm:$0xff] %v281
      %298 = vst [vmem:[%s116 + $0x48] sm:$0xff] %v282
      %299 = vst [vmem:[%s116 + $0x50] sm:$0xff] %v283
      %300 = vst [vmem:[%s116 + $0x58] sm:$0xff] %v284
      %301 = vst [vmem:[%s116 + $0x60] sm:$0xff] %v285
      %302 = vst [vmem:[%s116 + $0x68] sm:$0xff] %v286
      %303 = vst [vmem:[%s116 + $0x70] sm:$0xff] %v287
      %304 = vst [vmem:[%s116 + $0x78] sm:$0xff] %v288
      %p305 = scmp.lt.s32.totalorder %s12, 1
      %s306 = scalar_select %p305, %s12, 1
      %s307 = smul.addr %s306, 16
      %s308 = smul.addr %s307, 8
      %s309 = scalar_lea.vmem %s1, %s308
      // Predicated region
      $region25: #{decoder_forward.13} parent=23 // pred_check
        %p310 = pneg %p56
      $region26: #{decoder_forward.13} parent=23 // pred_check_branch
        %312 = sbr.rel (%p310) target = $region28
      $region27: #{decoder_forward.13} parent=23 // pred_region
        _
      $region28: #{decoder_forward.13} parent=23 // pred_fallthru
        _
    $region24: #{decoder_forward.13} parent=5 // pred_fallthru
      _
    %p313 = scmp.le.s32.totalorder 2, %s7
    // Predicated region
    $region29: #{decoder_forward.13} parent=5 // pred_check
      %p314 = pneg %p313
    $region30: #{decoder_forward.13} parent=5 // pred_check_branch
      %316 = sbr.rel (%p314) target = $region32
    $region31: #{decoder_forward.13} parent=5 // pred_region
      %s317 = ssub.s32 %s7, 2
      // Predicated region
      $region33: #{decoder_forward.13} parent=31 // pred_check
        %p318 = pneg %p62
      $region34: #{decoder_forward.13} parent=31 // pred_check_branch
        %320 = sbr.rel (%p318) target = $region36
      $region35: #{decoder_forward.13} parent=31 // pred_region
        %p321 = scmp.lt.s32.totalorder %s13, 1
        %s322 = scalar_select %p321, %s13, 1
        %s323 = smul.addr %s322, 16
        %s324 = smul.addr %s323, 8
        %s325 = scalar_lea.vmem %s1, %s324
      $region36: #{decoder_forward.13} parent=31 // pred_fallthru
        _
    $region32: #{decoder_forward.13} parent=5 // pred_fallthru
      _
  $region6: #{decoder_forward.13} parent=0 // loop_footer
    %s11 = sadd.s32 1, %s7
  $region7: #{decoder_forward.13} parent=0 // loop_footer_branch
    %6 = sbr.rel target = $region3
  $region8: #{decoder_forward.13} parent=0 // loop_exit
    _

// kernel: decoder_forward.12
$region0: #{decoder_forward.12}
  #allocation0 [shape = 'u32[]', space=smem, size = 0x4, offset = 0x4, fixed_abs, tag = 'smem constant byte address 0x4 - core index']
  #allocation1 [shape = 'u32[144,128]{1,0:T(1,128)}', space=vmem, size = 0x12000, scoped, tag = 'internal scratch']
  %s0 = inlined_call_operand.vmem [shape: bf16[512,1152], index: 0, kind: input, shape index: {}]
  %s1 = inlined_call_operand.vmem [shape: bf16[1152,64], index: 1, kind: input, shape index: {}]
  %s2 = inlined_call_operand.vmem [shape: f32[1,64], index: 2, kind: input, shape index: {}]
  %s3 = inlined_call_operand.vmem [shape: f32[512,64], index: 3, kind: output, shape index: {}]
  %s4 = sld [smem:[#allocation0]]
  $region45: #{decoder_forward.12} parent=0
    _
  %s6 = ssub.s32 1, %s4
  %s7 = scalar_select 0, %s6, %s4
  loop: start=0, step=1, limit=4
  $region2: #{decoder_forward.12} parent=0 // loop_pre_header
    _
  $region3: #{decoder_forward.12} parent=0 // loop_header
    %s9 = sphi 0, %s13
    %p10 = scmp.ge.s32.totalorder %s9, 4
    %s19 = sphi 0, %s21
    %s22 = sphi 0, %s19
    %s23 = sphi 0, %s22
    %s39 = sphi 0, %s23
    %s43 = sphi 0, %s43
    %s45 = sphi 0, %s43
    %s46 = sphi 0, %s45
    %s60 = sphi 0, %s46
    %s64 = sphi 0, %s64
    %s66 = sphi 0, %s64
    %s67 = sphi 0, %s66
    %s81 = sphi 0, %s67
    %s87 = sphi 0, %s89
    %s90 = sphi 0, %s87
    %s91 = sphi 0, %s90
    %s107 = sphi 0, %s91
  $region4: #{decoder_forward.12} parent=0 // loop_header_branch
    %12 = sbr.rel (%p10) target = $region8
  $region5: #{decoder_forward.12} parent=0 // loop_body
    %s14 = ssub.s32 %s9, 1
    %s15 = ssub.s32 %s9, 2
    %s16 = sadd.s32 %s9, 1
    %s17 = ssub.s32 %s9, %s16
    %p18 = scmp.eq.s32.totalorder %s17, 0
    %s20 = sadd.s32 %s19, 1
    %s21 = scalar_select %p18, %s19, %s20
    %p24 = pneg %p18
    %p25 = scmp.eq.s32.totalorder %s9, 1
    %p26 = por %p24, %p25
    %p27 = scmp.ne.s32.totalorder %s19, %s22
    %p28 = scmp.eq.s32.totalorder %s9, 0
    %p29 = por %p27, %p28
    %p30 = scmp.ne.s32.totalorder %s19, %s22
    %p31 = scmp.eq.s32.totalorder %s14, 1
    %p32 = por %p30, %p31
    %p33 = scmp.ne.s32.totalorder %s22, %s23
    %p34 = scmp.eq.s32.totalorder %s14, 0
    %p35 = por %p33, %p34
    %p36 = scmp.ne.s32.totalorder %s22, %s23
    %p37 = scmp.eq.s32.totalorder %s15, 1
    %p38 = por %p36, %p37
    %p40 = scmp.ne.s32.totalorder %s23, %s39
    %p41 = scmp.eq.s32.totalorder %s15, 0
    %p42 = por %p40, %p41
    %s44 = sadd.s32 %s43, 1
    %p47 = scmp.eq.s32.totalorder %s9, 1
    %p48 = scmp.ne.s32.totalorder %s43, %s45
    %p49 = scmp.eq.s32.totalorder %s9, 0
    %p50 = por %p48, %p49
    %p51 = scmp.ne.s32.totalorder %s43, %s45
    %p52 = scmp.eq.s32.totalorder %s14, 1
    %p53 = por %p51, %p52
    %p54 = scmp.ne.s32.totalorder %s45, %s46
    %p55 = scmp.eq.s32.totalorder %s14, 0
    %p56 = por %p54, %p55
    %p57 = scmp.ne.s32.totalorder %s45, %s46
    %p58 = scmp.eq.s32.totalorder %s15, 1
    %p59 = por %p57, %p58
    %p61 = scmp.ne.s32.totalorder %s46, %s60
    %p62 = scmp.eq.s32.totalorder %s15, 0
    %p63 = por %p61, %p62
    %s65 = sadd.s32 %s64, 1
    %p68 = scmp.eq.s32.totalorder %s9, 1
    %p69 = scmp.ne.s32.totalorder %s64, %s66
    %p70 = scmp.eq.s32.totalorder %s9, 0
    %p71 = por %p69, %p70
    %p72 = scmp.ne.s32.totalorder %s64, %s66
    %p73 = scmp.eq.s32.totalorder %s14, 1
    %p74 = por %p72, %p73
    %p75 = scmp.ne.s32.totalorder %s66, %s67
    %p76 = scmp.eq.s32.totalorder %s14, 0
    %p77 = por %p75, %p76
    %p78 = scmp.ne.s32.totalorder %s66, %s67
    %p79 = scmp.eq.s32.totalorder %s15, 1
    %p80 = por %p78, %p79
    %p82 = scmp.ne.s32.totalorder %s67, %s81
    %p83 = scmp.eq.s32.totalorder %s15, 0
    %p84 = por %p82, %p83
    %s85 = ssub.s32 %s9, %s16
    %p86 = scmp.eq.s32.totalorder %s85, 0
    %s88 = sadd.s32 %s87, 1
    %s89 = scalar_select %p86, %s87, %s88
    %p92 = pneg %p86
    %p93 = scmp.eq.s32.totalorder %s9, 1
    %p94 = por %p92, %p93
    %p95 = scmp.ne.s32.totalorder %s87, %s90
    %p96 = scmp.eq.s32.totalorder %s9, 0
    %p97 = por %p95, %p96
    %p98 = scmp.ne.s32.totalorder %s87, %s90
    %p99 = scmp.eq.s32.totalorder %s14, 1
    %p100 = por %p98, %p99
    %p101 = scmp.ne.s32.totalorder %s90, %s91
    %p102 = scmp.eq.s32.totalorder %s14, 0
    %p103 = por %p101, %p102
    %p104 = scmp.ne.s32.totalorder %s90, %s91
    %p105 = scmp.eq.s32.totalorder %s15, 1
    %p106 = por %p104, %p105
    %p108 = scmp.ne.s32.totalorder %s91, %s107
    %p109 = scmp.eq.s32.totalorder %s15, 0
    %p110 = por %p108, %p109
    %p111 = scmp.le.s32.totalorder 1, %s9
    %p112 = scmp.lt.s32.totalorder %s9, 3
    %p113 = pnand %p111, %p112
    %p114 = pneg %p113
    // Predicated region
    $region9: #{decoder_forward.12} parent=5 // pred_check
      _
    $region10: #{decoder_forward.12} parent=5 // pred_check_branch
      %116 = sbr.rel (%p113) target = $region12
    $region11: #{decoder_forward.12} parent=5 // pred_region
      %s117 = ssub.s32 %s9, 1
      // Predicated region
      $region13: #{decoder_forward.12} parent=11 // pred_check
        %p118 = pneg %p56
      $region14: #{decoder_forward.12} parent=11 // pred_check_branch
        %120 = sbr.rel (%p118) target = $region16
      $region15: #{decoder_forward.12} parent=11 // pred_region
        _
      $region16: #{decoder_forward.12} parent=11 // pred_fallthru
        _
      // Predicated region
      $region17: #{decoder_forward.12} parent=11 // pred_check
        %p121 = pneg %p77
      $region18: #{decoder_forward.12} parent=11 // pred_check_branch
        %123 = sbr.rel (%p121) target = $region20
      $region19: #{decoder_forward.12} parent=11 // pred_region
        _
      $region20: #{decoder_forward.12} parent=11 // pred_fallthru
        _
    $region12: #{decoder_forward.12} parent=5 // pred_fallthru
      _
    %p124 = scmp.lt.s32.totalorder %s9, 2
    // Predicated region
    $region21: #{decoder_forward.12} parent=5 // pred_check
      %p125 = pneg %p124
    $region22: #{decoder_forward.12} parent=5 // pred_check_branch
      %127 = sbr.rel (%p125) target = $region24
    $region23: #{decoder_forward.12} parent=5 // pred_region
      // Predicated region
      $region25: #{decoder_forward.12} parent=23 // pred_check
        %p128 = pneg %p29
      $region26: #{decoder_forward.12} parent=23 // pred_check_branch
        %130 = sbr.rel (%p128) target = $region28
      $region27: #{decoder_forward.12} parent=23 // pred_region
        %s131 = smul.u32 32, %s9
        %p132 = scmp.lt.s32.totalorder %s131, 63
        %s133 = scalar_select %p132, %s131, 63
        %s134 = smul.addr %s133, 9
        %s135 = smul.addr %s134, 4
        %s136 = scalar_lea.vmem %s0, %s135
        %s137 = smul.u32 32, %s9
      $region28: #{decoder_forward.12} parent=23 // pred_fallthru
        _
    $region24: #{decoder_forward.12} parent=5 // pred_fallthru
      _
    %p138 = scmp.le.s32.totalorder 1, %s9
    %p139 = scmp.lt.s32.totalorder %s9, 3
    %p140 = pnand %p138, %p139
    %p141 = pneg %p140
    // Predicated region
    $region29: #{decoder_forward.12} parent=5 // pred_check
      _
    $region30: #{decoder_forward.12} parent=5 // pred_check_branch
      %143 = sbr.rel (%p140) target = $region32
    $region31: #{decoder_forward.12} parent=5 // pred_region
      %s144 = ssub.s32 %s9, 1
      %s145 = smul.u32 32, %s14
      %p146 = scmp.lt.s32.totalorder %s145, 63
      %s147 = scalar_select %p146, %s145, 63
      %s148 = smul.addr %s147, 9
      %s149 = smul.addr %s148, 4
      %s150 = scalar_lea.vmem %s0, %s149
      %p151 = pneg %p35
      %p152 = pneg %p32
      %p153 = pneg %p56
      %p154 = pneg %p53
      %p155 = pneg %p77
      %p156 = pneg %p74
      %p157 = pneg %p103
      %p158 = pneg %p100
      %s159 = smul.u32 32, %s14
      %p160 = scmp.lt.s32.totalorder %s159, 63
      %s161 = scalar_select %p160, %s159, 63
      %s162 = smul.addr %s161, 8
      %s163 = scalar_lea.vmem %s3, %s162
      %s164 = smul.u32 32, %s14
      %p165 = scmp.lt.s32.totalorder %s164, 63
      %s166 = scalar_select %p165, %s164, 63
      %s167 = smul.addr %s166, 9
      %s168 = smul.addr %s167, 4
      %s169 = scalar_lea.vmem %s0, %s168
      %s170 = smul.u32 32, %s14
      %s171 = smul.u32 32, %s14
      %p172 = scmp.lt.s32.totalorder %s171, 63
      %s173 = scalar_select %p172, %s171, 63
      %s174 = smul.addr %s173, 8
      %s175 = scalar_lea.vmem %s3, %s174
      %s176 = smul.u32 32, %s14
      %v178 = vld [vmem:[%s169] sm:$0xff]
      %v179 = vld [vmem:[%s169 + $0x8] sm:$0xff]
      %v180 = vld [vmem:[%s169 + $0x10] sm:$0xff]
      %v181 = vld [vmem:[%s169 + $0x18] sm:$0xff]
      %v182 = vld [vmem:[%s169 + $0x20] sm:$0xf]
      %v183 = vld [vmem:[%s169 + $0x24] sm:$0xff]
      %v184 = vld [vmem:[%s169 + $0x2c] sm:$0xff]
      %v185 = vld [vmem:[%s169 + $0x34] sm:$0xff]
      %v186 = vld [vmem:[%s169 + $0x3c] sm:$0xff]
      %v187 = vld [vmem:[%s169 + $0x44] sm:$0xf]
      %v188 = vld [vmem:[%s169 + $0x48] sm:$0xff]
      %v189 = vld [vmem:[%s169 + $0x50] sm:$0xff]
      %v190 = vld [vmem:[%s169 + $0x58] sm:$0xff]
      %v191 = vld [vmem:[%s169 + $0x60] sm:$0xff]
      %v192 = vld [vmem:[%s169 + $0x68] sm:$0xf]
      %v193 = vld [vmem:[%s169 + $0x6c] sm:$0xff]
      %v194 = vld [vmem:[%s169 + $0x74] sm:$0xff]
      %v195 = vld [vmem:[%s169 + $0x7c] sm:$0xff]
      %v196 = vld [vmem:[%s169 + $0x84] sm:$0xff]
      %v197 = vld [vmem:[%s169 + $0x8c] sm:$0xf]
      %v198 = vld [vmem:[%s169 + $0x90] sm:$0xff]
      %v199 = vld [vmem:[%s169 + $0x98] sm:$0xff]
      %v200 = vld [vmem:[%s169 + $0xa0] sm:$0xff]
      %v201 = vld [vmem:[%s169 + $0xa8] sm:$0xff]
      %v202 = vld [vmem:[%s169 + $0xb0] sm:$0xf]
      %v203 = vld [vmem:[%s169 + $0xb4] sm:$0xff]
      %v204 = vld [vmem:[%s169 + $0xbc] sm:$0xff]
      %v205 = vld [vmem:[%s169 + $0xc4] sm:$0xff]
      %v206 = vld [vmem:[%s169 + $0xcc] sm:$0xff]
      %v207 = vld [vmem:[%s169 + $0xd4] sm:$0xf]
      %v208 = vld [vmem:[%s169 + $0xd8] sm:$0xff]
      %v209 = vld [vmem:[%s169 + $0xe0] sm:$0xff]
      %v210 = vld [vmem:[%s169 + $0xe8] sm:$0xff]
      %v211 = vld [vmem:[%s169 + $0xf0] sm:$0xff]
      %v212 = vld [vmem:[%s169 + $0xf8] sm:$0xf]
      %v213 = vld [vmem:[%s169 + $0xfc] sm:$0xff]
      %v214 = vld [vmem:[%s169 + $0x104] sm:$0xff]
      %v215 = vld [vmem:[%s169 + $0x10c] sm:$0xff]
      %v216 = vld [vmem:[%s169 + $0x114] sm:$0xff]
      %v217 = vld [vmem:[%s169 + $0x11c] sm:$0xf]
      %v218 = vld [vmem:[%s169 + $0x120] sm:$0xff]
      %v219 = vld [vmem:[%s169 + $0x128] sm:$0xff]
      %v220 = vld [vmem:[%s169 + $0x130] sm:$0xff]
      %v221 = vld [vmem:[%s169 + $0x138] sm:$0xff]
      %v222 = vld [vmem:[%s169 + $0x140] sm:$0xf]
      %v223 = vld [vmem:[%s169 + $0x144] sm:$0xff]
      %v224 = vld [vmem:[%s169 + $0x14c] sm:$0xff]
      %v225 = vld [vmem:[%s169 + $0x154] sm:$0xff]
      %v226 = vld [vmem:[%s169 + $0x15c] sm:$0xff]
      %v227 = vld [vmem:[%s169 + $0x164] sm:$0xf]
      %v228 = vld [vmem:[%s169 + $0x168] sm:$0xff]
      %v229 = vld [vmem:[%s169 + $0x170] sm:$0xff]
      %v230 = vld [vmem:[%s169 + $0x178] sm:$0xff]
      %v231 = vld [vmem:[%s169 + $0x180] sm:$0xff]
      %v232 = vld [vmem:[%s169 + $0x188] sm:$0xf]
      %v233 = vld [vmem:[%s169 + $0x18c] sm:$0xff]
      %v234 = vld [vmem:[%s169 + $0x194] sm:$0xff]
      %v235 = vld [vmem:[%s169 + $0x19c] sm:$0xff]
      %v236 = vld [vmem:[%s169 + $0x1a4] sm:$0xff]
      %v237 = vld [vmem:[%s169 + $0x1ac] sm:$0xf]
      %v238 = vld [vmem:[%s169 + $0x1b0] sm:$0xff]
      %v239 = vld [vmem:[%s169 + $0x1b8] sm:$0xff]
      %v240 = vld [vmem:[%s169 + $0x1c0] sm:$0xff]
      %v241 = vld [vmem:[%s169 + $0x1c8] sm:$0xff]
      %v242 = vld [vmem:[%s169 + $0x1d0] sm:$0xf]
      %v243 = vld [vmem:[%s169 + $0x1d4] sm:$0xff]
      %v244 = vld [vmem:[%s169 + $0x1dc] sm:$0xff]
      %v245 = vld [vmem:[%s169 + $0x1e4] sm:$0xff]
      %v246 = vld [vmem:[%s169 + $0x1ec] sm:$0xff]
      %v247 = vld [vmem:[%s169 + $0x1f4] sm:$0xf]
      %v248 = vld [vmem:[%s169 + $0x1f8] sm:$0xff]
      %v249 = vld [vmem:[%s169 + $0x200] sm:$0xff]
      %v250 = vld [vmem:[%s169 + $0x208] sm:$0xff]
      %v251 = vld [vmem:[%s169 + $0x210] sm:$0xff]
      %v252 = vld [vmem:[%s169 + $0x218] sm:$0xf]
      %v253 = vld [vmem:[%s169 + $0x21c] sm:$0xff]
      %v254 = vld [vmem:[%s169 + $0x224] sm:$0xff]
      %v255 = vld [vmem:[%s169 + $0x22c] sm:$0xff]
      %v256 = vld [vmem:[%s169 + $0x234] sm:$0xff]
      %v257 = vld [vmem:[%s169 + $0x23c] sm:$0xf]
      %v258 = vld [vmem:[%s169 + $0x240] sm:$0xff]
      %v259 = vld [vmem:[%s169 + $0x248] sm:$0xff]
      %v260 = vld [vmem:[%s169 + $0x250] sm:$0xff]
      %v261 = vld [vmem:[%s169 + $0x258] sm:$0xff]
      %v262 = vld [vmem:[%s169 + $0x260] sm:$0xf]
      %v263 = vld [vmem:[%s169 + $0x264] sm:$0xff]
      %v264 = vld [vmem:[%s169 + $0x26c] sm:$0xff]
      %v265 = vld [vmem:[%s169 + $0x274] sm:$0xff]
      %v266 = vld [vmem:[%s169 + $0x27c] sm:$0xff]
      %v267 = vld [vmem:[%s169 + $0x284] sm:$0xf]
      %v268 = vld [vmem:[%s169 + $0x288] sm:$0xff]
      %v269 = vld [vmem:[%s169 + $0x290] sm:$0xff]
      %v270 = vld [vmem:[%s169 + $0x298] sm:$0xff]
      %v271 = vld [vmem:[%s169 + $0x2a0] sm:$0xff]
      %v272 = vld [vmem:[%s169 + $0x2a8] sm:$0xf]
      %v273 = vld [vmem:[%s169 + $0x2ac] sm:$0xff]
      %v274 = vld [vmem:[%s169 + $0x2b4] sm:$0xff]
      %v275 = vld [vmem:[%s169 + $0x2bc] sm:$0xff]
      %v276 = vld [vmem:[%s169 + $0x2c4] sm:$0xff]
      %v277 = vld [vmem:[%s169 + $0x2cc] sm:$0xf]
      %v278 = vld [vmem:[%s169 + $0x2d0] sm:$0xff]
      %v279 = vld [vmem:[%s169 + $0x2d8] sm:$0xff]
      %v280 = vld [vmem:[%s169 + $0x2e0] sm:$0xff]
      %v281 = vld [vmem:[%s169 + $0x2e8] sm:$0xff]
      %v282 = vld [vmem:[%s169 + $0x2f0] sm:$0xf]
      %v283 = vld [vmem:[%s169 + $0x2f4] sm:$0xff]
      %v284 = vld [vmem:[%s169 + $0x2fc] sm:$0xff]
      %v285 = vld [vmem:[%s169 + $0x304] sm:$0xff]
      %v286 = vld [vmem:[%s169 + $0x30c] sm:$0xff]
      %v287 = vld [vmem:[%s169 + $0x314] sm:$0xf]
      %v288 = vld [vmem:[%s169 + $0x318] sm:$0xff]
      %v289 = vld [vmem:[%s169 + $0x320] sm:$0xff]
      %v290 = vld [vmem:[%s169 + $0x328] sm:$0xff]
      %v291 = vld [vmem:[%s169 + $0x330] sm:$0xff]
      %v292 = vld [vmem:[%s169 + $0x338] sm:$0xf]
      %v293 = vld [vmem:[%s169 + $0x33c] sm:$0xff]
      %v294 = vld [vmem:[%s169 + $0x344] sm:$0xff]
      %v295 = vld [vmem:[%s169 + $0x34c] sm:$0xff]
      %v296 = vld [vmem:[%s169 + $0x354] sm:$0xff]
      %v297 = vld [vmem:[%s169 + $0x35c] sm:$0xf]
      %v298 = vld [vmem:[%s169 + $0x360] sm:$0xff]
      %v299 = vld [vmem:[%s169 + $0x368] sm:$0xff]
      %v300 = vld [vmem:[%s169 + $0x370] sm:$0xff]
      %v301 = vld [vmem:[%s169 + $0x378] sm:$0xff]
      %v302 = vld [vmem:[%s169 + $0x380] sm:$0xf]
      %v303 = vld [vmem:[%s169 + $0x384] sm:$0xff]
      %v304 = vld [vmem:[%s169 + $0x38c] sm:$0xff]
      %v305 = vld [vmem:[%s169 + $0x394] sm:$0xff]
      %v306 = vld [vmem:[%s169 + $0x39c] sm:$0xff]
      %v307 = vld [vmem:[%s169 + $0x3a4] sm:$0xf]
      %v308 = vld [vmem:[%s169 + $0x3a8] sm:$0xff]
      %v309 = vld [vmem:[%s169 + $0x3b0] sm:$0xff]
      %v310 = vld [vmem:[%s169 + $0x3b8] sm:$0xff]
      %v311 = vld [vmem:[%s169 + $0x3c0] sm:$0xff]
      %v312 = vld [vmem:[%s169 + $0x3c8] sm:$0xf]
      %v313 = vld [vmem:[%s169 + $0x3cc] sm:$0xff]
      %v314 = vld [vmem:[%s169 + $0x3d4] sm:$0xff]
      %v315 = vld [vmem:[%s169 + $0x3dc] sm:$0xff]
      %v316 = vld [vmem:[%s169 + $0x3e4] sm:$0xff]
      %v317 = vld [vmem:[%s169 + $0x3ec] sm:$0xf]
      %v318 = vld [vmem:[%s169 + $0x3f0] sm:$0xff]
      %v319 = vld [vmem:[%s169 + $0x3f8] sm:$0xff]
      %v320 = vld [vmem:[%s169 + $0x400] sm:$0xff]
      %v321 = vld [vmem:[%s169 + $0x408] sm:$0xff]
      %v322 = vld [vmem:[%s169 + $0x410] sm:$0xf]
      %v323 = vld [vmem:[%s169 + $0x414] sm:$0xff]
      %v324 = vld [vmem:[%s169 + $0x41c] sm:$0xff]
      %v325 = vld [vmem:[%s169 + $0x424] sm:$0xff]
      %v326 = vld [vmem:[%s169 + $0x42c] sm:$0xff]
      %v327 = vld [vmem:[%s169 + $0x434] sm:$0xf]
      %v328 = vld [vmem:[%s169 + $0x438] sm:$0xff]
      %v329 = vld [vmem:[%s169 + $0x440] sm:$0xff]
      %v330 = vld [vmem:[%s169 + $0x448] sm:$0xff]
      %v331 = vld [vmem:[%s169 + $0x450] sm:$0xff]
      %v332 = vld [vmem:[%s169 + $0x458] sm:$0xf]
      %v333 = vld [vmem:[%s169 + $0x45c] sm:$0xff]
      %v334 = vld [vmem:[%s169 + $0x464] sm:$0xff]
      %v335 = vld [vmem:[%s169 + $0x46c] sm:$0xff]
      %v336 = vld [vmem:[%s169 + $0x474] sm:$0xff]
      %v337 = vld [vmem:[%s169 + $0x47c] sm:$0xf]
      %v338 = vld [vmem:[%s1] sm:$0xf]
      %v339 = vld [vmem:[%s1 + $0x4] sm:$0xf]
      %v340 = vld [vmem:[%s1 + $0x8] sm:$0xf]
      %v341 = vld [vmem:[%s1 + $0xc] sm:$0xf]
      %v342 = vld [vmem:[%s1 + $0x10] sm:$0xf]
      %v343 = vld [vmem:[%s1 + $0x14] sm:$0xf]
      %v344 = vld [vmem:[%s1 + $0x18] sm:$0xf]
      %v345 = vld [vmem:[%s1 + $0x1c] sm:$0xf]
      %v346 = vld [vmem:[%s1 + $0x20] sm:$0xf]
      %v347 = vld [vmem:[%s1 + $0x24] sm:$0xf]
      %v348 = vld [vmem:[%s1 + $0x28] sm:$0xf]
      %v349 = vld [vmem:[%s1 + $0x2c] sm:$0xf]
      %v350 = vld [vmem:[%s1 + $0x30] sm:$0xf]
      %v351 = vld [vmem:[%s1 + $0x34] sm:$0xf]
      %v352 = vld [vmem:[%s1 + $0x38] sm:$0xf]
      %v353 = vld [vmem:[%s1 + $0x3c] sm:$0xf]
      %v354 = vld [vmem:[%s1 + $0x40] sm:$0xf]
      %v355 = vld [vmem:[%s1 + $0x44] sm:$0xf]
      %v356 = vld [vmem:[%s1 + $0x48] sm:$0xf]
      %v357 = vld [vmem:[%s1 + $0x4c] sm:$0xf]
      %v358 = vld [vmem:[%s1 + $0x50] sm:$0xf]
      %v359 = vld [vmem:[%s1 + $0x54] sm:$0xf]
      %v360 = vld [vmem:[%s1 + $0x58] sm:$0xf]
      %v361 = vld [vmem:[%s1 + $0x5c] sm:$0xf]
      %v362 = vld [vmem:[%s1 + $0x60] sm:$0xf]
      %v363 = vld [vmem:[%s1 + $0x64] sm:$0xf]
      %v364 = vld [vmem:[%s1 + $0x68] sm:$0xf]
      %v365 = vld [vmem:[%s1 + $0x6c] sm:$0xf]
      %v366 = vld [vmem:[%s1 + $0x70] sm:$0xf]
      %v367 = vld [vmem:[%s1 + $0x74] sm:$0xf]
      %v368 = vld [vmem:[%s1 + $0x78] sm:$0xf]
      %v369 = vld [vmem:[%s1 + $0x7c] sm:$0xf]
      %v370 = vld [vmem:[%s1 + $0x80] sm:$0xf]
      %v371 = vld [vmem:[%s1 + $0x84] sm:$0xf]
      %v372 = vld [vmem:[%s1 + $0x88] sm:$0xf]
      %v373 = vld [vmem:[%s1 + $0x8c] sm:$0xf]
      %v374 = vld [vmem:[%s1 + $0x90] sm:$0xf]
      %v375 = vld [vmem:[%s1 + $0x94] sm:$0xf]
      %v376 = vld [vmem:[%s1 + $0x98] sm:$0xf]
      %v377 = vld [vmem:[%s1 + $0x9c] sm:$0xf]
      %v378 = vld [vmem:[%s1 + $0xa0] sm:$0xf]
      %v379 = vld [vmem:[%s1 + $0xa4] sm:$0xf]
      %v380 = vld [vmem:[%s1 + $0xa8] sm:$0xf]
      %v381 = vld [vmem:[%s1 + $0xac] sm:$0xf]
      %v382 = vld [vmem:[%s1 + $0xb0] sm:$0xf]
      %v383 = vld [vmem:[%s1 + $0xb4] sm:$0xf]
      %v384 = vld [vmem:[%s1 + $0xb8] sm:$0xf]
      %v385 = vld [vmem:[%s1 + $0xbc] sm:$0xf]
      %v386 = vld [vmem:[%s1 + $0xc0] sm:$0xf]
      %v387 = vld [vmem:[%s1 + $0xc4] sm:$0xf]
      %v388 = vld [vmem:[%s1 + $0xc8] sm:$0xf]
      %v389 = vld [vmem:[%s1 + $0xcc] sm:$0xf]
      %v390 = vld [vmem:[%s1 + $0xd0] sm:$0xf]
      %v391 = vld [vmem:[%s1 + $0xd4] sm:$0xf]
      %v392 = vld [vmem:[%s1 + $0xd8] sm:$0xf]
      %v393 = vld [vmem:[%s1 + $0xdc] sm:$0xf]
      %v394 = vld [vmem:[%s1 + $0xe0] sm:$0xf]
      %v395 = vld [vmem:[%s1 + $0xe4] sm:$0xf]
      %v396 = vld [vmem:[%s1 + $0xe8] sm:$0xf]
      %v397 = vld [vmem:[%s1 + $0xec] sm:$0xf]
      %v398 = vld [vmem:[%s1 + $0xf0] sm:$0xf]
      %v399 = vld [vmem:[%s1 + $0xf4] sm:$0xf]
      %v400 = vld [vmem:[%s1 + $0xf8] sm:$0xf]
      %v401 = vld [vmem:[%s1 + $0xfc] sm:$0xf]
      %v402 = vld [vmem:[%s1 + $0x100] sm:$0xf]
      %v403 = vld [vmem:[%s1 + $0x104] sm:$0xf]
      %v404 = vld [vmem:[%s1 + $0x108] sm:$0xf]
      %v405 = vld [vmem:[%s1 + $0x10c] sm:$0xf]
      %v406 = vld [vmem:[%s1 + $0x110] sm:$0xf]
      %v407 = vld [vmem:[%s1 + $0x114] sm:$0xf]
      %v408 = vld [vmem:[%s1 + $0x118] sm:$0xf]
      %v409 = vld [vmem:[%s1 + $0x11c] sm:$0xf]
      %v410 = vld [vmem:[%s1 + $0x120] sm:$0xf]
      %v411 = vld [vmem:[%s1 + $0x124] sm:$0xf]
      %v412 = vld [vmem:[%s1 + $0x128] sm:$0xf]
      %v413 = vld [vmem:[%s1 + $0x12c] sm:$0xf]
      %v414 = vld [vmem:[%s1 + $0x130] sm:$0xf]
      %v415 = vld [vmem:[%s1 + $0x134] sm:$0xf]
      %v416 = vld [vmem:[%s1 + $0x138] sm:$0xf]
      %v417 = vld [vmem:[%s1 + $0x13c] sm:$0xf]
      %v418 = vld [vmem:[%s1 + $0x140] sm:$0xf]
      %v419 = vld [vmem:[%s1 + $0x144] sm:$0xf]
      %v420 = vld [vmem:[%s1 + $0x148] sm:$0xf]
      %v421 = vld [vmem:[%s1 + $0x14c] sm:$0xf]
      %v422 = vld [vmem:[%s1 + $0x150] sm:$0xf]
      %v423 = vld [vmem:[%s1 + $0x154] sm:$0xf]
      %v424 = vld [vmem:[%s1 + $0x158] sm:$0xf]
      %v425 = vld [vmem:[%s1 + $0x15c] sm:$0xf]
      %v426 = vld [vmem:[%s1 + $0x160] sm:$0xf]
      %v427 = vld [vmem:[%s1 + $0x164] sm:$0xf]
      %v428 = vld [vmem:[%s1 + $0x168] sm:$0xf]
      %v429 = vld [vmem:[%s1 + $0x16c] sm:$0xf]
      %v430 = vld [vmem:[%s1 + $0x170] sm:$0xf]
      %v431 = vld [vmem:[%s1 + $0x174] sm:$0xf]
      %v432 = vld [vmem:[%s1 + $0x178] sm:$0xf]
      %v433 = vld [vmem:[%s1 + $0x17c] sm:$0xf]
      %v434 = vld [vmem:[%s1 + $0x180] sm:$0xf]
      %v435 = vld [vmem:[%s1 + $0x184] sm:$0xf]
      %v436 = vld [vmem:[%s1 + $0x188] sm:$0xf]
      %v437 = vld [vmem:[%s1 + $0x18c] sm:$0xf]
      %v438 = vld [vmem:[%s1 + $0x190] sm:$0xf]
      %v439 = vld [vmem:[%s1 + $0x194] sm:$0xf]
      %v440 = vld [vmem:[%s1 + $0x198] sm:$0xf]
      %v441 = vld [vmem:[%s1 + $0x19c] sm:$0xf]
      %v442 = vld [vmem:[%s1 + $0x1a0] sm:$0xf]
      %v443 = vld [vmem:[%s1 + $0x1a4] sm:$0xf]
      %v444 = vld [vmem:[%s1 + $0x1a8] sm:$0xf]
      %v445 = vld [vmem:[%s1 + $0x1ac] sm:$0xf]
      %v446 = vld [vmem:[%s1 + $0x1b0] sm:$0xf]
      %v447 = vld [vmem:[%s1 + $0x1b4] sm:$0xf]
      %v448 = vld [vmem:[%s1 + $0x1b8] sm:$0xf]
      %v449 = vld [vmem:[%s1 + $0x1bc] sm:$0xf]
      %v450 = vld [vmem:[%s1 + $0x1c0] sm:$0xf]
      %v451 = vld [vmem:[%s1 + $0x1c4] sm:$0xf]
      %v452 = vld [vmem:[%s1 + $0x1c8] sm:$0xf]
      %v453 = vld [vmem:[%s1 + $0x1cc] sm:$0xf]
      %v454 = vld [vmem:[%s1 + $0x1d0] sm:$0xf]
      %v455 = vld [vmem:[%s1 + $0x1d4] sm:$0xf]
      %v456 = vld [vmem:[%s1 + $0x1d8] sm:$0xf]
      %v457 = vld [vmem:[%s1 + $0x1dc] sm:$0xf]
      %v458 = vld [vmem:[%s1 + $0x1e0] sm:$0xf]
      %v459 = vld [vmem:[%s1 + $0x1e4] sm:$0xf]
      %v460 = vld [vmem:[%s1 + $0x1e8] sm:$0xf]
      %v461 = vld [vmem:[%s1 + $0x1ec] sm:$0xf]
      %v462 = vld [vmem:[%s1 + $0x1f0] sm:$0xf]
      %v463 = vld [vmem:[%s1 + $0x1f4] sm:$0xf]
      %v464 = vld [vmem:[%s1 + $0x1f8] sm:$0xf]
      %v465 = vld [vmem:[%s1 + $0x1fc] sm:$0xf]
      %v466 = vld [vmem:[%s1 + $0x200] sm:$0xf]
      %v467 = vld [vmem:[%s1 + $0x204] sm:$0xf]
      %v468 = vld [vmem:[%s1 + $0x208] sm:$0xf]
      %v469 = vld [vmem:[%s1 + $0x20c] sm:$0xf]
      %v470 = vld [vmem:[%s1 + $0x210] sm:$0xf]
      %v471 = vld [vmem:[%s1 + $0x214] sm:$0xf]
      %v472 = vld [vmem:[%s1 + $0x218] sm:$0xf]
      %v473 = vld [vmem:[%s1 + $0x21c] sm:$0xf]
      %v474 = vld [vmem:[%s1 + $0x220] sm:$0xf]
      %v475 = vld [vmem:[%s1 + $0x224] sm:$0xf]
      %v476 = vld [vmem:[%s1 + $0x228] sm:$0xf]
      %v477 = vld [vmem:[%s1 + $0x22c] sm:$0xf]
      %v478 = vld [vmem:[%s1 + $0x230] sm:$0xf]
      %v479 = vld [vmem:[%s1 + $0x234] sm:$0xf]
      %v480 = vld [vmem:[%s1 + $0x238] sm:$0xf]
      %v481 = vld [vmem:[%s1 + $0x23c] sm:$0xf]
      %v482 = vld [vmem:[%s2] sm:$0x1]
      %v484 = vlaneseq
      %v485 = vshrl.u32 %v484, 7
      %v486 = vsub.s32 0, %v485
      %v487 = vrot.slane %v482, %v486
      %v649 = vunpack.c.l.b16 %v178
      %v650 = vunpack.c.h.b16 %v178
      %v651 = vunpack.c.l.b16 %v179
      %v652 = vunpack.c.h.b16 %v179
      %v653 = vunpack.c.l.b16 %v180
      %v654 = vunpack.c.h.b16 %v180
      %v655 = vunpack.c.l.b16 %v181
      %v656 = vunpack.c.h.b16 %v181
      %v657 = vunpack.c.l.b16 %v182
      %v658 = vunpack.c.l.b16 %v183
      %v659 = vunpack.c.h.b16 %v183
      %v660 = vunpack.c.l.b16 %v184
      %v661 = vunpack.c.h.b16 %v184
      %v662 = vunpack.c.l.b16 %v185
      %v663 = vunpack.c.h.b16 %v185
      %v664 = vunpack.c.l.b16 %v186
      %v665 = vunpack.c.h.b16 %v186
      %v666 = vunpack.c.l.b16 %v187
      %v667 = vunpack.c.l.b16 %v188
      %v668 = vunpack.c.h.b16 %v188
      %v669 = vunpack.c.l.b16 %v189
      %v670 = vunpack.c.h.b16 %v189
      %v671 = vunpack.c.l.b16 %v190
      %v672 = vunpack.c.h.b16 %v190
      %v673 = vunpack.c.l.b16 %v191
      %v674 = vunpack.c.h.b16 %v191
      %v675 = vunpack.c.l.b16 %v192
      %v676 = vunpack.c.l.b16 %v193
      %v677 = vunpack.c.h.b16 %v193
      %v678 = vunpack.c.l.b16 %v194
      %v679 = vunpack.c.h.b16 %v194
      %v680 = vunpack.c.l.b16 %v195
      %v681 = vunpack.c.h.b16 %v195
      %v682 = vunpack.c.l.b16 %v196
      %v683 = vunpack.c.h.b16 %v196
      %v684 = vunpack.c.l.b16 %v197
      %v685 = vunpack.c.l.b16 %v198
      %v686 = vunpack.c.h.b16 %v198
      %v687 = vunpack.c.l.b16 %v199
      %v688 = vunpack.c.h.b16 %v199
      %v689 = vunpack.c.l.b16 %v200
      %v690 = vunpack.c.h.b16 %v200
      %v691 = vunpack.c.l.b16 %v201
      %v692 = vunpack.c.h.b16 %v201
      %v693 = vunpack.c.l.b16 %v202
      %v694 = vunpack.c.l.b16 %v203
      %v695 = vunpack.c.h.b16 %v203
      %v696 = vunpack.c.l.b16 %v204
      %v697 = vunpack.c.h.b16 %v204
      %v698 = vunpack.c.l.b16 %v205
      %v699 = vunpack.c.h.b16 %v205
      %v700 = vunpack.c.l.b16 %v206
      %v701 = vunpack.c.h.b16 %v206
      %v702 = vunpack.c.l.b16 %v207
      %v703 = vunpack.c.l.b16 %v208
      %v704 = vunpack.c.h.b16 %v208
      %v705 = vunpack.c.l.b16 %v209
      %v706 = vunpack.c.h.b16 %v209
      %v707 = vunpack.c.l.b16 %v210
      %v708 = vunpack.c.h.b16 %v210
      %v709 = vunpack.c.l.b16 %v211
      %v710 = vunpack.c.h.b16 %v211
      %v711 = vunpack.c.l.b16 %v212
      %v712 = vunpack.c.l.b16 %v213
      %v713 = vunpack.c.h.b16 %v213
      %v714 = vunpack.c.l.b16 %v214
      %v715 = vunpack.c.h.b16 %v214
      %v716 = vunpack.c.l.b16 %v215
      %v717 = vunpack.c.h.b16 %v215
      %v718 = vunpack.c.l.b16 %v216
      %v719 = vunpack.c.h.b16 %v216
      %v720 = vunpack.c.l.b16 %v217
      %v721 = vunpack.c.l.b16 %v218
      %v722 = vunpack.c.h.b16 %v218
      %v723 = vunpack.c.l.b16 %v219
      %v724 = vunpack.c.h.b16 %v219
      %v725 = vunpack.c.l.b16 %v220
      %v726 = vunpack.c.h.b16 %v220
      %v727 = vunpack.c.l.b16 %v221
      %v728 = vunpack.c.h.b16 %v221
      %v729 = vunpack.c.l.b16 %v222
      %v730 = vunpack.c.l.b16 %v223
      %v731 = vunpack.c.h.b16 %v223
      %v732 = vunpack.c.l.b16 %v224
      %v733 = vunpack.c.h.b16 %v224
      %v734 = vunpack.c.l.b16 %v225
      %v735 = vunpack.c.h.b16 %v225
      %v736 = vunpack.c.l.b16 %v226
      %v737 = vunpack.c.h.b16 %v226
      %v738 = vunpack.c.l.b16 %v227
      %v739 = vunpack.c.l.b16 %v228
      %v740 = vunpack.c.h.b16 %v228
      %v741 = vunpack.c.l.b16 %v229
      %v742 = vunpack.c.h.b16 %v229
      %v743 = vunpack.c.l.b16 %v230
      %v744 = vunpack.c.h.b16 %v230
      %v745 = vunpack.c.l.b16 %v231
      %v746 = vunpack.c.h.b16 %v231
      %v747 = vunpack.c.l.b16 %v232
      %v748 = vunpack.c.l.b16 %v233
      %v749 = vunpack.c.h.b16 %v233
      %v750 = vunpack.c.l.b16 %v234
      %v751 = vunpack.c.h.b16 %v234
      %v752 = vunpack.c.l.b16 %v235
      %v753 = vunpack.c.h.b16 %v235
      %v754 = vunpack.c.l.b16 %v236
      %v755 = vunpack.c.h.b16 %v236
      %v756 = vunpack.c.l.b16 %v237
      %v757 = vunpack.c.l.b16 %v238
      %v758 = vunpack.c.h.b16 %v238
      %v759 = vunpack.c.l.b16 %v239
      %v760 = vunpack.c.h.b16 %v239
      %v761 = vunpack.c.l.b16 %v240
      %v762 = vunpack.c.h.b16 %v240
      %v763 = vunpack.c.l.b16 %v241
      %v764 = vunpack.c.h.b16 %v241
      %v765 = vunpack.c.l.b16 %v242
      %v766 = vunpack.c.l.b16 %v243
      %v767 = vunpack.c.h.b16 %v243
      %v768 = vunpack.c.l.b16 %v244
      %v769 = vunpack.c.h.b16 %v244
      %v770 = vunpack.c.l.b16 %v245
      %v771 = vunpack.c.h.b16 %v245
      %v772 = vunpack.c.l.b16 %v246
      %v773 = vunpack.c.h.b16 %v246
      %v774 = vunpack.c.l.b16 %v247
      %v775 = vunpack.c.l.b16 %v248
      %v776 = vunpack.c.h.b16 %v248
      %v777 = vunpack.c.l.b16 %v249
      %v778 = vunpack.c.h.b16 %v249
      %v779 = vunpack.c.l.b16 %v250
      %v780 = vunpack.c.h.b16 %v250
      %v781 = vunpack.c.l.b16 %v251
      %v782 = vunpack.c.h.b16 %v251
      %v783 = vunpack.c.l.b16 %v252
      %v784 = vunpack.c.l.b16 %v253
      %v785 = vunpack.c.h.b16 %v253
      %v786 = vunpack.c.l.b16 %v254
      %v787 = vunpack.c.h.b16 %v254
      %v788 = vunpack.c.l.b16 %v255
      %v789 = vunpack.c.h.b16 %v255
      %v790 = vunpack.c.l.b16 %v256
      %v791 = vunpack.c.h.b16 %v256
      %v792 = vunpack.c.l.b16 %v257
      %v793 = vunpack.c.l.b16 %v258
      %v794 = vunpack.c.h.b16 %v258
      %v795 = vunpack.c.l.b16 %v259
      %v796 = vunpack.c.h.b16 %v259
      %v797 = vunpack.c.l.b16 %v260
      %v798 = vunpack.c.h.b16 %v260
      %v799 = vunpack.c.l.b16 %v261
      %v800 = vunpack.c.h.b16 %v261
      %v801 = vunpack.c.l.b16 %v262
      %v802 = vunpack.c.l.b16 %v263
      %v803 = vunpack.c.h.b16 %v263
      %v804 = vunpack.c.l.b16 %v264
      %v805 = vunpack.c.h.b16 %v264
      %v806 = vunpack.c.l.b16 %v265
      %v807 = vunpack.c.h.b16 %v265
      %v808 = vunpack.c.l.b16 %v266
      %v809 = vunpack.c.h.b16 %v266
      %v810 = vunpack.c.l.b16 %v267
      %v811 = vunpack.c.l.b16 %v268
      %v812 = vunpack.c.h.b16 %v268
      %v813 = vunpack.c.l.b16 %v269
      %v814 = vunpack.c.h.b16 %v269
      %v815 = vunpack.c.l.b16 %v270
      %v816 = vunpack.c.h.b16 %v270
      %v817 = vunpack.c.l.b16 %v271
      %v818 = vunpack.c.h.b16 %v271
      %v819 = vunpack.c.l.b16 %v272
      %v820 = vunpack.c.l.b16 %v273
      %v821 = vunpack.c.h.b16 %v273
      %v822 = vunpack.c.l.b16 %v274
      %v823 = vunpack.c.h.b16 %v274
      %v824 = vunpack.c.l.b16 %v275
      %v825 = vunpack.c.h.b16 %v275
      %v826 = vunpack.c.l.b16 %v276
      %v827 = vunpack.c.h.b16 %v276
      %v828 = vunpack.c.l.b16 %v277
      %v829 = vunpack.c.l.b16 %v278
      %v830 = vunpack.c.h.b16 %v278
      %v831 = vunpack.c.l.b16 %v279
      %v832 = vunpack.c.h.b16 %v279
      %v833 = vunpack.c.l.b16 %v280
      %v834 = vunpack.c.h.b16 %v280
      %v835 = vunpack.c.l.b16 %v281
      %v836 = vunpack.c.h.b16 %v281
      %v837 = vunpack.c.l.b16 %v282
      %v838 = vunpack.c.l.b16 %v283
      %v839 = vunpack.c.h.b16 %v283
      %v840 = vunpack.c.l.b16 %v284
      %v841 = vunpack.c.h.b16 %v284
      %v842 = vunpack.c.l.b16 %v285
      %v843 = vunpack.c.h.b16 %v285
      %v844 = vunpack.c.l.b16 %v286
      %v845 = vunpack.c.h.b16 %v286
      %v846 = vunpack.c.l.b16 %v287
      %v847 = vunpack.c.l.b16 %v288
      %v848 = vunpack.c.h.b16 %v288
      %v849 = vunpack.c.l.b16 %v289
      %v850 = vunpack.c.h.b16 %v289
      %v851 = vunpack.c.l.b16 %v290
      %v852 = vunpack.c.h.b16 %v290
      %v853 = vunpack.c.l.b16 %v291
      %v854 = vunpack.c.h.b16 %v291
      %v855 = vunpack.c.l.b16 %v292
      %v856 = vunpack.c.l.b16 %v293
      %v857 = vunpack.c.h.b16 %v293
      %v858 = vunpack.c.l.b16 %v294
      %v859 = vunpack.c.h.b16 %v294
      %v860 = vunpack.c.l.b16 %v295
      %v861 = vunpack.c.h.b16 %v295
      %v862 = vunpack.c.l.b16 %v296
      %v863 = vunpack.c.h.b16 %v296
      %v864 = vunpack.c.l.b16 %v297
      %v865 = vunpack.c.l.b16 %v298
      %v866 = vunpack.c.h.b16 %v298
      %v867 = vunpack.c.l.b16 %v299
      %v868 = vunpack.c.h.b16 %v299
      %v869 = vunpack.c.l.b16 %v300
      %v870 = vunpack.c.h.b16 %v300
      %v871 = vunpack.c.l.b16 %v301
      %v872 = vunpack.c.h.b16 %v301
      %v873 = vunpack.c.l.b16 %v302
      %v874 = vunpack.c.l.b16 %v303
      %v875 = vunpack.c.h.b16 %v303
      %v876 = vunpack.c.l.b16 %v304
      %v877 = vunpack.c.h.b16 %v304
      %v878 = vunpack.c.l.b16 %v305
      %v879 = vunpack.c.h.b16 %v305
      %v880 = vunpack.c.l.b16 %v306
      %v881 = vunpack.c.h.b16 %v306
      %v882 = vunpack.c.l.b16 %v307
      %v883 = vunpack.c.l.b16 %v308
      %v884 = vunpack.c.h.b16 %v308
      %v885 = vunpack.c.l.b16 %v309
      %v886 = vunpack.c.h.b16 %v309
      %v887 = vunpack.c.l.b16 %v310
      %v888 = vunpack.c.h.b16 %v310
      %v889 = vunpack.c.l.b16 %v311
      %v890 = vunpack.c.h.b16 %v311
      %v891 = vunpack.c.l.b16 %v312
      %v892 = vunpack.c.l.b16 %v313
      %v893 = vunpack.c.h.b16 %v313
      %v894 = vunpack.c.l.b16 %v314
      %v895 = vunpack.c.h.b16 %v314
      %v896 = vunpack.c.l.b16 %v315
      %v897 = vunpack.c.h.b16 %v315
      %v898 = vunpack.c.l.b16 %v316
      %v899 = vunpack.c.h.b16 %v316
      %v900 = vunpack.c.l.b16 %v317
      %v901 = vunpack.c.l.b16 %v318
      %v902 = vunpack.c.h.b16 %v318
      %v903 = vunpack.c.l.b16 %v319
      %v904 = vunpack.c.h.b16 %v319
      %v905 = vunpack.c.l.b16 %v320
      %v906 = vunpack.c.h.b16 %v320
      %v907 = vunpack.c.l.b16 %v321
      %v908 = vunpack.c.h.b16 %v321
      %v909 = vunpack.c.l.b16 %v322
      %v910 = vunpack.c.l.b16 %v323
      %v911 = vunpack.c.h.b16 %v323
      %v912 = vunpack.c.l.b16 %v324
      %v913 = vunpack.c.h.b16 %v324
      %v914 = vunpack.c.l.b16 %v325
      %v915 = vunpack.c.h.b16 %v325
      %v916 = vunpack.c.l.b16 %v326
      %v917 = vunpack.c.h.b16 %v326
      %v918 = vunpack.c.l.b16 %v327
      %v919 = vunpack.c.l.b16 %v328
      %v920 = vunpack.c.h.b16 %v328
      %v921 = vunpack.c.l.b16 %v329
      %v922 = vunpack.c.h.b16 %v329
      %v923 = vunpack.c.l.b16 %v330
      %v924 = vunpack.c.h.b16 %v330
      %v925 = vunpack.c.l.b16 %v331
      %v926 = vunpack.c.h.b16 %v331
      %v927 = vunpack.c.l.b16 %v332
      %v928 = vunpack.c.l.b16 %v333
      %v929 = vunpack.c.h.b16 %v333
      %v930 = vunpack.c.l.b16 %v334
      %v931 = vunpack.c.h.b16 %v334
      %v932 = vunpack.c.l.b16 %v335
      %v933 = vunpack.c.h.b16 %v335
      %v934 = vunpack.c.l.b16 %v336
      %v935 = vunpack.c.h.b16 %v336
      %v936 = vunpack.c.l.b16 %v337
      %v937 = vpack.c.b16 %v658, %v649
      %v938 = vpack.c.b16 %v659, %v650
      %v939 = vpack.c.b16 %v660, %v651
      %v940 = vpack.c.b16 %v661, %v652
      %v941 = vpack.c.b16 %v662, %v653
      %v942 = vpack.c.b16 %v663, %v654
      %v943 = vpack.c.b16 %v664, %v655
      %v944 = vpack.c.b16 %v665, %v656
      %v945 = vpack.c.b16 %v666, %v657
      %v946 = vpack.c.b16 %v676, %v667
      %v947 = vpack.c.b16 %v677, %v668
      %v948 = vpack.c.b16 %v678, %v669
      %v949 = vpack.c.b16 %v679, %v670
      %v950 = vpack.c.b16 %v680, %v671
      %v951 = vpack.c.b16 %v681, %v672
      %v952 = vpack.c.b16 %v682, %v673
      %v953 = vpack.c.b16 %v683, %v674
      %v954 = vpack.c.b16 %v684, %v675
      %v955 = vpack.c.b16 %v694, %v685
      %v956 = vpack.c.b16 %v695, %v686
      %v957 = vpack.c.b16 %v696, %v687
      %v958 = vpack.c.b16 %v697, %v688
      %v959 = vpack.c.b16 %v698, %v689
      %v960 = vpack.c.b16 %v699, %v690
      %v961 = vpack.c.b16 %v700, %v691
      %v962 = vpack.c.b16 %v701, %v692
      %v963 = vpack.c.b16 %v702, %v693
      %v964 = vpack.c.b16 %v712, %v703
      %v965 = vpack.c.b16 %v713, %v704
      %v966 = vpack.c.b16 %v714, %v705
      %v967 = vpack.c.b16 %v715, %v706
      %v968 = vpack.c.b16 %v716, %v707
      %v969 = vpack.c.b16 %v717, %v708
      %v970 = vpack.c.b16 %v718, %v709
      %v971 = vpack.c.b16 %v719, %v710
      %v972 = vpack.c.b16 %v720, %v711
      %v973 = vpack.c.b16 %v730, %v721
      %v974 = vpack.c.b16 %v731, %v722
      %v975 = vpack.c.b16 %v732, %v723
      %v976 = vpack.c.b16 %v733, %v724
      %v977 = vpack.c.b16 %v734, %v725
      %v978 = vpack.c.b16 %v735, %v726
      %v979 = vpack.c.b16 %v736, %v727
      %v980 = vpack.c.b16 %v737, %v728
      %v981 = vpack.c.b16 %v738, %v729
      %v982 = vpack.c.b16 %v748, %v739
      %v983 = vpack.c.b16 %v749, %v740
      %v984 = vpack.c.b16 %v750, %v741
      %v985 = vpack.c.b16 %v751, %v742
      %v986 = vpack.c.b16 %v752, %v743
      %v987 = vpack.c.b16 %v753, %v744
      %v988 = vpack.c.b16 %v754, %v745
      %v989 = vpack.c.b16 %v755, %v746
      %v990 = vpack.c.b16 %v756, %v747
      %v991 = vpack.c.b16 %v766, %v757
      %v992 = vpack.c.b16 %v767, %v758
      %v993 = vpack.c.b16 %v768, %v759
      %v994 = vpack.c.b16 %v769, %v760
      %v995 = vpack.c.b16 %v770, %v761
      %v996 = vpack.c.b16 %v771, %v762
      %v997 = vpack.c.b16 %v772, %v763
      %v998 = vpack.c.b16 %v773, %v764
      %v999 = vpack.c.b16 %v774, %v765
      %v1000 = vpack.c.b16 %v784, %v775
      %v1001 = vpack.c.b16 %v785, %v776
      %v1002 = vpack.c.b16 %v786, %v777
      %v1003 = vpack.c.b16 %v787, %v778
      %v1004 = vpack.c.b16 %v788, %v779
      %v1005 = vpack.c.b16 %v789, %v780
      %v1006 = vpack.c.b16 %v790, %v781
      %v1007 = vpack.c.b16 %v791, %v782
      %v1008 = vpack.c.b16 %v792, %v783
      %v1009 = vpack.c.b16 %v802, %v793
      %v1010 = vpack.c.b16 %v803, %v794
      %v1011 = vpack.c.b16 %v804, %v795
      %v1012 = vpack.c.b16 %v805, %v796
      %v1013 = vpack.c.b16 %v806, %v797
      %v1014 = vpack.c.b16 %v807, %v798
      %v1015 = vpack.c.b16 %v808, %v799
      %v1016 = vpack.c.b16 %v809, %v800
      %v1017 = vpack.c.b16 %v810, %v801
      %v1018 = vpack.c.b16 %v820, %v811
      %v1019 = vpack.c.b16 %v821, %v812
      %v1020 = vpack.c.b16 %v822, %v813
      %v1021 = vpack.c.b16 %v823, %v814
      %v1022 = vpack.c.b16 %v824, %v815
      %v1023 = vpack.c.b16 %v825, %v816
      %v1024 = vpack.c.b16 %v826, %v817
      %v1025 = vpack.c.b16 %v827, %v818
      %v1026 = vpack.c.b16 %v828, %v819
      %v1027 = vpack.c.b16 %v838, %v829
      %v1028 = vpack.c.b16 %v839, %v830
      %v1029 = vpack.c.b16 %v840, %v831
      %v1030 = vpack.c.b16 %v841, %v832
      %v1031 = vpack.c.b16 %v842, %v833
      %v1032 = vpack.c.b16 %v843, %v834
      %v1033 = vpack.c.b16 %v844, %v835
      %v1034 = vpack.c.b16 %v845, %v836
      %v1035 = vpack.c.b16 %v846, %v837
      %v1036 = vpack.c.b16 %v856, %v847
      %v1037 = vpack.c.b16 %v857, %v848
      %v1038 = vpack.c.b16 %v858, %v849
      %v1039 = vpack.c.b16 %v859, %v850
      %v1040 = vpack.c.b16 %v860, %v851
      %v1041 = vpack.c.b16 %v861, %v852
      %v1042 = vpack.c.b16 %v862, %v853
      %v1043 = vpack.c.b16 %v863, %v854
      %v1044 = vpack.c.b16 %v864, %v855
      %v1045 = vpack.c.b16 %v874, %v865
      %v1046 = vpack.c.b16 %v875, %v866
      %v1047 = vpack.c.b16 %v876, %v867
      %v1048 = vpack.c.b16 %v877, %v868
      %v1049 = vpack.c.b16 %v878, %v869
      %v1050 = vpack.c.b16 %v879, %v870
      %v1051 = vpack.c.b16 %v880, %v871
      %v1052 = vpack.c.b16 %v881, %v872
      %v1053 = vpack.c.b16 %v882, %v873
      %v1054 = vpack.c.b16 %v892, %v883
      %v1055 = vpack.c.b16 %v893, %v884
      %v1056 = vpack.c.b16 %v894, %v885
      %v1057 = vpack.c.b16 %v895, %v886
      %v1058 = vpack.c.b16 %v896, %v887
      %v1059 = vpack.c.b16 %v897, %v888
      %v1060 = vpack.c.b16 %v898, %v889
      %v1061 = vpack.c.b16 %v899, %v890
      %v1062 = vpack.c.b16 %v900, %v891
      %v1063 = vpack.c.b16 %v910, %v901
      %v1064 = vpack.c.b16 %v911, %v902
      %v1065 = vpack.c.b16 %v912, %v903
      %v1066 = vpack.c.b16 %v913, %v904
      %v1067 = vpack.c.b16 %v914, %v905
      %v1068 = vpack.c.b16 %v915, %v906
      %v1069 = vpack.c.b16 %v916, %v907
      %v1070 = vpack.c.b16 %v917, %v908
      %v1071 = vpack.c.b16 %v918, %v909
      %v1072 = vpack.c.b16 %v928, %v919
      %v1073 = vpack.c.b16 %v929, %v920
      %v1074 = vpack.c.b16 %v930, %v921
      %v1075 = vpack.c.b16 %v931, %v922
      %v1076 = vpack.c.b16 %v932, %v923
      %v1077 = vpack.c.b16 %v933, %v924
      %v1078 = vpack.c.b16 %v934, %v925
      %v1079 = vpack.c.b16 %v935, %v926
      %v1080 = vpack.c.b16 %v936, %v927
      %v1369 = vunpack.c.l.b16 %v338
      %v1370 = vunpack.c.l.b16 %v339
      %v1371 = vunpack.c.l.b16 %v340
      %v1372 = vunpack.c.l.b16 %v341
      %v1373 = vunpack.c.l.b16 %v342
      %v1374 = vunpack.c.l.b16 %v343
      %v1375 = vunpack.c.l.b16 %v344
      %v1376 = vunpack.c.l.b16 %v345
      %v1377 = vunpack.c.l.b16 %v346
      %v1378 = vunpack.c.l.b16 %v347
      %v1379 = vunpack.c.l.b16 %v348
      %v1380 = vunpack.c.l.b16 %v349
      %v1381 = vunpack.c.l.b16 %v350
      %v1382 = vunpack.c.l.b16 %v351
      %v1383 = vunpack.c.l.b16 %v352
      %v1384 = vunpack.c.l.b16 %v353
      %v1385 = vunpack.c.l.b16 %v354
      %v1386 = vunpack.c.l.b16 %v355
      %v1387 = vunpack.c.l.b16 %v356
      %v1388 = vunpack.c.l.b16 %v357
      %v1389 = vunpack.c.l.b16 %v358
      %v1390 = vunpack.c.l.b16 %v359
      %v1391 = vunpack.c.l.b16 %v360
      %v1392 = vunpack.c.l.b16 %v361
      %v1393 = vunpack.c.l.b16 %v362
      %v1394 = vunpack.c.l.b16 %v363
      %v1395 = vunpack.c.l.b16 %v364
      %v1396 = vunpack.c.l.b16 %v365
      %v1397 = vunpack.c.l.b16 %v366
      %v1398 = vunpack.c.l.b16 %v367
      %v1399 = vunpack.c.l.b16 %v368
      %v1400 = vunpack.c.l.b16 %v369
      %v1401 = vunpack.c.l.b16 %v370
      %v1402 = vunpack.c.l.b16 %v371
      %v1403 = vunpack.c.l.b16 %v372
      %v1404 = vunpack.c.l.b16 %v373
      %v1405 = vunpack.c.l.b16 %v374
      %v1406 = vunpack.c.l.b16 %v375
      %v1407 = vunpack.c.l.b16 %v376
      %v1408 = vunpack.c.l.b16 %v377
      %v1409 = vunpack.c.l.b16 %v378
      %v1410 = vunpack.c.l.b16 %v379
      %v1411 = vunpack.c.l.b16 %v380
      %v1412 = vunpack.c.l.b16 %v381
      %v1413 = vunpack.c.l.b16 %v382
      %v1414 = vunpack.c.l.b16 %v383
      %v1415 = vunpack.c.l.b16 %v384
      %v1416 = vunpack.c.l.b16 %v385
      %v1417 = vunpack.c.l.b16 %v386
      %v1418 = vunpack.c.l.b16 %v387
      %v1419 = vunpack.c.l.b16 %v388
      %v1420 = vunpack.c.l.b16 %v389
      %v1421 = vunpack.c.l.b16 %v390
      %v1422 = vunpack.c.l.b16 %v391
      %v1423 = vunpack.c.l.b16 %v392
      %v1424 = vunpack.c.l.b16 %v393
      %v1425 = vunpack.c.l.b16 %v394
      %v1426 = vunpack.c.l.b16 %v395
      %v1427 = vunpack.c.l.b16 %v396
      %v1428 = vunpack.c.l.b16 %v397
      %v1429 = vunpack.c.l.b16 %v398
      %v1430 = vunpack.c.l.b16 %v399
      %v1431 = vunpack.c.l.b16 %v400
      %v1432 = vunpack.c.l.b16 %v401
      %v1433 = vunpack.c.l.b16 %v402
      %v1434 = vunpack.c.l.b16 %v403
      %v1435 = vunpack.c.l.b16 %v404
      %v1436 = vunpack.c.l.b16 %v405
      %v1437 = vunpack.c.l.b16 %v406
      %v1438 = vunpack.c.l.b16 %v407
      %v1439 = vunpack.c.l.b16 %v408
      %v1440 = vunpack.c.l.b16 %v409
      %v1441 = vunpack.c.l.b16 %v410
      %v1442 = vunpack.c.l.b16 %v411
      %v1443 = vunpack.c.l.b16 %v412
      %v1444 = vunpack.c.l.b16 %v413
      %v1445 = vunpack.c.l.b16 %v414
      %v1446 = vunpack.c.l.b16 %v415
      %v1447 = vunpack.c.l.b16 %v416
      %v1448 = vunpack.c.l.b16 %v417
      %v1449 = vunpack.c.l.b16 %v418
      %v1450 = vunpack.c.l.b16 %v419
      %v1451 = vunpack.c.l.b16 %v420
      %v1452 = vunpack.c.l.b16 %v421
      %v1453 = vunpack.c.l.b16 %v422
      %v1454 = vunpack.c.l.b16 %v423
      %v1455 = vunpack.c.l.b16 %v424
      %v1456 = vunpack.c.l.b16 %v425
      %v1457 = vunpack.c.l.b16 %v426
      %v1458 = vunpack.c.l.b16 %v427
      %v1459 = vunpack.c.l.b16 %v428
      %v1460 = vunpack.c.l.b16 %v429
      %v1461 = vunpack.c.l.b16 %v430
      %v1462 = vunpack.c.l.b16 %v431
      %v1463 = vunpack.c.l.b16 %v432
      %v1464 = vunpack.c.l.b16 %v433
      %v1465 = vunpack.c.l.b16 %v434
      %v1466 = vunpack.c.l.b16 %v435
      %v1467 = vunpack.c.l.b16 %v436
      %v1468 = vunpack.c.l.b16 %v437
      %v1469 = vunpack.c.l.b16 %v438
      %v1470 = vunpack.c.l.b16 %v439
      %v1471 = vunpack.c.l.b16 %v440
      %v1472 = vunpack.c.l.b16 %v441
      %v1473 = vunpack.c.l.b16 %v442
      %v1474 = vunpack.c.l.b16 %v443
      %v1475 = vunpack.c.l.b16 %v444
      %v1476 = vunpack.c.l.b16 %v445
      %v1477 = vunpack.c.l.b16 %v446
      %v1478 = vunpack.c.l.b16 %v447
      %v1479 = vunpack.c.l.b16 %v448
      %v1480 = vunpack.c.l.b16 %v449
      %v1481 = vunpack.c.l.b16 %v450
      %v1482 = vunpack.c.l.b16 %v451
      %v1483 = vunpack.c.l.b16 %v452
      %v1484 = vunpack.c.l.b16 %v453
      %v1485 = vunpack.c.l.b16 %v454
      %v1486 = vunpack.c.l.b16 %v455
      %v1487 = vunpack.c.l.b16 %v456
      %v1488 = vunpack.c.l.b16 %v457
      %v1489 = vunpack.c.l.b16 %v458
      %v1490 = vunpack.c.l.b16 %v459
      %v1491 = vunpack.c.l.b16 %v460
      %v1492 = vunpack.c.l.b16 %v461
      %v1493 = vunpack.c.l.b16 %v462
      %v1494 = vunpack.c.l.b16 %v463
      %v1495 = vunpack.c.l.b16 %v464
      %v1496 = vunpack.c.l.b16 %v465
      %v1497 = vunpack.c.l.b16 %v466
      %v1498 = vunpack.c.l.b16 %v467
      %v1499 = vunpack.c.l.b16 %v468
      %v1500 = vunpack.c.l.b16 %v469
      %v1501 = vunpack.c.l.b16 %v470
      %v1502 = vunpack.c.l.b16 %v471
      %v1503 = vunpack.c.l.b16 %v472
      %v1504 = vunpack.c.l.b16 %v473
      %v1505 = vunpack.c.l.b16 %v474
      %v1506 = vunpack.c.l.b16 %v475
      %v1507 = vunpack.c.l.b16 %v476
      %v1508 = vunpack.c.l.b16 %v477
      %v1509 = vunpack.c.l.b16 %v478
      %v1510 = vunpack.c.l.b16 %v479
      %v1511 = vunpack.c.l.b16 %v480
      %v1512 = vunpack.c.l.b16 %v481
      %v1513 = vpack.c.b16 %v1370, %v1369
      %v1514 = vpack.c.b16 %v1372, %v1371
      %v1515 = vpack.c.b16 %v1374, %v1373
      %v1516 = vpack.c.b16 %v1376, %v1375
      %v1517 = vpack.c.b16 %v1378, %v1377
      %v1518 = vpack.c.b16 %v1380, %v1379
      %v1519 = vpack.c.b16 %v1382, %v1381
      %v1520 = vpack.c.b16 %v1384, %v1383
      %v1521 = vpack.c.b16 %v1386, %v1385
      %v1522 = vpack.c.b16 %v1388, %v1387
      %v1523 = vpack.c.b16 %v1390, %v1389
      %v1524 = vpack.c.b16 %v1392, %v1391
      %v1525 = vpack.c.b16 %v1394, %v1393
      %v1526 = vpack.c.b16 %v1396, %v1395
      %v1527 = vpack.c.b16 %v1398, %v1397
      %v1528 = vpack.c.b16 %v1400, %v1399
      %v1529 = vpack.c.b16 %v1402, %v1401
      %v1530 = vpack.c.b16 %v1404, %v1403
      %v1531 = vpack.c.b16 %v1406, %v1405
      %v1532 = vpack.c.b16 %v1408, %v1407
      %v1533 = vpack.c.b16 %v1410, %v1409
      %v1534 = vpack.c.b16 %v1412, %v1411
      %v1535 = vpack.c.b16 %v1414, %v1413
      %v1536 = vpack.c.b16 %v1416, %v1415
      %v1537 = vpack.c.b16 %v1418, %v1417
      %v1538 = vpack.c.b16 %v1420, %v1419
      %v1539 = vpack.c.b16 %v1422, %v1421
      %v1540 = vpack.c.b16 %v1424, %v1423
      %v1541 = vpack.c.b16 %v1426, %v1425
      %v1542 = vpack.c.b16 %v1428, %v1427
      %v1543 = vpack.c.b16 %v1430, %v1429
      %v1544 = vpack.c.b16 %v1432, %v1431
      %v1545 = vpack.c.b16 %v1434, %v1433
      %v1546 = vpack.c.b16 %v1436, %v1435
      %v1547 = vpack.c.b16 %v1438, %v1437
      %v1548 = vpack.c.b16 %v1440, %v1439
      %v1549 = vpack.c.b16 %v1442, %v1441
      %v1550 = vpack.c.b16 %v1444, %v1443
      %v1551 = vpack.c.b16 %v1446, %v1445
      %v1552 = vpack.c.b16 %v1448, %v1447
      %v1553 = vpack.c.b16 %v1450, %v1449
      %v1554 = vpack.c.b16 %v1452, %v1451
      %v1555 = vpack.c.b16 %v1454, %v1453
      %v1556 = vpack.c.b16 %v1456, %v1455
      %v1557 = vpack.c.b16 %v1458, %v1457
      %v1558 = vpack.c.b16 %v1460, %v1459
      %v1559 = vpack.c.b16 %v1462, %v1461
      %v1560 = vpack.c.b16 %v1464, %v1463
      %v1561 = vpack.c.b16 %v1466, %v1465
      %v1562 = vpack.c.b16 %v1468, %v1467
      %v1563 = vpack.c.b16 %v1470, %v1469
      %v1564 = vpack.c.b16 %v1472, %v1471
      %v1565 = vpack.c.b16 %v1474, %v1473
      %v1566 = vpack.c.b16 %v1476, %v1475
      %v1567 = vpack.c.b16 %v1478, %v1477
      %v1568 = vpack.c.b16 %v1480, %v1479
      %v1569 = vpack.c.b16 %v1482, %v1481
      %v1570 = vpack.c.b16 %v1484, %v1483
      %v1571 = vpack.c.b16 %v1486, %v1485
      %v1572 = vpack.c.b16 %v1488, %v1487
      %v1573 = vpack.c.b16 %v1490, %v1489
      %v1574 = vpack.c.b16 %v1492, %v1491
      %v1575 = vpack.c.b16 %v1494, %v1493
      %v1576 = vpack.c.b16 %v1496, %v1495
      %v1577 = vpack.c.b16 %v1498, %v1497
      %v1578 = vpack.c.b16 %v1500, %v1499
      %v1579 = vpack.c.b16 %v1502, %v1501
      %v1580 = vpack.c.b16 %v1504, %v1503
      %v1581 = vpack.c.b16 %v1506, %v1505
      %v1582 = vpack.c.b16 %v1508, %v1507
      %v1583 = vpack.c.b16 %v1510, %v1509
      %v1584 = vpack.c.b16 %v1512, %v1511
      %1657 = vmatprep.subr.bf16.mxu0 0
      %1658 = vmatpush1.bf16.msra.mxu0 %v1513
      %1659 = vmatprep.subr.bf16.mxu0 0
      %1660 = vmatpush1.bf16.msra.mxu0 %v1514
      %1661 = vmatprep.subr.bf16.mxu0 0
      %1662 = vmatpush1.bf16.msra.mxu0 %v1515
      %1663 = vmatprep.subr.bf16.mxu0 0
      %1664 = vmatpush1.bf16.msra.mxu0 %v1516
      %1665 = vmatprep.subr.bf16.mxu0 0
      %1666 = vmatpush1.bf16.msra.mxu0 %v1517
      %1667 = vmatprep.subr.bf16.mxu0 0
      %1668 = vmatpush1.bf16.msra.mxu0 %v1518
      %1669 = vmatprep.subr.bf16.mxu0 0
      %1670 = vmatpush1.bf16.msra.mxu0 %v1519
      %1671 = vmatprep.subr.bf16.mxu0 0
      %1672 = vmatpush1.bf16.msra.mxu0 %v1520
      %1673 = vmatprep.subr.bf16.mxu0 0
      %1674 = vmatpush1.bf16.msra.mxu0 %v1521
      %1675 = vmatprep.subr.bf16.mxu0 0
      %1676 = vmatpush1.bf16.msra.mxu0 %v1522
      %1677 = vmatprep.subr.bf16.mxu0 0
      %1678 = vmatpush1.bf16.msra.mxu0 %v1523
      %1679 = vmatprep.subr.bf16.mxu0 0
      %1680 = vmatpush1.bf16.msra.mxu0 %v1524
      %1681 = vmatprep.subr.bf16.mxu0 0
      %1682 = vmatpush1.bf16.msra.mxu0 %v1525
      %1683 = vmatprep.subr.bf16.mxu0 0
      %1684 = vmatpush1.bf16.msra.mxu0 %v1526
      %1685 = vmatprep.subr.bf16.mxu0 0
      %1686 = vmatpush1.bf16.msra.mxu0 %v1527
      %1687 = vmatprep.subr.bf16.mxu0 0
      %1688 = vmatpush1.bf16.msra.mxu0 %v1528
      %1689 = vmatprep.mubr.bf16.mxu0 %v938
      %1690 = vmatmul.mubr.bf16.gmra.mrb[0].mxu0 %v937
      %v1691 = vpop.f32.mrb[0].mxu0
      %v1692 = vadd.f32 %v487, %v1691
      %v1693 = vpop.f32.mrb[0].mxu0
      %v1694 = vpop.f32.mrb[0].mxu0
      %v1695 = vadd.f32 %v487, %v1694
      %v1696 = vpop.f32.mrb[0].mxu0
      %1697 = vmatprep.mubr.bf16.mxu0 %v947
      %1698 = vmatmul.mubr.bf16.gmra.mrb[0].mxu0 %v946
      %v1699 = vpop.f32.mrb[0].mxu0
      %v1700 = vadd.f32 %v487, %v1699
      %v1701 = vpop.f32.mrb[0].mxu0
      %v1702 = vpop.f32.mrb[0].mxu0
      %v1703 = vadd.f32 %v487, %v1702
      %v1704 = vpop.f32.mrb[0].mxu0
      %1705 = vmatprep.mubr.bf16.mxu0 %v956
      %1706 = vmatmul.mubr.bf16.gmra.mrb[0].mxu0 %v955
      %v1707 = vpop.f32.mrb[0].mxu0
      %v1708 = vadd.f32 %v487, %v1707
      %v1709 = vpop.f32.mrb[0].mxu0
      %v1710 = vpop.f32.mrb[0].mxu0
      %v1711 = vadd.f32 %v487, %v1710
      %v1712 = vpop.f32.mrb[0].mxu0
      %1713 = vmatprep.mubr.bf16.mxu0 %v965
      %1714 = vmatmul.mubr.bf16.gmra.mrb[0].mxu0 %v964
      %v1715 = vpop.f32.mrb[0].mxu0
      %v1716 = vadd.f32 %v487, %v1715
      %v1717 = vpop.f32.mrb[0].mxu0
      %v1718 = vpop.f32.mrb[0].mxu0
      %v1719 = vadd.f32 %v487, %v1718
      %v1720 = vpop.f32.mrb[0].mxu0
      %1721 = vmatprep.mubr.bf16.mxu0 %v974
      %1722 = vmatmul.mubr.bf16.gmra.mrb[0].mxu0 %v973
      %v1723 = vpop.f32.mrb[0].mxu0
      %v1724 = vadd.f32 %v487, %v1723
      %v1725 = vpop.f32.mrb[0].mxu0
      %v1726 = vpop.f32.mrb[0].mxu0
      %v1727 = vadd.f32 %v487, %v1726
      %v1728 = vpop.f32.mrb[0].mxu0
      %1729 = vmatprep.mubr.bf16.mxu0 %v983
      %1730 = vmatmul.mubr.bf16.gmra.mrb[0].mxu0 %v982
      %v1731 = vpop.f32.mrb[0].mxu0
      %v1732 = vadd.f32 %v487, %v1731
      %v1733 = vpop.f32.mrb[0].mxu0
      %v1734 = vpop.f32.mrb[0].mxu0
      %v1735 = vadd.f32 %v487, %v1734
      %v1736 = vpop.f32.mrb[0].mxu0
      %1737 = vmatprep.mubr.bf16.mxu0 %v992
      %1738 = vmatmul.mubr.bf16.gmra.mrb[0].mxu0 %v991
      %v1739 = vpop.f32.mrb[0].mxu0
      %v1740 = vadd.f32 %v487, %v1739
      %v1741 = vpop.f32.mrb[0].mxu0
      %v1742 = vpop.f32.mrb[0].mxu0
      %v1743 = vadd.f32 %v487, %v1742
      %v1744 = vpop.f32.mrb[0].mxu0
      %1745 = vmatprep.mubr.bf16.mxu0 %v1001
      %1746 = vmatmul.mubr.bf16.gmra.mrb[0].mxu0 %v1000
      %v1747 = vpop.f32.mrb[0].mxu0
      %v1748 = vadd.f32 %v487, %v1747
      %v1749 = vpop.f32.mrb[0].mxu0
      %v1750 = vpop.f32.mrb[0].mxu0
      %v1751 = vadd.f32 %v487, %v1750
      %v1752 = vpop.f32.mrb[0].mxu0
      %1753 = vmatprep.mubr.bf16.mxu0 %v1010
      %1754 = vmatmul.mubr.bf16.gmra.mrb[0].mxu0 %v1009
      %v1755 = vpop.f32.mrb[0].mxu0
      %v1756 = vadd.f32 %v487, %v1755
      %v1757 = vpop.f32.mrb[0].mxu0
      %v1758 = vpop.f32.mrb[0].mxu0
      %v1759 = vadd.f32 %v487, %v1758
      %v1760 = vpop.f32.mrb[0].mxu0
      %1761 = vmatprep.mubr.bf16.mxu0 %v1019
      %1762 = vmatmul.mubr.bf16.gmra.mrb[0].mxu0 %v1018
      %v1763 = vpop.f32.mrb[0].mxu0
      %v1764 = vadd.f32 %v487, %v1763
      %v1765 = vpop.f32.mrb[0].mxu0
      %v1766 = vpop.f32.mrb[0].mxu0
      %v1767 = vadd.f32 %v487, %v1766
      %v1768 = vpop.f32.mrb[0].mxu0
      %1769 = vmatprep.mubr.bf16.mxu0 %v1028
      %1770 = vmatmul.mubr.bf16.gmra.mrb[0].mxu0 %v1027
      %v1771 = vpop.f32.mrb[0].mxu0
      %v1772 = vadd.f32 %v487, %v1771
      %v1773 = vpop.f32.mrb[0].mxu0
      %v1774 = vpop.f32.mrb[0].mxu0
      %v1775 = vadd.f32 %v487, %v1774
      %v1776 = vpop.f32.mrb[0].mxu0
      %1777 = vmatprep.mubr.bf16.mxu0 %v1037
      %1778 = vmatmul.mubr.bf16.gmra.mrb[0].mxu0 %v1036
      %v1779 = vpop.f32.mrb[0].mxu0
      %v1780 = vadd.f32 %v487, %v1779
      %v1781 = vpop.f32.mrb[0].mxu0
      %v1782 = vpop.f32.mrb[0].mxu0
      %v1783 = vadd.f32 %v487, %v1782
      %v1784 = vpop.f32.mrb[0].mxu0
      %1785 = vmatprep.mubr.bf16.mxu0 %v1046
      %1786 = vmatmul.mubr.bf16.gmra.mrb[0].mxu0 %v1045
      %v1787 = vpop.f32.mrb[0].mxu0
      %v1788 = vadd.f32 %v487, %v1787
      %v1789 = vpop.f32.mrb[0].mxu0
      %v1790 = vpop.f32.mrb[0].mxu0
      %v1791 = vadd.f32 %v487, %v1790
      %v1792 = vpop.f32.mrb[0].mxu0
      %1793 = vmatprep.mubr.bf16.mxu0 %v1055
      %1794 = vmatmul.mubr.bf16.gmra.mrb[0].mxu0 %v1054
      %v1795 = vpop.f32.mrb[0].mxu0
      %v1796 = vadd.f32 %v487, %v1795
      %v1797 = vpop.f32.mrb[0].mxu0
      %v1798 = vpop.f32.mrb[0].mxu0
      %v1799 = vadd.f32 %v487, %v1798
      %v1800 = vpop.f32.mrb[0].mxu0
      %1801 = vmatprep.mubr.bf16.mxu0 %v1064
      %1802 = vmatmul.mubr.bf16.gmra.mrb[0].mxu0 %v1063
      %v1803 = vpop.f32.mrb[0].mxu0
      %v1804 = vadd.f32 %v487, %v1803
      %v1805 = vpop.f32.mrb[0].mxu0
      %v1806 = vpop.f32.mrb[0].mxu0
      %v1807 = vadd.f32 %v487, %v1806
      %v1808 = vpop.f32.mrb[0].mxu0
      %1809 = vmatprep.mubr.bf16.mxu0 %v1073
      %1810 = vmatmul.mubr.bf16.gmra.mrb[0].mxu0 %v1072
      %v1811 = vpop.f32.mrb[0].mxu0
      %v1812 = vadd.f32 %v487, %v1811
      %v1813 = vpop.f32.mrb[0].mxu0
      %v1814 = vpop.f32.mrb[0].mxu0
      %v1815 = vadd.f32 %v487, %v1814
      %v1816 = vpop.f32.mrb[0].mxu0
      %1817 = vdwg.mxu0
      %1818 = vmatprep.subr.bf16.mxu0 0
      %1819 = vmatpush1.bf16.msra.mxu0 %v1529
      %1820 = vmatprep.subr.bf16.mxu0 0
      %1821 = vmatpush1.bf16.msra.mxu0 %v1530
      %1822 = vmatprep.subr.bf16.mxu0 0
      %1823 = vmatpush1.bf16.msra.mxu0 %v1531
      %1824 = vmatprep.subr.bf16.mxu0 0
      %1825 = vmatpush1.bf16.msra.mxu0 %v1532
      %1826 = vmatprep.subr.bf16.mxu0 0
      %1827 = vmatpush1.bf16.msra.mxu0 %v1533
      %1828 = vmatprep.subr.bf16.mxu0 0
      %1829 = vmatpush1.bf16.msra.mxu0 %v1534
      %1830 = vmatprep.subr.bf16.mxu0 0
      %1831 = vmatpush1.bf16.msra.mxu0 %v1535
      %1832 = vmatprep.subr.bf16.mxu0 0
      %1833 = vmatpush1.bf16.msra.mxu0 %v1536
      %1834 = vmatprep.subr.bf16.mxu0 0
      %1835 = vmatpush1.bf16.msra.mxu0 %v1537
      %1836 = vmatprep.subr.bf16.mxu0 0
      %1837 = vmatpush1.bf16.msra.mxu0 %v1538
      %1838 = vmatprep.subr.bf16.mxu0 0
      %1839 = vmatpush1.bf16.msra.mxu0 %v1539
      %1840 = vmatprep.subr.bf16.mxu0 0
      %1841 = vmatpush1.bf16.msra.mxu0 %v1540
      %1842 = vmatprep.subr.bf16.mxu0 0
      %1843 = vmatpush1.bf16.msra.mxu0 %v1541
      %1844 = vmatprep.subr.bf16.mxu0 0
      %1845 = vmatpush1.bf16.msra.mxu0 %v1542
      %1846 = vmatprep.subr.bf16.mxu0 0
      %1847 = vmatpush1.bf16.msra.mxu0 %v1543
      %1848 = vmatprep.subr.bf16.mxu0 0
      %1849 = vmatpush1.bf16.msra.mxu0 %v1544
      %1850 = vmatprep.mubr.bf16.mxu0 %v940
      %1851 = vmatmul.mubr.bf16.gmra.mrb[0].mxu0 %v939
      %v1852 = vpop.f32.mrb[0].mxu0
      %v1853 = vadd.f32 %v1692, %v1852
      %v1854 = vpop.f32.mrb[0].mxu0
      %v1855 = vpop.f32.mrb[0].mxu0
      %v1856 = vadd.f32 %v1695, %v1855
      %v1857 = vpop.f32.mrb[0].mxu0
      %1858 = vmatprep.mubr.bf16.mxu0 %v949
      %1859 = vmatmul.mubr.bf16.gmra.mrb[0].mxu0 %v948
      %v1860 = vpop.f32.mrb[0].mxu0
      %v1861 = vadd.f32 %v1700, %v1860
      %v1862 = vpop.f32.mrb[0].mxu0
      %v1863 = vpop.f32.mrb[0].mxu0
      %v1864 = vadd.f32 %v1703, %v1863
      %v1865 = vpop.f32.mrb[0].mxu0
      %1866 = vmatprep.mubr.bf16.mxu0 %v958
      %1867 = vmatmul.mubr.bf16.gmra.mrb[0].mxu0 %v957
      %v1868 = vpop.f32.mrb[0].mxu0
      %v1869 = vadd.f32 %v1708, %v1868
      %v1870 = vpop.f32.mrb[0].mxu0
      %v1871 = vpop.f32.mrb[0].mxu0
      %v1872 = vadd.f32 %v1711, %v1871
      %v1873 = vpop.f32.mrb[0].mxu0
      %1874 = vmatprep.mubr.bf16.mxu0 %v967
      %1875 = vmatmul.mubr.bf16.gmra.mrb[0].mxu0 %v966
      %v1876 = vpop.f32.mrb[0].mxu0
      %v1877 = vadd.f32 %v1716, %v1876
      %v1878 = vpop.f32.mrb[0].mxu0
      %v1879 = vpop.f32.mrb[0].mxu0
      %v1880 = vadd.f32 %v1719, %v1879
      %v1881 = vpop.f32.mrb[0].mxu0
      %1882 = vmatprep.mubr.bf16.mxu0 %v976
      %1883 = vmatmul.mubr.bf16.gmra.mrb[0].mxu0 %v975
      %v1884 = vpop.f32.mrb[0].mxu0
      %v1885 = vadd.f32 %v1724, %v1884
      %v1886 = vpop.f32.mrb[0].mxu0
      %v1887 = vpop.f32.mrb[0].mxu0
      %v1888 = vadd.f32 %v1727, %v1887
      %v1889 = vpop.f32.mrb[0].mxu0
      %1890 = vmatprep.mubr.bf16.mxu0 %v985
      %1891 = vmatmul.mubr.bf16.gmra.mrb[0].mxu0 %v984
      %v1892 = vpop.f32.mrb[0].mxu0
      %v1893 = vadd.f32 %v1732, %v1892
      %v1894 = vpop.f32.mrb[0].mxu0
      %v1895 = vpop.f32.mrb[0].mxu0
      %v1896 = vadd.f32 %v1735, %v1895
      %v1897 = vpop.f32.mrb[0].mxu0
      %1898 = vmatprep.mubr.bf16.mxu0 %v994
      %1899 = vmatmul.mubr.bf16.gmra.mrb[0].mxu0 %v993
      %v1900 = vpop.f32.mrb[0].mxu0
      %v1901 = vadd.f32 %v1740, %v1900
      %v1902 = vpop.f32.mrb[0].mxu0
      %v1903 = vpop.f32.mrb[0].mxu0
      %v1904 = vadd.f32 %v1743, %v1903
      %v1905 = vpop.f32.mrb[0].mxu0
      %1906 = vmatprep.mubr.bf16.mxu0 %v1003
      %1907 = vmatmul.mubr.bf16.gmra.mrb[0].mxu0 %v1002
      %v1908 = vpop.f32.mrb[0].mxu0
      %v1909 = vadd.f32 %v1748, %v1908
      %v1910 = vpop.f32.mrb[0].mxu0
      %v1911 = vpop.f32.mrb[0].mxu0
      %v1912 = vadd.f32 %v1751, %v1911
      %v1913 = vpop.f32.mrb[0].mxu0
      %1914 = vmatprep.mubr.bf16.mxu0 %v1012
      %1915 = vmatmul.mubr.bf16.gmra.mrb[0].mxu0 %v1011
      %v1916 = vpop.f32.mrb[0].mxu0
      %v1917 = vadd.f32 %v1756, %v1916
      %v1918 = vpop.f32.mrb[0].mxu0
      %v1919 = vpop.f32.mrb[0].mxu0
      %v1920 = vadd.f32 %v1759, %v1919
      %v1921 = vpop.f32.mrb[0].mxu0
      %1922 = vmatprep.mubr.bf16.mxu0 %v1021
      %1923 = vmatmul.mubr.bf16.gmra.mrb[0].mxu0 %v1020
      %v1924 = vpop.f32.mrb[0].mxu0
      %v1925 = vadd.f32 %v1764, %v1924
      %v1926 = vpop.f32.mrb[0].mxu0
      %v1927 = vpop.f32.mrb[0].mxu0
      %v1928 = vadd.f32 %v1767, %v1927
      %v1929 = vpop.f32.mrb[0].mxu0
      %1930 = vmatprep.mubr.bf16.mxu0 %v1030
      %1931 = vmatmul.mubr.bf16.gmra.mrb[0].mxu0 %v1029
      %v1932 = vpop.f32.mrb[0].mxu0
      %v1933 = vadd.f32 %v1772, %v1932
      %v1934 = vpop.f32.mrb[0].mxu0
      %v1935 = vpop.f32.mrb[0].mxu0
      %v1936 = vadd.f32 %v1775, %v1935
      %v1937 = vpop.f32.mrb[0].mxu0
      %1938 = vmatprep.mubr.bf16.mxu0 %v1039
      %1939 = vmatmul.mubr.bf16.gmra.mrb[0].mxu0 %v1038
      %v1940 = vpop.f32.mrb[0].mxu0
      %v1941 = vadd.f32 %v1780, %v1940
      %v1942 = vpop.f32.mrb[0].mxu0
      %v1943 = vpop.f32.mrb[0].mxu0
      %v1944 = vadd.f32 %v1783, %v1943
      %v1945 = vpop.f32.mrb[0].mxu0
      %1946 = vmatprep.mubr.bf16.mxu0 %v1048
      %1947 = vmatmul.mubr.bf16.gmra.mrb[0].mxu0 %v1047
      %v1948 = vpop.f32.mrb[0].mxu0
      %v1949 = vadd.f32 %v1788, %v1948
      %v1950 = vpop.f32.mrb[0].mxu0
      %v1951 = vpop.f32.mrb[0].mxu0
      %v1952 = vadd.f32 %v1791, %v1951
      %v1953 = vpop.f32.mrb[0].mxu0
      %1954 = vmatprep.mubr.bf16.mxu0 %v1057
      %1955 = vmatmul.mubr.bf16.gmra.mrb[0].mxu0 %v1056
      %v1956 = vpop.f32.mrb[0].mxu0
      %v1957 = vadd.f32 %v1796, %v1956
      %v1958 = vpop.f32.mrb[0].mxu0
      %v1959 = vpop.f32.mrb[0].mxu0
      %v1960 = vadd.f32 %v1799, %v1959
      %v1961 = vpop.f32.mrb[0].mxu0
      %1962 = vmatprep.mubr.bf16.mxu0 %v1066
      %1963 = vmatmul.mubr.bf16.gmra.mrb[0].mxu0 %v1065
      %v1964 = vpop.f32.mrb[0].mxu0
      %v1965 = vadd.f32 %v1804, %v1964
      %v1966 = vpop.f32.mrb[0].mxu0
      %v1967 = vpop.f32.mrb[0].mxu0
      %v1968 = vadd.f32 %v1807, %v1967
      %v1969 = vpop.f32.mrb[0].mxu0
      %1970 = vmatprep.mubr.bf16.mxu0 %v1075
      %1971 = vmatmul.mubr.bf16.gmra.mrb[0].mxu0 %v1074
      %v1972 = vpop.f32.mrb[0].mxu0
      %v1973 = vadd.f32 %v1812, %v1972
      %v1974 = vpop.f32.mrb[0].mxu0
      %v1975 = vpop.f32.mrb[0].mxu0
      %v1976 = vadd.f32 %v1815, %v1975
      %v1977 = vpop.f32.mrb[0].mxu0
      %1978 = vdwg.mxu0
      %1979 = vmatprep.subr.bf16.mxu0 0
      %1980 = vmatpush1.bf16.msra.mxu0 %v1545
      %1981 = vmatprep.subr.bf16.mxu0 0
      %1982 = vmatpush1.bf16.msra.mxu0 %v1546
      %1983 = vmatprep.subr.bf16.mxu0 0
      %1984 = vmatpush1.bf16.msra.mxu0 %v1547
      %1985 = vmatprep.subr.bf16.mxu0 0
      %1986 = vmatpush1.bf16.msra.mxu0 %v1548
      %1987 = vmatprep.subr.bf16.mxu0 0
      %1988 = vmatpush1.bf16.msra.mxu0 %v1549
      %1989 = vmatprep.subr.bf16.mxu0 0
      %1990 = vmatpush1.bf16.msra.mxu0 %v1550
      %1991 = vmatprep.subr.bf16.mxu0 0
      %1992 = vmatpush1.bf16.msra.mxu0 %v1551
      %1993 = vmatprep.subr.bf16.mxu0 0
      %1994 = vmatpush1.bf16.msra.mxu0 %v1552
      %1995 = vmatprep.subr.bf16.mxu0 0
      %1996 = vmatpush1.bf16.msra.mxu0 %v1553
      %1997 = vmatprep.subr.bf16.mxu0 0
      %1998 = vmatpush1.bf16.msra.mxu0 %v1554
      %1999 = vmatprep.subr.bf16.mxu0 0
      %2000 = vmatpush1.bf16.msra.mxu0 %v1555
      %2001 = vmatprep.subr.bf16.mxu0 0
      %2002 = vmatpush1.bf16.msra.mxu0 %v1556
      %2003 = vmatprep.subr.bf16.mxu0 0
      %2004 = vmatpush1.bf16.msra.mxu0 %v1557
      %2005 = vmatprep.subr.bf16.mxu0 0
      %2006 = vmatpush1.bf16.msra.mxu0 %v1558
      %2007 = vmatprep.subr.bf16.mxu0 0
      %2008 = vmatpush1.bf16.msra.mxu0 %v1559
      %2009 = vmatprep.subr.bf16.mxu0 0
      %2010 = vmatpush1.bf16.msra.mxu0 %v1560
      %2011 = vmatprep.mubr.bf16.mxu0 %v942
      %2012 = vmatmul.mubr.bf16.gmra.mrb[0].mxu0 %v941
      %v2013 = vpop.f32.mrb[0].mxu0
      %v2014 = vadd.f32 %v1853, %v2013
      %v2015 = vpop.f32.mrb[0].mxu0
      %v2016 = vpop.f32.mrb[0].mxu0
      %v2017 = vadd.f32 %v1856, %v2016
      %v2018 = vpop.f32.mrb[0].mxu0
      %2019 = vmatprep.mubr.bf16.mxu0 %v951
      %2020 = vmatmul.mubr.bf16.gmra.mrb[0].mxu0 %v950
      %v2021 = vpop.f32.mrb[0].mxu0
      %v2022 = vadd.f32 %v1861, %v2021
      %v2023 = vpop.f32.mrb[0].mxu0
      %v2024 = vpop.f32.mrb[0].mxu0
      %v2025 = vadd.f32 %v1864, %v2024
      %v2026 = vpop.f32.mrb[0].mxu0
      %2027 = vmatprep.mubr.bf16.mxu0 %v960
      %2028 = vmatmul.mubr.bf16.gmra.mrb[0].mxu0 %v959
      %v2029 = vpop.f32.mrb[0].mxu0
      %v2030 = vadd.f32 %v1869, %v2029
      %v2031 = vpop.f32.mrb[0].mxu0
      %v2032 = vpop.f32.mrb[0].mxu0
      %v2033 = vadd.f32 %v1872, %v2032
      %v2034 = vpop.f32.mrb[0].mxu0
      %2035 = vmatprep.mubr.bf16.mxu0 %v969
      %2036 = vmatmul.mubr.bf16.gmra.mrb[0].mxu0 %v968
      %v2037 = vpop.f32.mrb[0].mxu0
      %v2038 = vadd.f32 %v1877, %v2037
      %v2039 = vpop.f32.mrb[0].mxu0
      %v2040 = vpop.f32.mrb[0].mxu0
      %v2041 = vadd.f32 %v1880, %v2040
      %v2042 = vpop.f32.mrb[0].mxu0
      %2043 = vmatprep.mubr.bf16.mxu0 %v978
      %2044 = vmatmul.mubr.bf16.gmra.mrb[0].mxu0 %v977
      %v2045 = vpop.f32.mrb[0].mxu0
      %v2046 = vadd.f32 %v1885, %v2045
      %v2047 = vpop.f32.mrb[0].mxu0
      %v2048 = vpop.f32.mrb[0].mxu0
      %v2049 = vadd.f32 %v1888, %v2048
      %v2050 = vpop.f32.mrb[0].mxu0
      %2051 = vmatprep.mubr.bf16.mxu0 %v987
      %2052 = vmatmul.mubr.bf16.gmra.mrb[0].mxu0 %v986
      %v2053 = vpop.f32.mrb[0].mxu0
      %v2054 = vadd.f32 %v1893, %v2053
      %v2055 = vpop.f32.mrb[0].mxu0
      %v2056 = vpop.f32.mrb[0].mxu0
      %v2057 = vadd.f32 %v1896, %v2056
      %v2058 = vpop.f32.mrb[0].mxu0
      %2059 = vmatprep.mubr.bf16.mxu0 %v996
      %2060 = vmatmul.mubr.bf16.gmra.mrb[0].mxu0 %v995
      %v2061 = vpop.f32.mrb[0].mxu0
      %v2062 = vadd.f32 %v1901, %v2061
      %v2063 = vpop.f32.mrb[0].mxu0
      %v2064 = vpop.f32.mrb[0].mxu0
      %v2065 = vadd.f32 %v1904, %v2064
      %v2066 = vpop.f32.mrb[0].mxu0
      %2067 = vmatprep.mubr.bf16.mxu0 %v1005
      %2068 = vmatmul.mubr.bf16.gmra.mrb[0].mxu0 %v1004
      %v2069 = vpop.f32.mrb[0].mxu0
      %v2070 = vadd.f32 %v1909, %v2069
      %v2071 = vpop.f32.mrb[0].mxu0
      %v2072 = vpop.f32.mrb[0].mxu0
      %v2073 = vadd.f32 %v1912, %v2072
      %v2074 = vpop.f32.mrb[0].mxu0
      %2075 = vmatprep.mubr.bf16.mxu0 %v1014
      %2076 = vmatmul.mubr.bf16.gmra.mrb[0].mxu0 %v1013
      %v2077 = vpop.f32.mrb[0].mxu0
      %v2078 = vadd.f32 %v1917, %v2077
      %v2079 = vpop.f32.mrb[0].mxu0
      %v2080 = vpop.f32.mrb[0].mxu0
      %v2081 = vadd.f32 %v1920, %v2080
      %v2082 = vpop.f32.mrb[0].mxu0
      %2083 = vmatprep.mubr.bf16.mxu0 %v1023
      %2084 = vmatmul.mubr.bf16.gmra.mrb[0].mxu0 %v1022
      %v2085 = vpop.f32.mrb[0].mxu0
      %v2086 = vadd.f32 %v1925, %v2085
      %v2087 = vpop.f32.mrb[0].mxu0
      %v2088 = vpop.f32.mrb[0].mxu0
      %v2089 = vadd.f32 %v1928, %v2088
      %v2090 = vpop.f32.mrb[0].mxu0
      %2091 = vmatprep.mubr.bf16.mxu0 %v1032
      %2092 = vmatmul.mubr.bf16.gmra.mrb[0].mxu0 %v1031
      %v2093 = vpop.f32.mrb[0].mxu0
      %v2094 = vadd.f32 %v1933, %v2093
      %v2095 = vpop.f32.mrb[0].mxu0
      %v2096 = vpop.f32.mrb[0].mxu0
      %v2097 = vadd.f32 %v1936, %v2096
      %v2098 = vpop.f32.mrb[0].mxu0
      %2099 = vmatprep.mubr.bf16.mxu0 %v1041
      %2100 = vmatmul.mubr.bf16.gmra.mrb[0].mxu0 %v1040
      %v2101 = vpop.f32.mrb[0].mxu0
      %v2102 = vadd.f32 %v1941, %v2101
      %v2103 = vpop.f32.mrb[0].mxu0
      %v2104 = vpop.f32.mrb[0].mxu0
      %v2105 = vadd.f32 %v1944, %v2104
      %v2106 = vpop.f32.mrb[0].mxu0
      %2107 = vmatprep.mubr.bf16.mxu0 %v1050
      %2108 = vmatmul.mubr.bf16.gmra.mrb[0].mxu0 %v1049
      %v2109 = vpop.f32.mrb[0].mxu0
      %v2110 = vadd.f32 %v1949, %v2109
      %v2111 = vpop.f32.mrb[0].mxu0
      %v2112 = vpop.f32.mrb[0].mxu0
      %v2113 = vadd.f32 %v1952, %v2112
      %v2114 = vpop.f32.mrb[0].mxu0
      %2115 = vmatprep.mubr.bf16.mxu0 %v1059
      %2116 = vmatmul.mubr.bf16.gmra.mrb[0].mxu0 %v1058
      %v2117 = vpop.f32.mrb[0].mxu0
      %v2118 = vadd.f32 %v1957, %v2117
      %v2119 = vpop.f32.mrb[0].mxu0
      %v2120 = vpop.f32.mrb[0].mxu0
      %v2121 = vadd.f32 %v1960, %v2120
      %v2122 = vpop.f32.mrb[0].mxu0
      %2123 = vmatprep.mubr.bf16.mxu0 %v1068
      %2124 = vmatmul.mubr.bf16.gmra.mrb[0].mxu0 %v1067
      %v2125 = vpop.f32.mrb[0].mxu0
      %v2126 = vadd.f32 %v1965, %v2125
      %v2127 = vpop.f32.mrb[0].mxu0
      %v2128 = vpop.f32.mrb[0].mxu0
      %v2129 = vadd.f32 %v1968, %v2128
      %v2130 = vpop.f32.mrb[0].mxu0
      %2131 = vmatprep.mubr.bf16.mxu0 %v1077
      %2132 = vmatmul.mubr.bf16.gmra.mrb[0].mxu0 %v1076
      %v2133 = vpop.f32.mrb[0].mxu0
      %v2134 = vadd.f32 %v1973, %v2133
      %v2135 = vpop.f32.mrb[0].mxu0
      %v2136 = vpop.f32.mrb[0].mxu0
      %v2137 = vadd.f32 %v1976, %v2136
      %v2138 = vpop.f32.mrb[0].mxu0
      %2139 = vdwg.mxu0
      %2140 = vmatprep.subr.bf16.mxu0 0
      %2141 = vmatpush1.bf16.msra.mxu0 %v1561
      %2142 = vmatprep.subr.bf16.mxu0 0
      %2143 = vmatpush1.bf16.msra.mxu0 %v1562
      %2144 = vmatprep.subr.bf16.mxu0 0
      %2145 = vmatpush1.bf16.msra.mxu0 %v1563
      %2146 = vmatprep.subr.bf16.mxu0 0
      %2147 = vmatpush1.bf16.msra.mxu0 %v1564
      %2148 = vmatprep.subr.bf16.mxu0 0
      %2149 = vmatpush1.bf16.msra.mxu0 %v1565
      %2150 = vmatprep.subr.bf16.mxu0 0
      %2151 = vmatpush1.bf16.msra.mxu0 %v1566
      %2152 = vmatprep.subr.bf16.mxu0 0
      %2153 = vmatpush1.bf16.msra.mxu0 %v1567
      %2154 = vmatprep.subr.bf16.mxu0 0
      %2155 = vmatpush1.bf16.msra.mxu0 %v1568
      %2156 = vmatprep.subr.bf16.mxu0 0
      %2157 = vmatpush1.bf16.msra.mxu0 %v1569
      %2158 = vmatprep.subr.bf16.mxu0 0
      %2159 = vmatpush1.bf16.msra.mxu0 %v1570
      %2160 = vmatprep.subr.bf16.mxu0 0
      %2161 = vmatpush1.bf16.msra.mxu0 %v1571
      %2162 = vmatprep.subr.bf16.mxu0 0
      %2163 = vmatpush1.bf16.msra.mxu0 %v1572
      %2164 = vmatprep.subr.bf16.mxu0 0
      %2165 = vmatpush1.bf16.msra.mxu0 %v1573
      %2166 = vmatprep.subr.bf16.mxu0 0
      %2167 = vmatpush1.bf16.msra.mxu0 %v1574
      %2168 = vmatprep.subr.bf16.mxu0 0
      %2169 = vmatpush1.bf16.msra.mxu0 %v1575
      %2170 = vmatprep.subr.bf16.mxu0 0
      %2171 = vmatpush1.bf16.msra.mxu0 %v1576
      %2172 = vmatprep.mubr.bf16.mxu0 %v944
      %2173 = vmatmul.mubr.bf16.gmra.mrb[0].mxu0 %v943
      %v2174 = vpop.f32.mrb[0].mxu0
      %v2175 = vadd.f32 %v2014, %v2174
      %v2176 = vpop.f32.mrb[0].mxu0
      %v2177 = vpop.f32.mrb[0].mxu0
      %v2178 = vadd.f32 %v2017, %v2177
      %v2179 = vpop.f32.mrb[0].mxu0
      %2180 = vmatprep.mubr.bf16.mxu0 %v953
      %2181 = vmatmul.mubr.bf16.gmra.mrb[0].mxu0 %v952
      %v2182 = vpop.f32.mrb[0].mxu0
      %v2183 = vadd.f32 %v2022, %v2182
      %v2184 = vpop.f32.mrb[0].mxu0
      %v2185 = vpop.f32.mrb[0].mxu0
      %v2186 = vadd.f32 %v2025, %v2185
      %v2187 = vpop.f32.mrb[0].mxu0
      %2188 = vmatprep.mubr.bf16.mxu0 %v962
      %2189 = vmatmul.mubr.bf16.gmra.mrb[0].mxu0 %v961
      %v2190 = vpop.f32.mrb[0].mxu0
      %v2191 = vadd.f32 %v2030, %v2190
      %v2192 = vpop.f32.mrb[0].mxu0
      %v2193 = vpop.f32.mrb[0].mxu0
      %v2194 = vadd.f32 %v2033, %v2193
      %v2195 = vpop.f32.mrb[0].mxu0
      %2196 = vmatprep.mubr.bf16.mxu0 %v971
      %2197 = vmatmul.mubr.bf16.gmra.mrb[0].mxu0 %v970
      %v2198 = vpop.f32.mrb[0].mxu0
      %v2199 = vadd.f32 %v2038, %v2198
      %v2200 = vpop.f32.mrb[0].mxu0
      %v2201 = vpop.f32.mrb[0].mxu0
      %v2202 = vadd.f32 %v2041, %v2201
      %v2203 = vpop.f32.mrb[0].mxu0
      %2204 = vmatprep.mubr.bf16.mxu0 %v980
      %2205 = vmatmul.mubr.bf16.gmra.mrb[0].mxu0 %v979
      %v2206 = vpop.f32.mrb[0].mxu0
      %v2207 = vadd.f32 %v2046, %v2206
      %v2208 = vpop.f32.mrb[0].mxu0
      %v2209 = vpop.f32.mrb[0].mxu0
      %v2210 = vadd.f32 %v2049, %v2209
      %v2211 = vpop.f32.mrb[0].mxu0
      %2212 = vmatprep.mubr.bf16.mxu0 %v989
      %2213 = vmatmul.mubr.bf16.gmra.mrb[0].mxu0 %v988
      %v2214 = vpop.f32.mrb[0].mxu0
      %v2215 = vadd.f32 %v2054, %v2214
      %v2216 = vpop.f32.mrb[0].mxu0
      %v2217 = vpop.f32.mrb[0].mxu0
      %v2218 = vadd.f32 %v2057, %v2217
      %v2219 = vpop.f32.mrb[0].mxu0
      %2220 = vmatprep.mubr.bf16.mxu0 %v998
      %2221 = vmatmul.mubr.bf16.gmra.mrb[0].mxu0 %v997
      %v2222 = vpop.f32.mrb[0].mxu0
      %v2223 = vadd.f32 %v2062, %v2222
      %v2224 = vpop.f32.mrb[0].mxu0
      %v2225 = vpop.f32.mrb[0].mxu0
      %v2226 = vadd.f32 %v2065, %v2225
      %v2227 = vpop.f32.mrb[0].mxu0
      %2228 = vmatprep.mubr.bf16.mxu0 %v1007
      %2229 = vmatmul.mubr.bf16.gmra.mrb[0].mxu0 %v1006
      %v2230 = vpop.f32.mrb[0].mxu0
      %v2231 = vadd.f32 %v2070, %v2230
      %v2232 = vpop.f32.mrb[0].mxu0
      %v2233 = vpop.f32.mrb[0].mxu0
      %v2234 = vadd.f32 %v2073, %v2233
      %v2235 = vpop.f32.mrb[0].mxu0
      %2236 = vmatprep.mubr.bf16.mxu0 %v1016
      %2237 = vmatmul.mubr.bf16.gmra.mrb[0].mxu0 %v1015
      %v2238 = vpop.f32.mrb[0].mxu0
      %v2239 = vadd.f32 %v2078, %v2238
      %v2240 = vpop.f32.mrb[0].mxu0
      %v2241 = vpop.f32.mrb[0].mxu0
      %v2242 = vadd.f32 %v2081, %v2241
      %v2243 = vpop.f32.mrb[0].mxu0
      %2244 = vmatprep.mubr.bf16.mxu0 %v1025
      %2245 = vmatmul.mubr.bf16.gmra.mrb[0].mxu0 %v1024
      %v2246 = vpop.f32.mrb[0].mxu0
      %v2247 = vadd.f32 %v2086, %v2246
      %v2248 = vpop.f32.mrb[0].mxu0
      %v2249 = vpop.f32.mrb[0].mxu0
      %v2250 = vadd.f32 %v2089, %v2249
      %v2251 = vpop.f32.mrb[0].mxu0
      %2252 = vmatprep.mubr.bf16.mxu0 %v1034
      %2253 = vmatmul.mubr.bf16.gmra.mrb[0].mxu0 %v1033
      %v2254 = vpop.f32.mrb[0].mxu0
      %v2255 = vadd.f32 %v2094, %v2254
      %v2256 = vpop.f32.mrb[0].mxu0
      %v2257 = vpop.f32.mrb[0].mxu0
      %v2258 = vadd.f32 %v2097, %v2257
      %v2259 = vpop.f32.mrb[0].mxu0
      %2260 = vmatprep.mubr.bf16.mxu0 %v1043
      %2261 = vmatmul.mubr.bf16.gmra.mrb[0].mxu0 %v1042
      %v2262 = vpop.f32.mrb[0].mxu0
      %v2263 = vadd.f32 %v2102, %v2262
      %v2264 = vpop.f32.mrb[0].mxu0
      %v2265 = vpop.f32.mrb[0].mxu0
      %v2266 = vadd.f32 %v2105, %v2265
      %v2267 = vpop.f32.mrb[0].mxu0
      %2268 = vmatprep.mubr.bf16.mxu0 %v1052
      %2269 = vmatmul.mubr.bf16.gmra.mrb[0].mxu0 %v1051
      %v2270 = vpop.f32.mrb[0].mxu0
      %v2271 = vadd.f32 %v2110, %v2270
      %v2272 = vpop.f32.mrb[0].mxu0
      %v2273 = vpop.f32.mrb[0].mxu0
      %v2274 = vadd.f32 %v2113, %v2273
      %v2275 = vpop.f32.mrb[0].mxu0
      %2276 = vmatprep.mubr.bf16.mxu0 %v1061
      %2277 = vmatmul.mubr.bf16.gmra.mrb[0].mxu0 %v1060
      %v2278 = vpop.f32.mrb[0].mxu0
      %v2279 = vadd.f32 %v2118, %v2278
      %v2280 = vpop.f32.mrb[0].mxu0
      %v2281 = vpop.f32.mrb[0].mxu0
      %v2282 = vadd.f32 %v2121, %v2281
      %v2283 = vpop.f32.mrb[0].mxu0
      %2284 = vmatprep.mubr.bf16.mxu0 %v1070
      %2285 = vmatmul.mubr.bf16.gmra.mrb[0].mxu0 %v1069
      %v2286 = vpop.f32.mrb[0].mxu0
      %v2287 = vadd.f32 %v2126, %v2286
      %v2288 = vpop.f32.mrb[0].mxu0
      %v2289 = vpop.f32.mrb[0].mxu0
      %v2290 = vadd.f32 %v2129, %v2289
      %v2291 = vpop.f32.mrb[0].mxu0
      %2292 = vmatprep.mubr.bf16.mxu0 %v1079
      %2293 = vmatmul.mubr.bf16.gmra.mrb[0].mxu0 %v1078
      %v2294 = vpop.f32.mrb[0].mxu0
      %v2295 = vadd.f32 %v2134, %v2294
      %v2296 = vpop.f32.mrb[0].mxu0
      %v2297 = vpop.f32.mrb[0].mxu0
      %v2298 = vadd.f32 %v2137, %v2297
      %v2299 = vpop.f32.mrb[0].mxu0
      %2300 = vdwg.mxu0
      %2301 = vmatprep.subr.bf16.mxu0 0
      %2302 = vmatpush1.bf16.msra.mxu0 %v1577
      %2303 = vmatprep.subr.bf16.mxu0 0
      %2304 = vmatpush1.bf16.msra.mxu0 %v1578
      %2305 = vmatprep.subr.bf16.mxu0 0
      %2306 = vmatpush1.bf16.msra.mxu0 %v1579
      %2307 = vmatprep.subr.bf16.mxu0 0
      %2308 = vmatpush1.bf16.msra.mxu0 %v1580
      %2309 = vmatprep.subr.bf16.mxu0 0
      %2310 = vmatpush1.bf16.msra.mxu0 %v1581
      %2311 = vmatprep.subr.bf16.mxu0 0
      %2312 = vmatpush1.bf16.msra.mxu0 %v1582
      %2313 = vmatprep.subr.bf16.mxu0 0
      %2314 = vmatpush1.bf16.msra.mxu0 %v1583
      %2315 = vmatprep.subr.bf16.mxu0 0
      %2316 = vmatpush1.bf16.msra.mxu0 %v1584
      %2317 = vmatprep.subr.bf16.mxu0 0
      %2318 = vmatpush1.bf16.msra.mxu0 0
      %2319 = vmatprep.subr.bf16.mxu0 0
      %2320 = vmatpush1.bf16.msra.mxu0 0
      %2321 = vmatprep.subr.bf16.mxu0 0
      %2322 = vmatpush1.bf16.msra.mxu0 0
      %2323 = vmatprep.subr.bf16.mxu0 0
      %2324 = vmatpush1.bf16.msra.mxu0 0
      %2325 = vmatprep.subr.bf16.mxu0 0
      %2326 = vmatpush1.bf16.msra.mxu0 0
      %2327 = vmatprep.subr.bf16.mxu0 0
      %2328 = vmatpush1.bf16.msra.mxu0 0
      %2329 = vmatprep.subr.bf16.mxu0 0
      %2330 = vmatpush1.bf16.msra.mxu0 0
      %2331 = vmatprep.subr.bf16.mxu0 0
      %2332 = vmatpush1.bf16.msra.mxu0 0
      %2333 = vmatprep.mubr.bf16.mxu0 0
      %2334 = vmatmul.mubr.bf16.gmra.mrb[0].mxu0 %v945
      %v2335 = vpop.f32.mrb[0].mxu0
      %v2336 = vadd.f32 %v2175, %v2335
      %v2337 = vpop.f32.mrb[0].mxu0
      %v2338 = vpop.f32.mrb[0].mxu0
      %v2339 = vadd.f32 %v2178, %v2338
      %v2340 = vpop.f32.mrb[0].mxu0
      %2341 = vmatprep.mubr.bf16.mxu0 0
      %2342 = vmatmul.mubr.bf16.gmra.mrb[0].mxu0 %v954
      %v2343 = vpop.f32.mrb[0].mxu0
      %v2344 = vadd.f32 %v2183, %v2343
      %v2345 = vpop.f32.mrb[0].mxu0
      %v2346 = vpop.f32.mrb[0].mxu0
      %v2347 = vadd.f32 %v2186, %v2346
      %v2348 = vpop.f32.mrb[0].mxu0
      %2349 = vmatprep.mubr.bf16.mxu0 0
      %2350 = vmatmul.mubr.bf16.gmra.mrb[0].mxu0 %v963
      %v2351 = vpop.f32.mrb[0].mxu0
      %v2352 = vadd.f32 %v2191, %v2351
      %v2353 = vpop.f32.mrb[0].mxu0
      %v2354 = vpop.f32.mrb[0].mxu0
      %v2355 = vadd.f32 %v2194, %v2354
      %v2356 = vpop.f32.mrb[0].mxu0
      %2357 = vmatprep.mubr.bf16.mxu0 0
      %2358 = vmatmul.mubr.bf16.gmra.mrb[0].mxu0 %v972
      %v2359 = vpop.f32.mrb[0].mxu0
      %v2360 = vadd.f32 %v2199, %v2359
      %v2361 = vpop.f32.mrb[0].mxu0
      %v2362 = vpop.f32.mrb[0].mxu0
      %v2363 = vadd.f32 %v2202, %v2362
      %v2364 = vpop.f32.mrb[0].mxu0
      %2365 = vmatprep.mubr.bf16.mxu0 0
      %2366 = vmatmul.mubr.bf16.gmra.mrb[0].mxu0 %v981
      %v2367 = vpop.f32.mrb[0].mxu0
      %v2368 = vadd.f32 %v2207, %v2367
      %v2369 = vpop.f32.mrb[0].mxu0
      %v2370 = vpop.f32.mrb[0].mxu0
      %v2371 = vadd.f32 %v2210, %v2370
      %v2372 = vpop.f32.mrb[0].mxu0
      %2373 = vmatprep.mubr.bf16.mxu0 0
      %2374 = vmatmul.mubr.bf16.gmra.mrb[0].mxu0 %v990
      %v2375 = vpop.f32.mrb[0].mxu0
      %v2376 = vadd.f32 %v2215, %v2375
      %v2377 = vpop.f32.mrb[0].mxu0
      %v2378 = vpop.f32.mrb[0].mxu0
      %v2379 = vadd.f32 %v2218, %v2378
      %v2380 = vpop.f32.mrb[0].mxu0
      %2381 = vmatprep.mubr.bf16.mxu0 0
      %2382 = vmatmul.mubr.bf16.gmra.mrb[0].mxu0 %v999
      %v2383 = vpop.f32.mrb[0].mxu0
      %v2384 = vadd.f32 %v2223, %v2383
      %v2385 = vpop.f32.mrb[0].mxu0
      %v2386 = vpop.f32.mrb[0].mxu0
      %v2387 = vadd.f32 %v2226, %v2386
      %v2388 = vpop.f32.mrb[0].mxu0
      %2389 = vmatprep.mubr.bf16.mxu0 0
      %2390 = vmatmul.mubr.bf16.gmra.mrb[0].mxu0 %v1008
      %v2391 = vpop.f32.mrb[0].mxu0
      %v2392 = vadd.f32 %v2231, %v2391
      %v2393 = vpop.f32.mrb[0].mxu0
      %v2394 = vpop.f32.mrb[0].mxu0
      %v2395 = vadd.f32 %v2234, %v2394
      %v2396 = vpop.f32.mrb[0].mxu0
      %2397 = vmatprep.mubr.bf16.mxu0 0
      %2398 = vmatmul.mubr.bf16.gmra.mrb[0].mxu0 %v1017
      %v2399 = vpop.f32.mrb[0].mxu0
      %v2400 = vadd.f32 %v2239, %v2399
      %v2401 = vpop.f32.mrb[0].mxu0
      %v2402 = vpop.f32.mrb[0].mxu0
      %v2403 = vadd.f32 %v2242, %v2402
      %v2404 = vpop.f32.mrb[0].mxu0
      %2405 = vmatprep.mubr.bf16.mxu0 0
      %2406 = vmatmul.mubr.bf16.gmra.mrb[0].mxu0 %v1026
      %v2407 = vpop.f32.mrb[0].mxu0
      %v2408 = vadd.f32 %v2247, %v2407
      %v2409 = vpop.f32.mrb[0].mxu0
      %v2410 = vpop.f32.mrb[0].mxu0
      %v2411 = vadd.f32 %v2250, %v2410
      %v2412 = vpop.f32.mrb[0].mxu0
      %2413 = vmatprep.mubr.bf16.mxu0 0
      %2414 = vmatmul.mubr.bf16.gmra.mrb[0].mxu0 %v1035
      %v2415 = vpop.f32.mrb[0].mxu0
      %v2416 = vadd.f32 %v2255, %v2415
      %v2417 = vpop.f32.mrb[0].mxu0
      %v2418 = vpop.f32.mrb[0].mxu0
      %v2419 = vadd.f32 %v2258, %v2418
      %v2420 = vpop.f32.mrb[0].mxu0
      %2421 = vmatprep.mubr.bf16.mxu0 0
      %2422 = vmatmul.mubr.bf16.gmra.mrb[0].mxu0 %v1044
      %v2423 = vpop.f32.mrb[0].mxu0
      %v2424 = vadd.f32 %v2263, %v2423
      %v2425 = vpop.f32.mrb[0].mxu0
      %v2426 = vpop.f32.mrb[0].mxu0
      %v2427 = vadd.f32 %v2266, %v2426
      %v2428 = vpop.f32.mrb[0].mxu0
      %2429 = vmatprep.mubr.bf16.mxu0 0
      %2430 = vmatmul.mubr.bf16.gmra.mrb[0].mxu0 %v1053
      %v2431 = vpop.f32.mrb[0].mxu0
      %v2432 = vadd.f32 %v2271, %v2431
      %v2433 = vpop.f32.mrb[0].mxu0
      %v2434 = vpop.f32.mrb[0].mxu0
      %v2435 = vadd.f32 %v2274, %v2434
      %v2436 = vpop.f32.mrb[0].mxu0
      %2437 = vmatprep.mubr.bf16.mxu0 0
      %2438 = vmatmul.mubr.bf16.gmra.mrb[0].mxu0 %v1062
      %v2439 = vpop.f32.mrb[0].mxu0
      %v2440 = vadd.f32 %v2279, %v2439
      %v2441 = vpop.f32.mrb[0].mxu0
      %v2442 = vpop.f32.mrb[0].mxu0
      %v2443 = vadd.f32 %v2282, %v2442
      %v2444 = vpop.f32.mrb[0].mxu0
      %2445 = vmatprep.mubr.bf16.mxu0 0
      %2446 = vmatmul.mubr.bf16.gmra.mrb[0].mxu0 %v1071
      %v2447 = vpop.f32.mrb[0].mxu0
      %v2448 = vadd.f32 %v2287, %v2447
      %v2449 = vpop.f32.mrb[0].mxu0
      %v2450 = vpop.f32.mrb[0].mxu0
      %v2451 = vadd.f32 %v2290, %v2450
      %v2452 = vpop.f32.mrb[0].mxu0
      %2453 = vmatprep.mubr.bf16.mxu0 0
      %2454 = vmatmul.mubr.bf16.gmra.mrb[0].mxu0 %v1080
      %v2455 = vpop.f32.mrb[0].mxu0
      %v2456 = vadd.f32 %v2295, %v2455
      %v2457 = vpop.f32.mrb[0].mxu0
      %v2458 = vpop.f32.mrb[0].mxu0
      %v2459 = vadd.f32 %v2298, %v2458
      %v2460 = vpop.f32.mrb[0].mxu0
      %2461 = vdwg.mxu0
      %vm2462 = vcmask 523264
      %2463 = vst.msk [vmem:[%s175] sm:$0xff] %vm2462, %v2336
      %2464 = vst.msk [vmem:[%s175 + $0x8] sm:$0xff] %vm2462, %v2339
      %2465 = vst.msk [vmem:[%s175 + $0x10] sm:$0xff] %vm2462, %v2344
      %2466 = vst.msk [vmem:[%s175 + $0x18] sm:$0xff] %vm2462, %v2347
      %2467 = vst.msk [vmem:[%s175 + $0x20] sm:$0xff] %vm2462, %v2352
      %2468 = vst.msk [vmem:[%s175 + $0x28] sm:$0xff] %vm2462, %v2355
      %2469 = vst.msk [vmem:[%s175 + $0x30] sm:$0xff] %vm2462, %v2360
      %2470 = vst.msk [vmem:[%s175 + $0x38] sm:$0xff] %vm2462, %v2363
      %2471 = vst.msk [vmem:[%s175 + $0x40] sm:$0xff] %vm2462, %v2368
      %2472 = vst.msk [vmem:[%s175 + $0x48] sm:$0xff] %vm2462, %v2371
      %2473 = vst.msk [vmem:[%s175 + $0x50] sm:$0xff] %vm2462, %v2376
      %2474 = vst.msk [vmem:[%s175 + $0x58] sm:$0xff] %vm2462, %v2379
      %2475 = vst.msk [vmem:[%s175 + $0x60] sm:$0xff] %vm2462, %v2384
      %2476 = vst.msk [vmem:[%s175 + $0x68] sm:$0xff] %vm2462, %v2387
      %2477 = vst.msk [vmem:[%s175 + $0x70] sm:$0xff] %vm2462, %v2392
      %2478 = vst.msk [vmem:[%s175 + $0x78] sm:$0xff] %vm2462, %v2395
      %2479 = vst.msk [vmem:[%s175 + $0x80] sm:$0xff] %vm2462, %v2400
      %2480 = vst.msk [vmem:[%s175 + $0x88] sm:$0xff] %vm2462, %v2403
      %2481 = vst.msk [vmem:[%s175 + $0x90] sm:$0xff] %vm2462, %v2408
      %2482 = vst.msk [vmem:[%s175 + $0x98] sm:$0xff] %vm2462, %v2411
      %2483 = vst.msk [vmem:[%s175 + $0xa0] sm:$0xff] %vm2462, %v2416
      %2484 = vst.msk [vmem:[%s175 + $0xa8] sm:$0xff] %vm2462, %v2419
      %2485 = vst.msk [vmem:[%s175 + $0xb0] sm:$0xff] %vm2462, %v2424
      %2486 = vst.msk [vmem:[%s175 + $0xb8] sm:$0xff] %vm2462, %v2427
      %2487 = vst.msk [vmem:[%s175 + $0xc0] sm:$0xff] %vm2462, %v2432
      %2488 = vst.msk [vmem:[%s175 + $0xc8] sm:$0xff] %vm2462, %v2435
      %2489 = vst.msk [vmem:[%s175 + $0xd0] sm:$0xff] %vm2462, %v2440
      %2490 = vst.msk [vmem:[%s175 + $0xd8] sm:$0xff] %vm2462, %v2443
      %2491 = vst.msk [vmem:[%s175 + $0xe0] sm:$0xff] %vm2462, %v2448
      %2492 = vst.msk [vmem:[%s175 + $0xe8] sm:$0xff] %vm2462, %v2451
      %2493 = vst.msk [vmem:[%s175 + $0xf0] sm:$0xff] %vm2462, %v2456
      %2494 = vst.msk [vmem:[%s175 + $0xf8] sm:$0xff] %vm2462, %v2459
      %s2495 = smul.u32 32, %s14
      %p2496 = scmp.lt.s32.totalorder %s2495, 63
      %s2497 = scalar_select %p2496, %s2495, 63
      %s2498 = smul.addr %s2497, 8
      %s2499 = scalar_lea.vmem %s3, %s2498
      // Predicated region
      $region33: #{decoder_forward.12} parent=31 // pred_check
        %p2500 = pneg %p100
      $region34: #{decoder_forward.12} parent=31 // pred_check_branch
        %2502 = sbr.rel (%p2500) target = $region36
      $region35: #{decoder_forward.12} parent=31 // pred_region
        %s2503 = smul.u32 32, %s14
      $region36: #{decoder_forward.12} parent=31 // pred_fallthru
        _
    $region32: #{decoder_forward.12} parent=5 // pred_fallthru
      _
    %p2504 = scmp.le.s32.totalorder 2, %s9
    // Predicated region
    $region37: #{decoder_forward.12} parent=5 // pred_check
      %p2505 = pneg %p2504
    $region38: #{decoder_forward.12} parent=5 // pred_check_branch
      %2507 = sbr.rel (%p2505) target = $region40
    $region39: #{decoder_forward.12} parent=5 // pred_region
      %s2508 = ssub.s32 %s9, 2
      // Predicated region
      $region41: #{decoder_forward.12} parent=39 // pred_check
        %p2509 = pneg %p106
      $region42: #{decoder_forward.12} parent=39 // pred_check_branch
        %2511 = sbr.rel (%p2509) target = $region44
      $region43: #{decoder_forward.12} parent=39 // pred_region
        %s2512 = smul.u32 32, %s15
        %p2513 = scmp.lt.s32.totalorder %s2512, 63
        %s2514 = scalar_select %p2513, %s2512, 63
        %s2515 = smul.addr %s2514, 8
        %s2516 = scalar_lea.vmem %s3, %s2515
      $region44: #{decoder_forward.12} parent=39 // pred_fallthru
        _
    $region40: #{decoder_forward.12} parent=5 // pred_fallthru
      _
  $region6: #{decoder_forward.12} parent=0 // loop_footer
    %s13 = sadd.s32 1, %s9
  $region7: #{decoder_forward.12} parent=0 // loop_footer_branch
    %8 = sbr.rel target = $region3
  $region8: #{decoder_forward.12} parent=0 // loop_exit
    _

// kernel: decoder_forward.14
$region0: #{decoder_forward.14}
  #allocation0 [shape = 'u32[]', space=smem, size = 0x4, offset = 0x4, fixed_abs, tag = 'smem constant byte address 0x4 - core index']
  #allocation1 [shape = 'u32[144,128]{1,0:T(1,128)}', space=vmem, size = 0x12000, scoped, tag = 'internal scratch']
  %s0 = inlined_call_operand.vmem [shape: bf16[512,576], index: 0, kind: input, shape index: {}]
  %s1 = inlined_call_operand.vmem [shape: bf16[576,64], index: 1, kind: input, shape index: {}]
  %s2 = inlined_call_operand.vmem [shape: f32[1,64], index: 2, kind: input, shape index: {}]
  %s3 = inlined_call_operand.vmem [shape: f32[512,64], index: 3, kind: output, shape index: {}]
  %s4 = sld [smem:[#allocation0]]
  $region45: #{decoder_forward.14} parent=0
    _
  %s6 = ssub.s32 1, %s4
  %s7 = scalar_select 0, %s6, %s4
  loop: start=0, step=1, limit=4
  $region2: #{decoder_forward.14} parent=0 // loop_pre_header
    _
  $region3: #{decoder_forward.14} parent=0 // loop_header
    %s9 = sphi 0, %s13
    %p10 = scmp.ge.s32.totalorder %s9, 4
    %s19 = sphi 0, %s21
    %s22 = sphi 0, %s19
    %s23 = sphi 0, %s22
    %s39 = sphi 0, %s23
    %s43 = sphi 0, %s43
    %s45 = sphi 0, %s43
    %s46 = sphi 0, %s45
    %s60 = sphi 0, %s46
    %s64 = sphi 0, %s64
    %s66 = sphi 0, %s64
    %s67 = sphi 0, %s66
    %s81 = sphi 0, %s67
    %s87 = sphi 0, %s89
    %s90 = sphi 0, %s87
    %s91 = sphi 0, %s90
    %s107 = sphi 0, %s91
  $region4: #{decoder_forward.14} parent=0 // loop_header_branch
    %12 = sbr.rel (%p10) target = $region8
  $region5: #{decoder_forward.14} parent=0 // loop_body
    %s14 = ssub.s32 %s9, 1
    %s15 = ssub.s32 %s9, 2
    %s16 = sadd.s32 %s9, 1
    %s17 = ssub.s32 %s9, %s16
    %p18 = scmp.eq.s32.totalorder %s17, 0
    %s20 = sadd.s32 %s19, 1
    %s21 = scalar_select %p18, %s19, %s20
    %p24 = pneg %p18
    %p25 = scmp.eq.s32.totalorder %s9, 1
    %p26 = por %p24, %p25
    %p27 = scmp.ne.s32.totalorder %s19, %s22
    %p28 = scmp.eq.s32.totalorder %s9, 0
    %p29 = por %p27, %p28
    %p30 = scmp.ne.s32.totalorder %s19, %s22
    %p31 = scmp.eq.s32.totalorder %s14, 1
    %p32 = por %p30, %p31
    %p33 = scmp.ne.s32.totalorder %s22, %s23
    %p34 = scmp.eq.s32.totalorder %s14, 0
    %p35 = por %p33, %p34
    %p36 = scmp.ne.s32.totalorder %s22, %s23
    %p37 = scmp.eq.s32.totalorder %s15, 1
    %p38 = por %p36, %p37
    %p40 = scmp.ne.s32.totalorder %s23, %s39
    %p41 = scmp.eq.s32.totalorder %s15, 0
    %p42 = por %p40, %p41
    %s44 = sadd.s32 %s43, 1
    %p47 = scmp.eq.s32.totalorder %s9, 1
    %p48 = scmp.ne.s32.totalorder %s43, %s45
    %p49 = scmp.eq.s32.totalorder %s9, 0
    %p50 = por %p48, %p49
    %p51 = scmp.ne.s32.totalorder %s43, %s45
    %p52 = scmp.eq.s32.totalorder %s14, 1
    %p53 = por %p51, %p52
    %p54 = scmp.ne.s32.totalorder %s45, %s46
    %p55 = scmp.eq.s32.totalorder %s14, 0
    %p56 = por %p54, %p55
    %p57 = scmp.ne.s32.totalorder %s45, %s46
    %p58 = scmp.eq.s32.totalorder %s15, 1
    %p59 = por %p57, %p58
    %p61 = scmp.ne.s32.totalorder %s46, %s60
    %p62 = scmp.eq.s32.totalorder %s15, 0
    %p63 = por %p61, %p62
    %s65 = sadd.s32 %s64, 1
    %p68 = scmp.eq.s32.totalorder %s9, 1
    %p69 = scmp.ne.s32.totalorder %s64, %s66
    %p70 = scmp.eq.s32.totalorder %s9, 0
    %p71 = por %p69, %p70
    %p72 = scmp.ne.s32.totalorder %s64, %s66
    %p73 = scmp.eq.s32.totalorder %s14, 1
    %p74 = por %p72, %p73
    %p75 = scmp.ne.s32.totalorder %s66, %s67
    %p76 = scmp.eq.s32.totalorder %s14, 0
    %p77 = por %p75, %p76
    %p78 = scmp.ne.s32.totalorder %s66, %s67
    %p79 = scmp.eq.s32.totalorder %s15, 1
    %p80 = por %p78, %p79
    %p82 = scmp.ne.s32.totalorder %s67, %s81
    %p83 = scmp.eq.s32.totalorder %s15, 0
    %p84 = por %p82, %p83
    %s85 = ssub.s32 %s9, %s16
    %p86 = scmp.eq.s32.totalorder %s85, 0
    %s88 = sadd.s32 %s87, 1
    %s89 = scalar_select %p86, %s87, %s88
    %p92 = pneg %p86
    %p93 = scmp.eq.s32.totalorder %s9, 1
    %p94 = por %p92, %p93
    %p95 = scmp.ne.s32.totalorder %s87, %s90
    %p96 = scmp.eq.s32.totalorder %s9, 0
    %p97 = por %p95, %p96
    %p98 = scmp.ne.s32.totalorder %s87, %s90
    %p99 = scmp.eq.s32.totalorder %s14, 1
    %p100 = por %p98, %p99
    %p101 = scmp.ne.s32.totalorder %s90, %s91
    %p102 = scmp.eq.s32.totalorder %s14, 0
    %p103 = por %p101, %p102
    %p104 = scmp.ne.s32.totalorder %s90, %s91
    %p105 = scmp.eq.s32.totalorder %s15, 1
    %p106 = por %p104, %p105
    %p108 = scmp.ne.s32.totalorder %s91, %s107
    %p109 = scmp.eq.s32.totalorder %s15, 0
    %p110 = por %p108, %p109
    %p111 = scmp.le.s32.totalorder 1, %s9
    %p112 = scmp.lt.s32.totalorder %s9, 3
    %p113 = pnand %p111, %p112
    %p114 = pneg %p113
    // Predicated region
    $region9: #{decoder_forward.14} parent=5 // pred_check
      _
    $region10: #{decoder_forward.14} parent=5 // pred_check_branch
      %116 = sbr.rel (%p113) target = $region12
    $region11: #{decoder_forward.14} parent=5 // pred_region
      %s117 = ssub.s32 %s9, 1
      // Predicated region
      $region13: #{decoder_forward.14} parent=11 // pred_check
        %p118 = pneg %p56
      $region14: #{decoder_forward.14} parent=11 // pred_check_branch
        %120 = sbr.rel (%p118) target = $region16
      $region15: #{decoder_forward.14} parent=11 // pred_region
        _
      $region16: #{decoder_forward.14} parent=11 // pred_fallthru
        _
      // Predicated region
      $region17: #{decoder_forward.14} parent=11 // pred_check
        %p121 = pneg %p77
      $region18: #{decoder_forward.14} parent=11 // pred_check_branch
        %123 = sbr.rel (%p121) target = $region20
      $region19: #{decoder_forward.14} parent=11 // pred_region
        _
      $region20: #{decoder_forward.14} parent=11 // pred_fallthru
        _
    $region12: #{decoder_forward.14} parent=5 // pred_fallthru
      _
    %p124 = scmp.lt.s32.totalorder %s9, 2
    // Predicated region
    $region21: #{decoder_forward.14} parent=5 // pred_check
      %p125 = pneg %p124
    $region22: #{decoder_forward.14} parent=5 // pred_check_branch
      %127 = sbr.rel (%p125) target = $region24
    $region23: #{decoder_forward.14} parent=5 // pred_region
      // Predicated region
      $region25: #{decoder_forward.14} parent=23 // pred_check
        %p128 = pneg %p29
      $region26: #{decoder_forward.14} parent=23 // pred_check_branch
        %130 = sbr.rel (%p128) target = $region28
      $region27: #{decoder_forward.14} parent=23 // pred_region
        %s131 = smul.u32 32, %s9
        %p132 = scmp.lt.s32.totalorder %s131, 63
        %s133 = scalar_select %p132, %s131, 63
        %s134 = smul.addr %s133, 5
        %s135 = smul.addr %s134, 4
        %s136 = scalar_lea.vmem %s0, %s135
        %s137 = smul.u32 32, %s9
      $region28: #{decoder_forward.14} parent=23 // pred_fallthru
        _
    $region24: #{decoder_forward.14} parent=5 // pred_fallthru
      _
    %p138 = scmp.le.s32.totalorder 1, %s9
    %p139 = scmp.lt.s32.totalorder %s9, 3
    %p140 = pnand %p138, %p139
    %p141 = pneg %p140
    // Predicated region
    $region29: #{decoder_forward.14} parent=5 // pred_check
      _
    $region30: #{decoder_forward.14} parent=5 // pred_check_branch
      %143 = sbr.rel (%p140) target = $region32
    $region31: #{decoder_forward.14} parent=5 // pred_region
      %s144 = ssub.s32 %s9, 1
      %s145 = smul.u32 32, %s14
      %p146 = scmp.lt.s32.totalorder %s145, 63
      %s147 = scalar_select %p146, %s145, 63
      %s148 = smul.addr %s147, 5
      %s149 = smul.addr %s148, 4
      %s150 = scalar_lea.vmem %s0, %s149
      %p151 = pneg %p35
      %p152 = pneg %p32
      %p153 = pneg %p56
      %p154 = pneg %p53
      %p155 = pneg %p77
      %p156 = pneg %p74
      %p157 = pneg %p103
      %p158 = pneg %p100
      %s159 = smul.u32 32, %s14
      %p160 = scmp.lt.s32.totalorder %s159, 63
      %s161 = scalar_select %p160, %s159, 63
      %s162 = smul.addr %s161, 8
      %s163 = scalar_lea.vmem %s3, %s162
      %s164 = smul.u32 32, %s14
      %p165 = scmp.lt.s32.totalorder %s164, 63
      %s166 = scalar_select %p165, %s164, 63
      %s167 = smul.addr %s166, 5
      %s168 = smul.addr %s167, 4
      %s169 = scalar_lea.vmem %s0, %s168
      %s170 = smul.u32 32, %s14
      %s171 = smul.u32 32, %s14
      %p172 = scmp.lt.s32.totalorder %s171, 63
      %s173 = scalar_select %p172, %s171, 63
      %s174 = smul.addr %s173, 8
      %s175 = scalar_lea.vmem %s3, %s174
      %s176 = smul.u32 32, %s14
      %v178 = vld [vmem:[%s169] sm:$0xff]
      %v179 = vld [vmem:[%s169 + $0x8] sm:$0xff]
      %v180 = vld [vmem:[%s169 + $0x10] sm:$0xf]
      %v181 = vld [vmem:[%s169 + $0x14] sm:$0xff]
      %v182 = vld [vmem:[%s169 + $0x1c] sm:$0xff]
      %v183 = vld [vmem:[%s169 + $0x24] sm:$0xf]
      %v184 = vld [vmem:[%s169 + $0x28] sm:$0xff]
      %v185 = vld [vmem:[%s169 + $0x30] sm:$0xff]
      %v186 = vld [vmem:[%s169 + $0x38] sm:$0xf]
      %v187 = vld [vmem:[%s169 + $0x3c] sm:$0xff]
      %v188 = vld [vmem:[%s169 + $0x44] sm:$0xff]
      %v189 = vld [vmem:[%s169 + $0x4c] sm:$0xf]
      %v190 = vld [vmem:[%s169 + $0x50] sm:$0xff]
      %v191 = vld [vmem:[%s169 + $0x58] sm:$0xff]
      %v192 = vld [vmem:[%s169 + $0x60] sm:$0xf]
      %v193 = vld [vmem:[%s169 + $0x64] sm:$0xff]
      %v194 = vld [vmem:[%s169 + $0x6c] sm:$0xff]
      %v195 = vld [vmem:[%s169 + $0x74] sm:$0xf]
      %v196 = vld [vmem:[%s169 + $0x78] sm:$0xff]
      %v197 = vld [vmem:[%s169 + $0x80] sm:$0xff]
      %v198 = vld [vmem:[%s169 + $0x88] sm:$0xf]
      %v199 = vld [vmem:[%s169 + $0x8c] sm:$0xff]
      %v200 = vld [vmem:[%s169 + $0x94] sm:$0xff]
      %v201 = vld [vmem:[%s169 + $0x9c] sm:$0xf]
      %v202 = vld [vmem:[%s169 + $0xa0] sm:$0xff]
      %v203 = vld [vmem:[%s169 + $0xa8] sm:$0xff]
      %v204 = vld [vmem:[%s169 + $0xb0] sm:$0xf]
      %v205 = vld [vmem:[%s169 + $0xb4] sm:$0xff]
      %v206 = vld [vmem:[%s169 + $0xbc] sm:$0xff]
      %v207 = vld [vmem:[%s169 + $0xc4] sm:$0xf]
      %v208 = vld [vmem:[%s169 + $0xc8] sm:$0xff]
      %v209 = vld [vmem:[%s169 + $0xd0] sm:$0xff]
      %v210 = vld [vmem:[%s169 + $0xd8] sm:$0xf]
      %v211 = vld [vmem:[%s169 + $0xdc] sm:$0xff]
      %v212 = vld [vmem:[%s169 + $0xe4] sm:$0xff]
      %v213 = vld [vmem:[%s169 + $0xec] sm:$0xf]
      %v214 = vld [vmem:[%s169 + $0xf0] sm:$0xff]
      %v215 = vld [vmem:[%s169 + $0xf8] sm:$0xff]
      %v216 = vld [vmem:[%s169 + $0x100] sm:$0xf]
      %v217 = vld [vmem:[%s169 + $0x104] sm:$0xff]
      %v218 = vld [vmem:[%s169 + $0x10c] sm:$0xff]
      %v219 = vld [vmem:[%s169 + $0x114] sm:$0xf]
      %v220 = vld [vmem:[%s169 + $0x118] sm:$0xff]
      %v221 = vld [vmem:[%s169 + $0x120] sm:$0xff]
      %v222 = vld [vmem:[%s169 + $0x128] sm:$0xf]
      %v223 = vld [vmem:[%s169 + $0x12c] sm:$0xff]
      %v224 = vld [vmem:[%s169 + $0x134] sm:$0xff]
      %v225 = vld [vmem:[%s169 + $0x13c] sm:$0xf]
      %v226 = vld [vmem:[%s169 + $0x140] sm:$0xff]
      %v227 = vld [vmem:[%s169 + $0x148] sm:$0xff]
      %v228 = vld [vmem:[%s169 + $0x150] sm:$0xf]
      %v229 = vld [vmem:[%s169 + $0x154] sm:$0xff]
      %v230 = vld [vmem:[%s169 + $0x15c] sm:$0xff]
      %v231 = vld [vmem:[%s169 + $0x164] sm:$0xf]
      %v232 = vld [vmem:[%s169 + $0x168] sm:$0xff]
      %v233 = vld [vmem:[%s169 + $0x170] sm:$0xff]
      %v234 = vld [vmem:[%s169 + $0x178] sm:$0xf]
      %v235 = vld [vmem:[%s169 + $0x17c] sm:$0xff]
      %v236 = vld [vmem:[%s169 + $0x184] sm:$0xff]
      %v237 = vld [vmem:[%s169 + $0x18c] sm:$0xf]
      %v238 = vld [vmem:[%s169 + $0x190] sm:$0xff]
      %v239 = vld [vmem:[%s169 + $0x198] sm:$0xff]
      %v240 = vld [vmem:[%s169 + $0x1a0] sm:$0xf]
      %v241 = vld [vmem:[%s169 + $0x1a4] sm:$0xff]
      %v242 = vld [vmem:[%s169 + $0x1ac] sm:$0xff]
      %v243 = vld [vmem:[%s169 + $0x1b4] sm:$0xf]
      %v244 = vld [vmem:[%s169 + $0x1b8] sm:$0xff]
      %v245 = vld [vmem:[%s169 + $0x1c0] sm:$0xff]
      %v246 = vld [vmem:[%s169 + $0x1c8] sm:$0xf]
      %v247 = vld [vmem:[%s169 + $0x1cc] sm:$0xff]
      %v248 = vld [vmem:[%s169 + $0x1d4] sm:$0xff]
      %v249 = vld [vmem:[%s169 + $0x1dc] sm:$0xf]
      %v250 = vld [vmem:[%s169 + $0x1e0] sm:$0xff]
      %v251 = vld [vmem:[%s169 + $0x1e8] sm:$0xff]
      %v252 = vld [vmem:[%s169 + $0x1f0] sm:$0xf]
      %v253 = vld [vmem:[%s169 + $0x1f4] sm:$0xff]
      %v254 = vld [vmem:[%s169 + $0x1fc] sm:$0xff]
      %v255 = vld [vmem:[%s169 + $0x204] sm:$0xf]
      %v256 = vld [vmem:[%s169 + $0x208] sm:$0xff]
      %v257 = vld [vmem:[%s169 + $0x210] sm:$0xff]
      %v258 = vld [vmem:[%s169 + $0x218] sm:$0xf]
      %v259 = vld [vmem:[%s169 + $0x21c] sm:$0xff]
      %v260 = vld [vmem:[%s169 + $0x224] sm:$0xff]
      %v261 = vld [vmem:[%s169 + $0x22c] sm:$0xf]
      %v262 = vld [vmem:[%s169 + $0x230] sm:$0xff]
      %v263 = vld [vmem:[%s169 + $0x238] sm:$0xff]
      %v264 = vld [vmem:[%s169 + $0x240] sm:$0xf]
      %v265 = vld [vmem:[%s169 + $0x244] sm:$0xff]
      %v266 = vld [vmem:[%s169 + $0x24c] sm:$0xff]
      %v267 = vld [vmem:[%s169 + $0x254] sm:$0xf]
      %v268 = vld [vmem:[%s169 + $0x258] sm:$0xff]
      %v269 = vld [vmem:[%s169 + $0x260] sm:$0xff]
      %v270 = vld [vmem:[%s169 + $0x268] sm:$0xf]
      %v271 = vld [vmem:[%s169 + $0x26c] sm:$0xff]
      %v272 = vld [vmem:[%s169 + $0x274] sm:$0xff]
      %v273 = vld [vmem:[%s169 + $0x27c] sm:$0xf]
      %v274 = vld [vmem:[%s1] sm:$0xf]
      %v275 = vld [vmem:[%s1 + $0x4] sm:$0xf]
      %v276 = vld [vmem:[%s1 + $0x8] sm:$0xf]
      %v277 = vld [vmem:[%s1 + $0xc] sm:$0xf]
      %v278 = vld [vmem:[%s1 + $0x10] sm:$0xf]
      %v279 = vld [vmem:[%s1 + $0x14] sm:$0xf]
      %v280 = vld [vmem:[%s1 + $0x18] sm:$0xf]
      %v281 = vld [vmem:[%s1 + $0x1c] sm:$0xf]
      %v282 = vld [vmem:[%s1 + $0x20] sm:$0xf]
      %v283 = vld [vmem:[%s1 + $0x24] sm:$0xf]
      %v284 = vld [vmem:[%s1 + $0x28] sm:$0xf]
      %v285 = vld [vmem:[%s1 + $0x2c] sm:$0xf]
      %v286 = vld [vmem:[%s1 + $0x30] sm:$0xf]
      %v287 = vld [vmem:[%s1 + $0x34] sm:$0xf]
      %v288 = vld [vmem:[%s1 + $0x38] sm:$0xf]
      %v289 = vld [vmem:[%s1 + $0x3c] sm:$0xf]
      %v290 = vld [vmem:[%s1 + $0x40] sm:$0xf]
      %v291 = vld [vmem:[%s1 + $0x44] sm:$0xf]
      %v292 = vld [vmem:[%s1 + $0x48] sm:$0xf]
      %v293 = vld [vmem:[%s1 + $0x4c] sm:$0xf]
      %v294 = vld [vmem:[%s1 + $0x50] sm:$0xf]
      %v295 = vld [vmem:[%s1 + $0x54] sm:$0xf]
      %v296 = vld [vmem:[%s1 + $0x58] sm:$0xf]
      %v297 = vld [vmem:[%s1 + $0x5c] sm:$0xf]
      %v298 = vld [vmem:[%s1 + $0x60] sm:$0xf]
      %v299 = vld [vmem:[%s1 + $0x64] sm:$0xf]
      %v300 = vld [vmem:[%s1 + $0x68] sm:$0xf]
      %v301 = vld [vmem:[%s1 + $0x6c] sm:$0xf]
      %v302 = vld [vmem:[%s1 + $0x70] sm:$0xf]
      %v303 = vld [vmem:[%s1 + $0x74] sm:$0xf]
      %v304 = vld [vmem:[%s1 + $0x78] sm:$0xf]
      %v305 = vld [vmem:[%s1 + $0x7c] sm:$0xf]
      %v306 = vld [vmem:[%s1 + $0x80] sm:$0xf]
      %v307 = vld [vmem:[%s1 + $0x84] sm:$0xf]
      %v308 = vld [vmem:[%s1 + $0x88] sm:$0xf]
      %v309 = vld [vmem:[%s1 + $0x8c] sm:$0xf]
      %v310 = vld [vmem:[%s1 + $0x90] sm:$0xf]
      %v311 = vld [vmem:[%s1 + $0x94] sm:$0xf]
      %v312 = vld [vmem:[%s1 + $0x98] sm:$0xf]
      %v313 = vld [vmem:[%s1 + $0x9c] sm:$0xf]
      %v314 = vld [vmem:[%s1 + $0xa0] sm:$0xf]
      %v315 = vld [vmem:[%s1 + $0xa4] sm:$0xf]
      %v316 = vld [vmem:[%s1 + $0xa8] sm:$0xf]
      %v317 = vld [vmem:[%s1 + $0xac] sm:$0xf]
      %v318 = vld [vmem:[%s1 + $0xb0] sm:$0xf]
      %v319 = vld [vmem:[%s1 + $0xb4] sm:$0xf]
      %v320 = vld [vmem:[%s1 + $0xb8] sm:$0xf]
      %v321 = vld [vmem:[%s1 + $0xbc] sm:$0xf]
      %v322 = vld [vmem:[%s1 + $0xc0] sm:$0xf]
      %v323 = vld [vmem:[%s1 + $0xc4] sm:$0xf]
      %v324 = vld [vmem:[%s1 + $0xc8] sm:$0xf]
      %v325 = vld [vmem:[%s1 + $0xcc] sm:$0xf]
      %v326 = vld [vmem:[%s1 + $0xd0] sm:$0xf]
      %v327 = vld [vmem:[%s1 + $0xd4] sm:$0xf]
      %v328 = vld [vmem:[%s1 + $0xd8] sm:$0xf]
      %v329 = vld [vmem:[%s1 + $0xdc] sm:$0xf]
      %v330 = vld [vmem:[%s1 + $0xe0] sm:$0xf]
      %v331 = vld [vmem:[%s1 + $0xe4] sm:$0xf]
      %v332 = vld [vmem:[%s1 + $0xe8] sm:$0xf]
      %v333 = vld [vmem:[%s1 + $0xec] sm:$0xf]
      %v334 = vld [vmem:[%s1 + $0xf0] sm:$0xf]
      %v335 = vld [vmem:[%s1 + $0xf4] sm:$0xf]
      %v336 = vld [vmem:[%s1 + $0xf8] sm:$0xf]
      %v337 = vld [vmem:[%s1 + $0xfc] sm:$0xf]
      %v338 = vld [vmem:[%s1 + $0x100] sm:$0xf]
      %v339 = vld [vmem:[%s1 + $0x104] sm:$0xf]
      %v340 = vld [vmem:[%s1 + $0x108] sm:$0xf]
      %v341 = vld [vmem:[%s1 + $0x10c] sm:$0xf]
      %v342 = vld [vmem:[%s1 + $0x110] sm:$0xf]
      %v343 = vld [vmem:[%s1 + $0x114] sm:$0xf]
      %v344 = vld [vmem:[%s1 + $0x118] sm:$0xf]
      %v345 = vld [vmem:[%s1 + $0x11c] sm:$0xf]
      %v346 = vld [vmem:[%s2] sm:$0x1]
      %v348 = vlaneseq
      %v349 = vshrl.u32 %v348, 7
      %v350 = vsub.s32 0, %v349
      %v351 = vrot.slane %v346, %v350
      %v449 = vunpack.c.l.b16 %v178
      %v450 = vunpack.c.h.b16 %v178
      %v451 = vunpack.c.l.b16 %v179
      %v452 = vunpack.c.h.b16 %v179
      %v453 = vunpack.c.l.b16 %v180
      %v454 = vunpack.c.l.b16 %v181
      %v455 = vunpack.c.h.b16 %v181
      %v456 = vunpack.c.l.b16 %v182
      %v457 = vunpack.c.h.b16 %v182
      %v458 = vunpack.c.l.b16 %v183
      %v459 = vunpack.c.l.b16 %v184
      %v460 = vunpack.c.h.b16 %v184
      %v461 = vunpack.c.l.b16 %v185
      %v462 = vunpack.c.h.b16 %v185
      %v463 = vunpack.c.l.b16 %v186
      %v464 = vunpack.c.l.b16 %v187
      %v465 = vunpack.c.h.b16 %v187
      %v466 = vunpack.c.l.b16 %v188
      %v467 = vunpack.c.h.b16 %v188
      %v468 = vunpack.c.l.b16 %v189
      %v469 = vunpack.c.l.b16 %v190
      %v470 = vunpack.c.h.b16 %v190
      %v471 = vunpack.c.l.b16 %v191
      %v472 = vunpack.c.h.b16 %v191
      %v473 = vunpack.c.l.b16 %v192
      %v474 = vunpack.c.l.b16 %v193
      %v475 = vunpack.c.h.b16 %v193
      %v476 = vunpack.c.l.b16 %v194
      %v477 = vunpack.c.h.b16 %v194
      %v478 = vunpack.c.l.b16 %v195
      %v479 = vunpack.c.l.b16 %v196
      %v480 = vunpack.c.h.b16 %v196
      %v481 = vunpack.c.l.b16 %v197
      %v482 = vunpack.c.h.b16 %v197
      %v483 = vunpack.c.l.b16 %v198
      %v484 = vunpack.c.l.b16 %v199
      %v485 = vunpack.c.h.b16 %v199
      %v486 = vunpack.c.l.b16 %v200
      %v487 = vunpack.c.h.b16 %v200
      %v488 = vunpack.c.l.b16 %v201
      %v489 = vunpack.c.l.b16 %v202
      %v490 = vunpack.c.h.b16 %v202
      %v491 = vunpack.c.l.b16 %v203
      %v492 = vunpack.c.h.b16 %v203
      %v493 = vunpack.c.l.b16 %v204
      %v494 = vunpack.c.l.b16 %v205
      %v495 = vunpack.c.h.b16 %v205
      %v496 = vunpack.c.l.b16 %v206
      %v497 = vunpack.c.h.b16 %v206
      %v498 = vunpack.c.l.b16 %v207
      %v499 = vunpack.c.l.b16 %v208
      %v500 = vunpack.c.h.b16 %v208
      %v501 = vunpack.c.l.b16 %v209
      %v502 = vunpack.c.h.b16 %v209
      %v503 = vunpack.c.l.b16 %v210
      %v504 = vunpack.c.l.b16 %v211
      %v505 = vunpack.c.h.b16 %v211
      %v506 = vunpack.c.l.b16 %v212
      %v507 = vunpack.c.h.b16 %v212
      %v508 = vunpack.c.l.b16 %v213
      %v509 = vunpack.c.l.b16 %v214
      %v510 = vunpack.c.h.b16 %v214
      %v511 = vunpack.c.l.b16 %v215
      %v512 = vunpack.c.h.b16 %v215
      %v513 = vunpack.c.l.b16 %v216
      %v514 = vunpack.c.l.b16 %v217
      %v515 = vunpack.c.h.b16 %v217
      %v516 = vunpack.c.l.b16 %v218
      %v517 = vunpack.c.h.b16 %v218
      %v518 = vunpack.c.l.b16 %v219
      %v519 = vunpack.c.l.b16 %v220
      %v520 = vunpack.c.h.b16 %v220
      %v521 = vunpack.c.l.b16 %v221
      %v522 = vunpack.c.h.b16 %v221
      %v523 = vunpack.c.l.b16 %v222
      %v524 = vunpack.c.l.b16 %v223
      %v525 = vunpack.c.h.b16 %v223
      %v526 = vunpack.c.l.b16 %v224
      %v527 = vunpack.c.h.b16 %v224
      %v528 = vunpack.c.l.b16 %v225
      %v529 = vunpack.c.l.b16 %v226
      %v530 = vunpack.c.h.b16 %v226
      %v531 = vunpack.c.l.b16 %v227
      %v532 = vunpack.c.h.b16 %v227
      %v533 = vunpack.c.l.b16 %v228
      %v534 = vunpack.c.l.b16 %v229
      %v535 = vunpack.c.h.b16 %v229
      %v536 = vunpack.c.l.b16 %v230
      %v537 = vunpack.c.h.b16 %v230
      %v538 = vunpack.c.l.b16 %v231
      %v539 = vunpack.c.l.b16 %v232
      %v540 = vunpack.c.h.b16 %v232
      %v541 = vunpack.c.l.b16 %v233
      %v542 = vunpack.c.h.b16 %v233
      %v543 = vunpack.c.l.b16 %v234
      %v544 = vunpack.c.l.b16 %v235
      %v545 = vunpack.c.h.b16 %v235
      %v546 = vunpack.c.l.b16 %v236
      %v547 = vunpack.c.h.b16 %v236
      %v548 = vunpack.c.l.b16 %v237
      %v549 = vunpack.c.l.b16 %v238
      %v550 = vunpack.c.h.b16 %v238
      %v551 = vunpack.c.l.b16 %v239
      %v552 = vunpack.c.h.b16 %v239
      %v553 = vunpack.c.l.b16 %v240
      %v554 = vunpack.c.l.b16 %v241
      %v555 = vunpack.c.h.b16 %v241
      %v556 = vunpack.c.l.b16 %v242
      %v557 = vunpack.c.h.b16 %v242
      %v558 = vunpack.c.l.b16 %v243
      %v559 = vunpack.c.l.b16 %v244
      %v560 = vunpack.c.h.b16 %v244
      %v561 = vunpack.c.l.b16 %v245
      %v562 = vunpack.c.h.b16 %v245
      %v563 = vunpack.c.l.b16 %v246
      %v564 = vunpack.c.l.b16 %v247
      %v565 = vunpack.c.h.b16 %v247
      %v566 = vunpack.c.l.b16 %v248
      %v567 = vunpack.c.h.b16 %v248
      %v568 = vunpack.c.l.b16 %v249
      %v569 = vunpack.c.l.b16 %v250
      %v570 = vunpack.c.h.b16 %v250
      %v571 = vunpack.c.l.b16 %v251
      %v572 = vunpack.c.h.b16 %v251
      %v573 = vunpack.c.l.b16 %v252
      %v574 = vunpack.c.l.b16 %v253
      %v575 = vunpack.c.h.b16 %v253
      %v576 = vunpack.c.l.b16 %v254
      %v577 = vunpack.c.h.b16 %v254
      %v578 = vunpack.c.l.b16 %v255
      %v579 = vunpack.c.l.b16 %v256
      %v580 = vunpack.c.h.b16 %v256
      %v581 = vunpack.c.l.b16 %v257
      %v582 = vunpack.c.h.b16 %v257
      %v583 = vunpack.c.l.b16 %v258
      %v584 = vunpack.c.l.b16 %v259
      %v585 = vunpack.c.h.b16 %v259
      %v586 = vunpack.c.l.b16 %v260
      %v587 = vunpack.c.h.b16 %v260
      %v588 = vunpack.c.l.b16 %v261
      %v589 = vunpack.c.l.b16 %v262
      %v590 = vunpack.c.h.b16 %v262
      %v591 = vunpack.c.l.b16 %v263
      %v592 = vunpack.c.h.b16 %v263
      %v593 = vunpack.c.l.b16 %v264
      %v594 = vunpack.c.l.b16 %v265
      %v595 = vunpack.c.h.b16 %v265
      %v596 = vunpack.c.l.b16 %v266
      %v597 = vunpack.c.h.b16 %v266
      %v598 = vunpack.c.l.b16 %v267
      %v599 = vunpack.c.l.b16 %v268
      %v600 = vunpack.c.h.b16 %v268
      %v601 = vunpack.c.l.b16 %v269
      %v602 = vunpack.c.h.b16 %v269
      %v603 = vunpack.c.l.b16 %v270
      %v604 = vunpack.c.l.b16 %v271
      %v605 = vunpack.c.h.b16 %v271
      %v606 = vunpack.c.l.b16 %v272
      %v607 = vunpack.c.h.b16 %v272
      %v608 = vunpack.c.l.b16 %v273
      %v609 = vpack.c.b16 %v454, %v449
      %v610 = vpack.c.b16 %v455, %v450
      %v611 = vpack.c.b16 %v456, %v451
      %v612 = vpack.c.b16 %v457, %v452
      %v613 = vpack.c.b16 %v458, %v453
      %v614 = vpack.c.b16 %v464, %v459
      %v615 = vpack.c.b16 %v465, %v460
      %v616 = vpack.c.b16 %v466, %v461
      %v617 = vpack.c.b16 %v467, %v462
      %v618 = vpack.c.b16 %v468, %v463
      %v619 = vpack.c.b16 %v474, %v469
      %v620 = vpack.c.b16 %v475, %v470
      %v621 = vpack.c.b16 %v476, %v471
      %v622 = vpack.c.b16 %v477, %v472
      %v623 = vpack.c.b16 %v478, %v473
      %v624 = vpack.c.b16 %v484, %v479
      %v625 = vpack.c.b16 %v485, %v480
      %v626 = vpack.c.b16 %v486, %v481
      %v627 = vpack.c.b16 %v487, %v482
      %v628 = vpack.c.b16 %v488, %v483
      %v629 = vpack.c.b16 %v494, %v489
      %v630 = vpack.c.b16 %v495, %v490
      %v631 = vpack.c.b16 %v496, %v491
      %v632 = vpack.c.b16 %v497, %v492
      %v633 = vpack.c.b16 %v498, %v493
      %v634 = vpack.c.b16 %v504, %v499
      %v635 = vpack.c.b16 %v505, %v500
      %v636 = vpack.c.b16 %v506, %v501
      %v637 = vpack.c.b16 %v507, %v502
      %v638 = vpack.c.b16 %v508, %v503
      %v639 = vpack.c.b16 %v514, %v509
      %v640 = vpack.c.b16 %v515, %v510
      %v641 = vpack.c.b16 %v516, %v511
      %v642 = vpack.c.b16 %v517, %v512
      %v643 = vpack.c.b16 %v518, %v513
      %v644 = vpack.c.b16 %v524, %v519
      %v645 = vpack.c.b16 %v525, %v520
      %v646 = vpack.c.b16 %v526, %v521
      %v647 = vpack.c.b16 %v527, %v522
      %v648 = vpack.c.b16 %v528, %v523
      %v649 = vpack.c.b16 %v534, %v529
      %v650 = vpack.c.b16 %v535, %v530
      %v651 = vpack.c.b16 %v536, %v531
      %v652 = vpack.c.b16 %v537, %v532
      %v653 = vpack.c.b16 %v538, %v533
      %v654 = vpack.c.b16 %v544, %v539
      %v655 = vpack.c.b16 %v545, %v540
      %v656 = vpack.c.b16 %v546, %v541
      %v657 = vpack.c.b16 %v547, %v542
      %v658 = vpack.c.b16 %v548, %v543
      %v659 = vpack.c.b16 %v554, %v549
      %v660 = vpack.c.b16 %v555, %v550
      %v661 = vpack.c.b16 %v556, %v551
      %v662 = vpack.c.b16 %v557, %v552
      %v663 = vpack.c.b16 %v558, %v553
      %v664 = vpack.c.b16 %v564, %v559
      %v665 = vpack.c.b16 %v565, %v560
      %v666 = vpack.c.b16 %v566, %v561
      %v667 = vpack.c.b16 %v567, %v562
      %v668 = vpack.c.b16 %v568, %v563
      %v669 = vpack.c.b16 %v574, %v569
      %v670 = vpack.c.b16 %v575, %v570
      %v671 = vpack.c.b16 %v576, %v571
      %v672 = vpack.c.b16 %v577, %v572
      %v673 = vpack.c.b16 %v578, %v573
      %v674 = vpack.c.b16 %v584, %v579
      %v675 = vpack.c.b16 %v585, %v580
      %v676 = vpack.c.b16 %v586, %v581
      %v677 = vpack.c.b16 %v587, %v582
      %v678 = vpack.c.b16 %v588, %v583
      %v679 = vpack.c.b16 %v594, %v589
      %v680 = vpack.c.b16 %v595, %v590
      %v681 = vpack.c.b16 %v596, %v591
      %v682 = vpack.c.b16 %v597, %v592
      %v683 = vpack.c.b16 %v598, %v593
      %v684 = vpack.c.b16 %v604, %v599
      %v685 = vpack.c.b16 %v605, %v600
      %v686 = vpack.c.b16 %v606, %v601
      %v687 = vpack.c.b16 %v607, %v602
      %v688 = vpack.c.b16 %v608, %v603
      %v825 = vunpack.c.l.b16 %v274
      %v826 = vunpack.c.l.b16 %v275
      %v827 = vunpack.c.l.b16 %v276
      %v828 = vunpack.c.l.b16 %v277
      %v829 = vunpack.c.l.b16 %v278
      %v830 = vunpack.c.l.b16 %v279
      %v831 = vunpack.c.l.b16 %v280
      %v832 = vunpack.c.l.b16 %v281
      %v833 = vunpack.c.l.b16 %v282
      %v834 = vunpack.c.l.b16 %v283
      %v835 = vunpack.c.l.b16 %v284
      %v836 = vunpack.c.l.b16 %v285
      %v837 = vunpack.c.l.b16 %v286
      %v838 = vunpack.c.l.b16 %v287
      %v839 = vunpack.c.l.b16 %v288
      %v840 = vunpack.c.l.b16 %v289
      %v841 = vunpack.c.l.b16 %v290
      %v842 = vunpack.c.l.b16 %v291
      %v843 = vunpack.c.l.b16 %v292
      %v844 = vunpack.c.l.b16 %v293
      %v845 = vunpack.c.l.b16 %v294
      %v846 = vunpack.c.l.b16 %v295
      %v847 = vunpack.c.l.b16 %v296
      %v848 = vunpack.c.l.b16 %v297
      %v849 = vunpack.c.l.b16 %v298
      %v850 = vunpack.c.l.b16 %v299
      %v851 = vunpack.c.l.b16 %v300
      %v852 = vunpack.c.l.b16 %v301
      %v853 = vunpack.c.l.b16 %v302
      %v854 = vunpack.c.l.b16 %v303
      %v855 = vunpack.c.l.b16 %v304
      %v856 = vunpack.c.l.b16 %v305
      %v857 = vunpack.c.l.b16 %v306
      %v858 = vunpack.c.l.b16 %v307
      %v859 = vunpack.c.l.b16 %v308
      %v860 = vunpack.c.l.b16 %v309
      %v861 = vunpack.c.l.b16 %v310
      %v862 = vunpack.c.l.b16 %v311
      %v863 = vunpack.c.l.b16 %v312
      %v864 = vunpack.c.l.b16 %v313
      %v865 = vunpack.c.l.b16 %v314
      %v866 = vunpack.c.l.b16 %v315
      %v867 = vunpack.c.l.b16 %v316
      %v868 = vunpack.c.l.b16 %v317
      %v869 = vunpack.c.l.b16 %v318
      %v870 = vunpack.c.l.b16 %v319
      %v871 = vunpack.c.l.b16 %v320
      %v872 = vunpack.c.l.b16 %v321
      %v873 = vunpack.c.l.b16 %v322
      %v874 = vunpack.c.l.b16 %v323
      %v875 = vunpack.c.l.b16 %v324
      %v876 = vunpack.c.l.b16 %v325
      %v877 = vunpack.c.l.b16 %v326
      %v878 = vunpack.c.l.b16 %v327
      %v879 = vunpack.c.l.b16 %v328
      %v880 = vunpack.c.l.b16 %v329
      %v881 = vunpack.c.l.b16 %v330
      %v882 = vunpack.c.l.b16 %v331
      %v883 = vunpack.c.l.b16 %v332
      %v884 = vunpack.c.l.b16 %v333
      %v885 = vunpack.c.l.b16 %v334
      %v886 = vunpack.c.l.b16 %v335
      %v887 = vunpack.c.l.b16 %v336
      %v888 = vunpack.c.l.b16 %v337
      %v889 = vunpack.c.l.b16 %v338
      %v890 = vunpack.c.l.b16 %v339
      %v891 = vunpack.c.l.b16 %v340
      %v892 = vunpack.c.l.b16 %v341
      %v893 = vunpack.c.l.b16 %v342
      %v894 = vunpack.c.l.b16 %v343
      %v895 = vunpack.c.l.b16 %v344
      %v896 = vunpack.c.l.b16 %v345
      %v897 = vpack.c.b16 %v826, %v825
      %v898 = vpack.c.b16 %v828, %v827
      %v899 = vpack.c.b16 %v830, %v829
      %v900 = vpack.c.b16 %v832, %v831
      %v901 = vpack.c.b16 %v834, %v833
      %v902 = vpack.c.b16 %v836, %v835
      %v903 = vpack.c.b16 %v838, %v837
      %v904 = vpack.c.b16 %v840, %v839
      %v905 = vpack.c.b16 %v842, %v841
      %v906 = vpack.c.b16 %v844, %v843
      %v907 = vpack.c.b16 %v846, %v845
      %v908 = vpack.c.b16 %v848, %v847
      %v909 = vpack.c.b16 %v850, %v849
      %v910 = vpack.c.b16 %v852, %v851
      %v911 = vpack.c.b16 %v854, %v853
      %v912 = vpack.c.b16 %v856, %v855
      %v913 = vpack.c.b16 %v858, %v857
      %v914 = vpack.c.b16 %v860, %v859
      %v915 = vpack.c.b16 %v862, %v861
      %v916 = vpack.c.b16 %v864, %v863
      %v917 = vpack.c.b16 %v866, %v865
      %v918 = vpack.c.b16 %v868, %v867
      %v919 = vpack.c.b16 %v870, %v869
      %v920 = vpack.c.b16 %v872, %v871
      %v921 = vpack.c.b16 %v874, %v873
      %v922 = vpack.c.b16 %v876, %v875
      %v923 = vpack.c.b16 %v878, %v877
      %v924 = vpack.c.b16 %v880, %v879
      %v925 = vpack.c.b16 %v882, %v881
      %v926 = vpack.c.b16 %v884, %v883
      %v927 = vpack.c.b16 %v886, %v885
      %v928 = vpack.c.b16 %v888, %v887
      %v929 = vpack.c.b16 %v890, %v889
      %v930 = vpack.c.b16 %v892, %v891
      %v931 = vpack.c.b16 %v894, %v893
      %v932 = vpack.c.b16 %v896, %v895
      %vm969 = vcmask 523264
      %v971 = vsel %vm969, %v613, 0
      %v974 = vsel %vm969, %v618, 0
      %v977 = vsel %vm969, %v623, 0
      %v980 = vsel %vm969, %v628, 0
      %v983 = vsel %vm969, %v633, 0
      %v986 = vsel %vm969, %v638, 0
      %v989 = vsel %vm969, %v643, 0
      %v992 = vsel %vm969, %v648, 0
      %v995 = vsel %vm969, %v653, 0
      %v998 = vsel %vm969, %v658, 0
      %v1001 = vsel %vm969, %v663, 0
      %v1004 = vsel %vm969, %v668, 0
      %v1007 = vsel %vm969, %v673, 0
      %v1010 = vsel %vm969, %v678, 0
      %v1013 = vsel %vm969, %v683, 0
      %v1016 = vsel %vm969, %v688, 0
      %1018 = vmatprep.subr.bf16.mxu0 0
      %1019 = vmatpush1.bf16.msra.mxu0 %v897
      %1020 = vmatprep.subr.bf16.mxu0 0
      %1021 = vmatpush1.bf16.msra.mxu0 %v898
      %1022 = vmatprep.subr.bf16.mxu0 0
      %1023 = vmatpush1.bf16.msra.mxu0 %v899
      %1024 = vmatprep.subr.bf16.mxu0 0
      %1025 = vmatpush1.bf16.msra.mxu0 %v900
      %1026 = vmatprep.subr.bf16.mxu0 0
      %1027 = vmatpush1.bf16.msra.mxu0 %v901
      %1028 = vmatprep.subr.bf16.mxu0 0
      %1029 = vmatpush1.bf16.msra.mxu0 %v902
      %1030 = vmatprep.subr.bf16.mxu0 0
      %1031 = vmatpush1.bf16.msra.mxu0 %v903
      %1032 = vmatprep.subr.bf16.mxu0 0
      %1033 = vmatpush1.bf16.msra.mxu0 %v904
      %1034 = vmatprep.subr.bf16.mxu0 0
      %1035 = vmatpush1.bf16.msra.mxu0 %v905
      %1036 = vmatprep.subr.bf16.mxu0 0
      %1037 = vmatpush1.bf16.msra.mxu0 %v906
      %1038 = vmatprep.subr.bf16.mxu0 0
      %1039 = vmatpush1.bf16.msra.mxu0 %v907
      %1040 = vmatprep.subr.bf16.mxu0 0
      %1041 = vmatpush1.bf16.msra.mxu0 %v908
      %1042 = vmatprep.subr.bf16.mxu0 0
      %1043 = vmatpush1.bf16.msra.mxu0 %v909
      %1044 = vmatprep.subr.bf16.mxu0 0
      %1045 = vmatpush1.bf16.msra.mxu0 %v910
      %1046 = vmatprep.subr.bf16.mxu0 0
      %1047 = vmatpush1.bf16.msra.mxu0 %v911
      %1048 = vmatprep.subr.bf16.mxu0 0
      %1049 = vmatpush1.bf16.msra.mxu0 %v912
      %1050 = vmatprep.mubr.bf16.mxu0 %v610
      %1051 = vmatmul.mubr.bf16.gmra.mrb[0].mxu0 %v609
      %v1052 = vpop.f32.mrb[0].mxu0
      %v1053 = vadd.f32 %v351, %v1052
      %v1054 = vpop.f32.mrb[0].mxu0
      %v1055 = vpop.f32.mrb[0].mxu0
      %v1056 = vadd.f32 %v351, %v1055
      %v1057 = vpop.f32.mrb[0].mxu0
      %1058 = vmatprep.mubr.bf16.mxu0 %v615
      %1059 = vmatmul.mubr.bf16.gmra.mrb[0].mxu0 %v614
      %v1060 = vpop.f32.mrb[0].mxu0
      %v1061 = vadd.f32 %v351, %v1060
      %v1062 = vpop.f32.mrb[0].mxu0
      %v1063 = vpop.f32.mrb[0].mxu0
      %v1064 = vadd.f32 %v351, %v1063
      %v1065 = vpop.f32.mrb[0].mxu0
      %1066 = vmatprep.mubr.bf16.mxu0 %v620
      %1067 = vmatmul.mubr.bf16.gmra.mrb[0].mxu0 %v619
      %v1068 = vpop.f32.mrb[0].mxu0
      %v1069 = vadd.f32 %v351, %v1068
      %v1070 = vpop.f32.mrb[0].mxu0
      %v1071 = vpop.f32.mrb[0].mxu0
      %v1072 = vadd.f32 %v351, %v1071
      %v1073 = vpop.f32.mrb[0].mxu0
      %1074 = vmatprep.mubr.bf16.mxu0 %v625
      %1075 = vmatmul.mubr.bf16.gmra.mrb[0].mxu0 %v624
      %v1076 = vpop.f32.mrb[0].mxu0
      %v1077 = vadd.f32 %v351, %v1076
      %v1078 = vpop.f32.mrb[0].mxu0
      %v1079 = vpop.f32.mrb[0].mxu0
      %v1080 = vadd.f32 %v351, %v1079
      %v1081 = vpop.f32.mrb[0].mxu0
      %1082 = vmatprep.mubr.bf16.mxu0 %v630
      %1083 = vmatmul.mubr.bf16.gmra.mrb[0].mxu0 %v629
      %v1084 = vpop.f32.mrb[0].mxu0
      %v1085 = vadd.f32 %v351, %v1084
      %v1086 = vpop.f32.mrb[0].mxu0
      %v1087 = vpop.f32.mrb[0].mxu0
      %v1088 = vadd.f32 %v351, %v1087
      %v1089 = vpop.f32.mrb[0].mxu0
      %1090 = vmatprep.mubr.bf16.mxu0 %v635
      %1091 = vmatmul.mubr.bf16.gmra.mrb[0].mxu0 %v634
      %v1092 = vpop.f32.mrb[0].mxu0
      %v1093 = vadd.f32 %v351, %v1092
      %v1094 = vpop.f32.mrb[0].mxu0
      %v1095 = vpop.f32.mrb[0].mxu0
      %v1096 = vadd.f32 %v351, %v1095
      %v1097 = vpop.f32.mrb[0].mxu0
      %1098 = vmatprep.mubr.bf16.mxu0 %v640
      %1099 = vmatmul.mubr.bf16.gmra.mrb[0].mxu0 %v639
      %v1100 = vpop.f32.mrb[0].mxu0
      %v1101 = vadd.f32 %v351, %v1100
      %v1102 = vpop.f32.mrb[0].mxu0
      %v1103 = vpop.f32.mrb[0].mxu0
      %v1104 = vadd.f32 %v351, %v1103
      %v1105 = vpop.f32.mrb[0].mxu0
      %1106 = vmatprep.mubr.bf16.mxu0 %v645
      %1107 = vmatmul.mubr.bf16.gmra.mrb[0].mxu0 %v644
      %v1108 = vpop.f32.mrb[0].mxu0
      %v1109 = vadd.f32 %v351, %v1108
      %v1110 = vpop.f32.mrb[0].mxu0
      %v1111 = vpop.f32.mrb[0].mxu0
      %v1112 = vadd.f32 %v351, %v1111
      %v1113 = vpop.f32.mrb[0].mxu0
      %1114 = vmatprep.mubr.bf16.mxu0 %v650
      %1115 = vmatmul.mubr.bf16.gmra.mrb[0].mxu0 %v649
      %v1116 = vpop.f32.mrb[0].mxu0
      %v1117 = vadd.f32 %v351, %v1116
      %v1118 = vpop.f32.mrb[0].mxu0
      %v1119 = vpop.f32.mrb[0].mxu0
      %v1120 = vadd.f32 %v351, %v1119
      %v1121 = vpop.f32.mrb[0].mxu0
      %1122 = vmatprep.mubr.bf16.mxu0 %v655
      %1123 = vmatmul.mubr.bf16.gmra.mrb[0].mxu0 %v654
      %v1124 = vpop.f32.mrb[0].mxu0
      %v1125 = vadd.f32 %v351, %v1124
      %v1126 = vpop.f32.mrb[0].mxu0
      %v1127 = vpop.f32.mrb[0].mxu0
      %v1128 = vadd.f32 %v351, %v1127
      %v1129 = vpop.f32.mrb[0].mxu0
      %1130 = vmatprep.mubr.bf16.mxu0 %v660
      %1131 = vmatmul.mubr.bf16.gmra.mrb[0].mxu0 %v659
      %v1132 = vpop.f32.mrb[0].mxu0
      %v1133 = vadd.f32 %v351, %v1132
      %v1134 = vpop.f32.mrb[0].mxu0
      %v1135 = vpop.f32.mrb[0].mxu0
      %v1136 = vadd.f32 %v351, %v1135
      %v1137 = vpop.f32.mrb[0].mxu0
      %1138 = vmatprep.mubr.bf16.mxu0 %v665
      %1139 = vmatmul.mubr.bf16.gmra.mrb[0].mxu0 %v664
      %v1140 = vpop.f32.mrb[0].mxu0
      %v1141 = vadd.f32 %v351, %v1140
      %v1142 = vpop.f32.mrb[0].mxu0
      %v1143 = vpop.f32.mrb[0].mxu0
      %v1144 = vadd.f32 %v351, %v1143
      %v1145 = vpop.f32.mrb[0].mxu0
      %1146 = vmatprep.mubr.bf16.mxu0 %v670
      %1147 = vmatmul.mubr.bf16.gmra.mrb[0].mxu0 %v669
      %v1148 = vpop.f32.mrb[0].mxu0
      %v1149 = vadd.f32 %v351, %v1148
      %v1150 = vpop.f32.mrb[0].mxu0
      %v1151 = vpop.f32.mrb[0].mxu0
      %v1152 = vadd.f32 %v351, %v1151
      %v1153 = vpop.f32.mrb[0].mxu0
      %1154 = vmatprep.mubr.bf16.mxu0 %v675
      %1155 = vmatmul.mubr.bf16.gmra.mrb[0].mxu0 %v674
      %v1156 = vpop.f32.mrb[0].mxu0
      %v1157 = vadd.f32 %v351, %v1156
      %v1158 = vpop.f32.mrb[0].mxu0
      %v1159 = vpop.f32.mrb[0].mxu0
      %v1160 = vadd.f32 %v351, %v1159
      %v1161 = vpop.f32.mrb[0].mxu0
      %1162 = vmatprep.mubr.bf16.mxu0 %v680
      %1163 = vmatmul.mubr.bf16.gmra.mrb[0].mxu0 %v679
      %v1164 = vpop.f32.mrb[0].mxu0
      %v1165 = vadd.f32 %v351, %v1164
      %v1166 = vpop.f32.mrb[0].mxu0
      %v1167 = vpop.f32.mrb[0].mxu0
      %v1168 = vadd.f32 %v351, %v1167
      %v1169 = vpop.f32.mrb[0].mxu0
      %1170 = vmatprep.mubr.bf16.mxu0 %v685
      %1171 = vmatmul.mubr.bf16.gmra.mrb[0].mxu0 %v684
      %v1172 = vpop.f32.mrb[0].mxu0
      %v1173 = vadd.f32 %v351, %v1172
      %v1174 = vpop.f32.mrb[0].mxu0
      %v1175 = vpop.f32.mrb[0].mxu0
      %v1176 = vadd.f32 %v351, %v1175
      %v1177 = vpop.f32.mrb[0].mxu0
      %1178 = vdwg.mxu0
      %1179 = vmatprep.subr.bf16.mxu0 0
      %1180 = vmatpush1.bf16.msra.mxu0 %v913
      %1181 = vmatprep.subr.bf16.mxu0 0
      %1182 = vmatpush1.bf16.msra.mxu0 %v914
      %1183 = vmatprep.subr.bf16.mxu0 0
      %1184 = vmatpush1.bf16.msra.mxu0 %v915
      %1185 = vmatprep.subr.bf16.mxu0 0
      %1186 = vmatpush1.bf16.msra.mxu0 %v916
      %1187 = vmatprep.subr.bf16.mxu0 0
      %1188 = vmatpush1.bf16.msra.mxu0 %v917
      %1189 = vmatprep.subr.bf16.mxu0 0
      %1190 = vmatpush1.bf16.msra.mxu0 %v918
      %1191 = vmatprep.subr.bf16.mxu0 0
      %1192 = vmatpush1.bf16.msra.mxu0 %v919
      %1193 = vmatprep.subr.bf16.mxu0 0
      %1194 = vmatpush1.bf16.msra.mxu0 %v920
      %1195 = vmatprep.subr.bf16.mxu0 0
      %1196 = vmatpush1.bf16.msra.mxu0 %v921
      %1197 = vmatprep.subr.bf16.mxu0 0
      %1198 = vmatpush1.bf16.msra.mxu0 %v922
      %1199 = vmatprep.subr.bf16.mxu0 0
      %1200 = vmatpush1.bf16.msra.mxu0 %v923
      %1201 = vmatprep.subr.bf16.mxu0 0
      %1202 = vmatpush1.bf16.msra.mxu0 %v924
      %1203 = vmatprep.subr.bf16.mxu0 0
      %1204 = vmatpush1.bf16.msra.mxu0 %v925
      %1205 = vmatprep.subr.bf16.mxu0 0
      %1206 = vmatpush1.bf16.msra.mxu0 %v926
      %1207 = vmatprep.subr.bf16.mxu0 0
      %1208 = vmatpush1.bf16.msra.mxu0 %v927
      %1209 = vmatprep.subr.bf16.mxu0 0
      %1210 = vmatpush1.bf16.msra.mxu0 %v928
      %1211 = vmatprep.mubr.bf16.mxu0 %v612
      %1212 = vmatmul.mubr.bf16.gmra.mrb[0].mxu0 %v611
      %v1213 = vpop.f32.mrb[0].mxu0
      %v1214 = vadd.f32 %v1053, %v1213
      %v1215 = vpop.f32.mrb[0].mxu0
      %v1216 = vpop.f32.mrb[0].mxu0
      %v1217 = vadd.f32 %v1056, %v1216
      %v1218 = vpop.f32.mrb[0].mxu0
      %1219 = vmatprep.mubr.bf16.mxu0 %v617
      %1220 = vmatmul.mubr.bf16.gmra.mrb[0].mxu0 %v616
      %v1221 = vpop.f32.mrb[0].mxu0
      %v1222 = vadd.f32 %v1061, %v1221
      %v1223 = vpop.f32.mrb[0].mxu0
      %v1224 = vpop.f32.mrb[0].mxu0
      %v1225 = vadd.f32 %v1064, %v1224
      %v1226 = vpop.f32.mrb[0].mxu0
      %1227 = vmatprep.mubr.bf16.mxu0 %v622
      %1228 = vmatmul.mubr.bf16.gmra.mrb[0].mxu0 %v621
      %v1229 = vpop.f32.mrb[0].mxu0
      %v1230 = vadd.f32 %v1069, %v1229
      %v1231 = vpop.f32.mrb[0].mxu0
      %v1232 = vpop.f32.mrb[0].mxu0
      %v1233 = vadd.f32 %v1072, %v1232
      %v1234 = vpop.f32.mrb[0].mxu0
      %1235 = vmatprep.mubr.bf16.mxu0 %v627
      %1236 = vmatmul.mubr.bf16.gmra.mrb[0].mxu0 %v626
      %v1237 = vpop.f32.mrb[0].mxu0
      %v1238 = vadd.f32 %v1077, %v1237
      %v1239 = vpop.f32.mrb[0].mxu0
      %v1240 = vpop.f32.mrb[0].mxu0
      %v1241 = vadd.f32 %v1080, %v1240
      %v1242 = vpop.f32.mrb[0].mxu0
      %1243 = vmatprep.mubr.bf16.mxu0 %v632
      %1244 = vmatmul.mubr.bf16.gmra.mrb[0].mxu0 %v631
      %v1245 = vpop.f32.mrb[0].mxu0
      %v1246 = vadd.f32 %v1085, %v1245
      %v1247 = vpop.f32.mrb[0].mxu0
      %v1248 = vpop.f32.mrb[0].mxu0
      %v1249 = vadd.f32 %v1088, %v1248
      %v1250 = vpop.f32.mrb[0].mxu0
      %1251 = vmatprep.mubr.bf16.mxu0 %v637
      %1252 = vmatmul.mubr.bf16.gmra.mrb[0].mxu0 %v636
      %v1253 = vpop.f32.mrb[0].mxu0
      %v1254 = vadd.f32 %v1093, %v1253
      %v1255 = vpop.f32.mrb[0].mxu0
      %v1256 = vpop.f32.mrb[0].mxu0
      %v1257 = vadd.f32 %v1096, %v1256
      %v1258 = vpop.f32.mrb[0].mxu0
      %1259 = vmatprep.mubr.bf16.mxu0 %v642
      %1260 = vmatmul.mubr.bf16.gmra.mrb[0].mxu0 %v641
      %v1261 = vpop.f32.mrb[0].mxu0
      %v1262 = vadd.f32 %v1101, %v1261
      %v1263 = vpop.f32.mrb[0].mxu0
      %v1264 = vpop.f32.mrb[0].mxu0
      %v1265 = vadd.f32 %v1104, %v1264
      %v1266 = vpop.f32.mrb[0].mxu0
      %1267 = vmatprep.mubr.bf16.mxu0 %v647
      %1268 = vmatmul.mubr.bf16.gmra.mrb[0].mxu0 %v646
      %v1269 = vpop.f32.mrb[0].mxu0
      %v1270 = vadd.f32 %v1109, %v1269
      %v1271 = vpop.f32.mrb[0].mxu0
      %v1272 = vpop.f32.mrb[0].mxu0
      %v1273 = vadd.f32 %v1112, %v1272
      %v1274 = vpop.f32.mrb[0].mxu0
      %1275 = vmatprep.mubr.bf16.mxu0 %v652
      %1276 = vmatmul.mubr.bf16.gmra.mrb[0].mxu0 %v651
      %v1277 = vpop.f32.mrb[0].mxu0
      %v1278 = vadd.f32 %v1117, %v1277
      %v1279 = vpop.f32.mrb[0].mxu0
      %v1280 = vpop.f32.mrb[0].mxu0
      %v1281 = vadd.f32 %v1120, %v1280
      %v1282 = vpop.f32.mrb[0].mxu0
      %1283 = vmatprep.mubr.bf16.mxu0 %v657
      %1284 = vmatmul.mubr.bf16.gmra.mrb[0].mxu0 %v656
      %v1285 = vpop.f32.mrb[0].mxu0
      %v1286 = vadd.f32 %v1125, %v1285
      %v1287 = vpop.f32.mrb[0].mxu0
      %v1288 = vpop.f32.mrb[0].mxu0
      %v1289 = vadd.f32 %v1128, %v1288
      %v1290 = vpop.f32.mrb[0].mxu0
      %1291 = vmatprep.mubr.bf16.mxu0 %v662
      %1292 = vmatmul.mubr.bf16.gmra.mrb[0].mxu0 %v661
      %v1293 = vpop.f32.mrb[0].mxu0
      %v1294 = vadd.f32 %v1133, %v1293
      %v1295 = vpop.f32.mrb[0].mxu0
      %v1296 = vpop.f32.mrb[0].mxu0
      %v1297 = vadd.f32 %v1136, %v1296
      %v1298 = vpop.f32.mrb[0].mxu0
      %1299 = vmatprep.mubr.bf16.mxu0 %v667
      %1300 = vmatmul.mubr.bf16.gmra.mrb[0].mxu0 %v666
      %v1301 = vpop.f32.mrb[0].mxu0
      %v1302 = vadd.f32 %v1141, %v1301
      %v1303 = vpop.f32.mrb[0].mxu0
      %v1304 = vpop.f32.mrb[0].mxu0
      %v1305 = vadd.f32 %v1144, %v1304
      %v1306 = vpop.f32.mrb[0].mxu0
      %1307 = vmatprep.mubr.bf16.mxu0 %v672
      %1308 = vmatmul.mubr.bf16.gmra.mrb[0].mxu0 %v671
      %v1309 = vpop.f32.mrb[0].mxu0
      %v1310 = vadd.f32 %v1149, %v1309
      %v1311 = vpop.f32.mrb[0].mxu0
      %v1312 = vpop.f32.mrb[0].mxu0
      %v1313 = vadd.f32 %v1152, %v1312
      %v1314 = vpop.f32.mrb[0].mxu0
      %1315 = vmatprep.mubr.bf16.mxu0 %v677
      %1316 = vmatmul.mubr.bf16.gmra.mrb[0].mxu0 %v676
      %v1317 = vpop.f32.mrb[0].mxu0
      %v1318 = vadd.f32 %v1157, %v1317
      %v1319 = vpop.f32.mrb[0].mxu0
      %v1320 = vpop.f32.mrb[0].mxu0
      %v1321 = vadd.f32 %v1160, %v1320
      %v1322 = vpop.f32.mrb[0].mxu0
      %1323 = vmatprep.mubr.bf16.mxu0 %v682
      %1324 = vmatmul.mubr.bf16.gmra.mrb[0].mxu0 %v681
      %v1325 = vpop.f32.mrb[0].mxu0
      %v1326 = vadd.f32 %v1165, %v1325
      %v1327 = vpop.f32.mrb[0].mxu0
      %v1328 = vpop.f32.mrb[0].mxu0
      %v1329 = vadd.f32 %v1168, %v1328
      %v1330 = vpop.f32.mrb[0].mxu0
      %1331 = vmatprep.mubr.bf16.mxu0 %v687
      %1332 = vmatmul.mubr.bf16.gmra.mrb[0].mxu0 %v686
      %v1333 = vpop.f32.mrb[0].mxu0
      %v1334 = vadd.f32 %v1173, %v1333
      %v1335 = vpop.f32.mrb[0].mxu0
      %v1336 = vpop.f32.mrb[0].mxu0
      %v1337 = vadd.f32 %v1176, %v1336
      %v1338 = vpop.f32.mrb[0].mxu0
      %1339 = vdwg.mxu0
      %1340 = vmatprep.subr.bf16.mxu0 0
      %1341 = vmatpush1.bf16.msra.mxu0 %v929
      %1342 = vmatprep.subr.bf16.mxu0 0
      %1343 = vmatpush1.bf16.msra.mxu0 %v930
      %1344 = vmatprep.subr.bf16.mxu0 0
      %1345 = vmatpush1.bf16.msra.mxu0 %v931
      %1346 = vmatprep.subr.bf16.mxu0 0
      %1347 = vmatpush1.bf16.msra.mxu0 %v932
      %1348 = vmatprep.subr.bf16.mxu0 0
      %1349 = vmatpush1.bf16.msra.mxu0 0
      %1350 = vmatprep.subr.bf16.mxu0 0
      %1351 = vmatpush1.bf16.msra.mxu0 0
      %1352 = vmatprep.subr.bf16.mxu0 0
      %1353 = vmatpush1.bf16.msra.mxu0 0
      %1354 = vmatprep.subr.bf16.mxu0 0
      %1355 = vmatpush1.bf16.msra.mxu0 0
      %1356 = vmatprep.subr.bf16.mxu0 0
      %1357 = vmatpush1.bf16.msra.mxu0 0
      %1358 = vmatprep.subr.bf16.mxu0 0
      %1359 = vmatpush1.bf16.msra.mxu0 0
      %1360 = vmatprep.subr.bf16.mxu0 0
      %1361 = vmatpush1.bf16.msra.mxu0 0
      %1362 = vmatprep.subr.bf16.mxu0 0
      %1363 = vmatpush1.bf16.msra.mxu0 0
      %1364 = vmatprep.subr.bf16.mxu0 0
      %1365 = vmatpush1.bf16.msra.mxu0 0
      %1366 = vmatprep.subr.bf16.mxu0 0
      %1367 = vmatpush1.bf16.msra.mxu0 0
      %1368 = vmatprep.subr.bf16.mxu0 0
      %1369 = vmatpush1.bf16.msra.mxu0 0
      %1370 = vmatprep.subr.bf16.mxu0 0
      %1371 = vmatpush1.bf16.msra.mxu0 0
      %1372 = vmatprep.mubr.bf16.mxu0 0
      %1373 = vmatmul.mubr.bf16.gmra.mrb[0].mxu0 %v971
      %v1374 = vpop.f32.mrb[0].mxu0
      %v1375 = vadd.f32 %v1214, %v1374
      %v1376 = vpop.f32.mrb[0].mxu0
      %v1377 = vpop.f32.mrb[0].mxu0
      %v1378 = vadd.f32 %v1217, %v1377
      %v1379 = vpop.f32.mrb[0].mxu0
      %1380 = vmatprep.mubr.bf16.mxu0 0
      %1381 = vmatmul.mubr.bf16.gmra.mrb[0].mxu0 %v974
      %v1382 = vpop.f32.mrb[0].mxu0
      %v1383 = vadd.f32 %v1222, %v1382
      %v1384 = vpop.f32.mrb[0].mxu0
      %v1385 = vpop.f32.mrb[0].mxu0
      %v1386 = vadd.f32 %v1225, %v1385
      %v1387 = vpop.f32.mrb[0].mxu0
      %1388 = vmatprep.mubr.bf16.mxu0 0
      %1389 = vmatmul.mubr.bf16.gmra.mrb[0].mxu0 %v977
      %v1390 = vpop.f32.mrb[0].mxu0
      %v1391 = vadd.f32 %v1230, %v1390
      %v1392 = vpop.f32.mrb[0].mxu0
      %v1393 = vpop.f32.mrb[0].mxu0
      %v1394 = vadd.f32 %v1233, %v1393
      %v1395 = vpop.f32.mrb[0].mxu0
      %1396 = vmatprep.mubr.bf16.mxu0 0
      %1397 = vmatmul.mubr.bf16.gmra.mrb[0].mxu0 %v980
      %v1398 = vpop.f32.mrb[0].mxu0
      %v1399 = vadd.f32 %v1238, %v1398
      %v1400 = vpop.f32.mrb[0].mxu0
      %v1401 = vpop.f32.mrb[0].mxu0
      %v1402 = vadd.f32 %v1241, %v1401
      %v1403 = vpop.f32.mrb[0].mxu0
      %1404 = vmatprep.mubr.bf16.mxu0 0
      %1405 = vmatmul.mubr.bf16.gmra.mrb[0].mxu0 %v983
      %v1406 = vpop.f32.mrb[0].mxu0
      %v1407 = vadd.f32 %v1246, %v1406
      %v1408 = vpop.f32.mrb[0].mxu0
      %v1409 = vpop.f32.mrb[0].mxu0
      %v1410 = vadd.f32 %v1249, %v1409
      %v1411 = vpop.f32.mrb[0].mxu0
      %1412 = vmatprep.mubr.bf16.mxu0 0
      %1413 = vmatmul.mubr.bf16.gmra.mrb[0].mxu0 %v986
      %v1414 = vpop.f32.mrb[0].mxu0
      %v1415 = vadd.f32 %v1254, %v1414
      %v1416 = vpop.f32.mrb[0].mxu0
      %v1417 = vpop.f32.mrb[0].mxu0
      %v1418 = vadd.f32 %v1257, %v1417
      %v1419 = vpop.f32.mrb[0].mxu0
      %1420 = vmatprep.mubr.bf16.mxu0 0
      %1421 = vmatmul.mubr.bf16.gmra.mrb[0].mxu0 %v989
      %v1422 = vpop.f32.mrb[0].mxu0
      %v1423 = vadd.f32 %v1262, %v1422
      %v1424 = vpop.f32.mrb[0].mxu0
      %v1425 = vpop.f32.mrb[0].mxu0
      %v1426 = vadd.f32 %v1265, %v1425
      %v1427 = vpop.f32.mrb[0].mxu0
      %1428 = vmatprep.mubr.bf16.mxu0 0
      %1429 = vmatmul.mubr.bf16.gmra.mrb[0].mxu0 %v992
      %v1430 = vpop.f32.mrb[0].mxu0
      %v1431 = vadd.f32 %v1270, %v1430
      %v1432 = vpop.f32.mrb[0].mxu0
      %v1433 = vpop.f32.mrb[0].mxu0
      %v1434 = vadd.f32 %v1273, %v1433
      %v1435 = vpop.f32.mrb[0].mxu0
      %1436 = vmatprep.mubr.bf16.mxu0 0
      %1437 = vmatmul.mubr.bf16.gmra.mrb[0].mxu0 %v995
      %v1438 = vpop.f32.mrb[0].mxu0
      %v1439 = vadd.f32 %v1278, %v1438
      %v1440 = vpop.f32.mrb[0].mxu0
      %v1441 = vpop.f32.mrb[0].mxu0
      %v1442 = vadd.f32 %v1281, %v1441
      %v1443 = vpop.f32.mrb[0].mxu0
      %1444 = vmatprep.mubr.bf16.mxu0 0
      %1445 = vmatmul.mubr.bf16.gmra.mrb[0].mxu0 %v998
      %v1446 = vpop.f32.mrb[0].mxu0
      %v1447 = vadd.f32 %v1286, %v1446
      %v1448 = vpop.f32.mrb[0].mxu0
      %v1449 = vpop.f32.mrb[0].mxu0
      %v1450 = vadd.f32 %v1289, %v1449
      %v1451 = vpop.f32.mrb[0].mxu0
      %1452 = vmatprep.mubr.bf16.mxu0 0
      %1453 = vmatmul.mubr.bf16.gmra.mrb[0].mxu0 %v1001
      %v1454 = vpop.f32.mrb[0].mxu0
      %v1455 = vadd.f32 %v1294, %v1454
      %v1456 = vpop.f32.mrb[0].mxu0
      %v1457 = vpop.f32.mrb[0].mxu0
      %v1458 = vadd.f32 %v1297, %v1457
      %v1459 = vpop.f32.mrb[0].mxu0
      %1460 = vmatprep.mubr.bf16.mxu0 0
      %1461 = vmatmul.mubr.bf16.gmra.mrb[0].mxu0 %v1004
      %v1462 = vpop.f32.mrb[0].mxu0
      %v1463 = vadd.f32 %v1302, %v1462
      %v1464 = vpop.f32.mrb[0].mxu0
      %v1465 = vpop.f32.mrb[0].mxu0
      %v1466 = vadd.f32 %v1305, %v1465
      %v1467 = vpop.f32.mrb[0].mxu0
      %1468 = vmatprep.mubr.bf16.mxu0 0
      %1469 = vmatmul.mubr.bf16.gmra.mrb[0].mxu0 %v1007
      %v1470 = vpop.f32.mrb[0].mxu0
      %v1471 = vadd.f32 %v1310, %v1470
      %v1472 = vpop.f32.mrb[0].mxu0
      %v1473 = vpop.f32.mrb[0].mxu0
      %v1474 = vadd.f32 %v1313, %v1473
      %v1475 = vpop.f32.mrb[0].mxu0
      %1476 = vmatprep.mubr.bf16.mxu0 0
      %1477 = vmatmul.mubr.bf16.gmra.mrb[0].mxu0 %v1010
      %v1478 = vpop.f32.mrb[0].mxu0
      %v1479 = vadd.f32 %v1318, %v1478
      %v1480 = vpop.f32.mrb[0].mxu0
      %v1481 = vpop.f32.mrb[0].mxu0
      %v1482 = vadd.f32 %v1321, %v1481
      %v1483 = vpop.f32.mrb[0].mxu0
      %1484 = vmatprep.mubr.bf16.mxu0 0
      %1485 = vmatmul.mubr.bf16.gmra.mrb[0].mxu0 %v1013
      %v1486 = vpop.f32.mrb[0].mxu0
      %v1487 = vadd.f32 %v1326, %v1486
      %v1488 = vpop.f32.mrb[0].mxu0
      %v1489 = vpop.f32.mrb[0].mxu0
      %v1490 = vadd.f32 %v1329, %v1489
      %v1491 = vpop.f32.mrb[0].mxu0
      %1492 = vmatprep.mubr.bf16.mxu0 0
      %1493 = vmatmul.mubr.bf16.gmra.mrb[0].mxu0 %v1016
      %v1494 = vpop.f32.mrb[0].mxu0
      %v1495 = vadd.f32 %v1334, %v1494
      %v1496 = vpop.f32.mrb[0].mxu0
      %v1497 = vpop.f32.mrb[0].mxu0
      %v1498 = vadd.f32 %v1337, %v1497
      %v1499 = vpop.f32.mrb[0].mxu0
      %1500 = vdwg.mxu0
      %1501 = vst.msk [vmem:[%s175] sm:$0xff] %vm969, %v1375
      %1502 = vst.msk [vmem:[%s175 + $0x8] sm:$0xff] %vm969, %v1378
      %1503 = vst.msk [vmem:[%s175 + $0x10] sm:$0xff] %vm969, %v1383
      %1504 = vst.msk [vmem:[%s175 + $0x18] sm:$0xff] %vm969, %v1386
      %1505 = vst.msk [vmem:[%s175 + $0x20] sm:$0xff] %vm969, %v1391
      %1506 = vst.msk [vmem:[%s175 + $0x28] sm:$0xff] %vm969, %v1394
      %1507 = vst.msk [vmem:[%s175 + $0x30] sm:$0xff] %vm969, %v1399
      %1508 = vst.msk [vmem:[%s175 + $0x38] sm:$0xff] %vm969, %v1402
      %1509 = vst.msk [vmem:[%s175 + $0x40] sm:$0xff] %vm969, %v1407
      %1510 = vst.msk [vmem:[%s175 + $0x48] sm:$0xff] %vm969, %v1410
      %1511 = vst.msk [vmem:[%s175 + $0x50] sm:$0xff] %vm969, %v1415
      %1512 = vst.msk [vmem:[%s175 + $0x58] sm:$0xff] %vm969, %v1418
      %1513 = vst.msk [vmem:[%s175 + $0x60] sm:$0xff] %vm969, %v1423
      %1514 = vst.msk [vmem:[%s175 + $0x68] sm:$0xff] %vm969, %v1426
      %1515 = vst.msk [vmem:[%s175 + $0x70] sm:$0xff] %vm969, %v1431
      %1516 = vst.msk [vmem:[%s175 + $0x78] sm:$0xff] %vm969, %v1434
      %1517 = vst.msk [vmem:[%s175 + $0x80] sm:$0xff] %vm969, %v1439
      %1518 = vst.msk [vmem:[%s175 + $0x88] sm:$0xff] %vm969, %v1442
      %1519 = vst.msk [vmem:[%s175 + $0x90] sm:$0xff] %vm969, %v1447
      %1520 = vst.msk [vmem:[%s175 + $0x98] sm:$0xff] %vm969, %v1450
      %1521 = vst.msk [vmem:[%s175 + $0xa0] sm:$0xff] %vm969, %v1455
      %1522 = vst.msk [vmem:[%s175 + $0xa8] sm:$0xff] %vm969, %v1458
      %1523 = vst.msk [vmem:[%s175 + $0xb0] sm:$0xff] %vm969, %v1463
      %1524 = vst.msk [vmem:[%s175 + $0xb8] sm:$0xff] %vm969, %v1466
      %1525 = vst.msk [vmem:[%s175 + $0xc0] sm:$0xff] %vm969, %v1471
      %1526 = vst.msk [vmem:[%s175 + $0xc8] sm:$0xff] %vm969, %v1474
      %1527 = vst.msk [vmem:[%s175 + $0xd0] sm:$0xff] %vm969, %v1479
      %1528 = vst.msk [vmem:[%s175 + $0xd8] sm:$0xff] %vm969, %v1482
      %1529 = vst.msk [vmem:[%s175 + $0xe0] sm:$0xff] %vm969, %v1487
      %1530 = vst.msk [vmem:[%s175 + $0xe8] sm:$0xff] %vm969, %v1490
      %1531 = vst.msk [vmem:[%s175 + $0xf0] sm:$0xff] %vm969, %v1495
      %1532 = vst.msk [vmem:[%s175 + $0xf8] sm:$0xff] %vm969, %v1498
      %s1533 = smul.u32 32, %s14
      %p1534 = scmp.lt.s32.totalorder %s1533, 63
      %s1535 = scalar_select %p1534, %s1533, 63
      %s1536 = smul.addr %s1535, 8
      %s1537 = scalar_lea.vmem %s3, %s1536
      // Predicated region
      $region33: #{decoder_forward.14} parent=31 // pred_check
        %p1538 = pneg %p100
      $region34: #{decoder_forward.14} parent=31 // pred_check_branch
        %1540 = sbr.rel (%p1538) target = $region36
      $region35: #{decoder_forward.14} parent=31 // pred_region
        %s1541 = smul.u32 32, %s14
      $region36: #{decoder_forward.14} parent=31 // pred_fallthru
        _
    $region32: #{decoder_forward.14} parent=5 // pred_fallthru
      _
    %p1542 = scmp.le.s32.totalorder 2, %s9
    // Predicated region
    $region37: #{decoder_forward.14} parent=5 // pred_check
      %p1543 = pneg %p1542
    $region38: #{decoder_forward.14} parent=5 // pred_check_branch
      %1545 = sbr.rel (%p1543) target = $region40
    $region39: #{decoder_forward.14} parent=5 // pred_region
      %s1546 = ssub.s32 %s9, 2
      // Predicated region
      $region41: #{decoder_forward.14} parent=39 // pred_check
        %p1547 = pneg %p106
      $region42: #{decoder_forward.14} parent=39 // pred_check_branch
        %1549 = sbr.rel (%p1547) target = $region44
      $region43: #{decoder_forward.14} parent=39 // pred_region
        %s1550 = smul.u32 32, %s15
        %p1551 = scmp.lt.s32.totalorder %s1550, 63
        %s1552 = scalar_select %p1551, %s1550, 63
        %s1553 = smul.addr %s1552, 8
        %s1554 = scalar_lea.vmem %s3, %s1553
      $region44: #{decoder_forward.14} parent=39 // pred_fallthru
        _
    $region40: #{decoder_forward.14} parent=5 // pred_fallthru
      _
  $region6: #{decoder_forward.14} parent=0 // loop_footer
    %s13 = sadd.s32 1, %s9
  $region7: #{decoder_forward.14} parent=0 // loop_footer_branch
    %8 = sbr.rel target = $region3
  $region8: #{decoder_forward.14} parent=0 // loop_exit
    _

// kernel: decoder_forward.16
$region0: #{decoder_forward.16}
  #allocation0 [shape = 'u32[]', space=smem, size = 0x4, offset = 0x4, fixed_abs, tag = 'smem constant byte address 0x4 - core index']
  #allocation1 [shape = 'u32[144,128]{1,0:T(1,128)}', space=vmem, size = 0x12000, scoped, tag = 'internal scratch']
  %s0 = inlined_call_operand.vmem [shape: bf16[512,64], index: 0, kind: input, shape index: {}]
  %s1 = inlined_call_operand.vmem [shape: bf16[64,128], index: 1, kind: input, shape index: {}]
  %s2 = inlined_call_operand.vmem [shape: f32[1,128], index: 2, kind: input, shape index: {}]
  %s3 = inlined_call_operand.vmem [shape: f32[512,128], index: 3, kind: output, shape index: {}]
  %s4 = sld [smem:[#allocation0]]
  $region45: #{decoder_forward.16} parent=0
    _
  %s6 = ssub.s32 1, %s4
  %s7 = scalar_select 0, %s6, %s4
  loop: start=0, step=1, limit=4
  $region2: #{decoder_forward.16} parent=0 // loop_pre_header
    _
  $region3: #{decoder_forward.16} parent=0 // loop_header
    %s9 = sphi 0, %s13
    %p10 = scmp.ge.s32.totalorder %s9, 4
    %s19 = sphi 0, %s21
    %s22 = sphi 0, %s19
    %s23 = sphi 0, %s22
    %s39 = sphi 0, %s23
    %s43 = sphi 0, %s43
    %s45 = sphi 0, %s43
    %s46 = sphi 0, %s45
    %s60 = sphi 0, %s46
    %s64 = sphi 0, %s64
    %s66 = sphi 0, %s64
    %s67 = sphi 0, %s66
    %s81 = sphi 0, %s67
    %s87 = sphi 0, %s89
    %s90 = sphi 0, %s87
    %s91 = sphi 0, %s90
    %s107 = sphi 0, %s91
  $region4: #{decoder_forward.16} parent=0 // loop_header_branch
    %12 = sbr.rel (%p10) target = $region8
  $region5: #{decoder_forward.16} parent=0 // loop_body
    %s14 = ssub.s32 %s9, 1
    %s15 = ssub.s32 %s9, 2
    %s16 = sadd.s32 %s9, 1
    %s17 = ssub.s32 %s9, %s16
    %p18 = scmp.eq.s32.totalorder %s17, 0
    %s20 = sadd.s32 %s19, 1
    %s21 = scalar_select %p18, %s19, %s20
    %p24 = pneg %p18
    %p25 = scmp.eq.s32.totalorder %s9, 1
    %p26 = por %p24, %p25
    %p27 = scmp.ne.s32.totalorder %s19, %s22
    %p28 = scmp.eq.s32.totalorder %s9, 0
    %p29 = por %p27, %p28
    %p30 = scmp.ne.s32.totalorder %s19, %s22
    %p31 = scmp.eq.s32.totalorder %s14, 1
    %p32 = por %p30, %p31
    %p33 = scmp.ne.s32.totalorder %s22, %s23
    %p34 = scmp.eq.s32.totalorder %s14, 0
    %p35 = por %p33, %p34
    %p36 = scmp.ne.s32.totalorder %s22, %s23
    %p37 = scmp.eq.s32.totalorder %s15, 1
    %p38 = por %p36, %p37
    %p40 = scmp.ne.s32.totalorder %s23, %s39
    %p41 = scmp.eq.s32.totalorder %s15, 0
    %p42 = por %p40, %p41
    %s44 = sadd.s32 %s43, 1
    %p47 = scmp.eq.s32.totalorder %s9, 1
    %p48 = scmp.ne.s32.totalorder %s43, %s45
    %p49 = scmp.eq.s32.totalorder %s9, 0
    %p50 = por %p48, %p49
    %p51 = scmp.ne.s32.totalorder %s43, %s45
    %p52 = scmp.eq.s32.totalorder %s14, 1
    %p53 = por %p51, %p52
    %p54 = scmp.ne.s32.totalorder %s45, %s46
    %p55 = scmp.eq.s32.totalorder %s14, 0
    %p56 = por %p54, %p55
    %p57 = scmp.ne.s32.totalorder %s45, %s46
    %p58 = scmp.eq.s32.totalorder %s15, 1
    %p59 = por %p57, %p58
    %p61 = scmp.ne.s32.totalorder %s46, %s60
    %p62 = scmp.eq.s32.totalorder %s15, 0
    %p63 = por %p61, %p62
    %s65 = sadd.s32 %s64, 1
    %p68 = scmp.eq.s32.totalorder %s9, 1
    %p69 = scmp.ne.s32.totalorder %s64, %s66
    %p70 = scmp.eq.s32.totalorder %s9, 0
    %p71 = por %p69, %p70
    %p72 = scmp.ne.s32.totalorder %s64, %s66
    %p73 = scmp.eq.s32.totalorder %s14, 1
    %p74 = por %p72, %p73
    %p75 = scmp.ne.s32.totalorder %s66, %s67
    %p76 = scmp.eq.s32.totalorder %s14, 0
    %p77 = por %p75, %p76
    %p78 = scmp.ne.s32.totalorder %s66, %s67
    %p79 = scmp.eq.s32.totalorder %s15, 1
    %p80 = por %p78, %p79
    %p82 = scmp.ne.s32.totalorder %s67, %s81
    %p83 = scmp.eq.s32.totalorder %s15, 0
    %p84 = por %p82, %p83
    %s85 = ssub.s32 %s9, %s16
    %p86 = scmp.eq.s32.totalorder %s85, 0
    %s88 = sadd.s32 %s87, 1
    %s89 = scalar_select %p86, %s87, %s88
    %p92 = pneg %p86
    %p93 = scmp.eq.s32.totalorder %s9, 1
    %p94 = por %p92, %p93
    %p95 = scmp.ne.s32.totalorder %s87, %s90
    %p96 = scmp.eq.s32.totalorder %s9, 0
    %p97 = por %p95, %p96
    %p98 = scmp.ne.s32.totalorder %s87, %s90
    %p99 = scmp.eq.s32.totalorder %s14, 1
    %p100 = por %p98, %p99
    %p101 = scmp.ne.s32.totalorder %s90, %s91
    %p102 = scmp.eq.s32.totalorder %s14, 0
    %p103 = por %p101, %p102
    %p104 = scmp.ne.s32.totalorder %s90, %s91
    %p105 = scmp.eq.s32.totalorder %s15, 1
    %p106 = por %p104, %p105
    %p108 = scmp.ne.s32.totalorder %s91, %s107
    %p109 = scmp.eq.s32.totalorder %s15, 0
    %p110 = por %p108, %p109
    %p111 = scmp.le.s32.totalorder 1, %s9
    %p112 = scmp.lt.s32.totalorder %s9, 3
    %p113 = pnand %p111, %p112
    %p114 = pneg %p113
    // Predicated region
    $region9: #{decoder_forward.16} parent=5 // pred_check
      _
    $region10: #{decoder_forward.16} parent=5 // pred_check_branch
      %116 = sbr.rel (%p113) target = $region12
    $region11: #{decoder_forward.16} parent=5 // pred_region
      %s117 = ssub.s32 %s9, 1
      // Predicated region
      $region13: #{decoder_forward.16} parent=11 // pred_check
        %p118 = pneg %p56
      $region14: #{decoder_forward.16} parent=11 // pred_check_branch
        %120 = sbr.rel (%p118) target = $region16
      $region15: #{decoder_forward.16} parent=11 // pred_region
        _
      $region16: #{decoder_forward.16} parent=11 // pred_fallthru
        _
      // Predicated region
      $region17: #{decoder_forward.16} parent=11 // pred_check
        %p121 = pneg %p77
      $region18: #{decoder_forward.16} parent=11 // pred_check_branch
        %123 = sbr.rel (%p121) target = $region20
      $region19: #{decoder_forward.16} parent=11 // pred_region
        _
      $region20: #{decoder_forward.16} parent=11 // pred_fallthru
        _
    $region12: #{decoder_forward.16} parent=5 // pred_fallthru
      _
    %p124 = scmp.lt.s32.totalorder %s9, 2
    // Predicated region
    $region21: #{decoder_forward.16} parent=5 // pred_check
      %p125 = pneg %p124
    $region22: #{decoder_forward.16} parent=5 // pred_check_branch
      %127 = sbr.rel (%p125) target = $region24
    $region23: #{decoder_forward.16} parent=5 // pred_region
      // Predicated region
      $region25: #{decoder_forward.16} parent=23 // pred_check
        %p128 = pneg %p29
      $region26: #{decoder_forward.16} parent=23 // pred_check_branch
        %130 = sbr.rel (%p128) target = $region28
      $region27: #{decoder_forward.16} parent=23 // pred_region
        %s131 = smul.u32 32, %s9
        %p132 = scmp.lt.s32.totalorder %s131, 63
        %s133 = scalar_select %p132, %s131, 63
        %s134 = smul.addr %s133, 4
        %s135 = scalar_lea.vmem %s0, %s134
        %s136 = smul.u32 32, %s9
      $region28: #{decoder_forward.16} parent=23 // pred_fallthru
        _
    $region24: #{decoder_forward.16} parent=5 // pred_fallthru
      _
    %p137 = scmp.le.s32.totalorder 1, %s9
    %p138 = scmp.lt.s32.totalorder %s9, 3
    %p139 = pnand %p137, %p138
    %p140 = pneg %p139
    // Predicated region
    $region29: #{decoder_forward.16} parent=5 // pred_check
      _
    $region30: #{decoder_forward.16} parent=5 // pred_check_branch
      %142 = sbr.rel (%p139) target = $region32
    $region31: #{decoder_forward.16} parent=5 // pred_region
      %s143 = ssub.s32 %s9, 1
      %s144 = smul.u32 32, %s14
      %p145 = scmp.lt.s32.totalorder %s144, 63
      %s146 = scalar_select %p145, %s144, 63
      %s147 = smul.addr %s146, 4
      %s148 = scalar_lea.vmem %s0, %s147
      %p149 = pneg %p35
      %p150 = pneg %p32
      %p151 = pneg %p56
      %p152 = pneg %p53
      %p153 = pneg %p77
      %p154 = pneg %p74
      %p155 = pneg %p103
      %p156 = pneg %p100
      %s157 = smul.u32 32, %s14
      %p158 = scmp.lt.s32.totalorder %s157, 63
      %s159 = scalar_select %p158, %s157, 63
      %s160 = smul.addr %s159, 8
      %s161 = scalar_lea.vmem %s3, %s160
      %s162 = smul.u32 32, %s14
      %p163 = scmp.lt.s32.totalorder %s162, 63
      %s164 = scalar_select %p163, %s162, 63
      %s165 = smul.addr %s164, 4
      %s166 = scalar_lea.vmem %s0, %s165
      %s167 = smul.u32 32, %s14
      %s168 = smul.u32 32, %s14
      %p169 = scmp.lt.s32.totalorder %s168, 63
      %s170 = scalar_select %p169, %s168, 63
      %s171 = smul.addr %s170, 8
      %s172 = scalar_lea.vmem %s3, %s171
      %s173 = smul.u32 32, %s14
      %v175 = vld [vmem:[%s166] sm:$0xf]
      %v176 = vld [vmem:[%s166 + $0x4] sm:$0xf]
      %v177 = vld [vmem:[%s166 + $0x8] sm:$0xf]
      %v178 = vld [vmem:[%s166 + $0xc] sm:$0xf]
      %v179 = vld [vmem:[%s166 + $0x10] sm:$0xf]
      %v180 = vld [vmem:[%s166 + $0x14] sm:$0xf]
      %v181 = vld [vmem:[%s166 + $0x18] sm:$0xf]
      %v182 = vld [vmem:[%s166 + $0x1c] sm:$0xf]
      %v183 = vld [vmem:[%s166 + $0x20] sm:$0xf]
      %v184 = vld [vmem:[%s166 + $0x24] sm:$0xf]
      %v185 = vld [vmem:[%s166 + $0x28] sm:$0xf]
      %v186 = vld [vmem:[%s166 + $0x2c] sm:$0xf]
      %v187 = vld [vmem:[%s166 + $0x30] sm:$0xf]
      %v188 = vld [vmem:[%s166 + $0x34] sm:$0xf]
      %v189 = vld [vmem:[%s166 + $0x38] sm:$0xf]
      %v190 = vld [vmem:[%s166 + $0x3c] sm:$0xf]
      %v191 = vld [vmem:[%s166 + $0x40] sm:$0xf]
      %v192 = vld [vmem:[%s166 + $0x44] sm:$0xf]
      %v193 = vld [vmem:[%s166 + $0x48] sm:$0xf]
      %v194 = vld [vmem:[%s166 + $0x4c] sm:$0xf]
      %v195 = vld [vmem:[%s166 + $0x50] sm:$0xf]
      %v196 = vld [vmem:[%s166 + $0x54] sm:$0xf]
      %v197 = vld [vmem:[%s166 + $0x58] sm:$0xf]
      %v198 = vld [vmem:[%s166 + $0x5c] sm:$0xf]
      %v199 = vld [vmem:[%s166 + $0x60] sm:$0xf]
      %v200 = vld [vmem:[%s166 + $0x64] sm:$0xf]
      %v201 = vld [vmem:[%s166 + $0x68] sm:$0xf]
      %v202 = vld [vmem:[%s166 + $0x6c] sm:$0xf]
      %v203 = vld [vmem:[%s166 + $0x70] sm:$0xf]
      %v204 = vld [vmem:[%s166 + $0x74] sm:$0xf]
      %v205 = vld [vmem:[%s166 + $0x78] sm:$0xf]
      %v206 = vld [vmem:[%s166 + $0x7c] sm:$0xf]
      %v207 = vld [vmem:[%s1] sm:$0xf]
      %v208 = vld [vmem:[%s1 + $0x4] sm:$0xf]
      %v209 = vld [vmem:[%s1 + $0x8] sm:$0xf]
      %v210 = vld [vmem:[%s1 + $0xc] sm:$0xf]
      %v211 = vld [vmem:[%s1 + $0x10] sm:$0xf]
      %v212 = vld [vmem:[%s1 + $0x14] sm:$0xf]
      %v213 = vld [vmem:[%s1 + $0x18] sm:$0xf]
      %v214 = vld [vmem:[%s1 + $0x1c] sm:$0xf]
      %v215 = vld [vmem:[%s2] sm:$0x1]
      %v217 = vlaneseq
      %v218 = vshrl.u32 %v217, 7
      %v219 = vsub.s32 0, %v218
      %v220 = vrot.slane %v215, %v219
      %v254 = vunpack.c.l.b16 %v175
      %v255 = vunpack.c.l.b16 %v176
      %v256 = vunpack.c.l.b16 %v177
      %v257 = vunpack.c.l.b16 %v178
      %v258 = vunpack.c.l.b16 %v179
      %v259 = vunpack.c.l.b16 %v180
      %v260 = vunpack.c.l.b16 %v181
      %v261 = vunpack.c.l.b16 %v182
      %v262 = vunpack.c.l.b16 %v183
      %v263 = vunpack.c.l.b16 %v184
      %v264 = vunpack.c.l.b16 %v185
      %v265 = vunpack.c.l.b16 %v186
      %v266 = vunpack.c.l.b16 %v187
      %v267 = vunpack.c.l.b16 %v188
      %v268 = vunpack.c.l.b16 %v189
      %v269 = vunpack.c.l.b16 %v190
      %v270 = vunpack.c.l.b16 %v191
      %v271 = vunpack.c.l.b16 %v192
      %v272 = vunpack.c.l.b16 %v193
      %v273 = vunpack.c.l.b16 %v194
      %v274 = vunpack.c.l.b16 %v195
      %v275 = vunpack.c.l.b16 %v196
      %v276 = vunpack.c.l.b16 %v197
      %v277 = vunpack.c.l.b16 %v198
      %v278 = vunpack.c.l.b16 %v199
      %v279 = vunpack.c.l.b16 %v200
      %v280 = vunpack.c.l.b16 %v201
      %v281 = vunpack.c.l.b16 %v202
      %v282 = vunpack.c.l.b16 %v203
      %v283 = vunpack.c.l.b16 %v204
      %v284 = vunpack.c.l.b16 %v205
      %v285 = vunpack.c.l.b16 %v206
      %v286 = vpack.c.b16 %v255, %v254
      %v287 = vpack.c.b16 %v257, %v256
      %v288 = vpack.c.b16 %v259, %v258
      %v289 = vpack.c.b16 %v261, %v260
      %v290 = vpack.c.b16 %v263, %v262
      %v291 = vpack.c.b16 %v265, %v264
      %v292 = vpack.c.b16 %v267, %v266
      %v293 = vpack.c.b16 %v269, %v268
      %v294 = vpack.c.b16 %v271, %v270
      %v295 = vpack.c.b16 %v273, %v272
      %v296 = vpack.c.b16 %v275, %v274
      %v297 = vpack.c.b16 %v277, %v276
      %v298 = vpack.c.b16 %v279, %v278
      %v299 = vpack.c.b16 %v281, %v280
      %v300 = vpack.c.b16 %v283, %v282
      %v301 = vpack.c.b16 %v285, %v284
      %v310 = vunpack.c.l.b16 %v207
      %v311 = vunpack.c.l.b16 %v208
      %v312 = vunpack.c.l.b16 %v209
      %v313 = vunpack.c.l.b16 %v210
      %v314 = vunpack.c.l.b16 %v211
      %v315 = vunpack.c.l.b16 %v212
      %v316 = vunpack.c.l.b16 %v213
      %v317 = vunpack.c.l.b16 %v214
      %v318 = vpack.c.b16 %v311, %v310
      %v319 = vpack.c.b16 %v313, %v312
      %v320 = vpack.c.b16 %v315, %v314
      %v321 = vpack.c.b16 %v317, %v316
      %vm326 = vcmask 523264
      %v328 = vsel %vm326, %v286, 0
      %v331 = vsel %vm326, %v287, 0
      %v334 = vsel %vm326, %v288, 0
      %v337 = vsel %vm326, %v289, 0
      %v340 = vsel %vm326, %v290, 0
      %v343 = vsel %vm326, %v291, 0
      %v346 = vsel %vm326, %v292, 0
      %v349 = vsel %vm326, %v293, 0
      %v352 = vsel %vm326, %v294, 0
      %v355 = vsel %vm326, %v295, 0
      %v358 = vsel %vm326, %v296, 0
      %v361 = vsel %vm326, %v297, 0
      %v364 = vsel %vm326, %v298, 0
      %v367 = vsel %vm326, %v299, 0
      %v370 = vsel %vm326, %v300, 0
      %v373 = vsel %vm326, %v301, 0
      %375 = vmatprep.subr.bf16.mxu0 0
      %376 = vmatpush1.bf16.msra.mxu0 %v318
      %377 = vmatprep.subr.bf16.mxu0 0
      %378 = vmatpush1.bf16.msra.mxu0 %v319
      %379 = vmatprep.subr.bf16.mxu0 0
      %380 = vmatpush1.bf16.msra.mxu0 %v320
      %381 = vmatprep.subr.bf16.mxu0 0
      %382 = vmatpush1.bf16.msra.mxu0 %v321
      %383 = vmatprep.subr.bf16.mxu0 0
      %384 = vmatpush1.bf16.msra.mxu0 0
      %385 = vmatprep.subr.bf16.mxu0 0
      %386 = vmatpush1.bf16.msra.mxu0 0
      %387 = vmatprep.subr.bf16.mxu0 0
      %388 = vmatpush1.bf16.msra.mxu0 0
      %389 = vmatprep.subr.bf16.mxu0 0
      %390 = vmatpush1.bf16.msra.mxu0 0
      %391 = vmatprep.subr.bf16.mxu0 0
      %392 = vmatpush1.bf16.msra.mxu0 0
      %393 = vmatprep.subr.bf16.mxu0 0
      %394 = vmatpush1.bf16.msra.mxu0 0
      %395 = vmatprep.subr.bf16.mxu0 0
      %396 = vmatpush1.bf16.msra.mxu0 0
      %397 = vmatprep.subr.bf16.mxu0 0
      %398 = vmatpush1.bf16.msra.mxu0 0
      %399 = vmatprep.subr.bf16.mxu0 0
      %400 = vmatpush1.bf16.msra.mxu0 0
      %401 = vmatprep.subr.bf16.mxu0 0
      %402 = vmatpush1.bf16.msra.mxu0 0
      %403 = vmatprep.subr.bf16.mxu0 0
      %404 = vmatpush1.bf16.msra.mxu0 0
      %405 = vmatprep.subr.bf16.mxu0 0
      %406 = vmatpush1.bf16.msra.mxu0 0
      %407 = vmatprep.mubr.bf16.mxu0 0
      %408 = vmatmul.mubr.bf16.gmra.mrb[0].mxu0 %v328
      %v409 = vpop.f32.mrb[0].mxu0
      %v410 = vadd.f32 %v220, %v409
      %v411 = vpop.f32.mrb[0].mxu0
      %v412 = vpop.f32.mrb[0].mxu0
      %v413 = vadd.f32 %v220, %v412
      %v414 = vpop.f32.mrb[0].mxu0
      %415 = vmatprep.mubr.bf16.mxu0 0
      %416 = vmatmul.mubr.bf16.gmra.mrb[0].mxu0 %v331
      %v417 = vpop.f32.mrb[0].mxu0
      %v418 = vadd.f32 %v220, %v417
      %v419 = vpop.f32.mrb[0].mxu0
      %v420 = vpop.f32.mrb[0].mxu0
      %v421 = vadd.f32 %v220, %v420
      %v422 = vpop.f32.mrb[0].mxu0
      %423 = vmatprep.mubr.bf16.mxu0 0
      %424 = vmatmul.mubr.bf16.gmra.mrb[0].mxu0 %v334
      %v425 = vpop.f32.mrb[0].mxu0
      %v426 = vadd.f32 %v220, %v425
      %v427 = vpop.f32.mrb[0].mxu0
      %v428 = vpop.f32.mrb[0].mxu0
      %v429 = vadd.f32 %v220, %v428
      %v430 = vpop.f32.mrb[0].mxu0
      %431 = vmatprep.mubr.bf16.mxu0 0
      %432 = vmatmul.mubr.bf16.gmra.mrb[0].mxu0 %v337
      %v433 = vpop.f32.mrb[0].mxu0
      %v434 = vadd.f32 %v220, %v433
      %v435 = vpop.f32.mrb[0].mxu0
      %v436 = vpop.f32.mrb[0].mxu0
      %v437 = vadd.f32 %v220, %v436
      %v438 = vpop.f32.mrb[0].mxu0
      %439 = vmatprep.mubr.bf16.mxu0 0
      %440 = vmatmul.mubr.bf16.gmra.mrb[0].mxu0 %v340
      %v441 = vpop.f32.mrb[0].mxu0
      %v442 = vadd.f32 %v220, %v441
      %v443 = vpop.f32.mrb[0].mxu0
      %v444 = vpop.f32.mrb[0].mxu0
      %v445 = vadd.f32 %v220, %v444
      %v446 = vpop.f32.mrb[0].mxu0
      %447 = vmatprep.mubr.bf16.mxu0 0
      %448 = vmatmul.mubr.bf16.gmra.mrb[0].mxu0 %v343
      %v449 = vpop.f32.mrb[0].mxu0
      %v450 = vadd.f32 %v220, %v449
      %v451 = vpop.f32.mrb[0].mxu0
      %v452 = vpop.f32.mrb[0].mxu0
      %v453 = vadd.f32 %v220, %v452
      %v454 = vpop.f32.mrb[0].mxu0
      %455 = vmatprep.mubr.bf16.mxu0 0
      %456 = vmatmul.mubr.bf16.gmra.mrb[0].mxu0 %v346
      %v457 = vpop.f32.mrb[0].mxu0
      %v458 = vadd.f32 %v220, %v457
      %v459 = vpop.f32.mrb[0].mxu0
      %v460 = vpop.f32.mrb[0].mxu0
      %v461 = vadd.f32 %v220, %v460
      %v462 = vpop.f32.mrb[0].mxu0
      %463 = vmatprep.mubr.bf16.mxu0 0
      %464 = vmatmul.mubr.bf16.gmra.mrb[0].mxu0 %v349
      %v465 = vpop.f32.mrb[0].mxu0
      %v466 = vadd.f32 %v220, %v465
      %v467 = vpop.f32.mrb[0].mxu0
      %v468 = vpop.f32.mrb[0].mxu0
      %v469 = vadd.f32 %v220, %v468
      %v470 = vpop.f32.mrb[0].mxu0
      %471 = vmatprep.mubr.bf16.mxu0 0
      %472 = vmatmul.mubr.bf16.gmra.mrb[0].mxu0 %v352
      %v473 = vpop.f32.mrb[0].mxu0
      %v474 = vadd.f32 %v220, %v473
      %v475 = vpop.f32.mrb[0].mxu0
      %v476 = vpop.f32.mrb[0].mxu0
      %v477 = vadd.f32 %v220, %v476
      %v478 = vpop.f32.mrb[0].mxu0
      %479 = vmatprep.mubr.bf16.mxu0 0
      %480 = vmatmul.mubr.bf16.gmra.mrb[0].mxu0 %v355
      %v481 = vpop.f32.mrb[0].mxu0
      %v482 = vadd.f32 %v220, %v481
      %v483 = vpop.f32.mrb[0].mxu0
      %v484 = vpop.f32.mrb[0].mxu0
      %v485 = vadd.f32 %v220, %v484
      %v486 = vpop.f32.mrb[0].mxu0
      %487 = vmatprep.mubr.bf16.mxu0 0
      %488 = vmatmul.mubr.bf16.gmra.mrb[0].mxu0 %v358
      %v489 = vpop.f32.mrb[0].mxu0
      %v490 = vadd.f32 %v220, %v489
      %v491 = vpop.f32.mrb[0].mxu0
      %v492 = vpop.f32.mrb[0].mxu0
      %v493 = vadd.f32 %v220, %v492
      %v494 = vpop.f32.mrb[0].mxu0
      %495 = vmatprep.mubr.bf16.mxu0 0
      %496 = vmatmul.mubr.bf16.gmra.mrb[0].mxu0 %v361
      %v497 = vpop.f32.mrb[0].mxu0
      %v498 = vadd.f32 %v220, %v497
      %v499 = vpop.f32.mrb[0].mxu0
      %v500 = vpop.f32.mrb[0].mxu0
      %v501 = vadd.f32 %v220, %v500
      %v502 = vpop.f32.mrb[0].mxu0
      %503 = vmatprep.mubr.bf16.mxu0 0
      %504 = vmatmul.mubr.bf16.gmra.mrb[0].mxu0 %v364
      %v505 = vpop.f32.mrb[0].mxu0
      %v506 = vadd.f32 %v220, %v505
      %v507 = vpop.f32.mrb[0].mxu0
      %v508 = vpop.f32.mrb[0].mxu0
      %v509 = vadd.f32 %v220, %v508
      %v510 = vpop.f32.mrb[0].mxu0
      %511 = vmatprep.mubr.bf16.mxu0 0
      %512 = vmatmul.mubr.bf16.gmra.mrb[0].mxu0 %v367
      %v513 = vpop.f32.mrb[0].mxu0
      %v514 = vadd.f32 %v220, %v513
      %v515 = vpop.f32.mrb[0].mxu0
      %v516 = vpop.f32.mrb[0].mxu0
      %v517 = vadd.f32 %v220, %v516
      %v518 = vpop.f32.mrb[0].mxu0
      %519 = vmatprep.mubr.bf16.mxu0 0
      %520 = vmatmul.mubr.bf16.gmra.mrb[0].mxu0 %v370
      %v521 = vpop.f32.mrb[0].mxu0
      %v522 = vadd.f32 %v220, %v521
      %v523 = vpop.f32.mrb[0].mxu0
      %v524 = vpop.f32.mrb[0].mxu0
      %v525 = vadd.f32 %v220, %v524
      %v526 = vpop.f32.mrb[0].mxu0
      %527 = vmatprep.mubr.bf16.mxu0 0
      %528 = vmatmul.mubr.bf16.gmra.mrb[0].mxu0 %v373
      %v529 = vpop.f32.mrb[0].mxu0
      %v530 = vadd.f32 %v220, %v529
      %v531 = vpop.f32.mrb[0].mxu0
      %v532 = vpop.f32.mrb[0].mxu0
      %v533 = vadd.f32 %v220, %v532
      %v534 = vpop.f32.mrb[0].mxu0
      %535 = vdwg.mxu0
      %536 = vst [vmem:[%s172] sm:$0xff] %v410
      %537 = vst [vmem:[%s172 + $0x8] sm:$0xff] %v413
      %538 = vst [vmem:[%s172 + $0x10] sm:$0xff] %v418
      %539 = vst [vmem:[%s172 + $0x18] sm:$0xff] %v421
      %540 = vst [vmem:[%s172 + $0x20] sm:$0xff] %v426
      %541 = vst [vmem:[%s172 + $0x28] sm:$0xff] %v429
      %542 = vst [vmem:[%s172 + $0x30] sm:$0xff] %v434
      %543 = vst [vmem:[%s172 + $0x38] sm:$0xff] %v437
      %544 = vst [vmem:[%s172 + $0x40] sm:$0xff] %v442
      %545 = vst [vmem:[%s172 + $0x48] sm:$0xff] %v445
      %546 = vst [vmem:[%s172 + $0x50] sm:$0xff] %v450
      %547 = vst [vmem:[%s172 + $0x58] sm:$0xff] %v453
      %548 = vst [vmem:[%s172 + $0x60] sm:$0xff] %v458
      %549 = vst [vmem:[%s172 + $0x68] sm:$0xff] %v461
      %550 = vst [vmem:[%s172 + $0x70] sm:$0xff] %v466
      %551 = vst [vmem:[%s172 + $0x78] sm:$0xff] %v469
      %552 = vst [vmem:[%s172 + $0x80] sm:$0xff] %v474
      %553 = vst [vmem:[%s172 + $0x88] sm:$0xff] %v477
      %554 = vst [vmem:[%s172 + $0x90] sm:$0xff] %v482
      %555 = vst [vmem:[%s172 + $0x98] sm:$0xff] %v485
      %556 = vst [vmem:[%s172 + $0xa0] sm:$0xff] %v490
      %557 = vst [vmem:[%s172 + $0xa8] sm:$0xff] %v493
      %558 = vst [vmem:[%s172 + $0xb0] sm:$0xff] %v498
      %559 = vst [vmem:[%s172 + $0xb8] sm:$0xff] %v501
      %560 = vst [vmem:[%s172 + $0xc0] sm:$0xff] %v506
      %561 = vst [vmem:[%s172 + $0xc8] sm:$0xff] %v509
      %562 = vst [vmem:[%s172 + $0xd0] sm:$0xff] %v514
      %563 = vst [vmem:[%s172 + $0xd8] sm:$0xff] %v517
      %564 = vst [vmem:[%s172 + $0xe0] sm:$0xff] %v522
      %565 = vst [vmem:[%s172 + $0xe8] sm:$0xff] %v525
      %566 = vst [vmem:[%s172 + $0xf0] sm:$0xff] %v530
      %567 = vst [vmem:[%s172 + $0xf8] sm:$0xff] %v533
      %s568 = smul.u32 32, %s14
      %p569 = scmp.lt.s32.totalorder %s568, 63
      %s570 = scalar_select %p569, %s568, 63
      %s571 = smul.addr %s570, 8
      %s572 = scalar_lea.vmem %s3, %s571
      // Predicated region
      $region33: #{decoder_forward.16} parent=31 // pred_check
        %p573 = pneg %p100
      $region34: #{decoder_forward.16} parent=31 // pred_check_branch
        %575 = sbr.rel (%p573) target = $region36
      $region35: #{decoder_forward.16} parent=31 // pred_region
        %s576 = smul.u32 32, %s14
      $region36: #{decoder_forward.16} parent=31 // pred_fallthru
        _
    $region32: #{decoder_forward.16} parent=5 // pred_fallthru
      _
    %p577 = scmp.le.s32.totalorder 2, %s9
    // Predicated region
    $region37: #{decoder_forward.16} parent=5 // pred_check
      %p578 = pneg %p577
    $region38: #{decoder_forward.16} parent=5 // pred_check_branch
      %580 = sbr.rel (%p578) target = $region40
    $region39: #{decoder_forward.16} parent=5 // pred_region
      %s581 = ssub.s32 %s9, 2
      // Predicated region
      $region41: #{decoder_forward.16} parent=39 // pred_check
        %p582 = pneg %p106
      $region42: #{decoder_forward.16} parent=39 // pred_check_branch
        %584 = sbr.rel (%p582) target = $region44
      $region43: #{decoder_forward.16} parent=39 // pred_region
        %s585 = smul.u32 32, %s15
        %p586 = scmp.lt.s32.totalorder %s585, 63
        %s587 = scalar_select %p586, %s585, 63
        %s588 = smul.addr %s587, 8
        %s589 = scalar_lea.vmem %s3, %s588
      $region44: #{decoder_forward.16} parent=39 // pred_fallthru
        _
    $region40: #{decoder_forward.16} parent=5 // pred_fallthru
      _
  $region6: #{decoder_forward.16} parent=0 // loop_footer
    %s13 = sadd.s32 1, %s9
  $region7: #{decoder_forward.16} parent=0 // loop_footer_branch
    %8 = sbr.rel target = $region3
  $region8: #{decoder_forward.16} parent=0 // loop_exit
    _

// kernel: decoder_forward.17
$region0: #{decoder_forward.17}
  #allocation0 [shape = 'u32[]', space=smem, size = 0x4, offset = 0x4, fixed_abs, tag = 'smem constant byte address 0x4 - core index']
  #allocation1 [shape = 'u32[144,128]{1,0:T(1,128)}', space=vmem, size = 0x12000, scoped, tag = 'internal scratch']
  %s0 = inlined_call_operand.vmem [shape: bf16[2048,576], index: 0, kind: input, shape index: {}]
  %s1 = inlined_call_operand.vmem [shape: bf16[576,32], index: 1, kind: input, shape index: {}]
  %s2 = inlined_call_operand.vmem [shape: f32[1,32], index: 2, kind: input, shape index: {}]
  %s3 = inlined_call_operand.vmem [shape: f32[2048,32], index: 3, kind: output, shape index: {}]
  %s4 = sld [smem:[#allocation0]]
  $region45: #{decoder_forward.17} parent=0
    _
  %s6 = ssub.s32 1, %s4
  %s7 = scalar_select 0, %s6, %s4
  loop: start=0, step=1, limit=10
  $region2: #{decoder_forward.17} parent=0 // loop_pre_header
    _
  $region3: #{decoder_forward.17} parent=0 // loop_header
    %s9 = sphi 0, %s13
    %p10 = scmp.ge.s32.totalorder %s9, 10
    %s19 = sphi 0, %s21
    %s22 = sphi 0, %s19
    %s23 = sphi 0, %s22
    %s39 = sphi 0, %s23
    %s43 = sphi 0, %s43
    %s45 = sphi 0, %s43
    %s46 = sphi 0, %s45
    %s60 = sphi 0, %s46
    %s64 = sphi 0, %s64
    %s66 = sphi 0, %s64
    %s67 = sphi 0, %s66
    %s81 = sphi 0, %s67
    %s87 = sphi 0, %s89
    %s90 = sphi 0, %s87
    %s91 = sphi 0, %s90
    %s107 = sphi 0, %s91
  $region4: #{decoder_forward.17} parent=0 // loop_header_branch
    %12 = sbr.rel (%p10) target = $region8
  $region5: #{decoder_forward.17} parent=0 // loop_body
    %s14 = ssub.s32 %s9, 1
    %s15 = ssub.s32 %s9, 2
    %s16 = sadd.s32 %s9, 1
    %s17 = ssub.s32 %s9, %s16
    %p18 = scmp.eq.s32.totalorder %s17, 0
    %s20 = sadd.s32 %s19, 1
    %s21 = scalar_select %p18, %s19, %s20
    %p24 = pneg %p18
    %p25 = scmp.eq.s32.totalorder %s9, 7
    %p26 = por %p24, %p25
    %p27 = scmp.ne.s32.totalorder %s19, %s22
    %p28 = scmp.eq.s32.totalorder %s9, 0
    %p29 = por %p27, %p28
    %p30 = scmp.ne.s32.totalorder %s19, %s22
    %p31 = scmp.eq.s32.totalorder %s14, 7
    %p32 = por %p30, %p31
    %p33 = scmp.ne.s32.totalorder %s22, %s23
    %p34 = scmp.eq.s32.totalorder %s14, 0
    %p35 = por %p33, %p34
    %p36 = scmp.ne.s32.totalorder %s22, %s23
    %p37 = scmp.eq.s32.totalorder %s15, 7
    %p38 = por %p36, %p37
    %p40 = scmp.ne.s32.totalorder %s23, %s39
    %p41 = scmp.eq.s32.totalorder %s15, 0
    %p42 = por %p40, %p41
    %s44 = sadd.s32 %s43, 1
    %p47 = scmp.eq.s32.totalorder %s9, 7
    %p48 = scmp.ne.s32.totalorder %s43, %s45
    %p49 = scmp.eq.s32.totalorder %s9, 0
    %p50 = por %p48, %p49
    %p51 = scmp.ne.s32.totalorder %s43, %s45
    %p52 = scmp.eq.s32.totalorder %s14, 7
    %p53 = por %p51, %p52
    %p54 = scmp.ne.s32.totalorder %s45, %s46
    %p55 = scmp.eq.s32.totalorder %s14, 0
    %p56 = por %p54, %p55
    %p57 = scmp.ne.s32.totalorder %s45, %s46
    %p58 = scmp.eq.s32.totalorder %s15, 7
    %p59 = por %p57, %p58
    %p61 = scmp.ne.s32.totalorder %s46, %s60
    %p62 = scmp.eq.s32.totalorder %s15, 0
    %p63 = por %p61, %p62
    %s65 = sadd.s32 %s64, 1
    %p68 = scmp.eq.s32.totalorder %s9, 7
    %p69 = scmp.ne.s32.totalorder %s64, %s66
    %p70 = scmp.eq.s32.totalorder %s9, 0
    %p71 = por %p69, %p70
    %p72 = scmp.ne.s32.totalorder %s64, %s66
    %p73 = scmp.eq.s32.totalorder %s14, 7
    %p74 = por %p72, %p73
    %p75 = scmp.ne.s32.totalorder %s66, %s67
    %p76 = scmp.eq.s32.totalorder %s14, 0
    %p77 = por %p75, %p76
    %p78 = scmp.ne.s32.totalorder %s66, %s67
    %p79 = scmp.eq.s32.totalorder %s15, 7
    %p80 = por %p78, %p79
    %p82 = scmp.ne.s32.totalorder %s67, %s81
    %p83 = scmp.eq.s32.totalorder %s15, 0
    %p84 = por %p82, %p83
    %s85 = ssub.s32 %s9, %s16
    %p86 = scmp.eq.s32.totalorder %s85, 0
    %s88 = sadd.s32 %s87, 1
    %s89 = scalar_select %p86, %s87, %s88
    %p92 = pneg %p86
    %p93 = scmp.eq.s32.totalorder %s9, 7
    %p94 = por %p92, %p93
    %p95 = scmp.ne.s32.totalorder %s87, %s90
    %p96 = scmp.eq.s32.totalorder %s9, 0
    %p97 = por %p95, %p96
    %p98 = scmp.ne.s32.totalorder %s87, %s90
    %p99 = scmp.eq.s32.totalorder %s14, 7
    %p100 = por %p98, %p99
    %p101 = scmp.ne.s32.totalorder %s90, %s91
    %p102 = scmp.eq.s32.totalorder %s14, 0
    %p103 = por %p101, %p102
    %p104 = scmp.ne.s32.totalorder %s90, %s91
    %p105 = scmp.eq.s32.totalorder %s15, 7
    %p106 = por %p104, %p105
    %p108 = scmp.ne.s32.totalorder %s91, %s107
    %p109 = scmp.eq.s32.totalorder %s15, 0
    %p110 = por %p108, %p109
    %p111 = scmp.le.s32.totalorder 1, %s9
    %p112 = scmp.lt.s32.totalorder %s9, 9
    %p113 = pnand %p111, %p112
    %p114 = pneg %p113
    // Predicated region
    $region9: #{decoder_forward.17} parent=5 // pred_check
      _
    $region10: #{decoder_forward.17} parent=5 // pred_check_branch
      %116 = sbr.rel (%p113) target = $region12
    $region11: #{decoder_forward.17} parent=5 // pred_region
      %s117 = ssub.s32 %s9, 1
      // Predicated region
      $region13: #{decoder_forward.17} parent=11 // pred_check
        %p118 = pneg %p56
      $region14: #{decoder_forward.17} parent=11 // pred_check_branch
        %120 = sbr.rel (%p118) target = $region16
      $region15: #{decoder_forward.17} parent=11 // pred_region
        _
      $region16: #{decoder_forward.17} parent=11 // pred_fallthru
        _
      // Predicated region
      $region17: #{decoder_forward.17} parent=11 // pred_check
        %p121 = pneg %p77
      $region18: #{decoder_forward.17} parent=11 // pred_check_branch
        %123 = sbr.rel (%p121) target = $region20
      $region19: #{decoder_forward.17} parent=11 // pred_region
        _
      $region20: #{decoder_forward.17} parent=11 // pred_fallthru
        _
    $region12: #{decoder_forward.17} parent=5 // pred_fallthru
      _
    %p124 = scmp.lt.s32.totalorder %s9, 8
    // Predicated region
    $region21: #{decoder_forward.17} parent=5 // pred_check
      %p125 = pneg %p124
    $region22: #{decoder_forward.17} parent=5 // pred_check_branch
      %127 = sbr.rel (%p125) target = $region24
    $region23: #{decoder_forward.17} parent=5 // pred_region
      // Predicated region
      $region25: #{decoder_forward.17} parent=23 // pred_check
        %p128 = pneg %p29
      $region26: #{decoder_forward.17} parent=23 // pred_check_branch
        %130 = sbr.rel (%p128) target = $region28
      $region27: #{decoder_forward.17} parent=23 // pred_region
        %s131 = smul.u32 32, %s9
        %p132 = scmp.lt.s32.totalorder %s131, 255
        %s133 = scalar_select %p132, %s131, 255
        %s134 = smul.addr %s133, 5
        %s135 = smul.addr %s134, 4
        %s136 = scalar_lea.vmem %s0, %s135
        %s137 = smul.u32 32, %s9
      $region28: #{decoder_forward.17} parent=23 // pred_fallthru
        _
    $region24: #{decoder_forward.17} parent=5 // pred_fallthru
      _
    %p138 = scmp.le.s32.totalorder 1, %s9
    %p139 = scmp.lt.s32.totalorder %s9, 9
    %p140 = pnand %p138, %p139
    %p141 = pneg %p140
    // Predicated region
    $region29: #{decoder_forward.17} parent=5 // pred_check
      _
    $region30: #{decoder_forward.17} parent=5 // pred_check_branch
      %143 = sbr.rel (%p140) target = $region32
    $region31: #{decoder_forward.17} parent=5 // pred_region
      %s144 = ssub.s32 %s9, 1
      %s145 = smul.u32 32, %s14
      %p146 = scmp.lt.s32.totalorder %s145, 255
      %s147 = scalar_select %p146, %s145, 255
      %s148 = smul.addr %s147, 5
      %s149 = smul.addr %s148, 4
      %s150 = scalar_lea.vmem %s0, %s149
      %p151 = pneg %p35
      %p152 = pneg %p32
      %p153 = pneg %p56
      %p154 = pneg %p53
      %p155 = pneg %p77
      %p156 = pneg %p74
      %p157 = pneg %p103
      %p158 = pneg %p100
      %s159 = smul.u32 32, %s14
      %p160 = scmp.lt.s32.totalorder %s159, 255
      %s161 = scalar_select %p160, %s159, 255
      %s162 = smul.addr %s161, 8
      %s163 = scalar_lea.vmem %s3, %s162
      %s164 = smul.u32 32, %s14
      %p165 = scmp.lt.s32.totalorder %s164, 255
      %s166 = scalar_select %p165, %s164, 255
      %s167 = smul.addr %s166, 5
      %s168 = smul.addr %s167, 4
      %s169 = scalar_lea.vmem %s0, %s168
      %s170 = smul.u32 32, %s14
      %s171 = smul.u32 32, %s14
      %p172 = scmp.lt.s32.totalorder %s171, 255
      %s173 = scalar_select %p172, %s171, 255
      %s174 = smul.addr %s173, 8
      %s175 = scalar_lea.vmem %s3, %s174
      %s176 = smul.u32 32, %s14
      %v178 = vld [vmem:[%s169] sm:$0xff]
      %v179 = vld [vmem:[%s169 + $0x8] sm:$0xff]
      %v180 = vld [vmem:[%s169 + $0x10] sm:$0xf]
      %v181 = vld [vmem:[%s169 + $0x14] sm:$0xff]
      %v182 = vld [vmem:[%s169 + $0x1c] sm:$0xff]
      %v183 = vld [vmem:[%s169 + $0x24] sm:$0xf]
      %v184 = vld [vmem:[%s169 + $0x28] sm:$0xff]
      %v185 = vld [vmem:[%s169 + $0x30] sm:$0xff]
      %v186 = vld [vmem:[%s169 + $0x38] sm:$0xf]
      %v187 = vld [vmem:[%s169 + $0x3c] sm:$0xff]
      %v188 = vld [vmem:[%s169 + $0x44] sm:$0xff]
      %v189 = vld [vmem:[%s169 + $0x4c] sm:$0xf]
      %v190 = vld [vmem:[%s169 + $0x50] sm:$0xff]
      %v191 = vld [vmem:[%s169 + $0x58] sm:$0xff]
      %v192 = vld [vmem:[%s169 + $0x60] sm:$0xf]
      %v193 = vld [vmem:[%s169 + $0x64] sm:$0xff]
      %v194 = vld [vmem:[%s169 + $0x6c] sm:$0xff]
      %v195 = vld [vmem:[%s169 + $0x74] sm:$0xf]
      %v196 = vld [vmem:[%s169 + $0x78] sm:$0xff]
      %v197 = vld [vmem:[%s169 + $0x80] sm:$0xff]
      %v198 = vld [vmem:[%s169 + $0x88] sm:$0xf]
      %v199 = vld [vmem:[%s169 + $0x8c] sm:$0xff]
      %v200 = vld [vmem:[%s169 + $0x94] sm:$0xff]
      %v201 = vld [vmem:[%s169 + $0x9c] sm:$0xf]
      %v202 = vld [vmem:[%s169 + $0xa0] sm:$0xff]
      %v203 = vld [vmem:[%s169 + $0xa8] sm:$0xff]
      %v204 = vld [vmem:[%s169 + $0xb0] sm:$0xf]
      %v205 = vld [vmem:[%s169 + $0xb4] sm:$0xff]
      %v206 = vld [vmem:[%s169 + $0xbc] sm:$0xff]
      %v207 = vld [vmem:[%s169 + $0xc4] sm:$0xf]
      %v208 = vld [vmem:[%s169 + $0xc8] sm:$0xff]
      %v209 = vld [vmem:[%s169 + $0xd0] sm:$0xff]
      %v210 = vld [vmem:[%s169 + $0xd8] sm:$0xf]
      %v211 = vld [vmem:[%s169 + $0xdc] sm:$0xff]
      %v212 = vld [vmem:[%s169 + $0xe4] sm:$0xff]
      %v213 = vld [vmem:[%s169 + $0xec] sm:$0xf]
      %v214 = vld [vmem:[%s169 + $0xf0] sm:$0xff]
      %v215 = vld [vmem:[%s169 + $0xf8] sm:$0xff]
      %v216 = vld [vmem:[%s169 + $0x100] sm:$0xf]
      %v217 = vld [vmem:[%s169 + $0x104] sm:$0xff]
      %v218 = vld [vmem:[%s169 + $0x10c] sm:$0xff]
      %v219 = vld [vmem:[%s169 + $0x114] sm:$0xf]
      %v220 = vld [vmem:[%s169 + $0x118] sm:$0xff]
      %v221 = vld [vmem:[%s169 + $0x120] sm:$0xff]
      %v222 = vld [vmem:[%s169 + $0x128] sm:$0xf]
      %v223 = vld [vmem:[%s169 + $0x12c] sm:$0xff]
      %v224 = vld [vmem:[%s169 + $0x134] sm:$0xff]
      %v225 = vld [vmem:[%s169 + $0x13c] sm:$0xf]
      %v226 = vld [vmem:[%s169 + $0x140] sm:$0xff]
      %v227 = vld [vmem:[%s169 + $0x148] sm:$0xff]
      %v228 = vld [vmem:[%s169 + $0x150] sm:$0xf]
      %v229 = vld [vmem:[%s169 + $0x154] sm:$0xff]
      %v230 = vld [vmem:[%s169 + $0x15c] sm:$0xff]
      %v231 = vld [vmem:[%s169 + $0x164] sm:$0xf]
      %v232 = vld [vmem:[%s169 + $0x168] sm:$0xff]
      %v233 = vld [vmem:[%s169 + $0x170] sm:$0xff]
      %v234 = vld [vmem:[%s169 + $0x178] sm:$0xf]
      %v235 = vld [vmem:[%s169 + $0x17c] sm:$0xff]
      %v236 = vld [vmem:[%s169 + $0x184] sm:$0xff]
      %v237 = vld [vmem:[%s169 + $0x18c] sm:$0xf]
      %v238 = vld [vmem:[%s169 + $0x190] sm:$0xff]
      %v239 = vld [vmem:[%s169 + $0x198] sm:$0xff]
      %v240 = vld [vmem:[%s169 + $0x1a0] sm:$0xf]
      %v241 = vld [vmem:[%s169 + $0x1a4] sm:$0xff]
      %v242 = vld [vmem:[%s169 + $0x1ac] sm:$0xff]
      %v243 = vld [vmem:[%s169 + $0x1b4] sm:$0xf]
      %v244 = vld [vmem:[%s169 + $0x1b8] sm:$0xff]
      %v245 = vld [vmem:[%s169 + $0x1c0] sm:$0xff]
      %v246 = vld [vmem:[%s169 + $0x1c8] sm:$0xf]
      %v247 = vld [vmem:[%s169 + $0x1cc] sm:$0xff]
      %v248 = vld [vmem:[%s169 + $0x1d4] sm:$0xff]
      %v249 = vld [vmem:[%s169 + $0x1dc] sm:$0xf]
      %v250 = vld [vmem:[%s169 + $0x1e0] sm:$0xff]
      %v251 = vld [vmem:[%s169 + $0x1e8] sm:$0xff]
      %v252 = vld [vmem:[%s169 + $0x1f0] sm:$0xf]
      %v253 = vld [vmem:[%s169 + $0x1f4] sm:$0xff]
      %v254 = vld [vmem:[%s169 + $0x1fc] sm:$0xff]
      %v255 = vld [vmem:[%s169 + $0x204] sm:$0xf]
      %v256 = vld [vmem:[%s169 + $0x208] sm:$0xff]
      %v257 = vld [vmem:[%s169 + $0x210] sm:$0xff]
      %v258 = vld [vmem:[%s169 + $0x218] sm:$0xf]
      %v259 = vld [vmem:[%s169 + $0x21c] sm:$0xff]
      %v260 = vld [vmem:[%s169 + $0x224] sm:$0xff]
      %v261 = vld [vmem:[%s169 + $0x22c] sm:$0xf]
      %v262 = vld [vmem:[%s169 + $0x230] sm:$0xff]
      %v263 = vld [vmem:[%s169 + $0x238] sm:$0xff]
      %v264 = vld [vmem:[%s169 + $0x240] sm:$0xf]
      %v265 = vld [vmem:[%s169 + $0x244] sm:$0xff]
      %v266 = vld [vmem:[%s169 + $0x24c] sm:$0xff]
      %v267 = vld [vmem:[%s169 + $0x254] sm:$0xf]
      %v268 = vld [vmem:[%s169 + $0x258] sm:$0xff]
      %v269 = vld [vmem:[%s169 + $0x260] sm:$0xff]
      %v270 = vld [vmem:[%s169 + $0x268] sm:$0xf]
      %v271 = vld [vmem:[%s169 + $0x26c] sm:$0xff]
      %v272 = vld [vmem:[%s169 + $0x274] sm:$0xff]
      %v273 = vld [vmem:[%s169 + $0x27c] sm:$0xf]
      %v274 = vld [vmem:[%s1] sm:$0xf]
      %v275 = vld [vmem:[%s1 + $0x4] sm:$0xf]
      %v276 = vld [vmem:[%s1 + $0x8] sm:$0xf]
      %v277 = vld [vmem:[%s1 + $0xc] sm:$0xf]
      %v278 = vld [vmem:[%s1 + $0x10] sm:$0xf]
      %v279 = vld [vmem:[%s1 + $0x14] sm:$0xf]
      %v280 = vld [vmem:[%s1 + $0x18] sm:$0xf]
      %v281 = vld [vmem:[%s1 + $0x1c] sm:$0xf]
      %v282 = vld [vmem:[%s1 + $0x20] sm:$0xf]
      %v283 = vld [vmem:[%s1 + $0x24] sm:$0xf]
      %v284 = vld [vmem:[%s1 + $0x28] sm:$0xf]
      %v285 = vld [vmem:[%s1 + $0x2c] sm:$0xf]
      %v286 = vld [vmem:[%s1 + $0x30] sm:$0xf]
      %v287 = vld [vmem:[%s1 + $0x34] sm:$0xf]
      %v288 = vld [vmem:[%s1 + $0x38] sm:$0xf]
      %v289 = vld [vmem:[%s1 + $0x3c] sm:$0xf]
      %v290 = vld [vmem:[%s1 + $0x40] sm:$0xf]
      %v291 = vld [vmem:[%s1 + $0x44] sm:$0xf]
      %v292 = vld [vmem:[%s1 + $0x48] sm:$0xf]
      %v293 = vld [vmem:[%s1 + $0x4c] sm:$0xf]
      %v294 = vld [vmem:[%s1 + $0x50] sm:$0xf]
      %v295 = vld [vmem:[%s1 + $0x54] sm:$0xf]
      %v296 = vld [vmem:[%s1 + $0x58] sm:$0xf]
      %v297 = vld [vmem:[%s1 + $0x5c] sm:$0xf]
      %v298 = vld [vmem:[%s1 + $0x60] sm:$0xf]
      %v299 = vld [vmem:[%s1 + $0x64] sm:$0xf]
      %v300 = vld [vmem:[%s1 + $0x68] sm:$0xf]
      %v301 = vld [vmem:[%s1 + $0x6c] sm:$0xf]
      %v302 = vld [vmem:[%s1 + $0x70] sm:$0xf]
      %v303 = vld [vmem:[%s1 + $0x74] sm:$0xf]
      %v304 = vld [vmem:[%s1 + $0x78] sm:$0xf]
      %v305 = vld [vmem:[%s1 + $0x7c] sm:$0xf]
      %v306 = vld [vmem:[%s1 + $0x80] sm:$0xf]
      %v307 = vld [vmem:[%s1 + $0x84] sm:$0xf]
      %v308 = vld [vmem:[%s1 + $0x88] sm:$0xf]
      %v309 = vld [vmem:[%s1 + $0x8c] sm:$0xf]
      %v310 = vld [vmem:[%s1 + $0x90] sm:$0xf]
      %v311 = vld [vmem:[%s1 + $0x94] sm:$0xf]
      %v312 = vld [vmem:[%s1 + $0x98] sm:$0xf]
      %v313 = vld [vmem:[%s1 + $0x9c] sm:$0xf]
      %v314 = vld [vmem:[%s1 + $0xa0] sm:$0xf]
      %v315 = vld [vmem:[%s1 + $0xa4] sm:$0xf]
      %v316 = vld [vmem:[%s1 + $0xa8] sm:$0xf]
      %v317 = vld [vmem:[%s1 + $0xac] sm:$0xf]
      %v318 = vld [vmem:[%s1 + $0xb0] sm:$0xf]
      %v319 = vld [vmem:[%s1 + $0xb4] sm:$0xf]
      %v320 = vld [vmem:[%s1 + $0xb8] sm:$0xf]
      %v321 = vld [vmem:[%s1 + $0xbc] sm:$0xf]
      %v322 = vld [vmem:[%s1 + $0xc0] sm:$0xf]
      %v323 = vld [vmem:[%s1 + $0xc4] sm:$0xf]
      %v324 = vld [vmem:[%s1 + $0xc8] sm:$0xf]
      %v325 = vld [vmem:[%s1 + $0xcc] sm:$0xf]
      %v326 = vld [vmem:[%s1 + $0xd0] sm:$0xf]
      %v327 = vld [vmem:[%s1 + $0xd4] sm:$0xf]
      %v328 = vld [vmem:[%s1 + $0xd8] sm:$0xf]
      %v329 = vld [vmem:[%s1 + $0xdc] sm:$0xf]
      %v330 = vld [vmem:[%s1 + $0xe0] sm:$0xf]
      %v331 = vld [vmem:[%s1 + $0xe4] sm:$0xf]
      %v332 = vld [vmem:[%s1 + $0xe8] sm:$0xf]
      %v333 = vld [vmem:[%s1 + $0xec] sm:$0xf]
      %v334 = vld [vmem:[%s1 + $0xf0] sm:$0xf]
      %v335 = vld [vmem:[%s1 + $0xf4] sm:$0xf]
      %v336 = vld [vmem:[%s1 + $0xf8] sm:$0xf]
      %v337 = vld [vmem:[%s1 + $0xfc] sm:$0xf]
      %v338 = vld [vmem:[%s1 + $0x100] sm:$0xf]
      %v339 = vld [vmem:[%s1 + $0x104] sm:$0xf]
      %v340 = vld [vmem:[%s1 + $0x108] sm:$0xf]
      %v341 = vld [vmem:[%s1 + $0x10c] sm:$0xf]
      %v342 = vld [vmem:[%s1 + $0x110] sm:$0xf]
      %v343 = vld [vmem:[%s1 + $0x114] sm:$0xf]
      %v344 = vld [vmem:[%s1 + $0x118] sm:$0xf]
      %v345 = vld [vmem:[%s1 + $0x11c] sm:$0xf]
      %v346 = vld [vmem:[%s2] sm:$0x1]
      %v348 = vlaneseq
      %v349 = vshrl.u32 %v348, 7
      %v350 = vsub.s32 0, %v349
      %v351 = vrot.slane %v346, %v350
      %v449 = vunpack.c.l.b16 %v178
      %v450 = vunpack.c.h.b16 %v178
      %v451 = vunpack.c.l.b16 %v179
      %v452 = vunpack.c.h.b16 %v179
      %v453 = vunpack.c.l.b16 %v180
      %v454 = vunpack.c.l.b16 %v181
      %v455 = vunpack.c.h.b16 %v181
      %v456 = vunpack.c.l.b16 %v182
      %v457 = vunpack.c.h.b16 %v182
      %v458 = vunpack.c.l.b16 %v183
      %v459 = vunpack.c.l.b16 %v184
      %v460 = vunpack.c.h.b16 %v184
      %v461 = vunpack.c.l.b16 %v185
      %v462 = vunpack.c.h.b16 %v185
      %v463 = vunpack.c.l.b16 %v186
      %v464 = vunpack.c.l.b16 %v187
      %v465 = vunpack.c.h.b16 %v187
      %v466 = vunpack.c.l.b16 %v188
      %v467 = vunpack.c.h.b16 %v188
      %v468 = vunpack.c.l.b16 %v189
      %v469 = vunpack.c.l.b16 %v190
      %v470 = vunpack.c.h.b16 %v190
      %v471 = vunpack.c.l.b16 %v191
      %v472 = vunpack.c.h.b16 %v191
      %v473 = vunpack.c.l.b16 %v192
      %v474 = vunpack.c.l.b16 %v193
      %v475 = vunpack.c.h.b16 %v193
      %v476 = vunpack.c.l.b16 %v194
      %v477 = vunpack.c.h.b16 %v194
      %v478 = vunpack.c.l.b16 %v195
      %v479 = vunpack.c.l.b16 %v196
      %v480 = vunpack.c.h.b16 %v196
      %v481 = vunpack.c.l.b16 %v197
      %v482 = vunpack.c.h.b16 %v197
      %v483 = vunpack.c.l.b16 %v198
      %v484 = vunpack.c.l.b16 %v199
      %v485 = vunpack.c.h.b16 %v199
      %v486 = vunpack.c.l.b16 %v200
      %v487 = vunpack.c.h.b16 %v200
      %v488 = vunpack.c.l.b16 %v201
      %v489 = vunpack.c.l.b16 %v202
      %v490 = vunpack.c.h.b16 %v202
      %v491 = vunpack.c.l.b16 %v203
      %v492 = vunpack.c.h.b16 %v203
      %v493 = vunpack.c.l.b16 %v204
      %v494 = vunpack.c.l.b16 %v205
      %v495 = vunpack.c.h.b16 %v205
      %v496 = vunpack.c.l.b16 %v206
      %v497 = vunpack.c.h.b16 %v206
      %v498 = vunpack.c.l.b16 %v207
      %v499 = vunpack.c.l.b16 %v208
      %v500 = vunpack.c.h.b16 %v208
      %v501 = vunpack.c.l.b16 %v209
      %v502 = vunpack.c.h.b16 %v209
      %v503 = vunpack.c.l.b16 %v210
      %v504 = vunpack.c.l.b16 %v211
      %v505 = vunpack.c.h.b16 %v211
      %v506 = vunpack.c.l.b16 %v212
      %v507 = vunpack.c.h.b16 %v212
      %v508 = vunpack.c.l.b16 %v213
      %v509 = vunpack.c.l.b16 %v214
      %v510 = vunpack.c.h.b16 %v214
      %v511 = vunpack.c.l.b16 %v215
      %v512 = vunpack.c.h.b16 %v215
      %v513 = vunpack.c.l.b16 %v216
      %v514 = vunpack.c.l.b16 %v217
      %v515 = vunpack.c.h.b16 %v217
      %v516 = vunpack.c.l.b16 %v218
      %v517 = vunpack.c.h.b16 %v218
      %v518 = vunpack.c.l.b16 %v219
      %v519 = vunpack.c.l.b16 %v220
      %v520 = vunpack.c.h.b16 %v220
      %v521 = vunpack.c.l.b16 %v221
      %v522 = vunpack.c.h.b16 %v221
      %v523 = vunpack.c.l.b16 %v222
      %v524 = vunpack.c.l.b16 %v223
      %v525 = vunpack.c.h.b16 %v223
      %v526 = vunpack.c.l.b16 %v224
      %v527 = vunpack.c.h.b16 %v224
      %v528 = vunpack.c.l.b16 %v225
      %v529 = vunpack.c.l.b16 %v226
      %v530 = vunpack.c.h.b16 %v226
      %v531 = vunpack.c.l.b16 %v227
      %v532 = vunpack.c.h.b16 %v227
      %v533 = vunpack.c.l.b16 %v228
      %v534 = vunpack.c.l.b16 %v229
      %v535 = vunpack.c.h.b16 %v229
      %v536 = vunpack.c.l.b16 %v230
      %v537 = vunpack.c.h.b16 %v230
      %v538 = vunpack.c.l.b16 %v231
      %v539 = vunpack.c.l.b16 %v232
      %v540 = vunpack.c.h.b16 %v232
      %v541 = vunpack.c.l.b16 %v233
      %v542 = vunpack.c.h.b16 %v233
      %v543 = vunpack.c.l.b16 %v234
      %v544 = vunpack.c.l.b16 %v235
      %v545 = vunpack.c.h.b16 %v235
      %v546 = vunpack.c.l.b16 %v236
      %v547 = vunpack.c.h.b16 %v236
      %v548 = vunpack.c.l.b16 %v237
      %v549 = vunpack.c.l.b16 %v238
      %v550 = vunpack.c.h.b16 %v238
      %v551 = vunpack.c.l.b16 %v239
      %v552 = vunpack.c.h.b16 %v239
      %v553 = vunpack.c.l.b16 %v240
      %v554 = vunpack.c.l.b16 %v241
      %v555 = vunpack.c.h.b16 %v241
      %v556 = vunpack.c.l.b16 %v242
      %v557 = vunpack.c.h.b16 %v242
      %v558 = vunpack.c.l.b16 %v243
      %v559 = vunpack.c.l.b16 %v244
      %v560 = vunpack.c.h.b16 %v244
      %v561 = vunpack.c.l.b16 %v245
      %v562 = vunpack.c.h.b16 %v245
      %v563 = vunpack.c.l.b16 %v246
      %v564 = vunpack.c.l.b16 %v247
      %v565 = vunpack.c.h.b16 %v247
      %v566 = vunpack.c.l.b16 %v248
      %v567 = vunpack.c.h.b16 %v248
      %v568 = vunpack.c.l.b16 %v249
      %v569 = vunpack.c.l.b16 %v250
      %v570 = vunpack.c.h.b16 %v250
      %v571 = vunpack.c.l.b16 %v251
      %v572 = vunpack.c.h.b16 %v251
      %v573 = vunpack.c.l.b16 %v252
      %v574 = vunpack.c.l.b16 %v253
      %v575 = vunpack.c.h.b16 %v253
      %v576 = vunpack.c.l.b16 %v254
      %v577 = vunpack.c.h.b16 %v254
      %v578 = vunpack.c.l.b16 %v255
      %v579 = vunpack.c.l.b16 %v256
      %v580 = vunpack.c.h.b16 %v256
      %v581 = vunpack.c.l.b16 %v257
      %v582 = vunpack.c.h.b16 %v257
      %v583 = vunpack.c.l.b16 %v258
      %v584 = vunpack.c.l.b16 %v259
      %v585 = vunpack.c.h.b16 %v259
      %v586 = vunpack.c.l.b16 %v260
      %v587 = vunpack.c.h.b16 %v260
      %v588 = vunpack.c.l.b16 %v261
      %v589 = vunpack.c.l.b16 %v262
      %v590 = vunpack.c.h.b16 %v262
      %v591 = vunpack.c.l.b16 %v263
      %v592 = vunpack.c.h.b16 %v263
      %v593 = vunpack.c.l.b16 %v264
      %v594 = vunpack.c.l.b16 %v265
      %v595 = vunpack.c.h.b16 %v265
      %v596 = vunpack.c.l.b16 %v266
      %v597 = vunpack.c.h.b16 %v266
      %v598 = vunpack.c.l.b16 %v267
      %v599 = vunpack.c.l.b16 %v268
      %v600 = vunpack.c.h.b16 %v268
      %v601 = vunpack.c.l.b16 %v269
      %v602 = vunpack.c.h.b16 %v269
      %v603 = vunpack.c.l.b16 %v270
      %v604 = vunpack.c.l.b16 %v271
      %v605 = vunpack.c.h.b16 %v271
      %v606 = vunpack.c.l.b16 %v272
      %v607 = vunpack.c.h.b16 %v272
      %v608 = vunpack.c.l.b16 %v273
      %v609 = vpack.c.b16 %v454, %v449
      %v610 = vpack.c.b16 %v455, %v450
      %v611 = vpack.c.b16 %v456, %v451
      %v612 = vpack.c.b16 %v457, %v452
      %v613 = vpack.c.b16 %v458, %v453
      %v614 = vpack.c.b16 %v464, %v459
      %v615 = vpack.c.b16 %v465, %v460
      %v616 = vpack.c.b16 %v466, %v461
      %v617 = vpack.c.b16 %v467, %v462
      %v618 = vpack.c.b16 %v468, %v463
      %v619 = vpack.c.b16 %v474, %v469
      %v620 = vpack.c.b16 %v475, %v470
      %v621 = vpack.c.b16 %v476, %v471
      %v622 = vpack.c.b16 %v477, %v472
      %v623 = vpack.c.b16 %v478, %v473
      %v624 = vpack.c.b16 %v484, %v479
      %v625 = vpack.c.b16 %v485, %v480
      %v626 = vpack.c.b16 %v486, %v481
      %v627 = vpack.c.b16 %v487, %v482
      %v628 = vpack.c.b16 %v488, %v483
      %v629 = vpack.c.b16 %v494, %v489
      %v630 = vpack.c.b16 %v495, %v490
      %v631 = vpack.c.b16 %v496, %v491
      %v632 = vpack.c.b16 %v497, %v492
      %v633 = vpack.c.b16 %v498, %v493
      %v634 = vpack.c.b16 %v504, %v499
      %v635 = vpack.c.b16 %v505, %v500
      %v636 = vpack.c.b16 %v506, %v501
      %v637 = vpack.c.b16 %v507, %v502
      %v638 = vpack.c.b16 %v508, %v503
      %v639 = vpack.c.b16 %v514, %v509
      %v640 = vpack.c.b16 %v515, %v510
      %v641 = vpack.c.b16 %v516, %v511
      %v642 = vpack.c.b16 %v517, %v512
      %v643 = vpack.c.b16 %v518, %v513
      %v644 = vpack.c.b16 %v524, %v519
      %v645 = vpack.c.b16 %v525, %v520
      %v646 = vpack.c.b16 %v526, %v521
      %v647 = vpack.c.b16 %v527, %v522
      %v648 = vpack.c.b16 %v528, %v523
      %v649 = vpack.c.b16 %v534, %v529
      %v650 = vpack.c.b16 %v535, %v530
      %v651 = vpack.c.b16 %v536, %v531
      %v652 = vpack.c.b16 %v537, %v532
      %v653 = vpack.c.b16 %v538, %v533
      %v654 = vpack.c.b16 %v544, %v539
      %v655 = vpack.c.b16 %v545, %v540
      %v656 = vpack.c.b16 %v546, %v541
      %v657 = vpack.c.b16 %v547, %v542
      %v658 = vpack.c.b16 %v548, %v543
      %v659 = vpack.c.b16 %v554, %v549
      %v660 = vpack.c.b16 %v555, %v550
      %v661 = vpack.c.b16 %v556, %v551
      %v662 = vpack.c.b16 %v557, %v552
      %v663 = vpack.c.b16 %v558, %v553
      %v664 = vpack.c.b16 %v564, %v559
      %v665 = vpack.c.b16 %v565, %v560
      %v666 = vpack.c.b16 %v566, %v561
      %v667 = vpack.c.b16 %v567, %v562
      %v668 = vpack.c.b16 %v568, %v563
      %v669 = vpack.c.b16 %v574, %v569
      %v670 = vpack.c.b16 %v575, %v570
      %v671 = vpack.c.b16 %v576, %v571
      %v672 = vpack.c.b16 %v577, %v572
      %v673 = vpack.c.b16 %v578, %v573
      %v674 = vpack.c.b16 %v584, %v579
      %v675 = vpack.c.b16 %v585, %v580
      %v676 = vpack.c.b16 %v586, %v581
      %v677 = vpack.c.b16 %v587, %v582
      %v678 = vpack.c.b16 %v588, %v583
      %v679 = vpack.c.b16 %v594, %v589
      %v680 = vpack.c.b16 %v595, %v590
      %v681 = vpack.c.b16 %v596, %v591
      %v682 = vpack.c.b16 %v597, %v592
      %v683 = vpack.c.b16 %v598, %v593
      %v684 = vpack.c.b16 %v604, %v599
      %v685 = vpack.c.b16 %v605, %v600
      %v686 = vpack.c.b16 %v606, %v601
      %v687 = vpack.c.b16 %v607, %v602
      %v688 = vpack.c.b16 %v608, %v603
      %v825 = vunpack.c.l.b16 %v274
      %v826 = vunpack.c.l.b16 %v275
      %v827 = vunpack.c.l.b16 %v276
      %v828 = vunpack.c.l.b16 %v277
      %v829 = vunpack.c.l.b16 %v278
      %v830 = vunpack.c.l.b16 %v279
      %v831 = vunpack.c.l.b16 %v280
      %v832 = vunpack.c.l.b16 %v281
      %v833 = vunpack.c.l.b16 %v282
      %v834 = vunpack.c.l.b16 %v283
      %v835 = vunpack.c.l.b16 %v284
      %v836 = vunpack.c.l.b16 %v285
      %v837 = vunpack.c.l.b16 %v286
      %v838 = vunpack.c.l.b16 %v287
      %v839 = vunpack.c.l.b16 %v288
      %v840 = vunpack.c.l.b16 %v289
      %v841 = vunpack.c.l.b16 %v290
      %v842 = vunpack.c.l.b16 %v291
      %v843 = vunpack.c.l.b16 %v292
      %v844 = vunpack.c.l.b16 %v293
      %v845 = vunpack.c.l.b16 %v294
      %v846 = vunpack.c.l.b16 %v295
      %v847 = vunpack.c.l.b16 %v296
      %v848 = vunpack.c.l.b16 %v297
      %v849 = vunpack.c.l.b16 %v298
      %v850 = vunpack.c.l.b16 %v299
      %v851 = vunpack.c.l.b16 %v300
      %v852 = vunpack.c.l.b16 %v301
      %v853 = vunpack.c.l.b16 %v302
      %v854 = vunpack.c.l.b16 %v303
      %v855 = vunpack.c.l.b16 %v304
      %v856 = vunpack.c.l.b16 %v305
      %v857 = vunpack.c.l.b16 %v306
      %v858 = vunpack.c.l.b16 %v307
      %v859 = vunpack.c.l.b16 %v308
      %v860 = vunpack.c.l.b16 %v309
      %v861 = vunpack.c.l.b16 %v310
      %v862 = vunpack.c.l.b16 %v311
      %v863 = vunpack.c.l.b16 %v312
      %v864 = vunpack.c.l.b16 %v313
      %v865 = vunpack.c.l.b16 %v314
      %v866 = vunpack.c.l.b16 %v315
      %v867 = vunpack.c.l.b16 %v316
      %v868 = vunpack.c.l.b16 %v317
      %v869 = vunpack.c.l.b16 %v318
      %v870 = vunpack.c.l.b16 %v319
      %v871 = vunpack.c.l.b16 %v320
      %v872 = vunpack.c.l.b16 %v321
      %v873 = vunpack.c.l.b16 %v322
      %v874 = vunpack.c.l.b16 %v323
      %v875 = vunpack.c.l.b16 %v324
      %v876 = vunpack.c.l.b16 %v325
      %v877 = vunpack.c.l.b16 %v326
      %v878 = vunpack.c.l.b16 %v327
      %v879 = vunpack.c.l.b16 %v328
      %v880 = vunpack.c.l.b16 %v329
      %v881 = vunpack.c.l.b16 %v330
      %v882 = vunpack.c.l.b16 %v331
      %v883 = vunpack.c.l.b16 %v332
      %v884 = vunpack.c.l.b16 %v333
      %v885 = vunpack.c.l.b16 %v334
      %v886 = vunpack.c.l.b16 %v335
      %v887 = vunpack.c.l.b16 %v336
      %v888 = vunpack.c.l.b16 %v337
      %v889 = vunpack.c.l.b16 %v338
      %v890 = vunpack.c.l.b16 %v339
      %v891 = vunpack.c.l.b16 %v340
      %v892 = vunpack.c.l.b16 %v341
      %v893 = vunpack.c.l.b16 %v342
      %v894 = vunpack.c.l.b16 %v343
      %v895 = vunpack.c.l.b16 %v344
      %v896 = vunpack.c.l.b16 %v345
      %v897 = vpack.c.b16 %v826, %v825
      %v898 = vpack.c.b16 %v828, %v827
      %v899 = vpack.c.b16 %v830, %v829
      %v900 = vpack.c.b16 %v832, %v831
      %v901 = vpack.c.b16 %v834, %v833
      %v902 = vpack.c.b16 %v836, %v835
      %v903 = vpack.c.b16 %v838, %v837
      %v904 = vpack.c.b16 %v840, %v839
      %v905 = vpack.c.b16 %v842, %v841
      %v906 = vpack.c.b16 %v844, %v843
      %v907 = vpack.c.b16 %v846, %v845
      %v908 = vpack.c.b16 %v848, %v847
      %v909 = vpack.c.b16 %v850, %v849
      %v910 = vpack.c.b16 %v852, %v851
      %v911 = vpack.c.b16 %v854, %v853
      %v912 = vpack.c.b16 %v856, %v855
      %v913 = vpack.c.b16 %v858, %v857
      %v914 = vpack.c.b16 %v860, %v859
      %v915 = vpack.c.b16 %v862, %v861
      %v916 = vpack.c.b16 %v864, %v863
      %v917 = vpack.c.b16 %v866, %v865
      %v918 = vpack.c.b16 %v868, %v867
      %v919 = vpack.c.b16 %v870, %v869
      %v920 = vpack.c.b16 %v872, %v871
      %v921 = vpack.c.b16 %v874, %v873
      %v922 = vpack.c.b16 %v876, %v875
      %v923 = vpack.c.b16 %v878, %v877
      %v924 = vpack.c.b16 %v880, %v879
      %v925 = vpack.c.b16 %v882, %v881
      %v926 = vpack.c.b16 %v884, %v883
      %v927 = vpack.c.b16 %v886, %v885
      %v928 = vpack.c.b16 %v888, %v887
      %v929 = vpack.c.b16 %v890, %v889
      %v930 = vpack.c.b16 %v892, %v891
      %v931 = vpack.c.b16 %v894, %v893
      %v932 = vpack.c.b16 %v896, %v895
      %vm969 = vcmask 523264
      %v971 = vsel %vm969, %v613, 0
      %v974 = vsel %vm969, %v618, 0
      %v977 = vsel %vm969, %v623, 0
      %v980 = vsel %vm969, %v628, 0
      %v983 = vsel %vm969, %v633, 0
      %v986 = vsel %vm969, %v638, 0
      %v989 = vsel %vm969, %v643, 0
      %v992 = vsel %vm969, %v648, 0
      %v995 = vsel %vm969, %v653, 0
      %v998 = vsel %vm969, %v658, 0
      %v1001 = vsel %vm969, %v663, 0
      %v1004 = vsel %vm969, %v668, 0
      %v1007 = vsel %vm969, %v673, 0
      %v1010 = vsel %vm969, %v678, 0
      %v1013 = vsel %vm969, %v683, 0
      %v1016 = vsel %vm969, %v688, 0
      %1018 = vmatprep.subr.bf16.mxu0 0
      %1019 = vmatpush1.bf16.msra.mxu0 %v897
      %1020 = vmatprep.subr.bf16.mxu0 0
      %1021 = vmatpush1.bf16.msra.mxu0 %v898
      %1022 = vmatprep.subr.bf16.mxu0 0
      %1023 = vmatpush1.bf16.msra.mxu0 %v899
      %1024 = vmatprep.subr.bf16.mxu0 0
      %1025 = vmatpush1.bf16.msra.mxu0 %v900
      %1026 = vmatprep.subr.bf16.mxu0 0
      %1027 = vmatpush1.bf16.msra.mxu0 %v901
      %1028 = vmatprep.subr.bf16.mxu0 0
      %1029 = vmatpush1.bf16.msra.mxu0 %v902
      %1030 = vmatprep.subr.bf16.mxu0 0
      %1031 = vmatpush1.bf16.msra.mxu0 %v903
      %1032 = vmatprep.subr.bf16.mxu0 0
      %1033 = vmatpush1.bf16.msra.mxu0 %v904
      %1034 = vmatprep.subr.bf16.mxu0 0
      %1035 = vmatpush1.bf16.msra.mxu0 %v905
      %1036 = vmatprep.subr.bf16.mxu0 0
      %1037 = vmatpush1.bf16.msra.mxu0 %v906
      %1038 = vmatprep.subr.bf16.mxu0 0
      %1039 = vmatpush1.bf16.msra.mxu0 %v907
      %1040 = vmatprep.subr.bf16.mxu0 0
      %1041 = vmatpush1.bf16.msra.mxu0 %v908
      %1042 = vmatprep.subr.bf16.mxu0 0
      %1043 = vmatpush1.bf16.msra.mxu0 %v909
      %1044 = vmatprep.subr.bf16.mxu0 0
      %1045 = vmatpush1.bf16.msra.mxu0 %v910
      %1046 = vmatprep.subr.bf16.mxu0 0
      %1047 = vmatpush1.bf16.msra.mxu0 %v911
      %1048 = vmatprep.subr.bf16.mxu0 0
      %1049 = vmatpush1.bf16.msra.mxu0 %v912
      %1050 = vmatprep.mubr.bf16.mxu0 %v610
      %1051 = vmatmul.mubr.bf16.gmra.mrb[0].mxu0 %v609
      %v1052 = vpop.f32.mrb[0].mxu0
      %v1053 = vadd.f32 %v351, %v1052
      %v1054 = vpop.f32.mrb[0].mxu0
      %v1055 = vpop.f32.mrb[0].mxu0
      %v1056 = vadd.f32 %v351, %v1055
      %v1057 = vpop.f32.mrb[0].mxu0
      %1058 = vmatprep.mubr.bf16.mxu0 %v615
      %1059 = vmatmul.mubr.bf16.gmra.mrb[0].mxu0 %v614
      %v1060 = vpop.f32.mrb[0].mxu0
      %v1061 = vadd.f32 %v351, %v1060
      %v1062 = vpop.f32.mrb[0].mxu0
      %v1063 = vpop.f32.mrb[0].mxu0
      %v1064 = vadd.f32 %v351, %v1063
      %v1065 = vpop.f32.mrb[0].mxu0
      %1066 = vmatprep.mubr.bf16.mxu0 %v620
      %1067 = vmatmul.mubr.bf16.gmra.mrb[0].mxu0 %v619
      %v1068 = vpop.f32.mrb[0].mxu0
      %v1069 = vadd.f32 %v351, %v1068
      %v1070 = vpop.f32.mrb[0].mxu0
      %v1071 = vpop.f32.mrb[0].mxu0
      %v1072 = vadd.f32 %v351, %v1071
      %v1073 = vpop.f32.mrb[0].mxu0
      %1074 = vmatprep.mubr.bf16.mxu0 %v625
      %1075 = vmatmul.mubr.bf16.gmra.mrb[0].mxu0 %v624
      %v1076 = vpop.f32.mrb[0].mxu0
      %v1077 = vadd.f32 %v351, %v1076
      %v1078 = vpop.f32.mrb[0].mxu0
      %v1079 = vpop.f32.mrb[0].mxu0
      %v1080 = vadd.f32 %v351, %v1079
      %v1081 = vpop.f32.mrb[0].mxu0
      %1082 = vmatprep.mubr.bf16.mxu0 %v630
      %1083 = vmatmul.mubr.bf16.gmra.mrb[0].mxu0 %v629
      %v1084 = vpop.f32.mrb[0].mxu0
      %v1085 = vadd.f32 %v351, %v1084
      %v1086 = vpop.f32.mrb[0].mxu0
      %v1087 = vpop.f32.mrb[0].mxu0
      %v1088 = vadd.f32 %v351, %v1087
      %v1089 = vpop.f32.mrb[0].mxu0
      %1090 = vmatprep.mubr.bf16.mxu0 %v635
      %1091 = vmatmul.mubr.bf16.gmra.mrb[0].mxu0 %v634
      %v1092 = vpop.f32.mrb[0].mxu0
      %v1093 = vadd.f32 %v351, %v1092
      %v1094 = vpop.f32.mrb[0].mxu0
      %v1095 = vpop.f32.mrb[0].mxu0
      %v1096 = vadd.f32 %v351, %v1095
      %v1097 = vpop.f32.mrb[0].mxu0
      %1098 = vmatprep.mubr.bf16.mxu0 %v640
      %1099 = vmatmul.mubr.bf16.gmra.mrb[0].mxu0 %v639
      %v1100 = vpop.f32.mrb[0].mxu0
      %v1101 = vadd.f32 %v351, %v1100
      %v1102 = vpop.f32.mrb[0].mxu0
      %v1103 = vpop.f32.mrb[0].mxu0
      %v1104 = vadd.f32 %v351, %v1103
      %v1105 = vpop.f32.mrb[0].mxu0
      %1106 = vmatprep.mubr.bf16.mxu0 %v645
      %1107 = vmatmul.mubr.bf16.gmra.mrb[0].mxu0 %v644
      %v1108 = vpop.f32.mrb[0].mxu0
      %v1109 = vadd.f32 %v351, %v1108
      %v1110 = vpop.f32.mrb[0].mxu0
      %v1111 = vpop.f32.mrb[0].mxu0
      %v1112 = vadd.f32 %v351, %v1111
      %v1113 = vpop.f32.mrb[0].mxu0
      %1114 = vmatprep.mubr.bf16.mxu0 %v650
      %1115 = vmatmul.mubr.bf16.gmra.mrb[0].mxu0 %v649
      %v1116 = vpop.f32.mrb[0].mxu0
      %v1117 = vadd.f32 %v351, %v1116
      %v1118 = vpop.f32.mrb[0].mxu0
      %v1119 = vpop.f32.mrb[0].mxu0
      %v1120 = vadd.f32 %v351, %v1119
      %v1121 = vpop.f32.mrb[0].mxu0
      %1122 = vmatprep.mubr.bf16.mxu0 %v655
      %1123 = vmatmul.mubr.bf16.gmra.mrb[0].mxu0 %v654
      %v1124 = vpop.f32.mrb[0].mxu0
      %v1125 = vadd.f32 %v351, %v1124
      %v1126 = vpop.f32.mrb[0].mxu0
      %v1127 = vpop.f32.mrb[0].mxu0
      %v1128 = vadd.f32 %v351, %v1127
      %v1129 = vpop.f32.mrb[0].mxu0
      %1130 = vmatprep.mubr.bf16.mxu0 %v660
      %1131 = vmatmul.mubr.bf16.gmra.mrb[0].mxu0 %v659
      %v1132 = vpop.f32.mrb[0].mxu0
      %v1133 = vadd.f32 %v351, %v1132
      %v1134 = vpop.f32.mrb[0].mxu0
      %v1135 = vpop.f32.mrb[0].mxu0
      %v1136 = vadd.f32 %v351, %v1135
      %v1137 = vpop.f32.mrb[0].mxu0
      %1138 = vmatprep.mubr.bf16.mxu0 %v665
      %1139 = vmatmul.mubr.bf16.gmra.mrb[0].mxu0 %v664
      %v1140 = vpop.f32.mrb[0].mxu0
      %v1141 = vadd.f32 %v351, %v1140
      %v1142 = vpop.f32.mrb[0].mxu0
      %v1143 = vpop.f32.mrb[0].mxu0
      %v1144 = vadd.f32 %v351, %v1143
      %v1145 = vpop.f32.mrb[0].mxu0
      %1146 = vmatprep.mubr.bf16.mxu0 %v670
      %1147 = vmatmul.mubr.bf16.gmra.mrb[0].mxu0 %v669
      %v1148 = vpop.f32.mrb[0].mxu0
      %v1149 = vadd.f32 %v351, %v1148
      %v1150 = vpop.f32.mrb[0].mxu0
      %v1151 = vpop.f32.mrb[0].mxu0
      %v1152 = vadd.f32 %v351, %v1151
      %v1153 = vpop.f32.mrb[0].mxu0
      %1154 = vmatprep.mubr.bf16.mxu0 %v675
      %1155 = vmatmul.mubr.bf16.gmra.mrb[0].mxu0 %v674
      %v1156 = vpop.f32.mrb[0].mxu0
      %v1157 = vadd.f32 %v351, %v1156
      %v1158 = vpop.f32.mrb[0].mxu0
      %v1159 = vpop.f32.mrb[0].mxu0
      %v1160 = vadd.f32 %v351, %v1159
      %v1161 = vpop.f32.mrb[0].mxu0
      %1162 = vmatprep.mubr.bf16.mxu0 %v680
      %1163 = vmatmul.mubr.bf16.gmra.mrb[0].mxu0 %v679
      %v1164 = vpop.f32.mrb[0].mxu0
      %v1165 = vadd.f32 %v351, %v1164
      %v1166 = vpop.f32.mrb[0].mxu0
      %v1167 = vpop.f32.mrb[0].mxu0
      %v1168 = vadd.f32 %v351, %v1167
      %v1169 = vpop.f32.mrb[0].mxu0
      %1170 = vmatprep.mubr.bf16.mxu0 %v685
      %1171 = vmatmul.mubr.bf16.gmra.mrb[0].mxu0 %v684
      %v1172 = vpop.f32.mrb[0].mxu0
      %v1173 = vadd.f32 %v351, %v1172
      %v1174 = vpop.f32.mrb[0].mxu0
      %v1175 = vpop.f32.mrb[0].mxu0
      %v1176 = vadd.f32 %v351, %v1175
      %v1177 = vpop.f32.mrb[0].mxu0
      %1178 = vdwg.mxu0
      %1179 = vmatprep.subr.bf16.mxu0 0
      %1180 = vmatpush1.bf16.msra.mxu0 %v913
      %1181 = vmatprep.subr.bf16.mxu0 0
      %1182 = vmatpush1.bf16.msra.mxu0 %v914
      %1183 = vmatprep.subr.bf16.mxu0 0
      %1184 = vmatpush1.bf16.msra.mxu0 %v915
      %1185 = vmatprep.subr.bf16.mxu0 0
      %1186 = vmatpush1.bf16.msra.mxu0 %v916
      %1187 = vmatprep.subr.bf16.mxu0 0
      %1188 = vmatpush1.bf16.msra.mxu0 %v917
      %1189 = vmatprep.subr.bf16.mxu0 0
      %1190 = vmatpush1.bf16.msra.mxu0 %v918
      %1191 = vmatprep.subr.bf16.mxu0 0
      %1192 = vmatpush1.bf16.msra.mxu0 %v919
      %1193 = vmatprep.subr.bf16.mxu0 0
      %1194 = vmatpush1.bf16.msra.mxu0 %v920
      %1195 = vmatprep.subr.bf16.mxu0 0
      %1196 = vmatpush1.bf16.msra.mxu0 %v921
      %1197 = vmatprep.subr.bf16.mxu0 0
      %1198 = vmatpush1.bf16.msra.mxu0 %v922
      %1199 = vmatprep.subr.bf16.mxu0 0
      %1200 = vmatpush1.bf16.msra.mxu0 %v923
      %1201 = vmatprep.subr.bf16.mxu0 0
      %1202 = vmatpush1.bf16.msra.mxu0 %v924
      %1203 = vmatprep.subr.bf16.mxu0 0
      %1204 = vmatpush1.bf16.msra.mxu0 %v925
      %1205 = vmatprep.subr.bf16.mxu0 0
      %1206 = vmatpush1.bf16.msra.mxu0 %v926
      %1207 = vmatprep.subr.bf16.mxu0 0
      %1208 = vmatpush1.bf16.msra.mxu0 %v927
      %1209 = vmatprep.subr.bf16.mxu0 0
      %1210 = vmatpush1.bf16.msra.mxu0 %v928
      %1211 = vmatprep.mubr.bf16.mxu0 %v612
      %1212 = vmatmul.mubr.bf16.gmra.mrb[0].mxu0 %v611
      %v1213 = vpop.f32.mrb[0].mxu0
      %v1214 = vadd.f32 %v1053, %v1213
      %v1215 = vpop.f32.mrb[0].mxu0
      %v1216 = vpop.f32.mrb[0].mxu0
      %v1217 = vadd.f32 %v1056, %v1216
      %v1218 = vpop.f32.mrb[0].mxu0
      %1219 = vmatprep.mubr.bf16.mxu0 %v617
      %1220 = vmatmul.mubr.bf16.gmra.mrb[0].mxu0 %v616
      %v1221 = vpop.f32.mrb[0].mxu0
      %v1222 = vadd.f32 %v1061, %v1221
      %v1223 = vpop.f32.mrb[0].mxu0
      %v1224 = vpop.f32.mrb[0].mxu0
      %v1225 = vadd.f32 %v1064, %v1224
      %v1226 = vpop.f32.mrb[0].mxu0
      %1227 = vmatprep.mubr.bf16.mxu0 %v622
      %1228 = vmatmul.mubr.bf16.gmra.mrb[0].mxu0 %v621
      %v1229 = vpop.f32.mrb[0].mxu0
      %v1230 = vadd.f32 %v1069, %v1229
      %v1231 = vpop.f32.mrb[0].mxu0
      %v1232 = vpop.f32.mrb[0].mxu0
      %v1233 = vadd.f32 %v1072, %v1232
      %v1234 = vpop.f32.mrb[0].mxu0
      %1235 = vmatprep.mubr.bf16.mxu0 %v627
      %1236 = vmatmul.mubr.bf16.gmra.mrb[0].mxu0 %v626
      %v1237 = vpop.f32.mrb[0].mxu0
      %v1238 = vadd.f32 %v1077, %v1237
      %v1239 = vpop.f32.mrb[0].mxu0
      %v1240 = vpop.f32.mrb[0].mxu0
      %v1241 = vadd.f32 %v1080, %v1240
      %v1242 = vpop.f32.mrb[0].mxu0
      %1243 = vmatprep.mubr.bf16.mxu0 %v632
      %1244 = vmatmul.mubr.bf16.gmra.mrb[0].mxu0 %v631
      %v1245 = vpop.f32.mrb[0].mxu0
      %v1246 = vadd.f32 %v1085, %v1245
      %v1247 = vpop.f32.mrb[0].mxu0
      %v1248 = vpop.f32.mrb[0].mxu0
      %v1249 = vadd.f32 %v1088, %v1248
      %v1250 = vpop.f32.mrb[0].mxu0
      %1251 = vmatprep.mubr.bf16.mxu0 %v637
      %1252 = vmatmul.mubr.bf16.gmra.mrb[0].mxu0 %v636
      %v1253 = vpop.f32.mrb[0].mxu0
      %v1254 = vadd.f32 %v1093, %v1253
      %v1255 = vpop.f32.mrb[0].mxu0
      %v1256 = vpop.f32.mrb[0].mxu0
      %v1257 = vadd.f32 %v1096, %v1256
      %v1258 = vpop.f32.mrb[0].mxu0
      %1259 = vmatprep.mubr.bf16.mxu0 %v642
      %1260 = vmatmul.mubr.bf16.gmra.mrb[0].mxu0 %v641
      %v1261 = vpop.f32.mrb[0].mxu0
      %v1262 = vadd.f32 %v1101, %v1261
      %v1263 = vpop.f32.mrb[0].mxu0
      %v1264 = vpop.f32.mrb[0].mxu0
      %v1265 = vadd.f32 %v1104, %v1264
      %v1266 = vpop.f32.mrb[0].mxu0
      %1267 = vmatprep.mubr.bf16.mxu0 %v647
      %1268 = vmatmul.mubr.bf16.gmra.mrb[0].mxu0 %v646
      %v1269 = vpop.f32.mrb[0].mxu0
      %v1270 = vadd.f32 %v1109, %v1269
      %v1271 = vpop.f32.mrb[0].mxu0
      %v1272 = vpop.f32.mrb[0].mxu0
      %v1273 = vadd.f32 %v1112, %v1272
      %v1274 = vpop.f32.mrb[0].mxu0
      %1275 = vmatprep.mubr.bf16.mxu0 %v652
      %1276 = vmatmul.mubr.bf16.gmra.mrb[0].mxu0 %v651
      %v1277 = vpop.f32.mrb[0].mxu0
      %v1278 = vadd.f32 %v1117, %v1277
      %v1279 = vpop.f32.mrb[0].mxu0
      %v1280 = vpop.f32.mrb[0].mxu0
      %v1281 = vadd.f32 %v1120, %v1280
      %v1282 = vpop.f32.mrb[0].mxu0
      %1283 = vmatprep.mubr.bf16.mxu0 %v657
      %1284 = vmatmul.mubr.bf16.gmra.mrb[0].mxu0 %v656
      %v1285 = vpop.f32.mrb[0].mxu0
      %v1286 = vadd.f32 %v1125, %v1285
      %v1287 = vpop.f32.mrb[0].mxu0
      %v1288 = vpop.f32.mrb[0].mxu0
      %v1289 = vadd.f32 %v1128, %v1288
      %v1290 = vpop.f32.mrb[0].mxu0
      %1291 = vmatprep.mubr.bf16.mxu0 %v662
      %1292 = vmatmul.mubr.bf16.gmra.mrb[0].mxu0 %v661
      %v1293 = vpop.f32.mrb[0].mxu0
      %v1294 = vadd.f32 %v1133, %v1293
      %v1295 = vpop.f32.mrb[0].mxu0
      %v1296 = vpop.f32.mrb[0].mxu0
      %v1297 = vadd.f32 %v1136, %v1296
      %v1298 = vpop.f32.mrb[0].mxu0
      %1299 = vmatprep.mubr.bf16.mxu0 %v667
      %1300 = vmatmul.mubr.bf16.gmra.mrb[0].mxu0 %v666
      %v1301 = vpop.f32.mrb[0].mxu0
      %v1302 = vadd.f32 %v1141, %v1301
      %v1303 = vpop.f32.mrb[0].mxu0
      %v1304 = vpop.f32.mrb[0].mxu0
      %v1305 = vadd.f32 %v1144, %v1304
      %v1306 = vpop.f32.mrb[0].mxu0
      %1307 = vmatprep.mubr.bf16.mxu0 %v672
      %1308 = vmatmul.mubr.bf16.gmra.mrb[0].mxu0 %v671
      %v1309 = vpop.f32.mrb[0].mxu0
      %v1310 = vadd.f32 %v1149, %v1309
      %v1311 = vpop.f32.mrb[0].mxu0
      %v1312 = vpop.f32.mrb[0].mxu0
      %v1313 = vadd.f32 %v1152, %v1312
      %v1314 = vpop.f32.mrb[0].mxu0
      %1315 = vmatprep.mubr.bf16.mxu0 %v677
      %1316 = vmatmul.mubr.bf16.gmra.mrb[0].mxu0 %v676
      %v1317 = vpop.f32.mrb[0].mxu0
      %v1318 = vadd.f32 %v1157, %v1317
      %v1319 = vpop.f32.mrb[0].mxu0
      %v1320 = vpop.f32.mrb[0].mxu0
      %v1321 = vadd.f32 %v1160, %v1320
      %v1322 = vpop.f32.mrb[0].mxu0
      %1323 = vmatprep.mubr.bf16.mxu0 %v682
      %1324 = vmatmul.mubr.bf16.gmra.mrb[0].mxu0 %v681
      %v1325 = vpop.f32.mrb[0].mxu0
      %v1326 = vadd.f32 %v1165, %v1325
      %v1327 = vpop.f32.mrb[0].mxu0
      %v1328 = vpop.f32.mrb[0].mxu0
      %v1329 = vadd.f32 %v1168, %v1328
      %v1330 = vpop.f32.mrb[0].mxu0
      %1331 = vmatprep.mubr.bf16.mxu0 %v687
      %1332 = vmatmul.mubr.bf16.gmra.mrb[0].mxu0 %v686
      %v1333 = vpop.f32.mrb[0].mxu0
      %v1334 = vadd.f32 %v1173, %v1333
      %v1335 = vpop.f32.mrb[0].mxu0
      %v1336 = vpop.f32.mrb[0].mxu0
      %v1337 = vadd.f32 %v1176, %v1336
      %v1338 = vpop.f32.mrb[0].mxu0
      %1339 = vdwg.mxu0
      %1340 = vmatprep.subr.bf16.mxu0 0
      %1341 = vmatpush1.bf16.msra.mxu0 %v929
      %1342 = vmatprep.subr.bf16.mxu0 0
      %1343 = vmatpush1.bf16.msra.mxu0 %v930
      %1344 = vmatprep.subr.bf16.mxu0 0
      %1345 = vmatpush1.bf16.msra.mxu0 %v931
      %1346 = vmatprep.subr.bf16.mxu0 0
      %1347 = vmatpush1.bf16.msra.mxu0 %v932
      %1348 = vmatprep.subr.bf16.mxu0 0
      %1349 = vmatpush1.bf16.msra.mxu0 0
      %1350 = vmatprep.subr.bf16.mxu0 0
      %1351 = vmatpush1.bf16.msra.mxu0 0
      %1352 = vmatprep.subr.bf16.mxu0 0
      %1353 = vmatpush1.bf16.msra.mxu0 0
      %1354 = vmatprep.subr.bf16.mxu0 0
      %1355 = vmatpush1.bf16.msra.mxu0 0
      %1356 = vmatprep.subr.bf16.mxu0 0
      %1357 = vmatpush1.bf16.msra.mxu0 0
      %1358 = vmatprep.subr.bf16.mxu0 0
      %1359 = vmatpush1.bf16.msra.mxu0 0
      %1360 = vmatprep.subr.bf16.mxu0 0
      %1361 = vmatpush1.bf16.msra.mxu0 0
      %1362 = vmatprep.subr.bf16.mxu0 0
      %1363 = vmatpush1.bf16.msra.mxu0 0
      %1364 = vmatprep.subr.bf16.mxu0 0
      %1365 = vmatpush1.bf16.msra.mxu0 0
      %1366 = vmatprep.subr.bf16.mxu0 0
      %1367 = vmatpush1.bf16.msra.mxu0 0
      %1368 = vmatprep.subr.bf16.mxu0 0
      %1369 = vmatpush1.bf16.msra.mxu0 0
      %1370 = vmatprep.subr.bf16.mxu0 0
      %1371 = vmatpush1.bf16.msra.mxu0 0
      %1372 = vmatprep.mubr.bf16.mxu0 0
      %1373 = vmatmul.mubr.bf16.gmra.mrb[0].mxu0 %v971
      %v1374 = vpop.f32.mrb[0].mxu0
      %v1375 = vadd.f32 %v1214, %v1374
      %v1376 = vpop.f32.mrb[0].mxu0
      %v1377 = vpop.f32.mrb[0].mxu0
      %v1378 = vadd.f32 %v1217, %v1377
      %v1379 = vpop.f32.mrb[0].mxu0
      %1380 = vmatprep.mubr.bf16.mxu0 0
      %1381 = vmatmul.mubr.bf16.gmra.mrb[0].mxu0 %v974
      %v1382 = vpop.f32.mrb[0].mxu0
      %v1383 = vadd.f32 %v1222, %v1382
      %v1384 = vpop.f32.mrb[0].mxu0
      %v1385 = vpop.f32.mrb[0].mxu0
      %v1386 = vadd.f32 %v1225, %v1385
      %v1387 = vpop.f32.mrb[0].mxu0
      %1388 = vmatprep.mubr.bf16.mxu0 0
      %1389 = vmatmul.mubr.bf16.gmra.mrb[0].mxu0 %v977
      %v1390 = vpop.f32.mrb[0].mxu0
      %v1391 = vadd.f32 %v1230, %v1390
      %v1392 = vpop.f32.mrb[0].mxu0
      %v1393 = vpop.f32.mrb[0].mxu0
      %v1394 = vadd.f32 %v1233, %v1393
      %v1395 = vpop.f32.mrb[0].mxu0
      %1396 = vmatprep.mubr.bf16.mxu0 0
      %1397 = vmatmul.mubr.bf16.gmra.mrb[0].mxu0 %v980
      %v1398 = vpop.f32.mrb[0].mxu0
      %v1399 = vadd.f32 %v1238, %v1398
      %v1400 = vpop.f32.mrb[0].mxu0
      %v1401 = vpop.f32.mrb[0].mxu0
      %v1402 = vadd.f32 %v1241, %v1401
      %v1403 = vpop.f32.mrb[0].mxu0
      %1404 = vmatprep.mubr.bf16.mxu0 0
      %1405 = vmatmul.mubr.bf16.gmra.mrb[0].mxu0 %v983
      %v1406 = vpop.f32.mrb[0].mxu0
      %v1407 = vadd.f32 %v1246, %v1406
      %v1408 = vpop.f32.mrb[0].mxu0
      %v1409 = vpop.f32.mrb[0].mxu0
      %v1410 = vadd.f32 %v1249, %v1409
      %v1411 = vpop.f32.mrb[0].mxu0
      %1412 = vmatprep.mubr.bf16.mxu0 0
      %1413 = vmatmul.mubr.bf16.gmra.mrb[0].mxu0 %v986
      %v1414 = vpop.f32.mrb[0].mxu0
      %v1415 = vadd.f32 %v1254, %v1414
      %v1416 = vpop.f32.mrb[0].mxu0
      %v1417 = vpop.f32.mrb[0].mxu0
      %v1418 = vadd.f32 %v1257, %v1417
      %v1419 = vpop.f32.mrb[0].mxu0
      %1420 = vmatprep.mubr.bf16.mxu0 0
      %1421 = vmatmul.mubr.bf16.gmra.mrb[0].mxu0 %v989
      %v1422 = vpop.f32.mrb[0].mxu0
      %v1423 = vadd.f32 %v1262, %v1422
      %v1424 = vpop.f32.mrb[0].mxu0
      %v1425 = vpop.f32.mrb[0].mxu0
      %v1426 = vadd.f32 %v1265, %v1425
      %v1427 = vpop.f32.mrb[0].mxu0
      %1428 = vmatprep.mubr.bf16.mxu0 0
      %1429 = vmatmul.mubr.bf16.gmra.mrb[0].mxu0 %v992
      %v1430 = vpop.f32.mrb[0].mxu0
      %v1431 = vadd.f32 %v1270, %v1430
      %v1432 = vpop.f32.mrb[0].mxu0
      %v1433 = vpop.f32.mrb[0].mxu0
      %v1434 = vadd.f32 %v1273, %v1433
      %v1435 = vpop.f32.mrb[0].mxu0
      %1436 = vmatprep.mubr.bf16.mxu0 0
      %1437 = vmatmul.mubr.bf16.gmra.mrb[0].mxu0 %v995
      %v1438 = vpop.f32.mrb[0].mxu0
      %v1439 = vadd.f32 %v1278, %v1438
      %v1440 = vpop.f32.mrb[0].mxu0
      %v1441 = vpop.f32.mrb[0].mxu0
      %v1442 = vadd.f32 %v1281, %v1441
      %v1443 = vpop.f32.mrb[0].mxu0
      %1444 = vmatprep.mubr.bf16.mxu0 0
      %1445 = vmatmul.mubr.bf16.gmra.mrb[0].mxu0 %v998
      %v1446 = vpop.f32.mrb[0].mxu0
      %v1447 = vadd.f32 %v1286, %v1446
      %v1448 = vpop.f32.mrb[0].mxu0
      %v1449 = vpop.f32.mrb[0].mxu0
      %v1450 = vadd.f32 %v1289, %v1449
      %v1451 = vpop.f32.mrb[0].mxu0
      %1452 = vmatprep.mubr.bf16.mxu0 0
      %1453 = vmatmul.mubr.bf16.gmra.mrb[0].mxu0 %v1001
      %v1454 = vpop.f32.mrb[0].mxu0
      %v1455 = vadd.f32 %v1294, %v1454
      %v1456 = vpop.f32.mrb[0].mxu0
      %v1457 = vpop.f32.mrb[0].mxu0
      %v1458 = vadd.f32 %v1297, %v1457
      %v1459 = vpop.f32.mrb[0].mxu0
      %1460 = vmatprep.mubr.bf16.mxu0 0
      %1461 = vmatmul.mubr.bf16.gmra.mrb[0].mxu0 %v1004
      %v1462 = vpop.f32.mrb[0].mxu0
      %v1463 = vadd.f32 %v1302, %v1462
      %v1464 = vpop.f32.mrb[0].mxu0
      %v1465 = vpop.f32.mrb[0].mxu0
      %v1466 = vadd.f32 %v1305, %v1465
      %v1467 = vpop.f32.mrb[0].mxu0
      %1468 = vmatprep.mubr.bf16.mxu0 0
      %1469 = vmatmul.mubr.bf16.gmra.mrb[0].mxu0 %v1007
      %v1470 = vpop.f32.mrb[0].mxu0
      %v1471 = vadd.f32 %v1310, %v1470
      %v1472 = vpop.f32.mrb[0].mxu0
      %v1473 = vpop.f32.mrb[0].mxu0
      %v1474 = vadd.f32 %v1313, %v1473
      %v1475 = vpop.f32.mrb[0].mxu0
      %1476 = vmatprep.mubr.bf16.mxu0 0
      %1477 = vmatmul.mubr.bf16.gmra.mrb[0].mxu0 %v1010
      %v1478 = vpop.f32.mrb[0].mxu0
      %v1479 = vadd.f32 %v1318, %v1478
      %v1480 = vpop.f32.mrb[0].mxu0
      %v1481 = vpop.f32.mrb[0].mxu0
      %v1482 = vadd.f32 %v1321, %v1481
      %v1483 = vpop.f32.mrb[0].mxu0
      %1484 = vmatprep.mubr.bf16.mxu0 0
      %1485 = vmatmul.mubr.bf16.gmra.mrb[0].mxu0 %v1013
      %v1486 = vpop.f32.mrb[0].mxu0
      %v1487 = vadd.f32 %v1326, %v1486
      %v1488 = vpop.f32.mrb[0].mxu0
      %v1489 = vpop.f32.mrb[0].mxu0
      %v1490 = vadd.f32 %v1329, %v1489
      %v1491 = vpop.f32.mrb[0].mxu0
      %1492 = vmatprep.mubr.bf16.mxu0 0
      %1493 = vmatmul.mubr.bf16.gmra.mrb[0].mxu0 %v1016
      %v1494 = vpop.f32.mrb[0].mxu0
      %v1495 = vadd.f32 %v1334, %v1494
      %v1496 = vpop.f32.mrb[0].mxu0
      %v1497 = vpop.f32.mrb[0].mxu0
      %v1498 = vadd.f32 %v1337, %v1497
      %v1499 = vpop.f32.mrb[0].mxu0
      %1500 = vdwg.mxu0
      %vm1501 = vcmask 261120
      %1502 = vst.msk [vmem:[%s175] sm:$0xff] %vm1501, %v1375
      %1503 = vst.msk [vmem:[%s175 + $0x8] sm:$0xff] %vm1501, %v1378
      %1504 = vst.msk [vmem:[%s175 + $0x10] sm:$0xff] %vm1501, %v1383
      %1505 = vst.msk [vmem:[%s175 + $0x18] sm:$0xff] %vm1501, %v1386
      %1506 = vst.msk [vmem:[%s175 + $0x20] sm:$0xff] %vm1501, %v1391
      %1507 = vst.msk [vmem:[%s175 + $0x28] sm:$0xff] %vm1501, %v1394
      %1508 = vst.msk [vmem:[%s175 + $0x30] sm:$0xff] %vm1501, %v1399
      %1509 = vst.msk [vmem:[%s175 + $0x38] sm:$0xff] %vm1501, %v1402
      %1510 = vst.msk [vmem:[%s175 + $0x40] sm:$0xff] %vm1501, %v1407
      %1511 = vst.msk [vmem:[%s175 + $0x48] sm:$0xff] %vm1501, %v1410
      %1512 = vst.msk [vmem:[%s175 + $0x50] sm:$0xff] %vm1501, %v1415
      %1513 = vst.msk [vmem:[%s175 + $0x58] sm:$0xff] %vm1501, %v1418
      %1514 = vst.msk [vmem:[%s175 + $0x60] sm:$0xff] %vm1501, %v1423
      %1515 = vst.msk [vmem:[%s175 + $0x68] sm:$0xff] %vm1501, %v1426
      %1516 = vst.msk [vmem:[%s175 + $0x70] sm:$0xff] %vm1501, %v1431
      %1517 = vst.msk [vmem:[%s175 + $0x78] sm:$0xff] %vm1501, %v1434
      %1518 = vst.msk [vmem:[%s175 + $0x80] sm:$0xff] %vm1501, %v1439
      %1519 = vst.msk [vmem:[%s175 + $0x88] sm:$0xff] %vm1501, %v1442
      %1520 = vst.msk [vmem:[%s175 + $0x90] sm:$0xff] %vm1501, %v1447
      %1521 = vst.msk [vmem:[%s175 + $0x98] sm:$0xff] %vm1501, %v1450
      %1522 = vst.msk [vmem:[%s175 + $0xa0] sm:$0xff] %vm1501, %v1455
      %1523 = vst.msk [vmem:[%s175 + $0xa8] sm:$0xff] %vm1501, %v1458
      %1524 = vst.msk [vmem:[%s175 + $0xb0] sm:$0xff] %vm1501, %v1463
      %1525 = vst.msk [vmem:[%s175 + $0xb8] sm:$0xff] %vm1501, %v1466
      %1526 = vst.msk [vmem:[%s175 + $0xc0] sm:$0xff] %vm1501, %v1471
      %1527 = vst.msk [vmem:[%s175 + $0xc8] sm:$0xff] %vm1501, %v1474
      %1528 = vst.msk [vmem:[%s175 + $0xd0] sm:$0xff] %vm1501, %v1479
      %1529 = vst.msk [vmem:[%s175 + $0xd8] sm:$0xff] %vm1501, %v1482
      %1530 = vst.msk [vmem:[%s175 + $0xe0] sm:$0xff] %vm1501, %v1487
      %1531 = vst.msk [vmem:[%s175 + $0xe8] sm:$0xff] %vm1501, %v1490
      %1532 = vst.msk [vmem:[%s175 + $0xf0] sm:$0xff] %vm1501, %v1495
      %1533 = vst.msk [vmem:[%s175 + $0xf8] sm:$0xff] %vm1501, %v1498
      %s1534 = smul.u32 32, %s14
      %p1535 = scmp.lt.s32.totalorder %s1534, 255
      %s1536 = scalar_select %p1535, %s1534, 255
      %s1537 = smul.addr %s1536, 8
      %s1538 = scalar_lea.vmem %s3, %s1537
      // Predicated region
      $region33: #{decoder_forward.17} parent=31 // pred_check
        %p1539 = pneg %p100
      $region34: #{decoder_forward.17} parent=31 // pred_check_branch
        %1541 = sbr.rel (%p1539) target = $region36
      $region35: #{decoder_forward.17} parent=31 // pred_region
        %s1542 = smul.u32 32, %s14
      $region36: #{decoder_forward.17} parent=31 // pred_fallthru
        _
    $region32: #{decoder_forward.17} parent=5 // pred_fallthru
      _
    %p1543 = scmp.le.s32.totalorder 2, %s9
    // Predicated region
    $region37: #{decoder_forward.17} parent=5 // pred_check
      %p1544 = pneg %p1543
    $region38: #{decoder_forward.17} parent=5 // pred_check_branch
      %1546 = sbr.rel (%p1544) target = $region40
    $region39: #{decoder_forward.17} parent=5 // pred_region
      %s1547 = ssub.s32 %s9, 2
      // Predicated region
      $region41: #{decoder_forward.17} parent=39 // pred_check
        %p1548 = pneg %p106
      $region42: #{decoder_forward.17} parent=39 // pred_check_branch
        %1550 = sbr.rel (%p1548) target = $region44
      $region43: #{decoder_forward.17} parent=39 // pred_region
        %s1551 = smul.u32 32, %s15
        %p1552 = scmp.lt.s32.totalorder %s1551, 255
        %s1553 = scalar_select %p1552, %s1551, 255
        %s1554 = smul.addr %s1553, 8
        %s1555 = scalar_lea.vmem %s3, %s1554
      $region44: #{decoder_forward.17} parent=39 // pred_fallthru
        _
    $region40: #{decoder_forward.17} parent=5 // pred_fallthru
      _
  $region6: #{decoder_forward.17} parent=0 // loop_footer
    %s13 = sadd.s32 1, %s9
  $region7: #{decoder_forward.17} parent=0 // loop_footer_branch
    %8 = sbr.rel target = $region3
  $region8: #{decoder_forward.17} parent=0 // loop_exit
    _

// kernel: decoder_forward.18
$region0: #{decoder_forward.18}
  #allocation0 [shape = 'u32[]', space=smem, size = 0x4, offset = 0x4, fixed_abs, tag = 'smem constant byte address 0x4 - core index']
  #allocation1 [shape = 'u32[144,128]{1,0:T(1,128)}', space=vmem, size = 0x12000, scoped, tag = 'internal scratch']
  %s0 = inlined_call_operand.vmem [shape: f32[2,256,128], index: 0, kind: input, shape index: {}]
  %s1 = inlined_call_operand.vmem [shape: f32[2,256,128], index: 1, kind: output, shape index: {}]
  %s2 = sld [smem:[#allocation0]]
  $region37: #{decoder_forward.18} parent=0
    _
  %s4 = ssub.s32 1, %s2
  %s5 = scalar_select 0, %s4, %s2
  loop: start=0, step=1, limit=4
  $region2: #{decoder_forward.18} parent=0 // loop_pre_header
    _
  $region3: #{decoder_forward.18} parent=0 // loop_header
    %s7 = sphi 0, %s11
    %p8 = scmp.ge.s32.totalorder %s7, 4
    %s17 = sphi 0, %s19
    %s20 = sphi 0, %s17
    %s21 = sphi 0, %s20
    %s37 = sphi 0, %s21
    %s43 = sphi 0, %s45
    %s46 = sphi 0, %s43
    %s47 = sphi 0, %s46
    %s63 = sphi 0, %s47
  $region4: #{decoder_forward.18} parent=0 // loop_header_branch
    %10 = sbr.rel (%p8) target = $region8
  $region5: #{decoder_forward.18} parent=0 // loop_body
    %s12 = ssub.s32 %s7, 1
    %s13 = ssub.s32 %s7, 2
    %s14 = sadd.s32 %s7, 1
    %s15 = ssub.s32 %s7, %s14
    %p16 = scmp.eq.s32.totalorder %s15, 0
    %s18 = sadd.s32 %s17, 1
    %s19 = scalar_select %p16, %s17, %s18
    %p22 = pneg %p16
    %p23 = scmp.eq.s32.totalorder %s7, 1
    %p24 = por %p22, %p23
    %p25 = scmp.ne.s32.totalorder %s17, %s20
    %p26 = scmp.eq.s32.totalorder %s7, 0
    %p27 = por %p25, %p26
    %p28 = scmp.ne.s32.totalorder %s17, %s20
    %p29 = scmp.eq.s32.totalorder %s12, 1
    %p30 = por %p28, %p29
    %p31 = scmp.ne.s32.totalorder %s20, %s21
    %p32 = scmp.eq.s32.totalorder %s12, 0
    %p33 = por %p31, %p32
    %p34 = scmp.ne.s32.totalorder %s20, %s21
    %p35 = scmp.eq.s32.totalorder %s13, 1
    %p36 = por %p34, %p35
    %p38 = scmp.ne.s32.totalorder %s21, %s37
    %p39 = scmp.eq.s32.totalorder %s13, 0
    %p40 = por %p38, %p39
    %s41 = ssub.s32 %s7, %s14
    %p42 = scmp.eq.s32.totalorder %s41, 0
    %s44 = sadd.s32 %s43, 1
    %s45 = scalar_select %p42, %s43, %s44
    %p48 = pneg %p42
    %p49 = scmp.eq.s32.totalorder %s7, 1
    %p50 = por %p48, %p49
    %p51 = scmp.ne.s32.totalorder %s43, %s46
    %p52 = scmp.eq.s32.totalorder %s7, 0
    %p53 = por %p51, %p52
    %p54 = scmp.ne.s32.totalorder %s43, %s46
    %p55 = scmp.eq.s32.totalorder %s12, 1
    %p56 = por %p54, %p55
    %p57 = scmp.ne.s32.totalorder %s46, %s47
    %p58 = scmp.eq.s32.totalorder %s12, 0
    %p59 = por %p57, %p58
    %p60 = scmp.ne.s32.totalorder %s46, %s47
    %p61 = scmp.eq.s32.totalorder %s13, 1
    %p62 = por %p60, %p61
    %p64 = scmp.ne.s32.totalorder %s47, %s63
    %p65 = scmp.eq.s32.totalorder %s13, 0
    %p66 = por %p64, %p65
    %p67 = scmp.le.s32.totalorder 1, %s7
    %p68 = scmp.lt.s32.totalorder %s7, 3
    %p69 = pnand %p67, %p68
    %p70 = pneg %p69
    // Predicated region
    $region9: #{decoder_forward.18} parent=5 // pred_check
      _
    $region10: #{decoder_forward.18} parent=5 // pred_check_branch
      %72 = sbr.rel (%p69) target = $region12
    $region11: #{decoder_forward.18} parent=5 // pred_region
      %s73 = ssub.s32 %s7, 1
    $region12: #{decoder_forward.18} parent=5 // pred_fallthru
      _
    %p74 = scmp.lt.s32.totalorder %s7, 2
    // Predicated region
    $region13: #{decoder_forward.18} parent=5 // pred_check
      %p75 = pneg %p74
    $region14: #{decoder_forward.18} parent=5 // pred_check_branch
      %77 = sbr.rel (%p75) target = $region16
    $region15: #{decoder_forward.18} parent=5 // pred_region
      // Predicated region
      $region17: #{decoder_forward.18} parent=15 // pred_check
        %p78 = pneg %p27
      $region18: #{decoder_forward.18} parent=15 // pred_check_branch
        %80 = sbr.rel (%p78) target = $region20
      $region19: #{decoder_forward.18} parent=15 // pred_region
        %p81 = scmp.lt.s32.totalorder %s7, 1
        %s82 = scalar_select %p81, %s7, 1
        %s83 = smul.addr %s82, 32
        %s84 = smul.addr %s83, 8
        %s85 = scalar_lea.vmem %s0, %s84
      $region20: #{decoder_forward.18} parent=15 // pred_fallthru
        _
    $region16: #{decoder_forward.18} parent=5 // pred_fallthru
      _
    %p86 = scmp.le.s32.totalorder 1, %s7
    %p87 = scmp.lt.s32.totalorder %s7, 3
    %p88 = pnand %p86, %p87
    %p89 = pneg %p88
    // Predicated region
    $region21: #{decoder_forward.18} parent=5 // pred_check
      _
    $region22: #{decoder_forward.18} parent=5 // pred_check_branch
      %91 = sbr.rel (%p88) target = $region24
    $region23: #{decoder_forward.18} parent=5 // pred_region
      %s92 = ssub.s32 %s7, 1
      %p93 = scmp.lt.s32.totalorder %s12, 1
      %s94 = scalar_select %p93, %s12, 1
      %s95 = smul.addr %s94, 32
      %s96 = smul.addr %s95, 8
      %s97 = scalar_lea.vmem %s0, %s96
      %p98 = pneg %p33
      %p99 = pneg %p30
      %p100 = pneg %p59
      %p101 = pneg %p56
      %p102 = scmp.lt.s32.totalorder %s12, 1
      %s103 = scalar_select %p102, %s12, 1
      %s104 = smul.addr %s103, 32
      %s105 = smul.addr %s104, 8
      %s106 = scalar_lea.vmem %s1, %s105
      %p107 = scmp.lt.s32.totalorder %s12, 1
      %s108 = scalar_select %p107, %s12, 1
      %s109 = smul.addr %s108, 32
      %s110 = smul.addr %s109, 8
      %s111 = scalar_lea.vmem %s0, %s110
      %p112 = scmp.lt.s32.totalorder %s12, 1
      %s113 = scalar_select %p112, %s12, 1
      %s114 = smul.addr %s113, 32
      %s115 = smul.addr %s114, 8
      %s116 = scalar_lea.vmem %s1, %s115
      %v117 = vld [vmem:[%s111] sm:$0xff]
      %v118 = vld [vmem:[%s111 + $0x8] sm:$0xff]
      %v119 = vld [vmem:[%s111 + $0x10] sm:$0xff]
      %v120 = vld [vmem:[%s111 + $0x18] sm:$0xff]
      %v121 = vld [vmem:[%s111 + $0x20] sm:$0xff]
      %v122 = vld [vmem:[%s111 + $0x28] sm:$0xff]
      %v123 = vld [vmem:[%s111 + $0x30] sm:$0xff]
      %v124 = vld [vmem:[%s111 + $0x38] sm:$0xff]
      %v125 = vld [vmem:[%s111 + $0x40] sm:$0xff]
      %v126 = vld [vmem:[%s111 + $0x48] sm:$0xff]
      %v127 = vld [vmem:[%s111 + $0x50] sm:$0xff]
      %v128 = vld [vmem:[%s111 + $0x58] sm:$0xff]
      %v129 = vld [vmem:[%s111 + $0x60] sm:$0xff]
      %v130 = vld [vmem:[%s111 + $0x68] sm:$0xff]
      %v131 = vld [vmem:[%s111 + $0x70] sm:$0xff]
      %v132 = vld [vmem:[%s111 + $0x78] sm:$0xff]
      %v133 = vld [vmem:[%s111 + $0x80] sm:$0xff]
      %v134 = vld [vmem:[%s111 + $0x88] sm:$0xff]
      %v135 = vld [vmem:[%s111 + $0x90] sm:$0xff]
      %v136 = vld [vmem:[%s111 + $0x98] sm:$0xff]
      %v137 = vld [vmem:[%s111 + $0xa0] sm:$0xff]
      %v138 = vld [vmem:[%s111 + $0xa8] sm:$0xff]
      %v139 = vld [vmem:[%s111 + $0xb0] sm:$0xff]
      %v140 = vld [vmem:[%s111 + $0xb8] sm:$0xff]
      %v141 = vld [vmem:[%s111 + $0xc0] sm:$0xff]
      %v142 = vld [vmem:[%s111 + $0xc8] sm:$0xff]
      %v143 = vld [vmem:[%s111 + $0xd0] sm:$0xff]
      %v144 = vld [vmem:[%s111 + $0xd8] sm:$0xff]
      %v145 = vld [vmem:[%s111 + $0xe0] sm:$0xff]
      %v146 = vld [vmem:[%s111 + $0xe8] sm:$0xff]
      %v147 = vld [vmem:[%s111 + $0xf0] sm:$0xff]
      %v148 = vld [vmem:[%s111 + $0xf8] sm:$0xff]
      %v149 = vadd.f32 %v117, %v118
      %v150 = vadd.f32 %v149, %v119
      %v151 = vadd.f32 %v150, %v120
      %v152 = vadd.f32 %v151, %v121
      %v153 = vadd.f32 %v152, %v122
      %v154 = vadd.f32 %v153, %v123
      %v155 = vadd.f32 %v154, %v124
      %v156 = vadd.f32 %v155, %v125
      %v157 = vadd.f32 %v156, %v126
      %v158 = vadd.f32 %v157, %v127
      %v159 = vadd.f32 %v158, %v128
      %v160 = vadd.f32 %v159, %v129
      %v161 = vadd.f32 %v160, %v130
      %v162 = vadd.f32 %v161, %v131
      %v163 = vadd.f32 %v162, %v132
      %v164 = vadd.f32 %v163, %v133
      %v165 = vadd.f32 %v164, %v134
      %v166 = vadd.f32 %v165, %v135
      %v167 = vadd.f32 %v166, %v136
      %v168 = vadd.f32 %v167, %v137
      %v169 = vadd.f32 %v168, %v138
      %v170 = vadd.f32 %v169, %v139
      %v171 = vadd.f32 %v170, %v140
      %v172 = vadd.f32 %v171, %v141
      %v173 = vadd.f32 %v172, %v142
      %v174 = vadd.f32 %v173, %v143
      %v175 = vadd.f32 %v174, %v144
      %v176 = vadd.f32 %v175, %v145
      %v177 = vadd.f32 %v176, %v146
      %v178 = vadd.f32 %v177, %v147
      %v179 = vadd.f32 %v178, %v148
      %180 = vadd.xlane.f32.xlu0 %v179
      %v181 = vpop.xlane.xlu0 %180
      %v182 = vrot.slane %v181, 4
      %v183 = vadd.f32 %v181, %v182
      %v184 = vrot.slane %v183, 2
      %v185 = vadd.f32 %v183, %v184
      %v186 = vrot.slane %v185, 1
      %v187 = vadd.f32 %v185, %v186
      %s188 = vtos %v187
      %v189 = vrcp.pop 32768.0
      %s190 = vtos %v189
      %s191 = smul.f32 %s188, %s190
      %v192 = vstv %s191
      %v193 = vsub.f32 %v117, %v192
      %v194 = vsub.f32 %v118, %v192
      %v195 = vsub.f32 %v119, %v192
      %v196 = vsub.f32 %v120, %v192
      %v197 = vsub.f32 %v121, %v192
      %v198 = vsub.f32 %v122, %v192
      %v199 = vsub.f32 %v123, %v192
      %v200 = vsub.f32 %v124, %v192
      %v201 = vsub.f32 %v125, %v192
      %v202 = vsub.f32 %v126, %v192
      %v203 = vsub.f32 %v127, %v192
      %v204 = vsub.f32 %v128, %v192
      %v205 = vsub.f32 %v129, %v192
      %v206 = vsub.f32 %v130, %v192
      %v207 = vsub.f32 %v131, %v192
      %v208 = vsub.f32 %v132, %v192
      %v209 = vsub.f32 %v133, %v192
      %v210 = vsub.f32 %v134, %v192
      %v211 = vsub.f32 %v135, %v192
      %v212 = vsub.f32 %v136, %v192
      %v213 = vsub.f32 %v137, %v192
      %v214 = vsub.f32 %v138, %v192
      %v215 = vsub.f32 %v139, %v192
      %v216 = vsub.f32 %v140, %v192
      %v217 = vsub.f32 %v141, %v192
      %v218 = vsub.f32 %v142, %v192
      %v219 = vsub.f32 %v143, %v192
      %v220 = vsub.f32 %v144, %v192
      %v221 = vsub.f32 %v145, %v192
      %v222 = vsub.f32 %v146, %v192
      %v223 = vsub.f32 %v147, %v192
      %v224 = vsub.f32 %v148, %v192
      %v225 = vmul.f32 %v193, %v193
      %v226 = vmul.f32 %v194, %v194
      %v227 = vmul.f32 %v195, %v195
      %v228 = vmul.f32 %v196, %v196
      %v229 = vmul.f32 %v197, %v197
      %v230 = vmul.f32 %v198, %v198
      %v231 = vmul.f32 %v199, %v199
      %v232 = vmul.f32 %v200, %v200
      %v233 = vmul.f32 %v201, %v201
      %v234 = vmul.f32 %v202, %v202
      %v235 = vmul.f32 %v203, %v203
      %v236 = vmul.f32 %v204, %v204
      %v237 = vmul.f32 %v205, %v205
      %v238 = vmul.f32 %v206, %v206
      %v239 = vmul.f32 %v207, %v207
      %v240 = vmul.f32 %v208, %v208
      %v241 = vmul.f32 %v209, %v209
      %v242 = vmul.f32 %v210, %v210
      %v243 = vmul.f32 %v211, %v211
      %v244 = vmul.f32 %v212, %v212
      %v245 = vmul.f32 %v213, %v213
      %v246 = vmul.f32 %v214, %v214
      %v247 = vmul.f32 %v215, %v215
      %v248 = vmul.f32 %v216, %v216
      %v249 = vmul.f32 %v217, %v217
      %v250 = vmul.f32 %v218, %v218
      %v251 = vmul.f32 %v219, %v219
      %v252 = vmul.f32 %v220, %v220
      %v253 = vmul.f32 %v221, %v221
      %v254 = vmul.f32 %v222, %v222
      %v255 = vmul.f32 %v223, %v223
      %v256 = vmul.f32 %v224, %v224
      %v257 = vadd.f32 %v225, %v226
      %v258 = vadd.f32 %v257, %v227
      %v259 = vadd.f32 %v258, %v228
      %v260 = vadd.f32 %v259, %v229
      %v261 = vadd.f32 %v260, %v230
      %v262 = vadd.f32 %v261, %v231
      %v263 = vadd.f32 %v262, %v232
      %v264 = vadd.f32 %v263, %v233
      %v265 = vadd.f32 %v264, %v234
      %v266 = vadd.f32 %v265, %v235
      %v267 = vadd.f32 %v266, %v236
      %v268 = vadd.f32 %v267, %v237
      %v269 = vadd.f32 %v268, %v238
      %v270 = vadd.f32 %v269, %v239
      %v271 = vadd.f32 %v270, %v240
      %v272 = vadd.f32 %v271, %v241
      %v273 = vadd.f32 %v272, %v242
      %v274 = vadd.f32 %v273, %v243
      %v275 = vadd.f32 %v274, %v244
      %v276 = vadd.f32 %v275, %v245
      %v277 = vadd.f32 %v276, %v246
      %v278 = vadd.f32 %v277, %v247
      %v279 = vadd.f32 %v278, %v248
      %v280 = vadd.f32 %v279, %v249
      %v281 = vadd.f32 %v280, %v250
      %v282 = vadd.f32 %v281, %v251
      %v283 = vadd.f32 %v282, %v252
      %v284 = vadd.f32 %v283, %v253
      %v285 = vadd.f32 %v284, %v254
      %v286 = vadd.f32 %v285, %v255
      %v287 = vadd.f32 %v286, %v256
      %288 = vadd.xlane.f32.xlu0 %v287
      %v289 = vpop.xlane.xlu0 %288
      %v290 = vrot.slane %v289, 4
      %v291 = vadd.f32 %v289, %v290
      %v292 = vrot.slane %v291, 2
      %v293 = vadd.f32 %v291, %v292
      %v294 = vrot.slane %v293, 1
      %v295 = vadd.f32 %v293, %v294
      %s296 = vtos %v295
      %v297 = vrcp.pop 32768.0
      %s298 = vtos %v297
      %s299 = smul.f32 %s296, %s298
      %s300 = sadd.f32 %s299, 1e-05
      %v301 = vstv %s300
      %v302 = vrsqrt.pop %v301
      %s303 = vtos %v302
      %v304 = vstv %s303
      %v305 = vmul.f32 %v193, %v304
      %v306 = vmul.f32 %v194, %v304
      %v307 = vmul.f32 %v195, %v304
      %v308 = vmul.f32 %v196, %v304
      %v309 = vmul.f32 %v197, %v304
      %v310 = vmul.f32 %v198, %v304
      %v311 = vmul.f32 %v199, %v304
      %v312 = vmul.f32 %v200, %v304
      %v313 = vmul.f32 %v201, %v304
      %v314 = vmul.f32 %v202, %v304
      %v315 = vmul.f32 %v203, %v304
      %v316 = vmul.f32 %v204, %v304
      %v317 = vmul.f32 %v205, %v304
      %v318 = vmul.f32 %v206, %v304
      %v319 = vmul.f32 %v207, %v304
      %v320 = vmul.f32 %v208, %v304
      %v321 = vmul.f32 %v209, %v304
      %v322 = vmul.f32 %v210, %v304
      %v323 = vmul.f32 %v211, %v304
      %v324 = vmul.f32 %v212, %v304
      %v325 = vmul.f32 %v213, %v304
      %v326 = vmul.f32 %v214, %v304
      %v327 = vmul.f32 %v215, %v304
      %v328 = vmul.f32 %v216, %v304
      %v329 = vmul.f32 %v217, %v304
      %v330 = vmul.f32 %v218, %v304
      %v331 = vmul.f32 %v219, %v304
      %v332 = vmul.f32 %v220, %v304
      %v333 = vmul.f32 %v221, %v304
      %v334 = vmul.f32 %v222, %v304
      %v335 = vmul.f32 %v223, %v304
      %v336 = vmul.f32 %v224, %v304
      %vm337 = vcmp.ge.f32.partialorder %v305, 0.0
      %vm338 = vcmp.ge.f32.partialorder %v306, 0.0
      %vm339 = vcmp.ge.f32.partialorder %v307, 0.0
      %vm340 = vcmp.ge.f32.partialorder %v308, 0.0
      %vm341 = vcmp.ge.f32.partialorder %v309, 0.0
      %vm342 = vcmp.ge.f32.partialorder %v310, 0.0
      %vm343 = vcmp.ge.f32.partialorder %v311, 0.0
      %vm344 = vcmp.ge.f32.partialorder %v312, 0.0
      %vm345 = vcmp.ge.f32.partialorder %v313, 0.0
      %vm346 = vcmp.ge.f32.partialorder %v314, 0.0
      %vm347 = vcmp.ge.f32.partialorder %v315, 0.0
      %vm348 = vcmp.ge.f32.partialorder %v316, 0.0
      %vm349 = vcmp.ge.f32.partialorder %v317, 0.0
      %vm350 = vcmp.ge.f32.partialorder %v318, 0.0
      %vm351 = vcmp.ge.f32.partialorder %v319, 0.0
      %vm352 = vcmp.ge.f32.partialorder %v320, 0.0
      %vm353 = vcmp.ge.f32.partialorder %v321, 0.0
      %vm354 = vcmp.ge.f32.partialorder %v322, 0.0
      %vm355 = vcmp.ge.f32.partialorder %v323, 0.0
      %vm356 = vcmp.ge.f32.partialorder %v324, 0.0
      %vm357 = vcmp.ge.f32.partialorder %v325, 0.0
      %vm358 = vcmp.ge.f32.partialorder %v326, 0.0
      %vm359 = vcmp.ge.f32.partialorder %v327, 0.0
      %vm360 = vcmp.ge.f32.partialorder %v328, 0.0
      %vm361 = vcmp.ge.f32.partialorder %v329, 0.0
      %vm362 = vcmp.ge.f32.partialorder %v330, 0.0
      %vm363 = vcmp.ge.f32.partialorder %v331, 0.0
      %vm364 = vcmp.ge.f32.partialorder %v332, 0.0
      %vm365 = vcmp.ge.f32.partialorder %v333, 0.0
      %vm366 = vcmp.ge.f32.partialorder %v334, 0.0
      %vm367 = vcmp.ge.f32.partialorder %v335, 0.0
      %vm368 = vcmp.ge.f32.partialorder %v336, 0.0
      %v369 = vmul.f32 %v305, 0.2
      %v370 = vmul.f32 %v306, 0.2
      %v371 = vmul.f32 %v307, 0.2
      %v372 = vmul.f32 %v308, 0.2
      %v373 = vmul.f32 %v309, 0.2
      %v374 = vmul.f32 %v310, 0.2
      %v375 = vmul.f32 %v311, 0.2
      %v376 = vmul.f32 %v312, 0.2
      %v377 = vmul.f32 %v313, 0.2
      %v378 = vmul.f32 %v314, 0.2
      %v379 = vmul.f32 %v315, 0.2
      %v380 = vmul.f32 %v316, 0.2
      %v381 = vmul.f32 %v317, 0.2
      %v382 = vmul.f32 %v318, 0.2
      %v383 = vmul.f32 %v319, 0.2
      %v384 = vmul.f32 %v320, 0.2
      %v385 = vmul.f32 %v321, 0.2
      %v386 = vmul.f32 %v322, 0.2
      %v387 = vmul.f32 %v323, 0.2
      %v388 = vmul.f32 %v324, 0.2
      %v389 = vmul.f32 %v325, 0.2
      %v390 = vmul.f32 %v326, 0.2
      %v391 = vmul.f32 %v327, 0.2
      %v392 = vmul.f32 %v328, 0.2
      %v393 = vmul.f32 %v329, 0.2
      %v394 = vmul.f32 %v330, 0.2
      %v395 = vmul.f32 %v331, 0.2
      %v396 = vmul.f32 %v332, 0.2
      %v397 = vmul.f32 %v333, 0.2
      %v398 = vmul.f32 %v334, 0.2
      %v399 = vmul.f32 %v335, 0.2
      %v400 = vmul.f32 %v336, 0.2
      %v401 = vsel %vm337, %v305, %v369
      %v402 = vsel %vm338, %v306, %v370
      %v403 = vsel %vm339, %v307, %v371
      %v404 = vsel %vm340, %v308, %v372
      %v405 = vsel %vm341, %v309, %v373
      %v406 = vsel %vm342, %v310, %v374
      %v407 = vsel %vm343, %v311, %v375
      %v408 = vsel %vm344, %v312, %v376
      %v409 = vsel %vm345, %v313, %v377
      %v410 = vsel %vm346, %v314, %v378
      %v411 = vsel %vm347, %v315, %v379
      %v412 = vsel %vm348, %v316, %v380
      %v413 = vsel %vm349, %v317, %v381
      %v414 = vsel %vm350, %v318, %v382
      %v415 = vsel %vm351, %v319, %v383
      %v416 = vsel %vm352, %v320, %v384
      %v417 = vsel %vm353, %v321, %v385
      %v418 = vsel %vm354, %v322, %v386
      %v419 = vsel %vm355, %v323, %v387
      %v420 = vsel %vm356, %v324, %v388
      %v421 = vsel %vm357, %v325, %v389
      %v422 = vsel %vm358, %v326, %v390
      %v423 = vsel %vm359, %v327, %v391
      %v424 = vsel %vm360, %v328, %v392
      %v425 = vsel %vm361, %v329, %v393
      %v426 = vsel %vm362, %v330, %v394
      %v427 = vsel %vm363, %v331, %v395
      %v428 = vsel %vm364, %v332, %v396
      %v429 = vsel %vm365, %v333, %v397
      %v430 = vsel %vm366, %v334, %v398
      %v431 = vsel %vm367, %v335, %v399
      %v432 = vsel %vm368, %v336, %v400
      %433 = vst [vmem:[%s116] sm:$0xff] %v401
      %434 = vst [vmem:[%s116 + $0x8] sm:$0xff] %v402
      %435 = vst [vmem:[%s116 + $0x10] sm:$0xff] %v403
      %436 = vst [vmem:[%s116 + $0x18] sm:$0xff] %v404
      %437 = vst [vmem:[%s116 + $0x20] sm:$0xff] %v405
      %438 = vst [vmem:[%s116 + $0x28] sm:$0xff] %v406
      %439 = vst [vmem:[%s116 + $0x30] sm:$0xff] %v407
      %440 = vst [vmem:[%s116 + $0x38] sm:$0xff] %v408
      %441 = vst [vmem:[%s116 + $0x40] sm:$0xff] %v409
      %442 = vst [vmem:[%s116 + $0x48] sm:$0xff] %v410
      %443 = vst [vmem:[%s116 + $0x50] sm:$0xff] %v411
      %444 = vst [vmem:[%s116 + $0x58] sm:$0xff] %v412
      %445 = vst [vmem:[%s116 + $0x60] sm:$0xff] %v413
      %446 = vst [vmem:[%s116 + $0x68] sm:$0xff] %v414
      %447 = vst [vmem:[%s116 + $0x70] sm:$0xff] %v415
      %448 = vst [vmem:[%s116 + $0x78] sm:$0xff] %v416
      %449 = vst [vmem:[%s116 + $0x80] sm:$0xff] %v417
      %450 = vst [vmem:[%s116 + $0x88] sm:$0xff] %v418
      %451 = vst [vmem:[%s116 + $0x90] sm:$0xff] %v419
      %452 = vst [vmem:[%s116 + $0x98] sm:$0xff] %v420
      %453 = vst [vmem:[%s116 + $0xa0] sm:$0xff] %v421
      %454 = vst [vmem:[%s116 + $0xa8] sm:$0xff] %v422
      %455 = vst [vmem:[%s116 + $0xb0] sm:$0xff] %v423
      %456 = vst [vmem:[%s116 + $0xb8] sm:$0xff] %v424
      %457 = vst [vmem:[%s116 + $0xc0] sm:$0xff] %v425
      %458 = vst [vmem:[%s116 + $0xc8] sm:$0xff] %v426
      %459 = vst [vmem:[%s116 + $0xd0] sm:$0xff] %v427
      %460 = vst [vmem:[%s116 + $0xd8] sm:$0xff] %v428
      %461 = vst [vmem:[%s116 + $0xe0] sm:$0xff] %v429
      %462 = vst [vmem:[%s116 + $0xe8] sm:$0xff] %v430
      %463 = vst [vmem:[%s116 + $0xf0] sm:$0xff] %v431
      %464 = vst [vmem:[%s116 + $0xf8] sm:$0xff] %v432
      %p465 = scmp.lt.s32.totalorder %s12, 1
      %s466 = scalar_select %p465, %s12, 1
      %s467 = smul.addr %s466, 32
      %s468 = smul.addr %s467, 8
      %s469 = scalar_lea.vmem %s1, %s468
      // Predicated region
      $region25: #{decoder_forward.18} parent=23 // pred_check
        %p470 = pneg %p56
      $region26: #{decoder_forward.18} parent=23 // pred_check_branch
        %472 = sbr.rel (%p470) target = $region28
      $region27: #{decoder_forward.18} parent=23 // pred_region
        _
      $region28: #{decoder_forward.18} parent=23 // pred_fallthru
        _
    $region24: #{decoder_forward.18} parent=5 // pred_fallthru
      _
    %p473 = scmp.le.s32.totalorder 2, %s7
    // Predicated region
    $region29: #{decoder_forward.18} parent=5 // pred_check
      %p474 = pneg %p473
    $region30: #{decoder_forward.18} parent=5 // pred_check_branch
      %476 = sbr.rel (%p474) target = $region32
    $region31: #{decoder_forward.18} parent=5 // pred_region
      %s477 = ssub.s32 %s7, 2
      // Predicated region
      $region33: #{decoder_forward.18} parent=31 // pred_check
        %p478 = pneg %p62
      $region34: #{decoder_forward.18} parent=31 // pred_check_branch
        %480 = sbr.rel (%p478) target = $region36
      $region35: #{decoder_forward.18} parent=31 // pred_region
        %p481 = scmp.lt.s32.totalorder %s13, 1
        %s482 = scalar_select %p481, %s13, 1
        %s483 = smul.addr %s482, 32
        %s484 = smul.addr %s483, 8
        %s485 = scalar_lea.vmem %s1, %s484
      $region36: #{decoder_forward.18} parent=31 // pred_fallthru
        _
    $region32: #{decoder_forward.18} parent=5 // pred_fallthru
      _
  $region6: #{decoder_forward.18} parent=0 // loop_footer
    %s11 = sadd.s32 1, %s7
  $region7: #{decoder_forward.18} parent=0 // loop_footer_branch
    %6 = sbr.rel target = $region3
  $region8: #{decoder_forward.18} parent=0 // loop_exit
    _

// kernel: decoder_forward.19
$region0: #{decoder_forward.19}
  #allocation0 [shape = 'u32[]', space=smem, size = 0x4, offset = 0x4, fixed_abs, tag = 'smem constant byte address 0x4 - core index']
  #allocation1 [shape = 'u32[144,128]{1,0:T(1,128)}', space=vmem, size = 0x12000, scoped, tag = 'internal scratch']
  %s0 = inlined_call_operand.vmem [shape: bf16[2048,288], index: 0, kind: input, shape index: {}]
  %s1 = inlined_call_operand.vmem [shape: bf16[288,32], index: 1, kind: input, shape index: {}]
  %s2 = inlined_call_operand.vmem [shape: f32[1,32], index: 2, kind: input, shape index: {}]
  %s3 = inlined_call_operand.vmem [shape: f32[2048,32], index: 3, kind: output, shape index: {}]
  %s4 = sld [smem:[#allocation0]]
  $region45: #{decoder_forward.19} parent=0
    _
  %s6 = ssub.s32 1, %s4
  %s7 = scalar_select 0, %s6, %s4
  loop: start=0, step=1, limit=10
  $region2: #{decoder_forward.19} parent=0 // loop_pre_header
    _
  $region3: #{decoder_forward.19} parent=0 // loop_header
    %s9 = sphi 0, %s13
    %p10 = scmp.ge.s32.totalorder %s9, 10
    %s19 = sphi 0, %s21
    %s22 = sphi 0, %s19
    %s23 = sphi 0, %s22
    %s39 = sphi 0, %s23
    %s43 = sphi 0, %s43
    %s45 = sphi 0, %s43
    %s46 = sphi 0, %s45
    %s60 = sphi 0, %s46
    %s64 = sphi 0, %s64
    %s66 = sphi 0, %s64
    %s67 = sphi 0, %s66
    %s81 = sphi 0, %s67
    %s87 = sphi 0, %s89
    %s90 = sphi 0, %s87
    %s91 = sphi 0, %s90
    %s107 = sphi 0, %s91
  $region4: #{decoder_forward.19} parent=0 // loop_header_branch
    %12 = sbr.rel (%p10) target = $region8
  $region5: #{decoder_forward.19} parent=0 // loop_body
    %s14 = ssub.s32 %s9, 1
    %s15 = ssub.s32 %s9, 2
    %s16 = sadd.s32 %s9, 1
    %s17 = ssub.s32 %s9, %s16
    %p18 = scmp.eq.s32.totalorder %s17, 0
    %s20 = sadd.s32 %s19, 1
    %s21 = scalar_select %p18, %s19, %s20
    %p24 = pneg %p18
    %p25 = scmp.eq.s32.totalorder %s9, 7
    %p26 = por %p24, %p25
    %p27 = scmp.ne.s32.totalorder %s19, %s22
    %p28 = scmp.eq.s32.totalorder %s9, 0
    %p29 = por %p27, %p28
    %p30 = scmp.ne.s32.totalorder %s19, %s22
    %p31 = scmp.eq.s32.totalorder %s14, 7
    %p32 = por %p30, %p31
    %p33 = scmp.ne.s32.totalorder %s22, %s23
    %p34 = scmp.eq.s32.totalorder %s14, 0
    %p35 = por %p33, %p34
    %p36 = scmp.ne.s32.totalorder %s22, %s23
    %p37 = scmp.eq.s32.totalorder %s15, 7
    %p38 = por %p36, %p37
    %p40 = scmp.ne.s32.totalorder %s23, %s39
    %p41 = scmp.eq.s32.totalorder %s15, 0
    %p42 = por %p40, %p41
    %s44 = sadd.s32 %s43, 1
    %p47 = scmp.eq.s32.totalorder %s9, 7
    %p48 = scmp.ne.s32.totalorder %s43, %s45
    %p49 = scmp.eq.s32.totalorder %s9, 0
    %p50 = por %p48, %p49
    %p51 = scmp.ne.s32.totalorder %s43, %s45
    %p52 = scmp.eq.s32.totalorder %s14, 7
    %p53 = por %p51, %p52
    %p54 = scmp.ne.s32.totalorder %s45, %s46
    %p55 = scmp.eq.s32.totalorder %s14, 0
    %p56 = por %p54, %p55
    %p57 = scmp.ne.s32.totalorder %s45, %s46
    %p58 = scmp.eq.s32.totalorder %s15, 7
    %p59 = por %p57, %p58
    %p61 = scmp.ne.s32.totalorder %s46, %s60
    %p62 = scmp.eq.s32.totalorder %s15, 0
    %p63 = por %p61, %p62
    %s65 = sadd.s32 %s64, 1
    %p68 = scmp.eq.s32.totalorder %s9, 7
    %p69 = scmp.ne.s32.totalorder %s64, %s66
    %p70 = scmp.eq.s32.totalorder %s9, 0
    %p71 = por %p69, %p70
    %p72 = scmp.ne.s32.totalorder %s64, %s66
    %p73 = scmp.eq.s32.totalorder %s14, 7
    %p74 = por %p72, %p73
    %p75 = scmp.ne.s32.totalorder %s66, %s67
    %p76 = scmp.eq.s32.totalorder %s14, 0
    %p77 = por %p75, %p76
    %p78 = scmp.ne.s32.totalorder %s66, %s67
    %p79 = scmp.eq.s32.totalorder %s15, 7
    %p80 = por %p78, %p79
    %p82 = scmp.ne.s32.totalorder %s67, %s81
    %p83 = scmp.eq.s32.totalorder %s15, 0
    %p84 = por %p82, %p83
    %s85 = ssub.s32 %s9, %s16
    %p86 = scmp.eq.s32.totalorder %s85, 0
    %s88 = sadd.s32 %s87, 1
    %s89 = scalar_select %p86, %s87, %s88
    %p92 = pneg %p86
    %p93 = scmp.eq.s32.totalorder %s9, 7
    %p94 = por %p92, %p93
    %p95 = scmp.ne.s32.totalorder %s87, %s90
    %p96 = scmp.eq.s32.totalorder %s9, 0
    %p97 = por %p95, %p96
    %p98 = scmp.ne.s32.totalorder %s87, %s90
    %p99 = scmp.eq.s32.totalorder %s14, 7
    %p100 = por %p98, %p99
    %p101 = scmp.ne.s32.totalorder %s90, %s91
    %p102 = scmp.eq.s32.totalorder %s14, 0
    %p103 = por %p101, %p102
    %p104 = scmp.ne.s32.totalorder %s90, %s91
    %p105 = scmp.eq.s32.totalorder %s15, 7
    %p106 = por %p104, %p105
    %p108 = scmp.ne.s32.totalorder %s91, %s107
    %p109 = scmp.eq.s32.totalorder %s15, 0
    %p110 = por %p108, %p109
    %p111 = scmp.le.s32.totalorder 1, %s9
    %p112 = scmp.lt.s32.totalorder %s9, 9
    %p113 = pnand %p111, %p112
    %p114 = pneg %p113
    // Predicated region
    $region9: #{decoder_forward.19} parent=5 // pred_check
      _
    $region10: #{decoder_forward.19} parent=5 // pred_check_branch
      %116 = sbr.rel (%p113) target = $region12
    $region11: #{decoder_forward.19} parent=5 // pred_region
      %s117 = ssub.s32 %s9, 1
      // Predicated region
      $region13: #{decoder_forward.19} parent=11 // pred_check
        %p118 = pneg %p56
      $region14: #{decoder_forward.19} parent=11 // pred_check_branch
        %120 = sbr.rel (%p118) target = $region16
      $region15: #{decoder_forward.19} parent=11 // pred_region
        _
      $region16: #{decoder_forward.19} parent=11 // pred_fallthru
        _
      // Predicated region
      $region17: #{decoder_forward.19} parent=11 // pred_check
        %p121 = pneg %p77
      $region18: #{decoder_forward.19} parent=11 // pred_check_branch
        %123 = sbr.rel (%p121) target = $region20
      $region19: #{decoder_forward.19} parent=11 // pred_region
        _
      $region20: #{decoder_forward.19} parent=11 // pred_fallthru
        _
    $region12: #{decoder_forward.19} parent=5 // pred_fallthru
      _
    %p124 = scmp.lt.s32.totalorder %s9, 8
    // Predicated region
    $region21: #{decoder_forward.19} parent=5 // pred_check
      %p125 = pneg %p124
    $region22: #{decoder_forward.19} parent=5 // pred_check_branch
      %127 = sbr.rel (%p125) target = $region24
    $region23: #{decoder_forward.19} parent=5 // pred_region
      // Predicated region
      $region25: #{decoder_forward.19} parent=23 // pred_check
        %p128 = pneg %p29
      $region26: #{decoder_forward.19} parent=23 // pred_check_branch
        %130 = sbr.rel (%p128) target = $region28
      $region27: #{decoder_forward.19} parent=23 // pred_region
        %s131 = smul.u32 32, %s9
        %p132 = scmp.lt.s32.totalorder %s131, 255
        %s133 = scalar_select %p132, %s131, 255
        %s134 = smul.addr %s133, 3
        %s135 = smul.addr %s134, 4
        %s136 = scalar_lea.vmem %s0, %s135
        %s137 = smul.u32 32, %s9
      $region28: #{decoder_forward.19} parent=23 // pred_fallthru
        _
    $region24: #{decoder_forward.19} parent=5 // pred_fallthru
      _
    %p138 = scmp.le.s32.totalorder 1, %s9
    %p139 = scmp.lt.s32.totalorder %s9, 9
    %p140 = pnand %p138, %p139
    %p141 = pneg %p140
    // Predicated region
    $region29: #{decoder_forward.19} parent=5 // pred_check
      _
    $region30: #{decoder_forward.19} parent=5 // pred_check_branch
      %143 = sbr.rel (%p140) target = $region32
    $region31: #{decoder_forward.19} parent=5 // pred_region
      %s144 = ssub.s32 %s9, 1
      %s145 = smul.u32 32, %s14
      %p146 = scmp.lt.s32.totalorder %s145, 255
      %s147 = scalar_select %p146, %s145, 255
      %s148 = smul.addr %s147, 3
      %s149 = smul.addr %s148, 4
      %s150 = scalar_lea.vmem %s0, %s149
      %p151 = pneg %p35
      %p152 = pneg %p32
      %p153 = pneg %p56
      %p154 = pneg %p53
      %p155 = pneg %p77
      %p156 = pneg %p74
      %p157 = pneg %p103
      %p158 = pneg %p100
      %s159 = smul.u32 32, %s14
      %p160 = scmp.lt.s32.totalorder %s159, 255
      %s161 = scalar_select %p160, %s159, 255
      %s162 = smul.addr %s161, 8
      %s163 = scalar_lea.vmem %s3, %s162
      %s164 = smul.u32 32, %s14
      %p165 = scmp.lt.s32.totalorder %s164, 255
      %s166 = scalar_select %p165, %s164, 255
      %s167 = smul.addr %s166, 3
      %s168 = smul.addr %s167, 4
      %s169 = scalar_lea.vmem %s0, %s168
      %s170 = smul.u32 32, %s14
      %s171 = smul.u32 32, %s14
      %p172 = scmp.lt.s32.totalorder %s171, 255
      %s173 = scalar_select %p172, %s171, 255
      %s174 = smul.addr %s173, 8
      %s175 = scalar_lea.vmem %s3, %s174
      %s176 = smul.u32 32, %s14
      %v178 = vld [vmem:[%s169] sm:$0xff]
      %v179 = vld [vmem:[%s169 + $0x8] sm:$0xf]
      %v180 = vld [vmem:[%s169 + $0xc] sm:$0xff]
      %v181 = vld [vmem:[%s169 + $0x14] sm:$0xf]
      %v182 = vld [vmem:[%s169 + $0x18] sm:$0xff]
      %v183 = vld [vmem:[%s169 + $0x20] sm:$0xf]
      %v184 = vld [vmem:[%s169 + $0x24] sm:$0xff]
      %v185 = vld [vmem:[%s169 + $0x2c] sm:$0xf]
      %v186 = vld [vmem:[%s169 + $0x30] sm:$0xff]
      %v187 = vld [vmem:[%s169 + $0x38] sm:$0xf]
      %v188 = vld [vmem:[%s169 + $0x3c] sm:$0xff]
      %v189 = vld [vmem:[%s169 + $0x44] sm:$0xf]
      %v190 = vld [vmem:[%s169 + $0x48] sm:$0xff]
      %v191 = vld [vmem:[%s169 + $0x50] sm:$0xf]
      %v192 = vld [vmem:[%s169 + $0x54] sm:$0xff]
      %v193 = vld [vmem:[%s169 + $0x5c] sm:$0xf]
      %v194 = vld [vmem:[%s169 + $0x60] sm:$0xff]
      %v195 = vld [vmem:[%s169 + $0x68] sm:$0xf]
      %v196 = vld [vmem:[%s169 + $0x6c] sm:$0xff]
      %v197 = vld [vmem:[%s169 + $0x74] sm:$0xf]
      %v198 = vld [vmem:[%s169 + $0x78] sm:$0xff]
      %v199 = vld [vmem:[%s169 + $0x80] sm:$0xf]
      %v200 = vld [vmem:[%s169 + $0x84] sm:$0xff]
      %v201 = vld [vmem:[%s169 + $0x8c] sm:$0xf]
      %v202 = vld [vmem:[%s169 + $0x90] sm:$0xff]
      %v203 = vld [vmem:[%s169 + $0x98] sm:$0xf]
      %v204 = vld [vmem:[%s169 + $0x9c] sm:$0xff]
      %v205 = vld [vmem:[%s169 + $0xa4] sm:$0xf]
      %v206 = vld [vmem:[%s169 + $0xa8] sm:$0xff]
      %v207 = vld [vmem:[%s169 + $0xb0] sm:$0xf]
      %v208 = vld [vmem:[%s169 + $0xb4] sm:$0xff]
      %v209 = vld [vmem:[%s169 + $0xbc] sm:$0xf]
      %v210 = vld [vmem:[%s169 + $0xc0] sm:$0xff]
      %v211 = vld [vmem:[%s169 + $0xc8] sm:$0xf]
      %v212 = vld [vmem:[%s169 + $0xcc] sm:$0xff]
      %v213 = vld [vmem:[%s169 + $0xd4] sm:$0xf]
      %v214 = vld [vmem:[%s169 + $0xd8] sm:$0xff]
      %v215 = vld [vmem:[%s169 + $0xe0] sm:$0xf]
      %v216 = vld [vmem:[%s169 + $0xe4] sm:$0xff]
      %v217 = vld [vmem:[%s169 + $0xec] sm:$0xf]
      %v218 = vld [vmem:[%s169 + $0xf0] sm:$0xff]
      %v219 = vld [vmem:[%s169 + $0xf8] sm:$0xf]
      %v220 = vld [vmem:[%s169 + $0xfc] sm:$0xff]
      %v221 = vld [vmem:[%s169 + $0x104] sm:$0xf]
      %v222 = vld [vmem:[%s169 + $0x108] sm:$0xff]
      %v223 = vld [vmem:[%s169 + $0x110] sm:$0xf]
      %v224 = vld [vmem:[%s169 + $0x114] sm:$0xff]
      %v225 = vld [vmem:[%s169 + $0x11c] sm:$0xf]
      %v226 = vld [vmem:[%s169 + $0x120] sm:$0xff]
      %v227 = vld [vmem:[%s169 + $0x128] sm:$0xf]
      %v228 = vld [vmem:[%s169 + $0x12c] sm:$0xff]
      %v229 = vld [vmem:[%s169 + $0x134] sm:$0xf]
      %v230 = vld [vmem:[%s169 + $0x138] sm:$0xff]
      %v231 = vld [vmem:[%s169 + $0x140] sm:$0xf]
      %v232 = vld [vmem:[%s169 + $0x144] sm:$0xff]
      %v233 = vld [vmem:[%s169 + $0x14c] sm:$0xf]
      %v234 = vld [vmem:[%s169 + $0x150] sm:$0xff]
      %v235 = vld [vmem:[%s169 + $0x158] sm:$0xf]
      %v236 = vld [vmem:[%s169 + $0x15c] sm:$0xff]
      %v237 = vld [vmem:[%s169 + $0x164] sm:$0xf]
      %v238 = vld [vmem:[%s169 + $0x168] sm:$0xff]
      %v239 = vld [vmem:[%s169 + $0x170] sm:$0xf]
      %v240 = vld [vmem:[%s169 + $0x174] sm:$0xff]
      %v241 = vld [vmem:[%s169 + $0x17c] sm:$0xf]
      %v242 = vld [vmem:[%s1] sm:$0xf]
      %v243 = vld [vmem:[%s1 + $0x4] sm:$0xf]
      %v244 = vld [vmem:[%s1 + $0x8] sm:$0xf]
      %v245 = vld [vmem:[%s1 + $0xc] sm:$0xf]
      %v246 = vld [vmem:[%s1 + $0x10] sm:$0xf]
      %v247 = vld [vmem:[%s1 + $0x14] sm:$0xf]
      %v248 = vld [vmem:[%s1 + $0x18] sm:$0xf]
      %v249 = vld [vmem:[%s1 + $0x1c] sm:$0xf]
      %v250 = vld [vmem:[%s1 + $0x20] sm:$0xf]
      %v251 = vld [vmem:[%s1 + $0x24] sm:$0xf]
      %v252 = vld [vmem:[%s1 + $0x28] sm:$0xf]
      %v253 = vld [vmem:[%s1 + $0x2c] sm:$0xf]
      %v254 = vld [vmem:[%s1 + $0x30] sm:$0xf]
      %v255 = vld [vmem:[%s1 + $0x34] sm:$0xf]
      %v256 = vld [vmem:[%s1 + $0x38] sm:$0xf]
      %v257 = vld [vmem:[%s1 + $0x3c] sm:$0xf]
      %v258 = vld [vmem:[%s1 + $0x40] sm:$0xf]
      %v259 = vld [vmem:[%s1 + $0x44] sm:$0xf]
      %v260 = vld [vmem:[%s1 + $0x48] sm:$0xf]
      %v261 = vld [vmem:[%s1 + $0x4c] sm:$0xf]
      %v262 = vld [vmem:[%s1 + $0x50] sm:$0xf]
      %v263 = vld [vmem:[%s1 + $0x54] sm:$0xf]
      %v264 = vld [vmem:[%s1 + $0x58] sm:$0xf]
      %v265 = vld [vmem:[%s1 + $0x5c] sm:$0xf]
      %v266 = vld [vmem:[%s1 + $0x60] sm:$0xf]
      %v267 = vld [vmem:[%s1 + $0x64] sm:$0xf]
      %v268 = vld [vmem:[%s1 + $0x68] sm:$0xf]
      %v269 = vld [vmem:[%s1 + $0x6c] sm:$0xf]
      %v270 = vld [vmem:[%s1 + $0x70] sm:$0xf]
      %v271 = vld [vmem:[%s1 + $0x74] sm:$0xf]
      %v272 = vld [vmem:[%s1 + $0x78] sm:$0xf]
      %v273 = vld [vmem:[%s1 + $0x7c] sm:$0xf]
      %v274 = vld [vmem:[%s1 + $0x80] sm:$0xf]
      %v275 = vld [vmem:[%s1 + $0x84] sm:$0xf]
      %v276 = vld [vmem:[%s1 + $0x88] sm:$0xf]
      %v277 = vld [vmem:[%s1 + $0x8c] sm:$0xf]
      %v278 = vld [vmem:[%s2] sm:$0x1]
      %v280 = vlaneseq
      %v281 = vshrl.u32 %v280, 7
      %v282 = vsub.s32 0, %v281
      %v283 = vrot.slane %v278, %v282
      %v349 = vunpack.c.l.b16 %v178
      %v350 = vunpack.c.h.b16 %v178
      %v351 = vunpack.c.l.b16 %v179
      %v352 = vunpack.c.l.b16 %v180
      %v353 = vunpack.c.h.b16 %v180
      %v354 = vunpack.c.l.b16 %v181
      %v355 = vunpack.c.l.b16 %v182
      %v356 = vunpack.c.h.b16 %v182
      %v357 = vunpack.c.l.b16 %v183
      %v358 = vunpack.c.l.b16 %v184
      %v359 = vunpack.c.h.b16 %v184
      %v360 = vunpack.c.l.b16 %v185
      %v361 = vunpack.c.l.b16 %v186
      %v362 = vunpack.c.h.b16 %v186
      %v363 = vunpack.c.l.b16 %v187
      %v364 = vunpack.c.l.b16 %v188
      %v365 = vunpack.c.h.b16 %v188
      %v366 = vunpack.c.l.b16 %v189
      %v367 = vunpack.c.l.b16 %v190
      %v368 = vunpack.c.h.b16 %v190
      %v369 = vunpack.c.l.b16 %v191
      %v370 = vunpack.c.l.b16 %v192
      %v371 = vunpack.c.h.b16 %v192
      %v372 = vunpack.c.l.b16 %v193
      %v373 = vunpack.c.l.b16 %v194
      %v374 = vunpack.c.h.b16 %v194
      %v375 = vunpack.c.l.b16 %v195
      %v376 = vunpack.c.l.b16 %v196
      %v377 = vunpack.c.h.b16 %v196
      %v378 = vunpack.c.l.b16 %v197
      %v379 = vunpack.c.l.b16 %v198
      %v380 = vunpack.c.h.b16 %v198
      %v381 = vunpack.c.l.b16 %v199
      %v382 = vunpack.c.l.b16 %v200
      %v383 = vunpack.c.h.b16 %v200
      %v384 = vunpack.c.l.b16 %v201
      %v385 = vunpack.c.l.b16 %v202
      %v386 = vunpack.c.h.b16 %v202
      %v387 = vunpack.c.l.b16 %v203
      %v388 = vunpack.c.l.b16 %v204
      %v389 = vunpack.c.h.b16 %v204
      %v390 = vunpack.c.l.b16 %v205
      %v391 = vunpack.c.l.b16 %v206
      %v392 = vunpack.c.h.b16 %v206
      %v393 = vunpack.c.l.b16 %v207
      %v394 = vunpack.c.l.b16 %v208
      %v395 = vunpack.c.h.b16 %v208
      %v396 = vunpack.c.l.b16 %v209
      %v397 = vunpack.c.l.b16 %v210
      %v398 = vunpack.c.h.b16 %v210
      %v399 = vunpack.c.l.b16 %v211
      %v400 = vunpack.c.l.b16 %v212
      %v401 = vunpack.c.h.b16 %v212
      %v402 = vunpack.c.l.b16 %v213
      %v403 = vunpack.c.l.b16 %v214
      %v404 = vunpack.c.h.b16 %v214
      %v405 = vunpack.c.l.b16 %v215
      %v406 = vunpack.c.l.b16 %v216
      %v407 = vunpack.c.h.b16 %v216
      %v408 = vunpack.c.l.b16 %v217
      %v409 = vunpack.c.l.b16 %v218
      %v410 = vunpack.c.h.b16 %v218
      %v411 = vunpack.c.l.b16 %v219
      %v412 = vunpack.c.l.b16 %v220
      %v413 = vunpack.c.h.b16 %v220
      %v414 = vunpack.c.l.b16 %v221
      %v415 = vunpack.c.l.b16 %v222
      %v416 = vunpack.c.h.b16 %v222
      %v417 = vunpack.c.l.b16 %v223
      %v418 = vunpack.c.l.b16 %v224
      %v419 = vunpack.c.h.b16 %v224
      %v420 = vunpack.c.l.b16 %v225
      %v421 = vunpack.c.l.b16 %v226
      %v422 = vunpack.c.h.b16 %v226
      %v423 = vunpack.c.l.b16 %v227
      %v424 = vunpack.c.l.b16 %v228
      %v425 = vunpack.c.h.b16 %v228
      %v426 = vunpack.c.l.b16 %v229
      %v427 = vunpack.c.l.b16 %v230
      %v428 = vunpack.c.h.b16 %v230
      %v429 = vunpack.c.l.b16 %v231
      %v430 = vunpack.c.l.b16 %v232
      %v431 = vunpack.c.h.b16 %v232
      %v432 = vunpack.c.l.b16 %v233
      %v433 = vunpack.c.l.b16 %v234
      %v434 = vunpack.c.h.b16 %v234
      %v435 = vunpack.c.l.b16 %v235
      %v436 = vunpack.c.l.b16 %v236
      %v437 = vunpack.c.h.b16 %v236
      %v438 = vunpack.c.l.b16 %v237
      %v439 = vunpack.c.l.b16 %v238
      %v440 = vunpack.c.h.b16 %v238
      %v441 = vunpack.c.l.b16 %v239
      %v442 = vunpack.c.l.b16 %v240
      %v443 = vunpack.c.h.b16 %v240
      %v444 = vunpack.c.l.b16 %v241
      %v445 = vpack.c.b16 %v352, %v349
      %v446 = vpack.c.b16 %v353, %v350
      %v447 = vpack.c.b16 %v354, %v351
      %v448 = vpack.c.b16 %v358, %v355
      %v449 = vpack.c.b16 %v359, %v356
      %v450 = vpack.c.b16 %v360, %v357
      %v451 = vpack.c.b16 %v364, %v361
      %v452 = vpack.c.b16 %v365, %v362
      %v453 = vpack.c.b16 %v366, %v363
      %v454 = vpack.c.b16 %v370, %v367
      %v455 = vpack.c.b16 %v371, %v368
      %v456 = vpack.c.b16 %v372, %v369
      %v457 = vpack.c.b16 %v376, %v373
      %v458 = vpack.c.b16 %v377, %v374
      %v459 = vpack.c.b16 %v378, %v375
      %v460 = vpack.c.b16 %v382, %v379
      %v461 = vpack.c.b16 %v383, %v380
      %v462 = vpack.c.b16 %v384, %v381
      %v463 = vpack.c.b16 %v388, %v385
      %v464 = vpack.c.b16 %v389, %v386
      %v465 = vpack.c.b16 %v390, %v387
      %v466 = vpack.c.b16 %v394, %v391
      %v467 = vpack.c.b16 %v395, %v392
      %v468 = vpack.c.b16 %v396, %v393
      %v469 = vpack.c.b16 %v400, %v397
      %v470 = vpack.c.b16 %v401, %v398
      %v471 = vpack.c.b16 %v402, %v399
      %v472 = vpack.c.b16 %v406, %v403
      %v473 = vpack.c.b16 %v407, %v404
      %v474 = vpack.c.b16 %v408, %v405
      %v475 = vpack.c.b16 %v412, %v409
      %v476 = vpack.c.b16 %v413, %v410
      %v477 = vpack.c.b16 %v414, %v411
      %v478 = vpack.c.b16 %v418, %v415
      %v479 = vpack.c.b16 %v419, %v416
      %v480 = vpack.c.b16 %v420, %v417
      %v481 = vpack.c.b16 %v424, %v421
      %v482 = vpack.c.b16 %v425, %v422
      %v483 = vpack.c.b16 %v426, %v423
      %v484 = vpack.c.b16 %v430, %v427
      %v485 = vpack.c.b16 %v431, %v428
      %v486 = vpack.c.b16 %v432, %v429
      %v487 = vpack.c.b16 %v436, %v433
      %v488 = vpack.c.b16 %v437, %v434
      %v489 = vpack.c.b16 %v438, %v435
      %v490 = vpack.c.b16 %v442, %v439
      %v491 = vpack.c.b16 %v443, %v440
      %v492 = vpack.c.b16 %v444, %v441
      %v561 = vunpack.c.l.b16 %v242
      %v562 = vunpack.c.l.b16 %v243
      %v563 = vunpack.c.l.b16 %v244
      %v564 = vunpack.c.l.b16 %v245
      %v565 = vunpack.c.l.b16 %v246
      %v566 = vunpack.c.l.b16 %v247
      %v567 = vunpack.c.l.b16 %v248
      %v568 = vunpack.c.l.b16 %v249
      %v569 = vunpack.c.l.b16 %v250
      %v570 = vunpack.c.l.b16 %v251
      %v571 = vunpack.c.l.b16 %v252
      %v572 = vunpack.c.l.b16 %v253
      %v573 = vunpack.c.l.b16 %v254
      %v574 = vunpack.c.l.b16 %v255
      %v575 = vunpack.c.l.b16 %v256
      %v576 = vunpack.c.l.b16 %v257
      %v577 = vunpack.c.l.b16 %v258
      %v578 = vunpack.c.l.b16 %v259
      %v579 = vunpack.c.l.b16 %v260
      %v580 = vunpack.c.l.b16 %v261
      %v581 = vunpack.c.l.b16 %v262
      %v582 = vunpack.c.l.b16 %v263
      %v583 = vunpack.c.l.b16 %v264
      %v584 = vunpack.c.l.b16 %v265
      %v585 = vunpack.c.l.b16 %v266
      %v586 = vunpack.c.l.b16 %v267
      %v587 = vunpack.c.l.b16 %v268
      %v588 = vunpack.c.l.b16 %v269
      %v589 = vunpack.c.l.b16 %v270
      %v590 = vunpack.c.l.b16 %v271
      %v591 = vunpack.c.l.b16 %v272
      %v592 = vunpack.c.l.b16 %v273
      %v593 = vunpack.c.l.b16 %v274
      %v594 = vunpack.c.l.b16 %v275
      %v595 = vunpack.c.l.b16 %v276
      %v596 = vunpack.c.l.b16 %v277
      %v597 = vpack.c.b16 %v562, %v561
      %v598 = vpack.c.b16 %v564, %v563
      %v599 = vpack.c.b16 %v566, %v565
      %v600 = vpack.c.b16 %v568, %v567
      %v601 = vpack.c.b16 %v570, %v569
      %v602 = vpack.c.b16 %v572, %v571
      %v603 = vpack.c.b16 %v574, %v573
      %v604 = vpack.c.b16 %v576, %v575
      %v605 = vpack.c.b16 %v578, %v577
      %v606 = vpack.c.b16 %v580, %v579
      %v607 = vpack.c.b16 %v582, %v581
      %v608 = vpack.c.b16 %v584, %v583
      %v609 = vpack.c.b16 %v586, %v585
      %v610 = vpack.c.b16 %v588, %v587
      %v611 = vpack.c.b16 %v590, %v589
      %v612 = vpack.c.b16 %v592, %v591
      %v613 = vpack.c.b16 %v594, %v593
      %v614 = vpack.c.b16 %v596, %v595
      %vm633 = vcmask 261120
      %v635 = vsel %vm633, %v447, 0
      %v638 = vsel %vm633, %v450, 0
      %v641 = vsel %vm633, %v453, 0
      %v644 = vsel %vm633, %v456, 0
      %v647 = vsel %vm633, %v459, 0
      %v650 = vsel %vm633, %v462, 0
      %v653 = vsel %vm633, %v465, 0
      %v656 = vsel %vm633, %v468, 0
      %v659 = vsel %vm633, %v471, 0
      %v662 = vsel %vm633, %v474, 0
      %v665 = vsel %vm633, %v477, 0
      %v668 = vsel %vm633, %v480, 0
      %v671 = vsel %vm633, %v483, 0
      %v674 = vsel %vm633, %v486, 0
      %v677 = vsel %vm633, %v489, 0
      %v680 = vsel %vm633, %v492, 0
      %682 = vmatprep.subr.bf16.mxu0 0
      %683 = vmatpush1.bf16.msra.mxu0 %v597
      %684 = vmatprep.subr.bf16.mxu0 0
      %685 = vmatpush1.bf16.msra.mxu0 %v598
      %686 = vmatprep.subr.bf16.mxu0 0
      %687 = vmatpush1.bf16.msra.mxu0 %v599
      %688 = vmatprep.subr.bf16.mxu0 0
      %689 = vmatpush1.bf16.msra.mxu0 %v600
      %690 = vmatprep.subr.bf16.mxu0 0
      %691 = vmatpush1.bf16.msra.mxu0 %v601
      %692 = vmatprep.subr.bf16.mxu0 0
      %693 = vmatpush1.bf16.msra.mxu0 %v602
      %694 = vmatprep.subr.bf16.mxu0 0
      %695 = vmatpush1.bf16.msra.mxu0 %v603
      %696 = vmatprep.subr.bf16.mxu0 0
      %697 = vmatpush1.bf16.msra.mxu0 %v604
      %698 = vmatprep.subr.bf16.mxu0 0
      %699 = vmatpush1.bf16.msra.mxu0 %v605
      %700 = vmatprep.subr.bf16.mxu0 0
      %701 = vmatpush1.bf16.msra.mxu0 %v606
      %702 = vmatprep.subr.bf16.mxu0 0
      %703 = vmatpush1.bf16.msra.mxu0 %v607
      %704 = vmatprep.subr.bf16.mxu0 0
      %705 = vmatpush1.bf16.msra.mxu0 %v608
      %706 = vmatprep.subr.bf16.mxu0 0
      %707 = vmatpush1.bf16.msra.mxu0 %v609
      %708 = vmatprep.subr.bf16.mxu0 0
      %709 = vmatpush1.bf16.msra.mxu0 %v610
      %710 = vmatprep.subr.bf16.mxu0 0
      %711 = vmatpush1.bf16.msra.mxu0 %v611
      %712 = vmatprep.subr.bf16.mxu0 0
      %713 = vmatpush1.bf16.msra.mxu0 %v612
      %714 = vmatprep.mubr.bf16.mxu0 %v446
      %715 = vmatmul.mubr.bf16.gmra.mrb[0].mxu0 %v445
      %v716 = vpop.f32.mrb[0].mxu0
      %v717 = vadd.f32 %v283, %v716
      %v718 = vpop.f32.mrb[0].mxu0
      %v719 = vpop.f32.mrb[0].mxu0
      %v720 = vadd.f32 %v283, %v719
      %v721 = vpop.f32.mrb[0].mxu0
      %722 = vmatprep.mubr.bf16.mxu0 %v449
      %723 = vmatmul.mubr.bf16.gmra.mrb[0].mxu0 %v448
      %v724 = vpop.f32.mrb[0].mxu0
      %v725 = vadd.f32 %v283, %v724
      %v726 = vpop.f32.mrb[0].mxu0
      %v727 = vpop.f32.mrb[0].mxu0
      %v728 = vadd.f32 %v283, %v727
      %v729 = vpop.f32.mrb[0].mxu0
      %730 = vmatprep.mubr.bf16.mxu0 %v452
      %731 = vmatmul.mubr.bf16.gmra.mrb[0].mxu0 %v451
      %v732 = vpop.f32.mrb[0].mxu0
      %v733 = vadd.f32 %v283, %v732
      %v734 = vpop.f32.mrb[0].mxu0
      %v735 = vpop.f32.mrb[0].mxu0
      %v736 = vadd.f32 %v283, %v735
      %v737 = vpop.f32.mrb[0].mxu0
      %738 = vmatprep.mubr.bf16.mxu0 %v455
      %739 = vmatmul.mubr.bf16.gmra.mrb[0].mxu0 %v454
      %v740 = vpop.f32.mrb[0].mxu0
      %v741 = vadd.f32 %v283, %v740
      %v742 = vpop.f32.mrb[0].mxu0
      %v743 = vpop.f32.mrb[0].mxu0
      %v744 = vadd.f32 %v283, %v743
      %v745 = vpop.f32.mrb[0].mxu0
      %746 = vmatprep.mubr.bf16.mxu0 %v458
      %747 = vmatmul.mubr.bf16.gmra.mrb[0].mxu0 %v457
      %v748 = vpop.f32.mrb[0].mxu0
      %v749 = vadd.f32 %v283, %v748
      %v750 = vpop.f32.mrb[0].mxu0
      %v751 = vpop.f32.mrb[0].mxu0
      %v752 = vadd.f32 %v283, %v751
      %v753 = vpop.f32.mrb[0].mxu0
      %754 = vmatprep.mubr.bf16.mxu0 %v461
      %755 = vmatmul.mubr.bf16.gmra.mrb[0].mxu0 %v460
      %v756 = vpop.f32.mrb[0].mxu0
      %v757 = vadd.f32 %v283, %v756
      %v758 = vpop.f32.mrb[0].mxu0
      %v759 = vpop.f32.mrb[0].mxu0
      %v760 = vadd.f32 %v283, %v759
      %v761 = vpop.f32.mrb[0].mxu0
      %762 = vmatprep.mubr.bf16.mxu0 %v464
      %763 = vmatmul.mubr.bf16.gmra.mrb[0].mxu0 %v463
      %v764 = vpop.f32.mrb[0].mxu0
      %v765 = vadd.f32 %v283, %v764
      %v766 = vpop.f32.mrb[0].mxu0
      %v767 = vpop.f32.mrb[0].mxu0
      %v768 = vadd.f32 %v283, %v767
      %v769 = vpop.f32.mrb[0].mxu0
      %770 = vmatprep.mubr.bf16.mxu0 %v467
      %771 = vmatmul.mubr.bf16.gmra.mrb[0].mxu0 %v466
      %v772 = vpop.f32.mrb[0].mxu0
      %v773 = vadd.f32 %v283, %v772
      %v774 = vpop.f32.mrb[0].mxu0
      %v775 = vpop.f32.mrb[0].mxu0
      %v776 = vadd.f32 %v283, %v775
      %v777 = vpop.f32.mrb[0].mxu0
      %778 = vmatprep.mubr.bf16.mxu0 %v470
      %779 = vmatmul.mubr.bf16.gmra.mrb[0].mxu0 %v469
      %v780 = vpop.f32.mrb[0].mxu0
      %v781 = vadd.f32 %v283, %v780
      %v782 = vpop.f32.mrb[0].mxu0
      %v783 = vpop.f32.mrb[0].mxu0
      %v784 = vadd.f32 %v283, %v783
      %v785 = vpop.f32.mrb[0].mxu0
      %786 = vmatprep.mubr.bf16.mxu0 %v473
      %787 = vmatmul.mubr.bf16.gmra.mrb[0].mxu0 %v472
      %v788 = vpop.f32.mrb[0].mxu0
      %v789 = vadd.f32 %v283, %v788
      %v790 = vpop.f32.mrb[0].mxu0
      %v791 = vpop.f32.mrb[0].mxu0
      %v792 = vadd.f32 %v283, %v791
      %v793 = vpop.f32.mrb[0].mxu0
      %794 = vmatprep.mubr.bf16.mxu0 %v476
      %795 = vmatmul.mubr.bf16.gmra.mrb[0].mxu0 %v475
      %v796 = vpop.f32.mrb[0].mxu0
      %v797 = vadd.f32 %v283, %v796
      %v798 = vpop.f32.mrb[0].mxu0
      %v799 = vpop.f32.mrb[0].mxu0
      %v800 = vadd.f32 %v283, %v799
      %v801 = vpop.f32.mrb[0].mxu0
      %802 = vmatprep.mubr.bf16.mxu0 %v479
      %803 = vmatmul.mubr.bf16.gmra.mrb[0].mxu0 %v478
      %v804 = vpop.f32.mrb[0].mxu0
      %v805 = vadd.f32 %v283, %v804
      %v806 = vpop.f32.mrb[0].mxu0
      %v807 = vpop.f32.mrb[0].mxu0
      %v808 = vadd.f32 %v283, %v807
      %v809 = vpop.f32.mrb[0].mxu0
      %810 = vmatprep.mubr.bf16.mxu0 %v482
      %811 = vmatmul.mubr.bf16.gmra.mrb[0].mxu0 %v481
      %v812 = vpop.f32.mrb[0].mxu0
      %v813 = vadd.f32 %v283, %v812
      %v814 = vpop.f32.mrb[0].mxu0
      %v815 = vpop.f32.mrb[0].mxu0
      %v816 = vadd.f32 %v283, %v815
      %v817 = vpop.f32.mrb[0].mxu0
      %818 = vmatprep.mubr.bf16.mxu0 %v485
      %819 = vmatmul.mubr.bf16.gmra.mrb[0].mxu0 %v484
      %v820 = vpop.f32.mrb[0].mxu0
      %v821 = vadd.f32 %v283, %v820
      %v822 = vpop.f32.mrb[0].mxu0
      %v823 = vpop.f32.mrb[0].mxu0
      %v824 = vadd.f32 %v283, %v823
      %v825 = vpop.f32.mrb[0].mxu0
      %826 = vmatprep.mubr.bf16.mxu0 %v488
      %827 = vmatmul.mubr.bf16.gmra.mrb[0].mxu0 %v487
      %v828 = vpop.f32.mrb[0].mxu0
      %v829 = vadd.f32 %v283, %v828
      %v830 = vpop.f32.mrb[0].mxu0
      %v831 = vpop.f32.mrb[0].mxu0
      %v832 = vadd.f32 %v283, %v831
      %v833 = vpop.f32.mrb[0].mxu0
      %834 = vmatprep.mubr.bf16.mxu0 %v491
      %835 = vmatmul.mubr.bf16.gmra.mrb[0].mxu0 %v490
      %v836 = vpop.f32.mrb[0].mxu0
      %v837 = vadd.f32 %v283, %v836
      %v838 = vpop.f32.mrb[0].mxu0
      %v839 = vpop.f32.mrb[0].mxu0
      %v840 = vadd.f32 %v283, %v839
      %v841 = vpop.f32.mrb[0].mxu0
      %842 = vdwg.mxu0
      %843 = vmatprep.subr.bf16.mxu0 0
      %844 = vmatpush1.bf16.msra.mxu0 %v613
      %845 = vmatprep.subr.bf16.mxu0 0
      %846 = vmatpush1.bf16.msra.mxu0 %v614
      %847 = vmatprep.subr.bf16.mxu0 0
      %848 = vmatpush1.bf16.msra.mxu0 0
      %849 = vmatprep.subr.bf16.mxu0 0
      %850 = vmatpush1.bf16.msra.mxu0 0
      %851 = vmatprep.subr.bf16.mxu0 0
      %852 = vmatpush1.bf16.msra.mxu0 0
      %853 = vmatprep.subr.bf16.mxu0 0
      %854 = vmatpush1.bf16.msra.mxu0 0
      %855 = vmatprep.subr.bf16.mxu0 0
      %856 = vmatpush1.bf16.msra.mxu0 0
      %857 = vmatprep.subr.bf16.mxu0 0
      %858 = vmatpush1.bf16.msra.mxu0 0
      %859 = vmatprep.subr.bf16.mxu0 0
      %860 = vmatpush1.bf16.msra.mxu0 0
      %861 = vmatprep.subr.bf16.mxu0 0
      %862 = vmatpush1.bf16.msra.mxu0 0
      %863 = vmatprep.subr.bf16.mxu0 0
      %864 = vmatpush1.bf16.msra.mxu0 0
      %865 = vmatprep.subr.bf16.mxu0 0
      %866 = vmatpush1.bf16.msra.mxu0 0
      %867 = vmatprep.subr.bf16.mxu0 0
      %868 = vmatpush1.bf16.msra.mxu0 0
      %869 = vmatprep.subr.bf16.mxu0 0
      %870 = vmatpush1.bf16.msra.mxu0 0
      %871 = vmatprep.subr.bf16.mxu0 0
      %872 = vmatpush1.bf16.msra.mxu0 0
      %873 = vmatprep.subr.bf16.mxu0 0
      %874 = vmatpush1.bf16.msra.mxu0 0
      %875 = vmatprep.mubr.bf16.mxu0 0
      %876 = vmatmul.mubr.bf16.gmra.mrb[0].mxu0 %v635
      %v877 = vpop.f32.mrb[0].mxu0
      %v878 = vadd.f32 %v717, %v877
      %v879 = vpop.f32.mrb[0].mxu0
      %v880 = vpop.f32.mrb[0].mxu0
      %v881 = vadd.f32 %v720, %v880
      %v882 = vpop.f32.mrb[0].mxu0
      %883 = vmatprep.mubr.bf16.mxu0 0
      %884 = vmatmul.mubr.bf16.gmra.mrb[0].mxu0 %v638
      %v885 = vpop.f32.mrb[0].mxu0
      %v886 = vadd.f32 %v725, %v885
      %v887 = vpop.f32.mrb[0].mxu0
      %v888 = vpop.f32.mrb[0].mxu0
      %v889 = vadd.f32 %v728, %v888
      %v890 = vpop.f32.mrb[0].mxu0
      %891 = vmatprep.mubr.bf16.mxu0 0
      %892 = vmatmul.mubr.bf16.gmra.mrb[0].mxu0 %v641
      %v893 = vpop.f32.mrb[0].mxu0
      %v894 = vadd.f32 %v733, %v893
      %v895 = vpop.f32.mrb[0].mxu0
      %v896 = vpop.f32.mrb[0].mxu0
      %v897 = vadd.f32 %v736, %v896
      %v898 = vpop.f32.mrb[0].mxu0
      %899 = vmatprep.mubr.bf16.mxu0 0
      %900 = vmatmul.mubr.bf16.gmra.mrb[0].mxu0 %v644
      %v901 = vpop.f32.mrb[0].mxu0
      %v902 = vadd.f32 %v741, %v901
      %v903 = vpop.f32.mrb[0].mxu0
      %v904 = vpop.f32.mrb[0].mxu0
      %v905 = vadd.f32 %v744, %v904
      %v906 = vpop.f32.mrb[0].mxu0
      %907 = vmatprep.mubr.bf16.mxu0 0
      %908 = vmatmul.mubr.bf16.gmra.mrb[0].mxu0 %v647
      %v909 = vpop.f32.mrb[0].mxu0
      %v910 = vadd.f32 %v749, %v909
      %v911 = vpop.f32.mrb[0].mxu0
      %v912 = vpop.f32.mrb[0].mxu0
      %v913 = vadd.f32 %v752, %v912
      %v914 = vpop.f32.mrb[0].mxu0
      %915 = vmatprep.mubr.bf16.mxu0 0
      %916 = vmatmul.mubr.bf16.gmra.mrb[0].mxu0 %v650
      %v917 = vpop.f32.mrb[0].mxu0
      %v918 = vadd.f32 %v757, %v917
      %v919 = vpop.f32.mrb[0].mxu0
      %v920 = vpop.f32.mrb[0].mxu0
      %v921 = vadd.f32 %v760, %v920
      %v922 = vpop.f32.mrb[0].mxu0
      %923 = vmatprep.mubr.bf16.mxu0 0
      %924 = vmatmul.mubr.bf16.gmra.mrb[0].mxu0 %v653
      %v925 = vpop.f32.mrb[0].mxu0
      %v926 = vadd.f32 %v765, %v925
      %v927 = vpop.f32.mrb[0].mxu0
      %v928 = vpop.f32.mrb[0].mxu0
      %v929 = vadd.f32 %v768, %v928
      %v930 = vpop.f32.mrb[0].mxu0
      %931 = vmatprep.mubr.bf16.mxu0 0
      %932 = vmatmul.mubr.bf16.gmra.mrb[0].mxu0 %v656
      %v933 = vpop.f32.mrb[0].mxu0
      %v934 = vadd.f32 %v773, %v933
      %v935 = vpop.f32.mrb[0].mxu0
      %v936 = vpop.f32.mrb[0].mxu0
      %v937 = vadd.f32 %v776, %v936
      %v938 = vpop.f32.mrb[0].mxu0
      %939 = vmatprep.mubr.bf16.mxu0 0
      %940 = vmatmul.mubr.bf16.gmra.mrb[0].mxu0 %v659
      %v941 = vpop.f32.mrb[0].mxu0
      %v942 = vadd.f32 %v781, %v941
      %v943 = vpop.f32.mrb[0].mxu0
      %v944 = vpop.f32.mrb[0].mxu0
      %v945 = vadd.f32 %v784, %v944
      %v946 = vpop.f32.mrb[0].mxu0
      %947 = vmatprep.mubr.bf16.mxu0 0
      %948 = vmatmul.mubr.bf16.gmra.mrb[0].mxu0 %v662
      %v949 = vpop.f32.mrb[0].mxu0
      %v950 = vadd.f32 %v789, %v949
      %v951 = vpop.f32.mrb[0].mxu0
      %v952 = vpop.f32.mrb[0].mxu0
      %v953 = vadd.f32 %v792, %v952
      %v954 = vpop.f32.mrb[0].mxu0
      %955 = vmatprep.mubr.bf16.mxu0 0
      %956 = vmatmul.mubr.bf16.gmra.mrb[0].mxu0 %v665
      %v957 = vpop.f32.mrb[0].mxu0
      %v958 = vadd.f32 %v797, %v957
      %v959 = vpop.f32.mrb[0].mxu0
      %v960 = vpop.f32.mrb[0].mxu0
      %v961 = vadd.f32 %v800, %v960
      %v962 = vpop.f32.mrb[0].mxu0
      %963 = vmatprep.mubr.bf16.mxu0 0
      %964 = vmatmul.mubr.bf16.gmra.mrb[0].mxu0 %v668
      %v965 = vpop.f32.mrb[0].mxu0
      %v966 = vadd.f32 %v805, %v965
      %v967 = vpop.f32.mrb[0].mxu0
      %v968 = vpop.f32.mrb[0].mxu0
      %v969 = vadd.f32 %v808, %v968
      %v970 = vpop.f32.mrb[0].mxu0
      %971 = vmatprep.mubr.bf16.mxu0 0
      %972 = vmatmul.mubr.bf16.gmra.mrb[0].mxu0 %v671
      %v973 = vpop.f32.mrb[0].mxu0
      %v974 = vadd.f32 %v813, %v973
      %v975 = vpop.f32.mrb[0].mxu0
      %v976 = vpop.f32.mrb[0].mxu0
      %v977 = vadd.f32 %v816, %v976
      %v978 = vpop.f32.mrb[0].mxu0
      %979 = vmatprep.mubr.bf16.mxu0 0
      %980 = vmatmul.mubr.bf16.gmra.mrb[0].mxu0 %v674
      %v981 = vpop.f32.mrb[0].mxu0
      %v982 = vadd.f32 %v821, %v981
      %v983 = vpop.f32.mrb[0].mxu0
      %v984 = vpop.f32.mrb[0].mxu0
      %v985 = vadd.f32 %v824, %v984
      %v986 = vpop.f32.mrb[0].mxu0
      %987 = vmatprep.mubr.bf16.mxu0 0
      %988 = vmatmul.mubr.bf16.gmra.mrb[0].mxu0 %v677
      %v989 = vpop.f32.mrb[0].mxu0
      %v990 = vadd.f32 %v829, %v989
      %v991 = vpop.f32.mrb[0].mxu0
      %v992 = vpop.f32.mrb[0].mxu0
      %v993 = vadd.f32 %v832, %v992
      %v994 = vpop.f32.mrb[0].mxu0
      %995 = vmatprep.mubr.bf16.mxu0 0
      %996 = vmatmul.mubr.bf16.gmra.mrb[0].mxu0 %v680
      %v997 = vpop.f32.mrb[0].mxu0
      %v998 = vadd.f32 %v837, %v997
      %v999 = vpop.f32.mrb[0].mxu0
      %v1000 = vpop.f32.mrb[0].mxu0
      %v1001 = vadd.f32 %v840, %v1000
      %v1002 = vpop.f32.mrb[0].mxu0
      %1003 = vdwg.mxu0
      %1004 = vst.msk [vmem:[%s175] sm:$0xff] %vm633, %v878
      %1005 = vst.msk [vmem:[%s175 + $0x8] sm:$0xff] %vm633, %v881
      %1006 = vst.msk [vmem:[%s175 + $0x10] sm:$0xff] %vm633, %v886
      %1007 = vst.msk [vmem:[%s175 + $0x18] sm:$0xff] %vm633, %v889
      %1008 = vst.msk [vmem:[%s175 + $0x20] sm:$0xff] %vm633, %v894
      %1009 = vst.msk [vmem:[%s175 + $0x28] sm:$0xff] %vm633, %v897
      %1010 = vst.msk [vmem:[%s175 + $0x30] sm:$0xff] %vm633, %v902
      %1011 = vst.msk [vmem:[%s175 + $0x38] sm:$0xff] %vm633, %v905
      %1012 = vst.msk [vmem:[%s175 + $0x40] sm:$0xff] %vm633, %v910
      %1013 = vst.msk [vmem:[%s175 + $0x48] sm:$0xff] %vm633, %v913
      %1014 = vst.msk [vmem:[%s175 + $0x50] sm:$0xff] %vm633, %v918
      %1015 = vst.msk [vmem:[%s175 + $0x58] sm:$0xff] %vm633, %v921
      %1016 = vst.msk [vmem:[%s175 + $0x60] sm:$0xff] %vm633, %v926
      %1017 = vst.msk [vmem:[%s175 + $0x68] sm:$0xff] %vm633, %v929
      %1018 = vst.msk [vmem:[%s175 + $0x70] sm:$0xff] %vm633, %v934
      %1019 = vst.msk [vmem:[%s175 + $0x78] sm:$0xff] %vm633, %v937
      %1020 = vst.msk [vmem:[%s175 + $0x80] sm:$0xff] %vm633, %v942
      %1021 = vst.msk [vmem:[%s175 + $0x88] sm:$0xff] %vm633, %v945
      %1022 = vst.msk [vmem:[%s175 + $0x90] sm:$0xff] %vm633, %v950
      %1023 = vst.msk [vmem:[%s175 + $0x98] sm:$0xff] %vm633, %v953
      %1024 = vst.msk [vmem:[%s175 + $0xa0] sm:$0xff] %vm633, %v958
      %1025 = vst.msk [vmem:[%s175 + $0xa8] sm:$0xff] %vm633, %v961
      %1026 = vst.msk [vmem:[%s175 + $0xb0] sm:$0xff] %vm633, %v966
      %1027 = vst.msk [vmem:[%s175 + $0xb8] sm:$0xff] %vm633, %v969
      %1028 = vst.msk [vmem:[%s175 + $0xc0] sm:$0xff] %vm633, %v974
      %1029 = vst.msk [vmem:[%s175 + $0xc8] sm:$0xff] %vm633, %v977
      %1030 = vst.msk [vmem:[%s175 + $0xd0] sm:$0xff] %vm633, %v982
      %1031 = vst.msk [vmem:[%s175 + $0xd8] sm:$0xff] %vm633, %v985
      %1032 = vst.msk [vmem:[%s175 + $0xe0] sm:$0xff] %vm633, %v990
      %1033 = vst.msk [vmem:[%s175 + $0xe8] sm:$0xff] %vm633, %v993
      %1034 = vst.msk [vmem:[%s175 + $0xf0] sm:$0xff] %vm633, %v998
      %1035 = vst.msk [vmem:[%s175 + $0xf8] sm:$0xff] %vm633, %v1001
      %s1036 = smul.u32 32, %s14
      %p1037 = scmp.lt.s32.totalorder %s1036, 255
      %s1038 = scalar_select %p1037, %s1036, 255
      %s1039 = smul.addr %s1038, 8
      %s1040 = scalar_lea.vmem %s3, %s1039
      // Predicated region
      $region33: #{decoder_forward.19} parent=31 // pred_check
        %p1041 = pneg %p100
      $region34: #{decoder_forward.19} parent=31 // pred_check_branch
        %1043 = sbr.rel (%p1041) target = $region36
      $region35: #{decoder_forward.19} parent=31 // pred_region
        %s1044 = smul.u32 32, %s14
      $region36: #{decoder_forward.19} parent=31 // pred_fallthru
        _
    $region32: #{decoder_forward.19} parent=5 // pred_fallthru
      _
    %p1045 = scmp.le.s32.totalorder 2, %s9
    // Predicated region
    $region37: #{decoder_forward.19} parent=5 // pred_check
      %p1046 = pneg %p1045
    $region38: #{decoder_forward.19} parent=5 // pred_check_branch
      %1048 = sbr.rel (%p1046) target = $region40
    $region39: #{decoder_forward.19} parent=5 // pred_region
      %s1049 = ssub.s32 %s9, 2
      // Predicated region
      $region41: #{decoder_forward.19} parent=39 // pred_check
        %p1050 = pneg %p106
      $region42: #{decoder_forward.19} parent=39 // pred_check_branch
        %1052 = sbr.rel (%p1050) target = $region44
      $region43: #{decoder_forward.19} parent=39 // pred_region
        %s1053 = smul.u32 32, %s15
        %p1054 = scmp.lt.s32.totalorder %s1053, 255
        %s1055 = scalar_select %p1054, %s1053, 255
        %s1056 = smul.addr %s1055, 8
        %s1057 = scalar_lea.vmem %s3, %s1056
      $region44: #{decoder_forward.19} parent=39 // pred_fallthru
        _
    $region40: #{decoder_forward.19} parent=5 // pred_fallthru
      _
  $region6: #{decoder_forward.19} parent=0 // loop_footer
    %s13 = sadd.s32 1, %s9
  $region7: #{decoder_forward.19} parent=0 // loop_footer_branch
    %8 = sbr.rel target = $region3
  $region8: #{decoder_forward.19} parent=0 // loop_exit
    _

// kernel: decoder_forward.21
$region0: #{decoder_forward.21}
  #allocation0 [shape = 'u32[]', space=smem, size = 0x4, offset = 0x4, fixed_abs, tag = 'smem constant byte address 0x4 - core index']
  #allocation1 [shape = 'u32[144,128]{1,0:T(1,128)}', space=vmem, size = 0x12000, scoped, tag = 'internal scratch']
  %s0 = inlined_call_operand.vmem [shape: bf16[2048,288], index: 0, kind: input, shape index: {}]
  %s1 = inlined_call_operand.vmem [shape: bf16[288,3], index: 1, kind: input, shape index: {}]
  %s2 = inlined_call_operand.vmem [shape: f32[1,3], index: 2, kind: input, shape index: {}]
  %s3 = inlined_call_operand.vmem [shape: f32[2048,3], index: 3, kind: output, shape index: {}]
  %s4 = sld [smem:[#allocation0]]
  $region45: #{decoder_forward.21} parent=0
    _
  %s6 = ssub.s32 1, %s4
  %s7 = scalar_select 0, %s6, %s4
  loop: start=0, step=1, limit=10
  $region2: #{decoder_forward.21} parent=0 // loop_pre_header
    _
  $region3: #{decoder_forward.21} parent=0 // loop_header
    %s9 = sphi 0, %s13
    %p10 = scmp.ge.s32.totalorder %s9, 10
    %s19 = sphi 0, %s21
    %s22 = sphi 0, %s19
    %s23 = sphi 0, %s22
    %s39 = sphi 0, %s23
    %s43 = sphi 0, %s43
    %s45 = sphi 0, %s43
    %s46 = sphi 0, %s45
    %s60 = sphi 0, %s46
    %s64 = sphi 0, %s64
    %s66 = sphi 0, %s64
    %s67 = sphi 0, %s66
    %s81 = sphi 0, %s67
    %s87 = sphi 0, %s89
    %s90 = sphi 0, %s87
    %s91 = sphi 0, %s90
    %s107 = sphi 0, %s91
  $region4: #{decoder_forward.21} parent=0 // loop_header_branch
    %12 = sbr.rel (%p10) target = $region8
  $region5: #{decoder_forward.21} parent=0 // loop_body
    %s14 = ssub.s32 %s9, 1
    %s15 = ssub.s32 %s9, 2
    %s16 = sadd.s32 %s9, 1
    %s17 = ssub.s32 %s9, %s16
    %p18 = scmp.eq.s32.totalorder %s17, 0
    %s20 = sadd.s32 %s19, 1
    %s21 = scalar_select %p18, %s19, %s20
    %p24 = pneg %p18
    %p25 = scmp.eq.s32.totalorder %s9, 7
    %p26 = por %p24, %p25
    %p27 = scmp.ne.s32.totalorder %s19, %s22
    %p28 = scmp.eq.s32.totalorder %s9, 0
    %p29 = por %p27, %p28
    %p30 = scmp.ne.s32.totalorder %s19, %s22
    %p31 = scmp.eq.s32.totalorder %s14, 7
    %p32 = por %p30, %p31
    %p33 = scmp.ne.s32.totalorder %s22, %s23
    %p34 = scmp.eq.s32.totalorder %s14, 0
    %p35 = por %p33, %p34
    %p36 = scmp.ne.s32.totalorder %s22, %s23
    %p37 = scmp.eq.s32.totalorder %s15, 7
    %p38 = por %p36, %p37
    %p40 = scmp.ne.s32.totalorder %s23, %s39
    %p41 = scmp.eq.s32.totalorder %s15, 0
    %p42 = por %p40, %p41
    %s44 = sadd.s32 %s43, 1
    %p47 = scmp.eq.s32.totalorder %s9, 7
    %p48 = scmp.ne.s32.totalorder %s43, %s45
    %p49 = scmp.eq.s32.totalorder %s9, 0
    %p50 = por %p48, %p49
    %p51 = scmp.ne.s32.totalorder %s43, %s45
    %p52 = scmp.eq.s32.totalorder %s14, 7
    %p53 = por %p51, %p52
    %p54 = scmp.ne.s32.totalorder %s45, %s46
    %p55 = scmp.eq.s32.totalorder %s14, 0
    %p56 = por %p54, %p55
    %p57 = scmp.ne.s32.totalorder %s45, %s46
    %p58 = scmp.eq.s32.totalorder %s15, 7
    %p59 = por %p57, %p58
    %p61 = scmp.ne.s32.totalorder %s46, %s60
    %p62 = scmp.eq.s32.totalorder %s15, 0
    %p63 = por %p61, %p62
    %s65 = sadd.s32 %s64, 1
    %p68 = scmp.eq.s32.totalorder %s9, 7
    %p69 = scmp.ne.s32.totalorder %s64, %s66
    %p70 = scmp.eq.s32.totalorder %s9, 0
    %p71 = por %p69, %p70
    %p72 = scmp.ne.s32.totalorder %s64, %s66
    %p73 = scmp.eq.s32.totalorder %s14, 7
    %p74 = por %p72, %p73
    %p75 = scmp.ne.s32.totalorder %s66, %s67
    %p76 = scmp.eq.s32.totalorder %s14, 0
    %p77 = por %p75, %p76
    %p78 = scmp.ne.s32.totalorder %s66, %s67
    %p79 = scmp.eq.s32.totalorder %s15, 7
    %p80 = por %p78, %p79
    %p82 = scmp.ne.s32.totalorder %s67, %s81
    %p83 = scmp.eq.s32.totalorder %s15, 0
    %p84 = por %p82, %p83
    %s85 = ssub.s32 %s9, %s16
    %p86 = scmp.eq.s32.totalorder %s85, 0
    %s88 = sadd.s32 %s87, 1
    %s89 = scalar_select %p86, %s87, %s88
    %p92 = pneg %p86
    %p93 = scmp.eq.s32.totalorder %s9, 7
    %p94 = por %p92, %p93
    %p95 = scmp.ne.s32.totalorder %s87, %s90
    %p96 = scmp.eq.s32.totalorder %s9, 0
    %p97 = por %p95, %p96
    %p98 = scmp.ne.s32.totalorder %s87, %s90
    %p99 = scmp.eq.s32.totalorder %s14, 7
    %p100 = por %p98, %p99
    %p101 = scmp.ne.s32.totalorder %s90, %s91
    %p102 = scmp.eq.s32.totalorder %s14, 0
    %p103 = por %p101, %p102
    %p104 = scmp.ne.s32.totalorder %s90, %s91
    %p105 = scmp.eq.s32.totalorder %s15, 7
    %p106 = por %p104, %p105
    %p108 = scmp.ne.s32.totalorder %s91, %s107
    %p109 = scmp.eq.s32.totalorder %s15, 0
    %p110 = por %p108, %p109
    %p111 = scmp.le.s32.totalorder 1, %s9
    %p112 = scmp.lt.s32.totalorder %s9, 9
    %p113 = pnand %p111, %p112
    %p114 = pneg %p113
    // Predicated region
    $region9: #{decoder_forward.21} parent=5 // pred_check
      _
    $region10: #{decoder_forward.21} parent=5 // pred_check_branch
      %116 = sbr.rel (%p113) target = $region12
    $region11: #{decoder_forward.21} parent=5 // pred_region
      %s117 = ssub.s32 %s9, 1
      // Predicated region
      $region13: #{decoder_forward.21} parent=11 // pred_check
        %p118 = pneg %p56
      $region14: #{decoder_forward.21} parent=11 // pred_check_branch
        %120 = sbr.rel (%p118) target = $region16
      $region15: #{decoder_forward.21} parent=11 // pred_region
        _
      $region16: #{decoder_forward.21} parent=11 // pred_fallthru
        _
      // Predicated region
      $region17: #{decoder_forward.21} parent=11 // pred_check
        %p121 = pneg %p77
      $region18: #{decoder_forward.21} parent=11 // pred_check_branch
        %123 = sbr.rel (%p121) target = $region20
      $region19: #{decoder_forward.21} parent=11 // pred_region
        _
      $region20: #{decoder_forward.21} parent=11 // pred_fallthru
        _
    $region12: #{decoder_forward.21} parent=5 // pred_fallthru
      _
    %p124 = scmp.lt.s32.totalorder %s9, 8
    // Predicated region
    $region21: #{decoder_forward.21} parent=5 // pred_check
      %p125 = pneg %p124
    $region22: #{decoder_forward.21} parent=5 // pred_check_branch
      %127 = sbr.rel (%p125) target = $region24
    $region23: #{decoder_forward.21} parent=5 // pred_region
      // Predicated region
      $region25: #{decoder_forward.21} parent=23 // pred_check
        %p128 = pneg %p29
      $region26: #{decoder_forward.21} parent=23 // pred_check_branch
        %130 = sbr.rel (%p128) target = $region28
      $region27: #{decoder_forward.21} parent=23 // pred_region
        %s131 = smul.u32 32, %s9
        %p132 = scmp.lt.s32.totalorder %s131, 255
        %s133 = scalar_select %p132, %s131, 255
        %s134 = smul.addr %s133, 3
        %s135 = smul.addr %s134, 4
        %s136 = scalar_lea.vmem %s0, %s135
        %s137 = smul.u32 32, %s9
      $region28: #{decoder_forward.21} parent=23 // pred_fallthru
        _
    $region24: #{decoder_forward.21} parent=5 // pred_fallthru
      _
    %p138 = scmp.le.s32.totalorder 1, %s9
    %p139 = scmp.lt.s32.totalorder %s9, 9
    %p140 = pnand %p138, %p139
    %p141 = pneg %p140
    // Predicated region
    $region29: #{decoder_forward.21} parent=5 // pred_check
      _
    $region30: #{decoder_forward.21} parent=5 // pred_check_branch
      %143 = sbr.rel (%p140) target = $region32
    $region31: #{decoder_forward.21} parent=5 // pred_region
      %s144 = ssub.s32 %s9, 1
      %s145 = smul.u32 32, %s14
      %p146 = scmp.lt.s32.totalorder %s145, 255
      %s147 = scalar_select %p146, %s145, 255
      %s148 = smul.addr %s147, 3
      %s149 = smul.addr %s148, 4
      %s150 = scalar_lea.vmem %s0, %s149
      %p151 = pneg %p35
      %p152 = pneg %p32
      %p153 = pneg %p56
      %p154 = pneg %p53
      %p155 = pneg %p77
      %p156 = pneg %p74
      %p157 = pneg %p103
      %p158 = pneg %p100
      %s159 = smul.u32 32, %s14
      %p160 = scmp.lt.s32.totalorder %s159, 255
      %s161 = scalar_select %p160, %s159, 255
      %s162 = smul.addr %s161, 8
      %s163 = scalar_lea.vmem %s3, %s162
      %s164 = smul.u32 32, %s14
      %p165 = scmp.lt.s32.totalorder %s164, 255
      %s166 = scalar_select %p165, %s164, 255
      %s167 = smul.addr %s166, 3
      %s168 = smul.addr %s167, 4
      %s169 = scalar_lea.vmem %s0, %s168
      %s170 = smul.u32 32, %s14
      %s171 = smul.u32 32, %s14
      %p172 = scmp.lt.s32.totalorder %s171, 255
      %s173 = scalar_select %p172, %s171, 255
      %s174 = smul.addr %s173, 8
      %s175 = scalar_lea.vmem %s3, %s174
      %s176 = smul.u32 32, %s14
      %v178 = vld [vmem:[%s169] sm:$0xff]
      %v179 = vld [vmem:[%s169 + $0x8] sm:$0xf]
      %v180 = vld [vmem:[%s169 + $0xc] sm:$0xff]
      %v181 = vld [vmem:[%s169 + $0x14] sm:$0xf]
      %v182 = vld [vmem:[%s169 + $0x18] sm:$0xff]
      %v183 = vld [vmem:[%s169 + $0x20] sm:$0xf]
      %v184 = vld [vmem:[%s169 + $0x24] sm:$0xff]
      %v185 = vld [vmem:[%s169 + $0x2c] sm:$0xf]
      %v186 = vld [vmem:[%s169 + $0x30] sm:$0xff]
      %v187 = vld [vmem:[%s169 + $0x38] sm:$0xf]
      %v188 = vld [vmem:[%s169 + $0x3c] sm:$0xff]
      %v189 = vld [vmem:[%s169 + $0x44] sm:$0xf]
      %v190 = vld [vmem:[%s169 + $0x48] sm:$0xff]
      %v191 = vld [vmem:[%s169 + $0x50] sm:$0xf]
      %v192 = vld [vmem:[%s169 + $0x54] sm:$0xff]
      %v193 = vld [vmem:[%s169 + $0x5c] sm:$0xf]
      %v194 = vld [vmem:[%s169 + $0x60] sm:$0xff]
      %v195 = vld [vmem:[%s169 + $0x68] sm:$0xf]
      %v196 = vld [vmem:[%s169 + $0x6c] sm:$0xff]
      %v197 = vld [vmem:[%s169 + $0x74] sm:$0xf]
      %v198 = vld [vmem:[%s169 + $0x78] sm:$0xff]
      %v199 = vld [vmem:[%s169 + $0x80] sm:$0xf]
      %v200 = vld [vmem:[%s169 + $0x84] sm:$0xff]
      %v201 = vld [vmem:[%s169 + $0x8c] sm:$0xf]
      %v202 = vld [vmem:[%s169 + $0x90] sm:$0xff]
      %v203 = vld [vmem:[%s169 + $0x98] sm:$0xf]
      %v204 = vld [vmem:[%s169 + $0x9c] sm:$0xff]
      %v205 = vld [vmem:[%s169 + $0xa4] sm:$0xf]
      %v206 = vld [vmem:[%s169 + $0xa8] sm:$0xff]
      %v207 = vld [vmem:[%s169 + $0xb0] sm:$0xf]
      %v208 = vld [vmem:[%s169 + $0xb4] sm:$0xff]
      %v209 = vld [vmem:[%s169 + $0xbc] sm:$0xf]
      %v210 = vld [vmem:[%s169 + $0xc0] sm:$0xff]
      %v211 = vld [vmem:[%s169 + $0xc8] sm:$0xf]
      %v212 = vld [vmem:[%s169 + $0xcc] sm:$0xff]
      %v213 = vld [vmem:[%s169 + $0xd4] sm:$0xf]
      %v214 = vld [vmem:[%s169 + $0xd8] sm:$0xff]
      %v215 = vld [vmem:[%s169 + $0xe0] sm:$0xf]
      %v216 = vld [vmem:[%s169 + $0xe4] sm:$0xff]
      %v217 = vld [vmem:[%s169 + $0xec] sm:$0xf]
      %v218 = vld [vmem:[%s169 + $0xf0] sm:$0xff]
      %v219 = vld [vmem:[%s169 + $0xf8] sm:$0xf]
      %v220 = vld [vmem:[%s169 + $0xfc] sm:$0xff]
      %v221 = vld [vmem:[%s169 + $0x104] sm:$0xf]
      %v222 = vld [vmem:[%s169 + $0x108] sm:$0xff]
      %v223 = vld [vmem:[%s169 + $0x110] sm:$0xf]
      %v224 = vld [vmem:[%s169 + $0x114] sm:$0xff]
      %v225 = vld [vmem:[%s169 + $0x11c] sm:$0xf]
      %v226 = vld [vmem:[%s169 + $0x120] sm:$0xff]
      %v227 = vld [vmem:[%s169 + $0x128] sm:$0xf]
      %v228 = vld [vmem:[%s169 + $0x12c] sm:$0xff]
      %v229 = vld [vmem:[%s169 + $0x134] sm:$0xf]
      %v230 = vld [vmem:[%s169 + $0x138] sm:$0xff]
      %v231 = vld [vmem:[%s169 + $0x140] sm:$0xf]
      %v232 = vld [vmem:[%s169 + $0x144] sm:$0xff]
      %v233 = vld [vmem:[%s169 + $0x14c] sm:$0xf]
      %v234 = vld [vmem:[%s169 + $0x150] sm:$0xff]
      %v235 = vld [vmem:[%s169 + $0x158] sm:$0xf]
      %v236 = vld [vmem:[%s169 + $0x15c] sm:$0xff]
      %v237 = vld [vmem:[%s169 + $0x164] sm:$0xf]
      %v238 = vld [vmem:[%s169 + $0x168] sm:$0xff]
      %v239 = vld [vmem:[%s169 + $0x170] sm:$0xf]
      %v240 = vld [vmem:[%s169 + $0x174] sm:$0xff]
      %v241 = vld [vmem:[%s169 + $0x17c] sm:$0xf]
      %v242 = vld [vmem:[%s1] sm:$0xf]
      %v243 = vld [vmem:[%s1 + $0x4] sm:$0xf]
      %v244 = vld [vmem:[%s1 + $0x8] sm:$0xf]
      %v245 = vld [vmem:[%s1 + $0xc] sm:$0xf]
      %v246 = vld [vmem:[%s1 + $0x10] sm:$0xf]
      %v247 = vld [vmem:[%s1 + $0x14] sm:$0xf]
      %v248 = vld [vmem:[%s1 + $0x18] sm:$0xf]
      %v249 = vld [vmem:[%s1 + $0x1c] sm:$0xf]
      %v250 = vld [vmem:[%s1 + $0x20] sm:$0xf]
      %v251 = vld [vmem:[%s1 + $0x24] sm:$0xf]
      %v252 = vld [vmem:[%s1 + $0x28] sm:$0xf]
      %v253 = vld [vmem:[%s1 + $0x2c] sm:$0xf]
      %v254 = vld [vmem:[%s1 + $0x30] sm:$0xf]
      %v255 = vld [vmem:[%s1 + $0x34] sm:$0xf]
      %v256 = vld [vmem:[%s1 + $0x38] sm:$0xf]
      %v257 = vld [vmem:[%s1 + $0x3c] sm:$0xf]
      %v258 = vld [vmem:[%s1 + $0x40] sm:$0xf]
      %v259 = vld [vmem:[%s1 + $0x44] sm:$0xf]
      %v260 = vld [vmem:[%s1 + $0x48] sm:$0xf]
      %v261 = vld [vmem:[%s1 + $0x4c] sm:$0xf]
      %v262 = vld [vmem:[%s1 + $0x50] sm:$0xf]
      %v263 = vld [vmem:[%s1 + $0x54] sm:$0xf]
      %v264 = vld [vmem:[%s1 + $0x58] sm:$0xf]
      %v265 = vld [vmem:[%s1 + $0x5c] sm:$0xf]
      %v266 = vld [vmem:[%s1 + $0x60] sm:$0xf]
      %v267 = vld [vmem:[%s1 + $0x64] sm:$0xf]
      %v268 = vld [vmem:[%s1 + $0x68] sm:$0xf]
      %v269 = vld [vmem:[%s1 + $0x6c] sm:$0xf]
      %v270 = vld [vmem:[%s1 + $0x70] sm:$0xf]
      %v271 = vld [vmem:[%s1 + $0x74] sm:$0xf]
      %v272 = vld [vmem:[%s1 + $0x78] sm:$0xf]
      %v273 = vld [vmem:[%s1 + $0x7c] sm:$0xf]
      %v274 = vld [vmem:[%s1 + $0x80] sm:$0xf]
      %v275 = vld [vmem:[%s1 + $0x84] sm:$0xf]
      %v276 = vld [vmem:[%s1 + $0x88] sm:$0xf]
      %v277 = vld [vmem:[%s1 + $0x8c] sm:$0xf]
      %v278 = vld [vmem:[%s2] sm:$0x1]
      %v280 = vlaneseq
      %v281 = vshrl.u32 %v280, 7
      %v282 = vsub.s32 0, %v281
      %v283 = vrot.slane %v278, %v282
      %v349 = vunpack.c.l.b16 %v178
      %v350 = vunpack.c.h.b16 %v178
      %v351 = vunpack.c.l.b16 %v179
      %v352 = vunpack.c.l.b16 %v180
      %v353 = vunpack.c.h.b16 %v180
      %v354 = vunpack.c.l.b16 %v181
      %v355 = vunpack.c.l.b16 %v182
      %v356 = vunpack.c.h.b16 %v182
      %v357 = vunpack.c.l.b16 %v183
      %v358 = vunpack.c.l.b16 %v184
      %v359 = vunpack.c.h.b16 %v184
      %v360 = vunpack.c.l.b16 %v185
      %v361 = vunpack.c.l.b16 %v186
      %v362 = vunpack.c.h.b16 %v186
      %v363 = vunpack.c.l.b16 %v187
      %v364 = vunpack.c.l.b16 %v188
      %v365 = vunpack.c.h.b16 %v188
      %v366 = vunpack.c.l.b16 %v189
      %v367 = vunpack.c.l.b16 %v190
      %v368 = vunpack.c.h.b16 %v190
      %v369 = vunpack.c.l.b16 %v191
      %v370 = vunpack.c.l.b16 %v192
      %v371 = vunpack.c.h.b16 %v192
      %v372 = vunpack.c.l.b16 %v193
      %v373 = vunpack.c.l.b16 %v194
      %v374 = vunpack.c.h.b16 %v194
      %v375 = vunpack.c.l.b16 %v195
      %v376 = vunpack.c.l.b16 %v196
      %v377 = vunpack.c.h.b16 %v196
      %v378 = vunpack.c.l.b16 %v197
      %v379 = vunpack.c.l.b16 %v198
      %v380 = vunpack.c.h.b16 %v198
      %v381 = vunpack.c.l.b16 %v199
      %v382 = vunpack.c.l.b16 %v200
      %v383 = vunpack.c.h.b16 %v200
      %v384 = vunpack.c.l.b16 %v201
      %v385 = vunpack.c.l.b16 %v202
      %v386 = vunpack.c.h.b16 %v202
      %v387 = vunpack.c.l.b16 %v203
      %v388 = vunpack.c.l.b16 %v204
      %v389 = vunpack.c.h.b16 %v204
      %v390 = vunpack.c.l.b16 %v205
      %v391 = vunpack.c.l.b16 %v206
      %v392 = vunpack.c.h.b16 %v206
      %v393 = vunpack.c.l.b16 %v207
      %v394 = vunpack.c.l.b16 %v208
      %v395 = vunpack.c.h.b16 %v208
      %v396 = vunpack.c.l.b16 %v209
      %v397 = vunpack.c.l.b16 %v210
      %v398 = vunpack.c.h.b16 %v210
      %v399 = vunpack.c.l.b16 %v211
      %v400 = vunpack.c.l.b16 %v212
      %v401 = vunpack.c.h.b16 %v212
      %v402 = vunpack.c.l.b16 %v213
      %v403 = vunpack.c.l.b16 %v214
      %v404 = vunpack.c.h.b16 %v214
      %v405 = vunpack.c.l.b16 %v215
      %v406 = vunpack.c.l.b16 %v216
      %v407 = vunpack.c.h.b16 %v216
      %v408 = vunpack.c.l.b16 %v217
      %v409 = vunpack.c.l.b16 %v218
      %v410 = vunpack.c.h.b16 %v218
      %v411 = vunpack.c.l.b16 %v219
      %v412 = vunpack.c.l.b16 %v220
      %v413 = vunpack.c.h.b16 %v220
      %v414 = vunpack.c.l.b16 %v221
      %v415 = vunpack.c.l.b16 %v222
      %v416 = vunpack.c.h.b16 %v222
      %v417 = vunpack.c.l.b16 %v223
      %v418 = vunpack.c.l.b16 %v224
      %v419 = vunpack.c.h.b16 %v224
      %v420 = vunpack.c.l.b16 %v225
      %v421 = vunpack.c.l.b16 %v226
      %v422 = vunpack.c.h.b16 %v226
      %v423 = vunpack.c.l.b16 %v227
      %v424 = vunpack.c.l.b16 %v228
      %v425 = vunpack.c.h.b16 %v228
      %v426 = vunpack.c.l.b16 %v229
      %v427 = vunpack.c.l.b16 %v230
      %v428 = vunpack.c.h.b16 %v230
      %v429 = vunpack.c.l.b16 %v231
      %v430 = vunpack.c.l.b16 %v232
      %v431 = vunpack.c.h.b16 %v232
      %v432 = vunpack.c.l.b16 %v233
      %v433 = vunpack.c.l.b16 %v234
      %v434 = vunpack.c.h.b16 %v234
      %v435 = vunpack.c.l.b16 %v235
      %v436 = vunpack.c.l.b16 %v236
      %v437 = vunpack.c.h.b16 %v236
      %v438 = vunpack.c.l.b16 %v237
      %v439 = vunpack.c.l.b16 %v238
      %v440 = vunpack.c.h.b16 %v238
      %v441 = vunpack.c.l.b16 %v239
      %v442 = vunpack.c.l.b16 %v240
      %v443 = vunpack.c.h.b16 %v240
      %v444 = vunpack.c.l.b16 %v241
      %v445 = vpack.c.b16 %v352, %v349
      %v446 = vpack.c.b16 %v353, %v350
      %v447 = vpack.c.b16 %v354, %v351
      %v448 = vpack.c.b16 %v358, %v355
      %v449 = vpack.c.b16 %v359, %v356
      %v450 = vpack.c.b16 %v360, %v357
      %v451 = vpack.c.b16 %v364, %v361
      %v452 = vpack.c.b16 %v365, %v362
      %v453 = vpack.c.b16 %v366, %v363
      %v454 = vpack.c.b16 %v370, %v367
      %v455 = vpack.c.b16 %v371, %v368
      %v456 = vpack.c.b16 %v372, %v369
      %v457 = vpack.c.b16 %v376, %v373
      %v458 = vpack.c.b16 %v377, %v374
      %v459 = vpack.c.b16 %v378, %v375
      %v460 = vpack.c.b16 %v382, %v379
      %v461 = vpack.c.b16 %v383, %v380
      %v462 = vpack.c.b16 %v384, %v381
      %v463 = vpack.c.b16 %v388, %v385
      %v464 = vpack.c.b16 %v389, %v386
      %v465 = vpack.c.b16 %v390, %v387
      %v466 = vpack.c.b16 %v394, %v391
      %v467 = vpack.c.b16 %v395, %v392
      %v468 = vpack.c.b16 %v396, %v393
      %v469 = vpack.c.b16 %v400, %v397
      %v470 = vpack.c.b16 %v401, %v398
      %v471 = vpack.c.b16 %v402, %v399
      %v472 = vpack.c.b16 %v406, %v403
      %v473 = vpack.c.b16 %v407, %v404
      %v474 = vpack.c.b16 %v408, %v405
      %v475 = vpack.c.b16 %v412, %v409
      %v476 = vpack.c.b16 %v413, %v410
      %v477 = vpack.c.b16 %v414, %v411
      %v478 = vpack.c.b16 %v418, %v415
      %v479 = vpack.c.b16 %v419, %v416
      %v480 = vpack.c.b16 %v420, %v417
      %v481 = vpack.c.b16 %v424, %v421
      %v482 = vpack.c.b16 %v425, %v422
      %v483 = vpack.c.b16 %v426, %v423
      %v484 = vpack.c.b16 %v430, %v427
      %v485 = vpack.c.b16 %v431, %v428
      %v486 = vpack.c.b16 %v432, %v429
      %v487 = vpack.c.b16 %v436, %v433
      %v488 = vpack.c.b16 %v437, %v434
      %v489 = vpack.c.b16 %v438, %v435
      %v490 = vpack.c.b16 %v442, %v439
      %v491 = vpack.c.b16 %v443, %v440
      %v492 = vpack.c.b16 %v444, %v441
      %v561 = vunpack.c.l.b16 %v242
      %v562 = vunpack.c.l.b16 %v243
      %v563 = vunpack.c.l.b16 %v244
      %v564 = vunpack.c.l.b16 %v245
      %v565 = vunpack.c.l.b16 %v246
      %v566 = vunpack.c.l.b16 %v247
      %v567 = vunpack.c.l.b16 %v248
      %v568 = vunpack.c.l.b16 %v249
      %v569 = vunpack.c.l.b16 %v250
      %v570 = vunpack.c.l.b16 %v251
      %v571 = vunpack.c.l.b16 %v252
      %v572 = vunpack.c.l.b16 %v253
      %v573 = vunpack.c.l.b16 %v254
      %v574 = vunpack.c.l.b16 %v255
      %v575 = vunpack.c.l.b16 %v256
      %v576 = vunpack.c.l.b16 %v257
      %v577 = vunpack.c.l.b16 %v258
      %v578 = vunpack.c.l.b16 %v259
      %v579 = vunpack.c.l.b16 %v260
      %v580 = vunpack.c.l.b16 %v261
      %v581 = vunpack.c.l.b16 %v262
      %v582 = vunpack.c.l.b16 %v263
      %v583 = vunpack.c.l.b16 %v264
      %v584 = vunpack.c.l.b16 %v265
      %v585 = vunpack.c.l.b16 %v266
      %v586 = vunpack.c.l.b16 %v267
      %v587 = vunpack.c.l.b16 %v268
      %v588 = vunpack.c.l.b16 %v269
      %v589 = vunpack.c.l.b16 %v270
      %v590 = vunpack.c.l.b16 %v271
      %v591 = vunpack.c.l.b16 %v272
      %v592 = vunpack.c.l.b16 %v273
      %v593 = vunpack.c.l.b16 %v274
      %v594 = vunpack.c.l.b16 %v275
      %v595 = vunpack.c.l.b16 %v276
      %v596 = vunpack.c.l.b16 %v277
      %v597 = vpack.c.b16 %v562, %v561
      %v598 = vpack.c.b16 %v564, %v563
      %v599 = vpack.c.b16 %v566, %v565
      %v600 = vpack.c.b16 %v568, %v567
      %v601 = vpack.c.b16 %v570, %v569
      %v602 = vpack.c.b16 %v572, %v571
      %v603 = vpack.c.b16 %v574, %v573
      %v604 = vpack.c.b16 %v576, %v575
      %v605 = vpack.c.b16 %v578, %v577
      %v606 = vpack.c.b16 %v580, %v579
      %v607 = vpack.c.b16 %v582, %v581
      %v608 = vpack.c.b16 %v584, %v583
      %v609 = vpack.c.b16 %v586, %v585
      %v610 = vpack.c.b16 %v588, %v587
      %v611 = vpack.c.b16 %v590, %v589
      %v612 = vpack.c.b16 %v592, %v591
      %v613 = vpack.c.b16 %v594, %v593
      %v614 = vpack.c.b16 %v596, %v595
      %vm633 = vcmask 261120
      %v635 = vsel %vm633, %v447, 0
      %v638 = vsel %vm633, %v450, 0
      %v641 = vsel %vm633, %v453, 0
      %v644 = vsel %vm633, %v456, 0
      %v647 = vsel %vm633, %v459, 0
      %v650 = vsel %vm633, %v462, 0
      %v653 = vsel %vm633, %v465, 0
      %v656 = vsel %vm633, %v468, 0
      %v659 = vsel %vm633, %v471, 0
      %v662 = vsel %vm633, %v474, 0
      %v665 = vsel %vm633, %v477, 0
      %v668 = vsel %vm633, %v480, 0
      %v671 = vsel %vm633, %v483, 0
      %v674 = vsel %vm633, %v486, 0
      %v677 = vsel %vm633, %v489, 0
      %v680 = vsel %vm633, %v492, 0
      %682 = vmatprep.subr.bf16.mxu0 0
      %683 = vmatpush1.bf16.msra.mxu0 %v597
      %684 = vmatprep.subr.bf16.mxu0 0
      %685 = vmatpush1.bf16.msra.mxu0 %v598
      %686 = vmatprep.subr.bf16.mxu0 0
      %687 = vmatpush1.bf16.msra.mxu0 %v599
      %688 = vmatprep.subr.bf16.mxu0 0
      %689 = vmatpush1.bf16.msra.mxu0 %v600
      %690 = vmatprep.subr.bf16.mxu0 0
      %691 = vmatpush1.bf16.msra.mxu0 %v601
      %692 = vmatprep.subr.bf16.mxu0 0
      %693 = vmatpush1.bf16.msra.mxu0 %v602
      %694 = vmatprep.subr.bf16.mxu0 0
      %695 = vmatpush1.bf16.msra.mxu0 %v603
      %696 = vmatprep.subr.bf16.mxu0 0
      %697 = vmatpush1.bf16.msra.mxu0 %v604
      %698 = vmatprep.subr.bf16.mxu0 0
      %699 = vmatpush1.bf16.msra.mxu0 %v605
      %700 = vmatprep.subr.bf16.mxu0 0
      %701 = vmatpush1.bf16.msra.mxu0 %v606
      %702 = vmatprep.subr.bf16.mxu0 0
      %703 = vmatpush1.bf16.msra.mxu0 %v607
      %704 = vmatprep.subr.bf16.mxu0 0
      %705 = vmatpush1.bf16.msra.mxu0 %v608
      %706 = vmatprep.subr.bf16.mxu0 0
      %707 = vmatpush1.bf16.msra.mxu0 %v609
      %708 = vmatprep.subr.bf16.mxu0 0
      %709 = vmatpush1.bf16.msra.mxu0 %v610
      %710 = vmatprep.subr.bf16.mxu0 0
      %711 = vmatpush1.bf16.msra.mxu0 %v611
      %712 = vmatprep.subr.bf16.mxu0 0
      %713 = vmatpush1.bf16.msra.mxu0 %v612
      %714 = vmatprep.mubr.bf16.mxu0 %v446
      %715 = vmatmul.mubr.bf16.gmra.mrb[0].mxu0 %v445
      %v716 = vpop.f32.mrb[0].mxu0
      %v717 = vadd.f32 %v283, %v716
      %v718 = vpop.f32.mrb[0].mxu0
      %v719 = vpop.f32.mrb[0].mxu0
      %v720 = vadd.f32 %v283, %v719
      %v721 = vpop.f32.mrb[0].mxu0
      %722 = vmatprep.mubr.bf16.mxu0 %v449
      %723 = vmatmul.mubr.bf16.gmra.mrb[0].mxu0 %v448
      %v724 = vpop.f32.mrb[0].mxu0
      %v725 = vadd.f32 %v283, %v724
      %v726 = vpop.f32.mrb[0].mxu0
      %v727 = vpop.f32.mrb[0].mxu0
      %v728 = vadd.f32 %v283, %v727
      %v729 = vpop.f32.mrb[0].mxu0
      %730 = vmatprep.mubr.bf16.mxu0 %v452
      %731 = vmatmul.mubr.bf16.gmra.mrb[0].mxu0 %v451
      %v732 = vpop.f32.mrb[0].mxu0
      %v733 = vadd.f32 %v283, %v732
      %v734 = vpop.f32.mrb[0].mxu0
      %v735 = vpop.f32.mrb[0].mxu0
      %v736 = vadd.f32 %v283, %v735
      %v737 = vpop.f32.mrb[0].mxu0
      %738 = vmatprep.mubr.bf16.mxu0 %v455
      %739 = vmatmul.mubr.bf16.gmra.mrb[0].mxu0 %v454
      %v740 = vpop.f32.mrb[0].mxu0
      %v741 = vadd.f32 %v283, %v740
      %v742 = vpop.f32.mrb[0].mxu0
      %v743 = vpop.f32.mrb[0].mxu0
      %v744 = vadd.f32 %v283, %v743
      %v745 = vpop.f32.mrb[0].mxu0
      %746 = vmatprep.mubr.bf16.mxu0 %v458
      %747 = vmatmul.mubr.bf16.gmra.mrb[0].mxu0 %v457
      %v748 = vpop.f32.mrb[0].mxu0
      %v749 = vadd.f32 %v283, %v748
      %v750 = vpop.f32.mrb[0].mxu0
      %v751 = vpop.f32.mrb[0].mxu0
      %v752 = vadd.f32 %v283, %v751
      %v753 = vpop.f32.mrb[0].mxu0
      %754 = vmatprep.mubr.bf16.mxu0 %v461
      %755 = vmatmul.mubr.bf16.gmra.mrb[0].mxu0 %v460
      %v756 = vpop.f32.mrb[0].mxu0
      %v757 = vadd.f32 %v283, %v756
      %v758 = vpop.f32.mrb[0].mxu0
      %v759 = vpop.f32.mrb[0].mxu0
      %v760 = vadd.f32 %v283, %v759
      %v761 = vpop.f32.mrb[0].mxu0
      %762 = vmatprep.mubr.bf16.mxu0 %v464
      %763 = vmatmul.mubr.bf16.gmra.mrb[0].mxu0 %v463
      %v764 = vpop.f32.mrb[0].mxu0
      %v765 = vadd.f32 %v283, %v764
      %v766 = vpop.f32.mrb[0].mxu0
      %v767 = vpop.f32.mrb[0].mxu0
      %v768 = vadd.f32 %v283, %v767
      %v769 = vpop.f32.mrb[0].mxu0
      %770 = vmatprep.mubr.bf16.mxu0 %v467
      %771 = vmatmul.mubr.bf16.gmra.mrb[0].mxu0 %v466
      %v772 = vpop.f32.mrb[0].mxu0
      %v773 = vadd.f32 %v283, %v772
      %v774 = vpop.f32.mrb[0].mxu0
      %v775 = vpop.f32.mrb[0].mxu0
      %v776 = vadd.f32 %v283, %v775
      %v777 = vpop.f32.mrb[0].mxu0
      %778 = vmatprep.mubr.bf16.mxu0 %v470
      %779 = vmatmul.mubr.bf16.gmra.mrb[0].mxu0 %v469
      %v780 = vpop.f32.mrb[0].mxu0
      %v781 = vadd.f32 %v283, %v780
      %v782 = vpop.f32.mrb[0].mxu0
      %v783 = vpop.f32.mrb[0].mxu0
      %v784 = vadd.f32 %v283, %v783
      %v785 = vpop.f32.mrb[0].mxu0
      %786 = vmatprep.mubr.bf16.mxu0 %v473
      %787 = vmatmul.mubr.bf16.gmra.mrb[0].mxu0 %v472
      %v788 = vpop.f32.mrb[0].mxu0
      %v789 = vadd.f32 %v283, %v788
      %v790 = vpop.f32.mrb[0].mxu0
      %v791 = vpop.f32.mrb[0].mxu0
      %v792 = vadd.f32 %v283, %v791
      %v793 = vpop.f32.mrb[0].mxu0
      %794 = vmatprep.mubr.bf16.mxu0 %v476
      %795 = vmatmul.mubr.bf16.gmra.mrb[0].mxu0 %v475
      %v796 = vpop.f32.mrb[0].mxu0
      %v797 = vadd.f32 %v283, %v796
      %v798 = vpop.f32.mrb[0].mxu0
      %v799 = vpop.f32.mrb[0].mxu0
      %v800 = vadd.f32 %v283, %v799
      %v801 = vpop.f32.mrb[0].mxu0
      %802 = vmatprep.mubr.bf16.mxu0 %v479
      %803 = vmatmul.mubr.bf16.gmra.mrb[0].mxu0 %v478
      %v804 = vpop.f32.mrb[0].mxu0
      %v805 = vadd.f32 %v283, %v804
      %v806 = vpop.f32.mrb[0].mxu0
      %v807 = vpop.f32.mrb[0].mxu0
      %v808 = vadd.f32 %v283, %v807
      %v809 = vpop.f32.mrb[0].mxu0
      %810 = vmatprep.mubr.bf16.mxu0 %v482
      %811 = vmatmul.mubr.bf16.gmra.mrb[0].mxu0 %v481
      %v812 = vpop.f32.mrb[0].mxu0
      %v813 = vadd.f32 %v283, %v812
      %v814 = vpop.f32.mrb[0].mxu0
      %v815 = vpop.f32.mrb[0].mxu0
      %v816 = vadd.f32 %v283, %v815
      %v817 = vpop.f32.mrb[0].mxu0
      %818 = vmatprep.mubr.bf16.mxu0 %v485
      %819 = vmatmul.mubr.bf16.gmra.mrb[0].mxu0 %v484
      %v820 = vpop.f32.mrb[0].mxu0
      %v821 = vadd.f32 %v283, %v820
      %v822 = vpop.f32.mrb[0].mxu0
      %v823 = vpop.f32.mrb[0].mxu0
      %v824 = vadd.f32 %v283, %v823
      %v825 = vpop.f32.mrb[0].mxu0
      %826 = vmatprep.mubr.bf16.mxu0 %v488
      %827 = vmatmul.mubr.bf16.gmra.mrb[0].mxu0 %v487
      %v828 = vpop.f32.mrb[0].mxu0
      %v829 = vadd.f32 %v283, %v828
      %v830 = vpop.f32.mrb[0].mxu0
      %v831 = vpop.f32.mrb[0].mxu0
      %v832 = vadd.f32 %v283, %v831
      %v833 = vpop.f32.mrb[0].mxu0
      %834 = vmatprep.mubr.bf16.mxu0 %v491
      %835 = vmatmul.mubr.bf16.gmra.mrb[0].mxu0 %v490
      %v836 = vpop.f32.mrb[0].mxu0
      %v837 = vadd.f32 %v283, %v836
      %v838 = vpop.f32.mrb[0].mxu0
      %v839 = vpop.f32.mrb[0].mxu0
      %v840 = vadd.f32 %v283, %v839
      %v841 = vpop.f32.mrb[0].mxu0
      %842 = vdwg.mxu0
      %843 = vmatprep.subr.bf16.mxu0 0
      %844 = vmatpush1.bf16.msra.mxu0 %v613
      %845 = vmatprep.subr.bf16.mxu0 0
      %846 = vmatpush1.bf16.msra.mxu0 %v614
      %847 = vmatprep.subr.bf16.mxu0 0
      %848 = vmatpush1.bf16.msra.mxu0 0
      %849 = vmatprep.subr.bf16.mxu0 0
      %850 = vmatpush1.bf16.msra.mxu0 0
      %851 = vmatprep.subr.bf16.mxu0 0
      %852 = vmatpush1.bf16.msra.mxu0 0
      %853 = vmatprep.subr.bf16.mxu0 0
      %854 = vmatpush1.bf16.msra.mxu0 0
      %855 = vmatprep.subr.bf16.mxu0 0
      %856 = vmatpush1.bf16.msra.mxu0 0
      %857 = vmatprep.subr.bf16.mxu0 0
      %858 = vmatpush1.bf16.msra.mxu0 0
      %859 = vmatprep.subr.bf16.mxu0 0
      %860 = vmatpush1.bf16.msra.mxu0 0
      %861 = vmatprep.subr.bf16.mxu0 0
      %862 = vmatpush1.bf16.msra.mxu0 0
      %863 = vmatprep.subr.bf16.mxu0 0
      %864 = vmatpush1.bf16.msra.mxu0 0
      %865 = vmatprep.subr.bf16.mxu0 0
      %866 = vmatpush1.bf16.msra.mxu0 0
      %867 = vmatprep.subr.bf16.mxu0 0
      %868 = vmatpush1.bf16.msra.mxu0 0
      %869 = vmatprep.subr.bf16.mxu0 0
      %870 = vmatpush1.bf16.msra.mxu0 0
      %871 = vmatprep.subr.bf16.mxu0 0
      %872 = vmatpush1.bf16.msra.mxu0 0
      %873 = vmatprep.subr.bf16.mxu0 0
      %874 = vmatpush1.bf16.msra.mxu0 0
      %875 = vmatprep.mubr.bf16.mxu0 0
      %876 = vmatmul.mubr.bf16.gmra.mrb[0].mxu0 %v635
      %v877 = vpop.f32.mrb[0].mxu0
      %v878 = vadd.f32 %v717, %v877
      %v879 = vpop.f32.mrb[0].mxu0
      %v880 = vpop.f32.mrb[0].mxu0
      %v881 = vadd.f32 %v720, %v880
      %v882 = vpop.f32.mrb[0].mxu0
      %883 = vmatprep.mubr.bf16.mxu0 0
      %884 = vmatmul.mubr.bf16.gmra.mrb[0].mxu0 %v638
      %v885 = vpop.f32.mrb[0].mxu0
      %v886 = vadd.f32 %v725, %v885
      %v887 = vpop.f32.mrb[0].mxu0
      %v888 = vpop.f32.mrb[0].mxu0
      %v889 = vadd.f32 %v728, %v888
      %v890 = vpop.f32.mrb[0].mxu0
      %891 = vmatprep.mubr.bf16.mxu0 0
      %892 = vmatmul.mubr.bf16.gmra.mrb[0].mxu0 %v641
      %v893 = vpop.f32.mrb[0].mxu0
      %v894 = vadd.f32 %v733, %v893
      %v895 = vpop.f32.mrb[0].mxu0
      %v896 = vpop.f32.mrb[0].mxu0
      %v897 = vadd.f32 %v736, %v896
      %v898 = vpop.f32.mrb[0].mxu0
      %899 = vmatprep.mubr.bf16.mxu0 0
      %900 = vmatmul.mubr.bf16.gmra.mrb[0].mxu0 %v644
      %v901 = vpop.f32.mrb[0].mxu0
      %v902 = vadd.f32 %v741, %v901
      %v903 = vpop.f32.mrb[0].mxu0
      %v904 = vpop.f32.mrb[0].mxu0
      %v905 = vadd.f32 %v744, %v904
      %v906 = vpop.f32.mrb[0].mxu0
      %907 = vmatprep.mubr.bf16.mxu0 0
      %908 = vmatmul.mubr.bf16.gmra.mrb[0].mxu0 %v647
      %v909 = vpop.f32.mrb[0].mxu0
      %v910 = vadd.f32 %v749, %v909
      %v911 = vpop.f32.mrb[0].mxu0
      %v912 = vpop.f32.mrb[0].mxu0
      %v913 = vadd.f32 %v752, %v912
      %v914 = vpop.f32.mrb[0].mxu0
      %915 = vmatprep.mubr.bf16.mxu0 0
      %916 = vmatmul.mubr.bf16.gmra.mrb[0].mxu0 %v650
      %v917 = vpop.f32.mrb[0].mxu0
      %v918 = vadd.f32 %v757, %v917
      %v919 = vpop.f32.mrb[0].mxu0
      %v920 = vpop.f32.mrb[0].mxu0
      %v921 = vadd.f32 %v760, %v920
      %v922 = vpop.f32.mrb[0].mxu0
      %923 = vmatprep.mubr.bf16.mxu0 0
      %924 = vmatmul.mubr.bf16.gmra.mrb[0].mxu0 %v653
      %v925 = vpop.f32.mrb[0].mxu0
      %v926 = vadd.f32 %v765, %v925
      %v927 = vpop.f32.mrb[0].mxu0
      %v928 = vpop.f32.mrb[0].mxu0
      %v929 = vadd.f32 %v768, %v928
      %v930 = vpop.f32.mrb[0].mxu0
      %931 = vmatprep.mubr.bf16.mxu0 0
      %932 = vmatmul.mubr.bf16.gmra.mrb[0].mxu0 %v656
      %v933 = vpop.f32.mrb[0].mxu0
      %v934 = vadd.f32 %v773, %v933
      %v935 = vpop.f32.mrb[0].mxu0
      %v936 = vpop.f32.mrb[0].mxu0
      %v937 = vadd.f32 %v776, %v936
      %v938 = vpop.f32.mrb[0].mxu0
      %939 = vmatprep.mubr.bf16.mxu0 0
      %940 = vmatmul.mubr.bf16.gmra.mrb[0].mxu0 %v659
      %v941 = vpop.f32.mrb[0].mxu0
      %v942 = vadd.f32 %v781, %v941
      %v943 = vpop.f32.mrb[0].mxu0
      %v944 = vpop.f32.mrb[0].mxu0
      %v945 = vadd.f32 %v784, %v944
      %v946 = vpop.f32.mrb[0].mxu0
      %947 = vmatprep.mubr.bf16.mxu0 0
      %948 = vmatmul.mubr.bf16.gmra.mrb[0].mxu0 %v662
      %v949 = vpop.f32.mrb[0].mxu0
      %v950 = vadd.f32 %v789, %v949
      %v951 = vpop.f32.mrb[0].mxu0
      %v952 = vpop.f32.mrb[0].mxu0
      %v953 = vadd.f32 %v792, %v952
      %v954 = vpop.f32.mrb[0].mxu0
      %955 = vmatprep.mubr.bf16.mxu0 0
      %956 = vmatmul.mubr.bf16.gmra.mrb[0].mxu0 %v665
      %v957 = vpop.f32.mrb[0].mxu0
      %v958 = vadd.f32 %v797, %v957
      %v959 = vpop.f32.mrb[0].mxu0
      %v960 = vpop.f32.mrb[0].mxu0
      %v961 = vadd.f32 %v800, %v960
      %v962 = vpop.f32.mrb[0].mxu0
      %963 = vmatprep.mubr.bf16.mxu0 0
      %964 = vmatmul.mubr.bf16.gmra.mrb[0].mxu0 %v668
      %v965 = vpop.f32.mrb[0].mxu0
      %v966 = vadd.f32 %v805, %v965
      %v967 = vpop.f32.mrb[0].mxu0
      %v968 = vpop.f32.mrb[0].mxu0
      %v969 = vadd.f32 %v808, %v968
      %v970 = vpop.f32.mrb[0].mxu0
      %971 = vmatprep.mubr.bf16.mxu0 0
      %972 = vmatmul.mubr.bf16.gmra.mrb[0].mxu0 %v671
      %v973 = vpop.f32.mrb[0].mxu0
      %v974 = vadd.f32 %v813, %v973
      %v975 = vpop.f32.mrb[0].mxu0
      %v976 = vpop.f32.mrb[0].mxu0
      %v977 = vadd.f32 %v816, %v976
      %v978 = vpop.f32.mrb[0].mxu0
      %979 = vmatprep.mubr.bf16.mxu0 0
      %980 = vmatmul.mubr.bf16.gmra.mrb[0].mxu0 %v674
      %v981 = vpop.f32.mrb[0].mxu0
      %v982 = vadd.f32 %v821, %v981
      %v983 = vpop.f32.mrb[0].mxu0
      %v984 = vpop.f32.mrb[0].mxu0
      %v985 = vadd.f32 %v824, %v984
      %v986 = vpop.f32.mrb[0].mxu0
      %987 = vmatprep.mubr.bf16.mxu0 0
      %988 = vmatmul.mubr.bf16.gmra.mrb[0].mxu0 %v677
      %v989 = vpop.f32.mrb[0].mxu0
      %v990 = vadd.f32 %v829, %v989
      %v991 = vpop.f32.mrb[0].mxu0
      %v992 = vpop.f32.mrb[0].mxu0
      %v993 = vadd.f32 %v832, %v992
      %v994 = vpop.f32.mrb[0].mxu0
      %995 = vmatprep.mubr.bf16.mxu0 0
      %996 = vmatmul.mubr.bf16.gmra.mrb[0].mxu0 %v680
      %v997 = vpop.f32.mrb[0].mxu0
      %v998 = vadd.f32 %v837, %v997
      %v999 = vpop.f32.mrb[0].mxu0
      %v1000 = vpop.f32.mrb[0].mxu0
      %v1001 = vadd.f32 %v840, %v1000
      %v1002 = vpop.f32.mrb[0].mxu0
      %1003 = vdwg.mxu0
      %vm1004 = vcmask 23552
      %1005 = vst.msk [vmem:[%s175] sm:$0xff] %vm1004, %v878
      %1006 = vst.msk [vmem:[%s175 + $0x8] sm:$0xff] %vm1004, %v881
      %1007 = vst.msk [vmem:[%s175 + $0x10] sm:$0xff] %vm1004, %v886
      %1008 = vst.msk [vmem:[%s175 + $0x18] sm:$0xff] %vm1004, %v889
      %1009 = vst.msk [vmem:[%s175 + $0x20] sm:$0xff] %vm1004, %v894
      %1010 = vst.msk [vmem:[%s175 + $0x28] sm:$0xff] %vm1004, %v897
      %1011 = vst.msk [vmem:[%s175 + $0x30] sm:$0xff] %vm1004, %v902
      %1012 = vst.msk [vmem:[%s175 + $0x38] sm:$0xff] %vm1004, %v905
      %1013 = vst.msk [vmem:[%s175 + $0x40] sm:$0xff] %vm1004, %v910
      %1014 = vst.msk [vmem:[%s175 + $0x48] sm:$0xff] %vm1004, %v913
      %1015 = vst.msk [vmem:[%s175 + $0x50] sm:$0xff] %vm1004, %v918
      %1016 = vst.msk [vmem:[%s175 + $0x58] sm:$0xff] %vm1004, %v921
      %1017 = vst.msk [vmem:[%s175 + $0x60] sm:$0xff] %vm1004, %v926
      %1018 = vst.msk [vmem:[%s175 + $0x68] sm:$0xff] %vm1004, %v929
      %1019 = vst.msk [vmem:[%s175 + $0x70] sm:$0xff] %vm1004, %v934
      %1020 = vst.msk [vmem:[%s175 + $0x78] sm:$0xff] %vm1004, %v937
      %1021 = vst.msk [vmem:[%s175 + $0x80] sm:$0xff] %vm1004, %v942
      %1022 = vst.msk [vmem:[%s175 + $0x88] sm:$0xff] %vm1004, %v945
      %1023 = vst.msk [vmem:[%s175 + $0x90] sm:$0xff] %vm1004, %v950
      %1024 = vst.msk [vmem:[%s175 + $0x98] sm:$0xff] %vm1004, %v953
      %1025 = vst.msk [vmem:[%s175 + $0xa0] sm:$0xff] %vm1004, %v958
      %1026 = vst.msk [vmem:[%s175 + $0xa8] sm:$0xff] %vm1004, %v961
      %1027 = vst.msk [vmem:[%s175 + $0xb0] sm:$0xff] %vm1004, %v966
      %1028 = vst.msk [vmem:[%s175 + $0xb8] sm:$0xff] %vm1004, %v969
      %1029 = vst.msk [vmem:[%s175 + $0xc0] sm:$0xff] %vm1004, %v974
      %1030 = vst.msk [vmem:[%s175 + $0xc8] sm:$0xff] %vm1004, %v977
      %1031 = vst.msk [vmem:[%s175 + $0xd0] sm:$0xff] %vm1004, %v982
      %1032 = vst.msk [vmem:[%s175 + $0xd8] sm:$0xff] %vm1004, %v985
      %1033 = vst.msk [vmem:[%s175 + $0xe0] sm:$0xff] %vm1004, %v990
      %1034 = vst.msk [vmem:[%s175 + $0xe8] sm:$0xff] %vm1004, %v993
      %1035 = vst.msk [vmem:[%s175 + $0xf0] sm:$0xff] %vm1004, %v998
      %1036 = vst.msk [vmem:[%s175 + $0xf8] sm:$0xff] %vm1004, %v1001
      %s1037 = smul.u32 32, %s14
      %p1038 = scmp.lt.s32.totalorder %s1037, 255
      %s1039 = scalar_select %p1038, %s1037, 255
      %s1040 = smul.addr %s1039, 8
      %s1041 = scalar_lea.vmem %s3, %s1040
      // Predicated region
      $region33: #{decoder_forward.21} parent=31 // pred_check
        %p1042 = pneg %p100
      $region34: #{decoder_forward.21} parent=31 // pred_check_branch
        %1044 = sbr.rel (%p1042) target = $region36
      $region35: #{decoder_forward.21} parent=31 // pred_region
        %s1045 = smul.u32 32, %s14
      $region36: #{decoder_forward.21} parent=31 // pred_fallthru
        _
    $region32: #{decoder_forward.21} parent=5 // pred_fallthru
      _
    %p1046 = scmp.le.s32.totalorder 2, %s9
    // Predicated region
    $region37: #{decoder_forward.21} parent=5 // pred_check
      %p1047 = pneg %p1046
    $region38: #{decoder_forward.21} parent=5 // pred_check_branch
      %1049 = sbr.rel (%p1047) target = $region40
    $region39: #{decoder_forward.21} parent=5 // pred_region
      %s1050 = ssub.s32 %s9, 2
      // Predicated region
      $region41: #{decoder_forward.21} parent=39 // pred_check
        %p1051 = pneg %p106
      $region42: #{decoder_forward.21} parent=39 // pred_check_branch
        %1053 = sbr.rel (%p1051) target = $region44
      $region43: #{decoder_forward.21} parent=39 // pred_region
        %s1054 = smul.u32 32, %s15
        %p1055 = scmp.lt.s32.totalorder %s1054, 255
        %s1056 = scalar_select %p1055, %s1054, 255
        %s1057 = smul.addr %s1056, 8
        %s1058 = scalar_lea.vmem %s3, %s1057
      $region44: #{decoder_forward.21} parent=39 // pred_fallthru
        _
    $region40: #{decoder_forward.21} parent=5 // pred_fallthru
      _
  $region6: #{decoder_forward.21} parent=0 // loop_footer
    %s13 = sadd.s32 1, %s9
  $region7: #{decoder_forward.21} parent=0 // loop_footer_branch
    %8 = sbr.rel target = $region3
  $region8: #{decoder_forward.21} parent=0 // loop_exit
    _

</llo_original>
